<compile_context>
chip_gen: v7x
topology: tpu7x:2x2x1
jax: 0.10.0
libtpu: 0.0.40
codegen_flags: <defaults>
</compile_context>

<pallas_src>
import math

import jax
import jax.numpy as jnp
import numpy as np
from jax.experimental import pallas as pl
from jax.experimental.pallas import tpu as pltpu

STEP = 4        # MaxPool / ConvTranspose stride of the reference module
EPS = 1e-5      # BatchNorm eps


# --------------------------- in-kernel helpers (pure value ops) ---------------------------

def _one_hot(shape, predicate, dtype=jnp.float32):
    """2-D 0/1 matrix M[r, c] = predicate(r, c), built from broadcasted iotas."""
    r = jax.lax.broadcasted_iota(jnp.int32, shape, 0)
    c = jax.lax.broadcasted_iota(jnp.int32, shape, 1)
    return jnp.where(predicate(r, c), 1.0, 0.0).astype(dtype)


def _shift_rows(y, off):
    """z[l, :] = y[l + off, :], zero-filled out of range (exact one-hot matmul)."""
    if off == 0:
        return y
    L = y.shape[0]
    t = _one_hot((L, L), lambda r, c: c == r + off)
    return jnp.dot(t, y, preferred_element_type=jnp.float32)


def _conv_bn_act(inputs, aff_ref, *, K, pad, relu=True):
    """Conv1d over the channel-concatenation of `inputs` (list of (x, w_ref) pairs,
    x: (L, Cin_i) bf16, w_ref: (Cin_i, K*Cout) bf16) + folded-BN affine (+ ReLU).
    One wide bf16 MXU matmul per input, then K exact row-shift matmuls (= taps/pad)."""
    xw = None
    for x, w_ref in inputs:
        t = jnp.dot(x, w_ref[...], preferred_element_type=jnp.float32)
        xw = t if xw is None else xw + t
    Cout = xw.shape[1] // K
    acc = None
    for k in range(K):
        term = _shift_rows(xw[:, k * Cout:(k + 1) * Cout], k - pad)
        acc = term if acc is None else acc + term
    aff = aff_ref[...]                       # (2, Cout): row0 = scale, row1 = bias*scale+shift
    y = acc * aff[0:1, :] + aff[1:2, :]
    if relu:
        y = jnp.maximum(y, 0.0)
    return y                                 # f32 (L, Cout)


def _maxpool_rows(x, s):
    """MaxPool1d(kernel=stride=s) along rows via s exact one-hot gather matmuls."""
    L, _ = x.shape
    Lo = L // s
    out = None
    for k in range(s):
        g = _one_hot((Lo, L), lambda r, c: c == s * r + k, x.dtype)
        v = jnp.dot(g, x, preferred_element_type=jnp.float32)
        out = v if out is None else jnp.maximum(out, v)
    return out.astype(jnp.bfloat16)


def _deconv_bn_relu(inputs, aff_ref, *, K):
    """ConvTranspose1d(kernel=stride=K, no overlap) over the channel-concatenation
    of `inputs`: out row K*j + k = x[j] @ W_k; + folded-BN affine + ReLU.
    The row de-interleave is an exact one-hot scatter matmul (no reshapes)."""
    Lin = inputs[0][0].shape[0]
    yw = None
    for x, w_ref in inputs:
        t = jnp.dot(x, w_ref[...], preferred_element_type=jnp.float32)
        yw = t if yw is None else yw + t
    Cout = yw.shape[1] // K
    Lout = Lin * K
    acc = None
    if Lin == 1:
        # scatter of a single row -> simple broadcast + row-index mask
        row = jax.lax.broadcasted_iota(jnp.int32, (Lout, Cout), 0)
        for k in range(K):
            term = jnp.where(row == k, yw[:, k * Cout:(k + 1) * Cout], 0.0)
            acc = term if acc is None else acc + term
    else:
        for k in range(K):
            r = _one_hot((Lout, Lin), lambda rr, cc: rr == K * cc + k)
            term = jnp.dot(r, yw[:, k * Cout:(k + 1) * Cout],
                           preferred_element_type=jnp.float32)
            acc = term if acc is None else acc + term
    aff = aff_ref[...]
    y = acc * aff[0:1, :] + aff[1:2, :]
    return jnp.maximum(y, 0.0).astype(jnp.bfloat16)


# --------------------------- the fused U-Net kernel ---------------------------

def _unet_kernel(x_ref,
                 we1a, ae1a, we1b, ae1b,
                 we2a, ae2a, we2b, ae2b,
                 we3a, ae3a, we3b, ae3b,
                 wd1, ad1, wd2a, wd2b, ad2,
                 wd3a, wd3b, ad3,
                 wfa, wfb, af,
                 o_ref):
    bf16 = jnp.bfloat16
    x = x_ref[...]                                                        # (L, Cin) bf16
    # ---- encoder ----
    h = _conv_bn_act([(x, we1a)], ae1a, K=5, pad=2).astype(bf16)
    h = _conv_bn_act([(h, we1b)], ae1b, K=3, pad=1).astype(bf16)
    enc1 = _maxpool_rows(h, STEP)                                         # (L/4, 64)
    h = _conv_bn_act([(enc1, we2a)], ae2a, K=5, pad=2).astype(bf16)
    h = _conv_bn_act([(h, we2b)], ae2b, K=3, pad=1).astype(bf16)
    enc2 = _maxpool_rows(h, STEP)                                         # (L/16, 128)
    h = _conv_bn_act([(enc2, we3a)], ae3a, K=5, pad=2).astype(bf16)
    h = _conv_bn_act([(h, we3b)], ae3b, K=3, pad=1).astype(bf16)
    enc3 = _maxpool_rows(h, STEP)                                         # (L/64, 256)
    # ---- decoder (skip concats folded into split-Cin matmuls) ----
    d1 = _deconv_bn_relu([(enc3, wd1)], ad1, K=STEP)                      # (L/16, 128)
    d2 = _deconv_bn_relu([(d1, wd2a), (enc2, wd2b)], ad2, K=STEP)         # (L/4, 64)
    d3 = _deconv_bn_relu([(d2, wd3a), (enc1, wd3b)], ad3, K=STEP)         # (L, 32)
    # ---- final 1x1 conv, fused, split over [d3 | x] ----
    y = _conv_bn_act([(d3, wfa), (x, wfb)], af, K=1, pad=0, relu=False)   # (L, 1) f32
    o_ref[...] = y


@jax.jit
def unet_forward(x_ncl, kparams):
    """x_ncl: (B, Cin, L) float32 (PyTorch NCL layout).  Returns (B, L) float32."""
    B, Cin, L = x_ncl.shape
    x = jnp.transpose(x_ncl, (0, 2, 1)).astype(jnp.bfloat16)              # NCL -> NLC
    in_specs = [pl.BlockSpec((None, L, Cin), lambda b: (b, 0, 0))]
    in_specs += [pl.BlockSpec(a.shape, lambda b: (0, 0)) for a in kparams]
    out = pl.pallas_call(
        _unet_kernel,
        out_shape=jax.ShapeDtypeStruct((B, L, 1), jnp.float32),
        grid=(B,),
        in_specs=in_specs,
        out_specs=pl.BlockSpec((None, L, 1), lambda b: (b, 0, 0)),
        compiler_params=pltpu.CompilerParams(dimension_semantics=("parallel",)),
    )(x, *kparams)
    return out[..., 0]                                                    # Flatten -> (B, L)


# --------------------------- parameters (torch layout) + one-time packing ---------------------------

def init_params(key, input_channels):
    keys = iter(jax.random.split(key, 64))

    def bn(c):
        gamma = 1.0 + 0.1 * jax.random.normal(next(keys), (c,), jnp.float32)
        beta = 0.1 * jax.random.normal(next(keys), (c,), jnp.float32)
        mean = 0.1 * jax.random.normal(next(keys), (c,), jnp.float32)
        var = 1.0 + 0.5 * jax.random.uniform(next(keys), (c,), jnp.float32)
        scale = gamma / jnp.sqrt(var + EPS)            # fold BN into affine
        shift = beta - mean * scale
        return scale, shift

    def conv(cin, cout, k, with_bn=True):
        w = jax.random.normal(next(keys), (cout, cin, k), jnp.float32) / math.sqrt(cin * k)
        b = 0.05 * jax.random.normal(next(keys), (cout,), jnp.float32)
        if with_bn:
            scale, shift = bn(cout)
        else:
            scale, shift = jnp.ones((cout,), jnp.float32), jnp.zeros((cout,), jnp.float32)
        return dict(w=w, b=b, scale=scale, shift=shift)

    def deconv(cin, cout, k):
        w = jax.random.normal(next(keys), (cin, cout, k), jnp.float32) / math.sqrt(cin * k)
        b = 0.05 * jax.random.normal(next(keys), (cout,), jnp.float32)
        scale, shift = bn(cout)
        return dict(w=w, b=b, scale=scale, shift=shift)

    return {
        "enc1_c1": conv(input_channels, 64, 5), "enc1_c2": conv(64, 64, 3),
        "enc2_c1": conv(64, 128, 5), "enc2_c2": conv(128, 128, 3),
        "enc3_c1": conv(128, 256, 5), "enc3_c2": conv(256, 256, 3),
        "dec1": deconv(256, 128, STEP), "dec2": deconv(256, 64, STEP),
        "dec3": deconv(128, 32, STEP),
        "final": conv(input_channels + 32, 1, 1, with_bn=False),
    }


def pack_params(p):
    """One-time packing: bf16 matmul weights (Cin, K*Cout) + f32 (2, Cout) affine
    with row0 = BN scale and row1 = bias*scale + shift (bias folded in)."""
    def affine(e):
        return jnp.stack([e["scale"], e["b"] * e["scale"] + e["shift"]]).astype(jnp.float32)

    def conv_pack(e):          # torch Conv1d weight (Cout, Cin, K)
        cout, cin, k = e["w"].shape
        wf = jnp.transpose(e["w"], (1, 2, 0)).reshape(cin, k * cout).astype(jnp.bfloat16)
        return wf, affine(e)

    def deconv_pack(e):        # torch ConvTranspose1d weight (Cin, Cout, K)
        cin, cout, k = e["w"].shape
        wf = jnp.transpose(e["w"], (0, 2, 1)).reshape(cin, k * cout).astype(jnp.bfloat16)
        return wf, affine(e)

    we1a, ae1a = conv_pack(p["enc1_c1"]); we1b, ae1b = conv_pack(p["enc1_c2"])
    we2a, ae2a = conv_pack(p["enc2_c1"]); we2b, ae2b = conv_pack(p["enc2_c2"])
    we3a, ae3a = conv_pack(p["enc3_c1"]); we3b, ae3b = conv_pack(p["enc3_c2"])
    wd1, ad1 = deconv_pack(p["dec1"])
    wd2, ad2 = deconv_pack(p["dec2"])
    wd3, ad3 = deconv_pack(p["dec3"])
    wf, af = conv_pack(p["final"])
    s2 = p["dec1"]["w"].shape[1]            # dec1 Cout: split point of dec2 input (d1 | enc2)
    s3 = p["dec2"]["w"].shape[1]            # dec2 Cout: split point of dec3 input (d2 | enc1)
    sf = p["dec3"]["w"].shape[1]            # dec3 Cout: split point of final input (d3 | x)
    wd2a, wd2b = wd2[:s2], wd2[s2:]
    wd3a, wd3b = wd3[:s3], wd3[s3:]
    wfa, wfb = wf[:sf], wf[sf:]
    return (we1a, ae1a, we1b, ae1b, we2a, ae2a, we2b, ae2b,
            we3a, ae3a, we3b, ae3b, wd1, ad1, wd2a, wd2b, ad2,
            wd3a, wd3b, ad3, wfa, wfb, af)


# --------------------------- pure-JAX f32 reference (module semantics) ---------------------------

def _ref_conv(x_ncl, e, pad, relu=True):
    y = jax.lax.conv_general_dilated(x_ncl, e["w"], (1,), [(pad, pad)],
                                     dimension_numbers=("NCH", "OIH", "NCH"))
    y = (y + e["b"][None, :, None]) * e["scale"][None, :, None] + e["shift"][None, :, None]
    return jnp.maximum(y, 0.0) if relu else y


def _ref_pool(x_ncl, s):
    B, C, L = x_ncl.shape
    return x_ncl.reshape(B, C, L // s, s).max(axis=-1)


def _ref_deconv(x_ncl, e, step):
    w = e["w"]                                               # (Cin, Cout, K)
    B = x_ncl.shape[0]
    cout = w.shape[1]
    y = jnp.einsum("bcl,cok->bolk", x_ncl, w).reshape(B, cout, -1)
    y = (y + e["b"][None, :, None]) * e["scale"][None, :, None] + e["shift"][None, :, None]
    return jnp.maximum(y, 0.0)


def ref_forward(x_ncl, p):
    h = _ref_conv(x_ncl, p["enc1_c1"], 2)
    h = _ref_conv(h, p["enc1_c2"], 1)
    enc1 = _ref_pool(h, STEP)
    h = _ref_conv(enc1, p["enc2_c1"], 2)
    h = _ref_conv(h, p["enc2_c2"], 1)
    enc2 = _ref_pool(h, STEP)
    h = _ref_conv(enc2, p["enc3_c1"], 2)
    h = _ref_conv(h, p["enc3_c2"], 1)
    enc3 = _ref_pool(h, STEP)
    d1 = jnp.concatenate([_ref_deconv(enc3, p["dec1"], STEP), enc2], axis=1)
    d2 = jnp.concatenate([_ref_deconv(d1, p["dec2"], STEP), enc1], axis=1)
    d3 = jnp.concatenate([_ref_deconv(d2, p["dec3"], STEP), x_ncl], axis=1)
    out = _ref_conv(d3, p["final"], 0, relu=False)           # (B, 1, L)
    return out.reshape(out.shape[0], -1)


# --------------------------- main ---------------------------

if __name__ == "__main__":
    B, CIN, L = 2, 4, 64          # L must be divisible by STEP**3 = 64 (3 maxpools)
    key = jax.random.PRNGKey(0)
    kx, kp = jax.random.split(key)
    x = jax.random.normal(kx, (B, CIN, L), jnp.float32)   # PyTorch NCL input layout
    params = init_params(kp, CIN)
    kparams = pack_params(params)                         # one-time packing (bf16 weights)

    out = jax.block_until_ready(unet_forward(x, kparams))
    assert out.shape == (B, L), out.shape

    ref = jax.block_until_ready(ref_forward(x, params))   # full-f32 module semantics
    # bf16 MXU inputs with f32 accumulation -> ~1% expected deviation vs. the f32 reference.
    np.testing.assert_allclose(np.asarray(out), np.asarray(ref), rtol=5e-2, atol=5e-2)

    print("KERNEL_OK")
</pallas_src>

<mosaic_0001>
module attributes {stable_mosaic.version = 11 : i64} {
  func.func @_unet_kernel(%arg0: i32, %arg1: memref<1x64x4xbf16, #tpu.memory_space<vmem>>, %arg2: memref<4x320xbf16, #tpu.memory_space<vmem>>, %arg3: memref<2x64xf32, #tpu.memory_space<vmem>>, %arg4: memref<64x192xbf16, #tpu.memory_space<vmem>>, %arg5: memref<2x64xf32, #tpu.memory_space<vmem>>, %arg6: memref<64x640xbf16, #tpu.memory_space<vmem>>, %arg7: memref<2x128xf32, #tpu.memory_space<vmem>>, %arg8: memref<128x384xbf16, #tpu.memory_space<vmem>>, %arg9: memref<2x128xf32, #tpu.memory_space<vmem>>, %arg10: memref<128x1280xbf16, #tpu.memory_space<vmem>>, %arg11: memref<2x256xf32, #tpu.memory_space<vmem>>, %arg12: memref<256x768xbf16, #tpu.memory_space<vmem>>, %arg13: memref<2x256xf32, #tpu.memory_space<vmem>>, %arg14: memref<256x512xbf16, #tpu.memory_space<vmem>>, %arg15: memref<2x128xf32, #tpu.memory_space<vmem>>, %arg16: memref<128x256xbf16, #tpu.memory_space<vmem>>, %arg17: memref<128x256xbf16, #tpu.memory_space<vmem>>, %arg18: memref<2x64xf32, #tpu.memory_space<vmem>>, %arg19: memref<64x128xbf16, #tpu.memory_space<vmem>>, %arg20: memref<64x128xbf16, #tpu.memory_space<vmem>>, %arg21: memref<2x32xf32, #tpu.memory_space<vmem>>, %arg22: memref<32x1xbf16, #tpu.memory_space<vmem>>, %arg23: memref<4x1xbf16, #tpu.memory_space<vmem>>, %arg24: memref<2x1xf32, #tpu.memory_space<vmem>>, %arg25: memref<1x64x1xf32, #tpu.memory_space<vmem>>) attributes {dimension_semantics = [#tpu.dimension_semantics<parallel>], iteration_bounds = array<i64: 2>, scalar_prefetch = 0 : i64, scratch_operands = 0 : i64, tpu.core_type = #tpu.core_type<tc>, window_params = [{transform_indices = @transform_0, window_bounds = array<i64: 1, 64, 4>}, {pipeline_mode = #tpu.pipeline_mode<synchronous>, transform_indices = @transform_1, window_bounds = array<i64: 4, 320>}, {pipeline_mode = #tpu.pipeline_mode<synchronous>, transform_indices = @transform_2, window_bounds = array<i64: 2, 64>}, {pipeline_mode = #tpu.pipeline_mode<synchronous>, transform_indices = @transform_3, window_bounds = array<i64: 64, 192>}, {pipeline_mode = #tpu.pipeline_mode<synchronous>, transform_indices = @transform_4, window_bounds = array<i64: 2, 64>}, {pipeline_mode = #tpu.pipeline_mode<synchronous>, transform_indices = @transform_5, window_bounds = array<i64: 64, 640>}, {pipeline_mode = #tpu.pipeline_mode<synchronous>, transform_indices = @transform_6, window_bounds = array<i64: 2, 128>}, {pipeline_mode = #tpu.pipeline_mode<synchronous>, transform_indices = @transform_7, window_bounds = array<i64: 128, 384>}, {pipeline_mode = #tpu.pipeline_mode<synchronous>, transform_indices = @transform_8, window_bounds = array<i64: 2, 128>}, {pipeline_mode = #tpu.pipeline_mode<synchronous>, transform_indices = @transform_9, window_bounds = array<i64: 128, 1280>}, {pipeline_mode = #tpu.pipeline_mode<synchronous>, transform_indices = @transform_10, window_bounds = array<i64: 2, 256>}, {pipeline_mode = #tpu.pipeline_mode<synchronous>, transform_indices = @transform_11, window_bounds = array<i64: 256, 768>}, {pipeline_mode = #tpu.pipeline_mode<synchronous>, transform_indices = @transform_12, window_bounds = array<i64: 2, 256>}, {pipeline_mode = #tpu.pipeline_mode<synchronous>, transform_indices = @transform_13, window_bounds = array<i64: 256, 512>}, {pipeline_mode = #tpu.pipeline_mode<synchronous>, transform_indices = @transform_14, window_bounds = array<i64: 2, 128>}, {pipeline_mode = #tpu.pipeline_mode<synchronous>, transform_indices = @transform_15, window_bounds = array<i64: 128, 256>}, {pipeline_mode = #tpu.pipeline_mode<synchronous>, transform_indices = @transform_16, window_bounds = array<i64: 128, 256>}, {pipeline_mode = #tpu.pipeline_mode<synchronous>, transform_indices = @transform_17, window_bounds = array<i64: 2, 64>}, {pipeline_mode = #tpu.pipeline_mode<synchronous>, transform_indices = @transform_18, window_bounds = array<i64: 64, 128>}, {pipeline_mode = #tpu.pipeline_mode<synchronous>, transform_indices = @transform_19, window_bounds = array<i64: 64, 128>}, {pipeline_mode = #tpu.pipeline_mode<synchronous>, transform_indices = @transform_20, window_bounds = array<i64: 2, 32>}, {pipeline_mode = #tpu.pipeline_mode<synchronous>, transform_indices = @transform_21, window_bounds = array<i64: 32, 1>}, {pipeline_mode = #tpu.pipeline_mode<synchronous>, transform_indices = @transform_22, window_bounds = array<i64: 4, 1>}, {pipeline_mode = #tpu.pipeline_mode<synchronous>, transform_indices = @transform_23, window_bounds = array<i64: 2, 1>}, {transform_indices = @transform_24, window_bounds = array<i64: 1, 64, 1>}]} {
    %c0 = arith.constant 0 : index
    %c0_0 = arith.constant 0 : index
    %c0_1 = arith.constant 0 : index
    %0 = vector.load %arg1[%c0, %c0_0, %c0_1] : memref<1x64x4xbf16, #tpu.memory_space<vmem>>, vector<1x64x4xbf16>
    %1 = vector.shape_cast %0 : vector<1x64x4xbf16> to vector<64x4xbf16>
    %c0_2 = arith.constant 0 : index
    %c0_3 = arith.constant 0 : index
    %2 = vector.load %arg2[%c0_2, %c0_3] : memref<4x320xbf16, #tpu.memory_space<vmem>>, vector<4x320xbf16>
    %cst = arith.constant dense<0.000000e+00> : vector<64x320xf32>
    %3 = tpu.matmul %1, %2, %cst {dimension_numbers = #tpu.dot_dimension_numbers<[1], [0], [0], [1], [0, 0, 1, 1], [], []>} : vector<64x4xbf16>, vector<4x320xbf16>, vector<64x320xf32> -> vector<64x320xf32>
    %4 = vector.extract_strided_slice %3 {offsets = [0, 0], sizes = [64, 64], strides = [1, 1]} : vector<64x320xf32> to vector<64x64xf32>
    %5 = tpu.iota {dimensions = array<i32: 0>} : vector<64x64xi32>
    %6 = tpu.iota {dimensions = array<i32: 1>} : vector<64x64xi32>
    %c-2_i32 = arith.constant -2 : i32
    %7 = vector.broadcast %c-2_i32 : i32 to vector<64x64xi32>
    %8 = arith.addi %5, %7 : vector<64x64xi32>
    %9 = arith.cmpi eq, %6, %8 : vector<64x64xi32>
    %cst_4 = arith.constant 1.000000e+00 : f32
    %cst_5 = arith.constant 0.000000e+00 : f32
    %10 = vector.broadcast %cst_4 : f32 to vector<64x64xf32>
    %11 = vector.broadcast %cst_5 : f32 to vector<64x64xf32>
    %12 = arith.select %9, %10, %11 : vector<64x64xi1>, vector<64x64xf32>
    %cst_6 = arith.constant dense<0.000000e+00> : vector<64x64xf32>
    %13 = tpu.matmul %12, %4, %cst_6 {dimension_numbers = #tpu.dot_dimension_numbers<[1], [0], [0], [1], [0, 0, 1, 1], [], []>} : vector<64x64xf32>, vector<64x64xf32>, vector<64x64xf32> -> vector<64x64xf32>
    %14 = vector.extract_strided_slice %3 {offsets = [0, 64], sizes = [64, 64], strides = [1, 1]} : vector<64x320xf32> to vector<64x64xf32>
    %15 = tpu.iota {dimensions = array<i32: 0>} : vector<64x64xi32>
    %16 = tpu.iota {dimensions = array<i32: 1>} : vector<64x64xi32>
    %c-1_i32 = arith.constant -1 : i32
    %17 = vector.broadcast %c-1_i32 : i32 to vector<64x64xi32>
    %18 = arith.addi %15, %17 : vector<64x64xi32>
    %19 = arith.cmpi eq, %16, %18 : vector<64x64xi32>
    %cst_7 = arith.constant 1.000000e+00 : f32
    %cst_8 = arith.constant 0.000000e+00 : f32
    %20 = vector.broadcast %cst_7 : f32 to vector<64x64xf32>
    %21 = vector.broadcast %cst_8 : f32 to vector<64x64xf32>
    %22 = arith.select %19, %20, %21 : vector<64x64xi1>, vector<64x64xf32>
    %cst_9 = arith.constant dense<0.000000e+00> : vector<64x64xf32>
    %23 = tpu.matmul %22, %14, %cst_9 {dimension_numbers = #tpu.dot_dimension_numbers<[1], [0], [0], [1], [0, 0, 1, 1], [], []>} : vector<64x64xf32>, vector<64x64xf32>, vector<64x64xf32> -> vector<64x64xf32>
    %24 = arith.addf %13, %23 : vector<64x64xf32>
    %25 = vector.extract_strided_slice %3 {offsets = [0, 128], sizes = [64, 64], strides = [1, 1]} : vector<64x320xf32> to vector<64x64xf32>
    %26 = arith.addf %24, %25 : vector<64x64xf32>
    %27 = vector.extract_strided_slice %3 {offsets = [0, 192], sizes = [64, 64], strides = [1, 1]} : vector<64x320xf32> to vector<64x64xf32>
    %28 = tpu.iota {dimensions = array<i32: 0>} : vector<64x64xi32>
    %29 = tpu.iota {dimensions = array<i32: 1>} : vector<64x64xi32>
    %c1_i32 = arith.constant 1 : i32
    %30 = vector.broadcast %c1_i32 : i32 to vector<64x64xi32>
    %31 = arith.addi %28, %30 : vector<64x64xi32>
    %32 = arith.cmpi eq, %29, %31 : vector<64x64xi32>
    %cst_10 = arith.constant 1.000000e+00 : f32
    %cst_11 = arith.constant 0.000000e+00 : f32
    %33 = vector.broadcast %cst_10 : f32 to vector<64x64xf32>
    %34 = vector.broadcast %cst_11 : f32 to vector<64x64xf32>
    %35 = arith.select %32, %33, %34 : vector<64x64xi1>, vector<64x64xf32>
    %cst_12 = arith.constant dense<0.000000e+00> : vector<64x64xf32>
    %36 = tpu.matmul %35, %27, %cst_12 {dimension_numbers = #tpu.dot_dimension_numbers<[1], [0], [0], [1], [0, 0, 1, 1], [], []>} : vector<64x64xf32>, vector<64x64xf32>, vector<64x64xf32> -> vector<64x64xf32>
    %37 = arith.addf %26, %36 : vector<64x64xf32>
    %38 = vector.extract_strided_slice %3 {offsets = [0, 256], sizes = [64, 64], strides = [1, 1]} : vector<64x320xf32> to vector<64x64xf32>
    %39 = tpu.iota {dimensions = array<i32: 0>} : vector<64x64xi32>
    %40 = tpu.iota {dimensions = array<i32: 1>} : vector<64x64xi32>
    %c2_i32 = arith.constant 2 : i32
    %41 = vector.broadcast %c2_i32 : i32 to vector<64x64xi32>
    %42 = arith.addi %39, %41 : vector<64x64xi32>
    %43 = arith.cmpi eq, %40, %42 : vector<64x64xi32>
    %cst_13 = arith.constant 1.000000e+00 : f32
    %cst_14 = arith.constant 0.000000e+00 : f32
    %44 = vector.broadcast %cst_13 : f32 to vector<64x64xf32>
    %45 = vector.broadcast %cst_14 : f32 to vector<64x64xf32>
    %46 = arith.select %43, %44, %45 : vector<64x64xi1>, vector<64x64xf32>
    %cst_15 = arith.constant dense<0.000000e+00> : vector<64x64xf32>
    %47 = tpu.matmul %46, %38, %cst_15 {dimension_numbers = #tpu.dot_dimension_numbers<[1], [0], [0], [1], [0, 0, 1, 1], [], []>} : vector<64x64xf32>, vector<64x64xf32>, vector<64x64xf32> -> vector<64x64xf32>
    %48 = arith.addf %37, %47 : vector<64x64xf32>
    %c0_16 = arith.constant 0 : index
    %c0_17 = arith.constant 0 : index
    %49 = vector.load %arg3[%c0_16, %c0_17] : memref<2x64xf32, #tpu.memory_space<vmem>>, vector<2x64xf32>
    %50 = vector.extract_strided_slice %49 {offsets = [0, 0], sizes = [1, 64], strides = [1, 1]} : vector<2x64xf32> to vector<1x64xf32>
    %51 = vector.broadcast %50 : vector<1x64xf32> to vector<64x64xf32>
    %52 = arith.mulf %48, %51 : vector<64x64xf32>
    %53 = vector.extract_strided_slice %49 {offsets = [1, 0], sizes = [1, 64], strides = [1, 1]} : vector<2x64xf32> to vector<1x64xf32>
    %54 = vector.broadcast %53 : vector<1x64xf32> to vector<64x64xf32>
    %55 = arith.addf %52, %54 : vector<64x64xf32>
    %cst_18 = arith.constant 0.000000e+00 : f32
    %56 = vector.broadcast %cst_18 : f32 to vector<64x64xf32>
    %57 = arith.maximumf %55, %56 : vector<64x64xf32>
    %58 = arith.truncf %57 : vector<64x64xf32> to vector<64x64xbf16>
    %c0_19 = arith.constant 0 : index
    %c0_20 = arith.constant 0 : index
    %59 = vector.load %arg4[%c0_19, %c0_20] : memref<64x192xbf16, #tpu.memory_space<vmem>>, vector<64x192xbf16>
    %cst_21 = arith.constant dense<0.000000e+00> : vector<64x192xf32>
    %60 = tpu.matmul %58, %59, %cst_21 {dimension_numbers = #tpu.dot_dimension_numbers<[1], [0], [0], [1], [0, 0, 1, 1], [], []>} : vector<64x64xbf16>, vector<64x192xbf16>, vector<64x192xf32> -> vector<64x192xf32>
    %61 = vector.extract_strided_slice %60 {offsets = [0, 0], sizes = [64, 64], strides = [1, 1]} : vector<64x192xf32> to vector<64x64xf32>
    %62 = tpu.iota {dimensions = array<i32: 0>} : vector<64x64xi32>
    %63 = tpu.iota {dimensions = array<i32: 1>} : vector<64x64xi32>
    %c-1_i32_22 = arith.constant -1 : i32
    %64 = vector.broadcast %c-1_i32_22 : i32 to vector<64x64xi32>
    %65 = arith.addi %62, %64 : vector<64x64xi32>
    %66 = arith.cmpi eq, %63, %65 : vector<64x64xi32>
    %cst_23 = arith.constant 1.000000e+00 : f32
    %cst_24 = arith.constant 0.000000e+00 : f32
    %67 = vector.broadcast %cst_23 : f32 to vector<64x64xf32>
    %68 = vector.broadcast %cst_24 : f32 to vector<64x64xf32>
    %69 = arith.select %66, %67, %68 : vector<64x64xi1>, vector<64x64xf32>
    %cst_25 = arith.constant dense<0.000000e+00> : vector<64x64xf32>
    %70 = tpu.matmul %69, %61, %cst_25 {dimension_numbers = #tpu.dot_dimension_numbers<[1], [0], [0], [1], [0, 0, 1, 1], [], []>} : vector<64x64xf32>, vector<64x64xf32>, vector<64x64xf32> -> vector<64x64xf32>
    %71 = vector.extract_strided_slice %60 {offsets = [0, 64], sizes = [64, 64], strides = [1, 1]} : vector<64x192xf32> to vector<64x64xf32>
    %72 = arith.addf %70, %71 : vector<64x64xf32>
    %73 = vector.extract_strided_slice %60 {offsets = [0, 128], sizes = [64, 64], strides = [1, 1]} : vector<64x192xf32> to vector<64x64xf32>
    %74 = tpu.iota {dimensions = array<i32: 0>} : vector<64x64xi32>
    %75 = tpu.iota {dimensions = array<i32: 1>} : vector<64x64xi32>
    %c1_i32_26 = arith.constant 1 : i32
    %76 = vector.broadcast %c1_i32_26 : i32 to vector<64x64xi32>
    %77 = arith.addi %74, %76 : vector<64x64xi32>
    %78 = arith.cmpi eq, %75, %77 : vector<64x64xi32>
    %cst_27 = arith.constant 1.000000e+00 : f32
    %cst_28 = arith.constant 0.000000e+00 : f32
    %79 = vector.broadcast %cst_27 : f32 to vector<64x64xf32>
    %80 = vector.broadcast %cst_28 : f32 to vector<64x64xf32>
    %81 = arith.select %78, %79, %80 : vector<64x64xi1>, vector<64x64xf32>
    %cst_29 = arith.constant dense<0.000000e+00> : vector<64x64xf32>
    %82 = tpu.matmul %81, %73, %cst_29 {dimension_numbers = #tpu.dot_dimension_numbers<[1], [0], [0], [1], [0, 0, 1, 1], [], []>} : vector<64x64xf32>, vector<64x64xf32>, vector<64x64xf32> -> vector<64x64xf32>
    %83 = arith.addf %72, %82 : vector<64x64xf32>
    %c0_30 = arith.constant 0 : index
    %c0_31 = arith.constant 0 : index
    %84 = vector.load %arg5[%c0_30, %c0_31] : memref<2x64xf32, #tpu.memory_space<vmem>>, vector<2x64xf32>
    %85 = vector.extract_strided_slice %84 {offsets = [0, 0], sizes = [1, 64], strides = [1, 1]} : vector<2x64xf32> to vector<1x64xf32>
    %86 = vector.broadcast %85 : vector<1x64xf32> to vector<64x64xf32>
    %87 = arith.mulf %83, %86 : vector<64x64xf32>
    %88 = vector.extract_strided_slice %84 {offsets = [1, 0], sizes = [1, 64], strides = [1, 1]} : vector<2x64xf32> to vector<1x64xf32>
    %89 = vector.broadcast %88 : vector<1x64xf32> to vector<64x64xf32>
    %90 = arith.addf %87, %89 : vector<64x64xf32>
    %cst_32 = arith.constant 0.000000e+00 : f32
    %91 = vector.broadcast %cst_32 : f32 to vector<64x64xf32>
    %92 = arith.maximumf %90, %91 : vector<64x64xf32>
    %93 = arith.truncf %92 : vector<64x64xf32> to vector<64x64xbf16>
    %94 = tpu.iota {dimensions = array<i32: 0>} : vector<16x64xi32>
    %95 = tpu.iota {dimensions = array<i32: 1>} : vector<16x64xi32>
    %c4_i32 = arith.constant 4 : i32
    %96 = vector.broadcast %c4_i32 : i32 to vector<16x64xi32>
    %97 = arith.muli %96, %94 : vector<16x64xi32>
    %c0_i32 = arith.constant 0 : i32
    %98 = vector.broadcast %c0_i32 : i32 to vector<16x64xi32>
    %99 = arith.addi %97, %98 : vector<16x64xi32>
    %100 = arith.cmpi eq, %95, %99 : vector<16x64xi32>
    %cst_33 = arith.constant 1.000000e+00 : f32
    %cst_34 = arith.constant 0.000000e+00 : f32
    %101 = vector.broadcast %cst_33 : f32 to vector<16x64xf32>
    %102 = vector.broadcast %cst_34 : f32 to vector<16x64xf32>
    %103 = arith.select %100, %101, %102 : vector<16x64xi1>, vector<16x64xf32>
    %104 = arith.truncf %103 : vector<16x64xf32> to vector<16x64xbf16>
    %cst_35 = arith.constant dense<0.000000e+00> : vector<16x64xf32>
    %105 = tpu.matmul %104, %93, %cst_35 {dimension_numbers = #tpu.dot_dimension_numbers<[1], [0], [0], [1], [0, 0, 1, 1], [], []>} : vector<16x64xbf16>, vector<64x64xbf16>, vector<16x64xf32> -> vector<16x64xf32>
    %106 = tpu.iota {dimensions = array<i32: 0>} : vector<16x64xi32>
    %107 = tpu.iota {dimensions = array<i32: 1>} : vector<16x64xi32>
    %c4_i32_36 = arith.constant 4 : i32
    %108 = vector.broadcast %c4_i32_36 : i32 to vector<16x64xi32>
    %109 = arith.muli %108, %106 : vector<16x64xi32>
    %c1_i32_37 = arith.constant 1 : i32
    %110 = vector.broadcast %c1_i32_37 : i32 to vector<16x64xi32>
    %111 = arith.addi %109, %110 : vector<16x64xi32>
    %112 = arith.cmpi eq, %107, %111 : vector<16x64xi32>
    %cst_38 = arith.constant 1.000000e+00 : f32
    %cst_39 = arith.constant 0.000000e+00 : f32
    %113 = vector.broadcast %cst_38 : f32 to vector<16x64xf32>
    %114 = vector.broadcast %cst_39 : f32 to vector<16x64xf32>
    %115 = arith.select %112, %113, %114 : vector<16x64xi1>, vector<16x64xf32>
    %116 = arith.truncf %115 : vector<16x64xf32> to vector<16x64xbf16>
    %cst_40 = arith.constant dense<0.000000e+00> : vector<16x64xf32>
    %117 = tpu.matmul %116, %93, %cst_40 {dimension_numbers = #tpu.dot_dimension_numbers<[1], [0], [0], [1], [0, 0, 1, 1], [], []>} : vector<16x64xbf16>, vector<64x64xbf16>, vector<16x64xf32> -> vector<16x64xf32>
    %118 = arith.maximumf %105, %117 : vector<16x64xf32>
    %119 = tpu.iota {dimensions = array<i32: 0>} : vector<16x64xi32>
    %120 = tpu.iota {dimensions = array<i32: 1>} : vector<16x64xi32>
    %c4_i32_41 = arith.constant 4 : i32
    %121 = vector.broadcast %c4_i32_41 : i32 to vector<16x64xi32>
    %122 = arith.muli %121, %119 : vector<16x64xi32>
    %c2_i32_42 = arith.constant 2 : i32
    %123 = vector.broadcast %c2_i32_42 : i32 to vector<16x64xi32>
    %124 = arith.addi %122, %123 : vector<16x64xi32>
    %125 = arith.cmpi eq, %120, %124 : vector<16x64xi32>
    %cst_43 = arith.constant 1.000000e+00 : f32
    %cst_44 = arith.constant 0.000000e+00 : f32
    %126 = vector.broadcast %cst_43 : f32 to vector<16x64xf32>
    %127 = vector.broadcast %cst_44 : f32 to vector<16x64xf32>
    %128 = arith.select %125, %126, %127 : vector<16x64xi1>, vector<16x64xf32>
    %129 = arith.truncf %128 : vector<16x64xf32> to vector<16x64xbf16>
    %cst_45 = arith.constant dense<0.000000e+00> : vector<16x64xf32>
    %130 = tpu.matmul %129, %93, %cst_45 {dimension_numbers = #tpu.dot_dimension_numbers<[1], [0], [0], [1], [0, 0, 1, 1], [], []>} : vector<16x64xbf16>, vector<64x64xbf16>, vector<16x64xf32> -> vector<16x64xf32>
    %131 = arith.maximumf %118, %130 : vector<16x64xf32>
    %132 = tpu.iota {dimensions = array<i32: 0>} : vector<16x64xi32>
    %133 = tpu.iota {dimensions = array<i32: 1>} : vector<16x64xi32>
    %c4_i32_46 = arith.constant 4 : i32
    %134 = vector.broadcast %c4_i32_46 : i32 to vector<16x64xi32>
    %135 = arith.muli %134, %132 : vector<16x64xi32>
    %c3_i32 = arith.constant 3 : i32
    %136 = vector.broadcast %c3_i32 : i32 to vector<16x64xi32>
    %137 = arith.addi %135, %136 : vector<16x64xi32>
    %138 = arith.cmpi eq, %133, %137 : vector<16x64xi32>
    %cst_47 = arith.constant 1.000000e+00 : f32
    %cst_48 = arith.constant 0.000000e+00 : f32
    %139 = vector.broadcast %cst_47 : f32 to vector<16x64xf32>
    %140 = vector.broadcast %cst_48 : f32 to vector<16x64xf32>
    %141 = arith.select %138, %139, %140 : vector<16x64xi1>, vector<16x64xf32>
    %142 = arith.truncf %141 : vector<16x64xf32> to vector<16x64xbf16>
    %cst_49 = arith.constant dense<0.000000e+00> : vector<16x64xf32>
    %143 = tpu.matmul %142, %93, %cst_49 {dimension_numbers = #tpu.dot_dimension_numbers<[1], [0], [0], [1], [0, 0, 1, 1], [], []>} : vector<16x64xbf16>, vector<64x64xbf16>, vector<16x64xf32> -> vector<16x64xf32>
    %144 = arith.maximumf %131, %143 : vector<16x64xf32>
    %145 = arith.truncf %144 : vector<16x64xf32> to vector<16x64xbf16>
    %c0_50 = arith.constant 0 : index
    %c0_51 = arith.constant 0 : index
    %146 = vector.load %arg6[%c0_50, %c0_51] : memref<64x640xbf16, #tpu.memory_space<vmem>>, vector<64x640xbf16>
    %cst_52 = arith.constant dense<0.000000e+00> : vector<16x640xf32>
    %147 = tpu.matmul %145, %146, %cst_52 {dimension_numbers = #tpu.dot_dimension_numbers<[1], [0], [0], [1], [0, 0, 1, 1], [], []>} : vector<16x64xbf16>, vector<64x640xbf16>, vector<16x640xf32> -> vector<16x640xf32>
    %148 = vector.extract_strided_slice %147 {offsets = [0, 0], sizes = [16, 128], strides = [1, 1]} : vector<16x640xf32> to vector<16x128xf32>
    %149 = tpu.iota {dimensions = array<i32: 0>} : vector<16x16xi32>
    %150 = tpu.iota {dimensions = array<i32: 1>} : vector<16x16xi32>
    %c-2_i32_53 = arith.constant -2 : i32
    %151 = vector.broadcast %c-2_i32_53 : i32 to vector<16x16xi32>
    %152 = arith.addi %149, %151 : vector<16x16xi32>
    %153 = arith.cmpi eq, %150, %152 : vector<16x16xi32>
    %cst_54 = arith.constant 1.000000e+00 : f32
    %cst_55 = arith.constant 0.000000e+00 : f32
    %154 = vector.broadcast %cst_54 : f32 to vector<16x16xf32>
    %155 = vector.broadcast %cst_55 : f32 to vector<16x16xf32>
    %156 = arith.select %153, %154, %155 : vector<16x16xi1>, vector<16x16xf32>
    %cst_56 = arith.constant dense<0.000000e+00> : vector<16x128xf32>
    %157 = tpu.matmul %156, %148, %cst_56 {dimension_numbers = #tpu.dot_dimension_numbers<[1], [0], [0], [1], [0, 0, 1, 1], [], []>} : vector<16x16xf32>, vector<16x128xf32>, vector<16x128xf32> -> vector<16x128xf32>
    %158 = vector.extract_strided_slice %147 {offsets = [0, 128], sizes = [16, 128], strides = [1, 1]} : vector<16x640xf32> to vector<16x128xf32>
    %159 = tpu.iota {dimensions = array<i32: 0>} : vector<16x16xi32>
    %160 = tpu.iota {dimensions = array<i32: 1>} : vector<16x16xi32>
    %c-1_i32_57 = arith.constant -1 : i32
    %161 = vector.broadcast %c-1_i32_57 : i32 to vector<16x16xi32>
    %162 = arith.addi %159, %161 : vector<16x16xi32>
    %163 = arith.cmpi eq, %160, %162 : vector<16x16xi32>
    %cst_58 = arith.constant 1.000000e+00 : f32
    %cst_59 = arith.constant 0.000000e+00 : f32
    %164 = vector.broadcast %cst_58 : f32 to vector<16x16xf32>
    %165 = vector.broadcast %cst_59 : f32 to vector<16x16xf32>
    %166 = arith.select %163, %164, %165 : vector<16x16xi1>, vector<16x16xf32>
    %cst_60 = arith.constant dense<0.000000e+00> : vector<16x128xf32>
    %167 = tpu.matmul %166, %158, %cst_60 {dimension_numbers = #tpu.dot_dimension_numbers<[1], [0], [0], [1], [0, 0, 1, 1], [], []>} : vector<16x16xf32>, vector<16x128xf32>, vector<16x128xf32> -> vector<16x128xf32>
    %168 = arith.addf %157, %167 : vector<16x128xf32>
    %169 = vector.extract_strided_slice %147 {offsets = [0, 256], sizes = [16, 128], strides = [1, 1]} : vector<16x640xf32> to vector<16x128xf32>
    %170 = arith.addf %168, %169 : vector<16x128xf32>
    %171 = vector.extract_strided_slice %147 {offsets = [0, 384], sizes = [16, 128], strides = [1, 1]} : vector<16x640xf32> to vector<16x128xf32>
    %172 = tpu.iota {dimensions = array<i32: 0>} : vector<16x16xi32>
    %173 = tpu.iota {dimensions = array<i32: 1>} : vector<16x16xi32>
    %c1_i32_61 = arith.constant 1 : i32
    %174 = vector.broadcast %c1_i32_61 : i32 to vector<16x16xi32>
    %175 = arith.addi %172, %174 : vector<16x16xi32>
    %176 = arith.cmpi eq, %173, %175 : vector<16x16xi32>
    %cst_62 = arith.constant 1.000000e+00 : f32
    %cst_63 = arith.constant 0.000000e+00 : f32
    %177 = vector.broadcast %cst_62 : f32 to vector<16x16xf32>
    %178 = vector.broadcast %cst_63 : f32 to vector<16x16xf32>
    %179 = arith.select %176, %177, %178 : vector<16x16xi1>, vector<16x16xf32>
    %cst_64 = arith.constant dense<0.000000e+00> : vector<16x128xf32>
    %180 = tpu.matmul %179, %171, %cst_64 {dimension_numbers = #tpu.dot_dimension_numbers<[1], [0], [0], [1], [0, 0, 1, 1], [], []>} : vector<16x16xf32>, vector<16x128xf32>, vector<16x128xf32> -> vector<16x128xf32>
    %181 = arith.addf %170, %180 : vector<16x128xf32>
    %182 = vector.extract_strided_slice %147 {offsets = [0, 512], sizes = [16, 128], strides = [1, 1]} : vector<16x640xf32> to vector<16x128xf32>
    %183 = tpu.iota {dimensions = array<i32: 0>} : vector<16x16xi32>
    %184 = tpu.iota {dimensions = array<i32: 1>} : vector<16x16xi32>
    %c2_i32_65 = arith.constant 2 : i32
    %185 = vector.broadcast %c2_i32_65 : i32 to vector<16x16xi32>
    %186 = arith.addi %183, %185 : vector<16x16xi32>
    %187 = arith.cmpi eq, %184, %186 : vector<16x16xi32>
    %cst_66 = arith.constant 1.000000e+00 : f32
    %cst_67 = arith.constant 0.000000e+00 : f32
    %188 = vector.broadcast %cst_66 : f32 to vector<16x16xf32>
    %189 = vector.broadcast %cst_67 : f32 to vector<16x16xf32>
    %190 = arith.select %187, %188, %189 : vector<16x16xi1>, vector<16x16xf32>
    %cst_68 = arith.constant dense<0.000000e+00> : vector<16x128xf32>
    %191 = tpu.matmul %190, %182, %cst_68 {dimension_numbers = #tpu.dot_dimension_numbers<[1], [0], [0], [1], [0, 0, 1, 1], [], []>} : vector<16x16xf32>, vector<16x128xf32>, vector<16x128xf32> -> vector<16x128xf32>
    %192 = arith.addf %181, %191 : vector<16x128xf32>
    %c0_69 = arith.constant 0 : index
    %c0_70 = arith.constant 0 : index
    %193 = vector.load %arg7[%c0_69, %c0_70] : memref<2x128xf32, #tpu.memory_space<vmem>>, vector<2x128xf32>
    %194 = vector.extract_strided_slice %193 {offsets = [0, 0], sizes = [1, 128], strides = [1, 1]} : vector<2x128xf32> to vector<1x128xf32>
    %195 = vector.broadcast %194 : vector<1x128xf32> to vector<16x128xf32>
    %196 = arith.mulf %192, %195 : vector<16x128xf32>
    %197 = vector.extract_strided_slice %193 {offsets = [1, 0], sizes = [1, 128], strides = [1, 1]} : vector<2x128xf32> to vector<1x128xf32>
    %198 = vector.broadcast %197 : vector<1x128xf32> to vector<16x128xf32>
    %199 = arith.addf %196, %198 : vector<16x128xf32>
    %cst_71 = arith.constant 0.000000e+00 : f32
    %200 = vector.broadcast %cst_71 : f32 to vector<16x128xf32>
    %201 = arith.maximumf %199, %200 : vector<16x128xf32>
    %202 = arith.truncf %201 : vector<16x128xf32> to vector<16x128xbf16>
    %c0_72 = arith.constant 0 : index
    %c0_73 = arith.constant 0 : index
    %203 = vector.load %arg8[%c0_72, %c0_73] : memref<128x384xbf16, #tpu.memory_space<vmem>>, vector<128x384xbf16>
    %cst_74 = arith.constant dense<0.000000e+00> : vector<16x384xf32>
    %204 = tpu.matmul %202, %203, %cst_74 {dimension_numbers = #tpu.dot_dimension_numbers<[1], [0], [0], [1], [0, 0, 1, 1], [], []>} : vector<16x128xbf16>, vector<128x384xbf16>, vector<16x384xf32> -> vector<16x384xf32>
    %205 = vector.extract_strided_slice %204 {offsets = [0, 0], sizes = [16, 128], strides = [1, 1]} : vector<16x384xf32> to vector<16x128xf32>
    %206 = tpu.iota {dimensions = array<i32: 0>} : vector<16x16xi32>
    %207 = tpu.iota {dimensions = array<i32: 1>} : vector<16x16xi32>
    %c-1_i32_75 = arith.constant -1 : i32
    %208 = vector.broadcast %c-1_i32_75 : i32 to vector<16x16xi32>
    %209 = arith.addi %206, %208 : vector<16x16xi32>
    %210 = arith.cmpi eq, %207, %209 : vector<16x16xi32>
    %cst_76 = arith.constant 1.000000e+00 : f32
    %cst_77 = arith.constant 0.000000e+00 : f32
    %211 = vector.broadcast %cst_76 : f32 to vector<16x16xf32>
    %212 = vector.broadcast %cst_77 : f32 to vector<16x16xf32>
    %213 = arith.select %210, %211, %212 : vector<16x16xi1>, vector<16x16xf32>
    %cst_78 = arith.constant dense<0.000000e+00> : vector<16x128xf32>
    %214 = tpu.matmul %213, %205, %cst_78 {dimension_numbers = #tpu.dot_dimension_numbers<[1], [0], [0], [1], [0, 0, 1, 1], [], []>} : vector<16x16xf32>, vector<16x128xf32>, vector<16x128xf32> -> vector<16x128xf32>
    %215 = vector.extract_strided_slice %204 {offsets = [0, 128], sizes = [16, 128], strides = [1, 1]} : vector<16x384xf32> to vector<16x128xf32>
    %216 = arith.addf %214, %215 : vector<16x128xf32>
    %217 = vector.extract_strided_slice %204 {offsets = [0, 256], sizes = [16, 128], strides = [1, 1]} : vector<16x384xf32> to vector<16x128xf32>
    %218 = tpu.iota {dimensions = array<i32: 0>} : vector<16x16xi32>
    %219 = tpu.iota {dimensions = array<i32: 1>} : vector<16x16xi32>
    %c1_i32_79 = arith.constant 1 : i32
    %220 = vector.broadcast %c1_i32_79 : i32 to vector<16x16xi32>
    %221 = arith.addi %218, %220 : vector<16x16xi32>
    %222 = arith.cmpi eq, %219, %221 : vector<16x16xi32>
    %cst_80 = arith.constant 1.000000e+00 : f32
    %cst_81 = arith.constant 0.000000e+00 : f32
    %223 = vector.broadcast %cst_80 : f32 to vector<16x16xf32>
    %224 = vector.broadcast %cst_81 : f32 to vector<16x16xf32>
    %225 = arith.select %222, %223, %224 : vector<16x16xi1>, vector<16x16xf32>
    %cst_82 = arith.constant dense<0.000000e+00> : vector<16x128xf32>
    %226 = tpu.matmul %225, %217, %cst_82 {dimension_numbers = #tpu.dot_dimension_numbers<[1], [0], [0], [1], [0, 0, 1, 1], [], []>} : vector<16x16xf32>, vector<16x128xf32>, vector<16x128xf32> -> vector<16x128xf32>
    %227 = arith.addf %216, %226 : vector<16x128xf32>
    %c0_83 = arith.constant 0 : index
    %c0_84 = arith.constant 0 : index
    %228 = vector.load %arg9[%c0_83, %c0_84] : memref<2x128xf32, #tpu.memory_space<vmem>>, vector<2x128xf32>
    %229 = vector.extract_strided_slice %228 {offsets = [0, 0], sizes = [1, 128], strides = [1, 1]} : vector<2x128xf32> to vector<1x128xf32>
    %230 = vector.broadcast %229 : vector<1x128xf32> to vector<16x128xf32>
    %231 = arith.mulf %227, %230 : vector<16x128xf32>
    %232 = vector.extract_strided_slice %228 {offsets = [1, 0], sizes = [1, 128], strides = [1, 1]} : vector<2x128xf32> to vector<1x128xf32>
    %233 = vector.broadcast %232 : vector<1x128xf32> to vector<16x128xf32>
    %234 = arith.addf %231, %233 : vector<16x128xf32>
    %cst_85 = arith.constant 0.000000e+00 : f32
    %235 = vector.broadcast %cst_85 : f32 to vector<16x128xf32>
    %236 = arith.maximumf %234, %235 : vector<16x128xf32>
    %237 = arith.truncf %236 : vector<16x128xf32> to vector<16x128xbf16>
    %238 = tpu.iota {dimensions = array<i32: 0>} : vector<4x16xi32>
    %239 = tpu.iota {dimensions = array<i32: 1>} : vector<4x16xi32>
    %c4_i32_86 = arith.constant 4 : i32
    %240 = vector.broadcast %c4_i32_86 : i32 to vector<4x16xi32>
    %241 = arith.muli %240, %238 : vector<4x16xi32>
    %c0_i32_87 = arith.constant 0 : i32
    %242 = vector.broadcast %c0_i32_87 : i32 to vector<4x16xi32>
    %243 = arith.addi %241, %242 : vector<4x16xi32>
    %244 = arith.cmpi eq, %239, %243 : vector<4x16xi32>
    %cst_88 = arith.constant 1.000000e+00 : f32
    %cst_89 = arith.constant 0.000000e+00 : f32
    %245 = vector.broadcast %cst_88 : f32 to vector<4x16xf32>
    %246 = vector.broadcast %cst_89 : f32 to vector<4x16xf32>
    %247 = arith.select %244, %245, %246 : vector<4x16xi1>, vector<4x16xf32>
    %248 = arith.truncf %247 : vector<4x16xf32> to vector<4x16xbf16>
    %cst_90 = arith.constant dense<0.000000e+00> : vector<4x128xf32>
    %249 = tpu.matmul %248, %237, %cst_90 {dimension_numbers = #tpu.dot_dimension_numbers<[1], [0], [0], [1], [0, 0, 1, 1], [], []>} : vector<4x16xbf16>, vector<16x128xbf16>, vector<4x128xf32> -> vector<4x128xf32>
    %250 = tpu.iota {dimensions = array<i32: 0>} : vector<4x16xi32>
    %251 = tpu.iota {dimensions = array<i32: 1>} : vector<4x16xi32>
    %c4_i32_91 = arith.constant 4 : i32
    %252 = vector.broadcast %c4_i32_91 : i32 to vector<4x16xi32>
    %253 = arith.muli %252, %250 : vector<4x16xi32>
    %c1_i32_92 = arith.constant 1 : i32
    %254 = vector.broadcast %c1_i32_92 : i32 to vector<4x16xi32>
    %255 = arith.addi %253, %254 : vector<4x16xi32>
    %256 = arith.cmpi eq, %251, %255 : vector<4x16xi32>
    %cst_93 = arith.constant 1.000000e+00 : f32
    %cst_94 = arith.constant 0.000000e+00 : f32
    %257 = vector.broadcast %cst_93 : f32 to vector<4x16xf32>
    %258 = vector.broadcast %cst_94 : f32 to vector<4x16xf32>
    %259 = arith.select %256, %257, %258 : vector<4x16xi1>, vector<4x16xf32>
    %260 = arith.truncf %259 : vector<4x16xf32> to vector<4x16xbf16>
    %cst_95 = arith.constant dense<0.000000e+00> : vector<4x128xf32>
    %261 = tpu.matmul %260, %237, %cst_95 {dimension_numbers = #tpu.dot_dimension_numbers<[1], [0], [0], [1], [0, 0, 1, 1], [], []>} : vector<4x16xbf16>, vector<16x128xbf16>, vector<4x128xf32> -> vector<4x128xf32>
    %262 = arith.maximumf %249, %261 : vector<4x128xf32>
    %263 = tpu.iota {dimensions = array<i32: 0>} : vector<4x16xi32>
    %264 = tpu.iota {dimensions = array<i32: 1>} : vector<4x16xi32>
    %c4_i32_96 = arith.constant 4 : i32
    %265 = vector.broadcast %c4_i32_96 : i32 to vector<4x16xi32>
    %266 = arith.muli %265, %263 : vector<4x16xi32>
    %c2_i32_97 = arith.constant 2 : i32
    %267 = vector.broadcast %c2_i32_97 : i32 to vector<4x16xi32>
    %268 = arith.addi %266, %267 : vector<4x16xi32>
    %269 = arith.cmpi eq, %264, %268 : vector<4x16xi32>
    %cst_98 = arith.constant 1.000000e+00 : f32
    %cst_99 = arith.constant 0.000000e+00 : f32
    %270 = vector.broadcast %cst_98 : f32 to vector<4x16xf32>
    %271 = vector.broadcast %cst_99 : f32 to vector<4x16xf32>
    %272 = arith.select %269, %270, %271 : vector<4x16xi1>, vector<4x16xf32>
    %273 = arith.truncf %272 : vector<4x16xf32> to vector<4x16xbf16>
    %cst_100 = arith.constant dense<0.000000e+00> : vector<4x128xf32>
    %274 = tpu.matmul %273, %237, %cst_100 {dimension_numbers = #tpu.dot_dimension_numbers<[1], [0], [0], [1], [0, 0, 1, 1], [], []>} : vector<4x16xbf16>, vector<16x128xbf16>, vector<4x128xf32> -> vector<4x128xf32>
    %275 = arith.maximumf %262, %274 : vector<4x128xf32>
    %276 = tpu.iota {dimensions = array<i32: 0>} : vector<4x16xi32>
    %277 = tpu.iota {dimensions = array<i32: 1>} : vector<4x16xi32>
    %c4_i32_101 = arith.constant 4 : i32
    %278 = vector.broadcast %c4_i32_101 : i32 to vector<4x16xi32>
    %279 = arith.muli %278, %276 : vector<4x16xi32>
    %c3_i32_102 = arith.constant 3 : i32
    %280 = vector.broadcast %c3_i32_102 : i32 to vector<4x16xi32>
    %281 = arith.addi %279, %280 : vector<4x16xi32>
    %282 = arith.cmpi eq, %277, %281 : vector<4x16xi32>
    %cst_103 = arith.constant 1.000000e+00 : f32
    %cst_104 = arith.constant 0.000000e+00 : f32
    %283 = vector.broadcast %cst_103 : f32 to vector<4x16xf32>
    %284 = vector.broadcast %cst_104 : f32 to vector<4x16xf32>
    %285 = arith.select %282, %283, %284 : vector<4x16xi1>, vector<4x16xf32>
    %286 = arith.truncf %285 : vector<4x16xf32> to vector<4x16xbf16>
    %cst_105 = arith.constant dense<0.000000e+00> : vector<4x128xf32>
    %287 = tpu.matmul %286, %237, %cst_105 {dimension_numbers = #tpu.dot_dimension_numbers<[1], [0], [0], [1], [0, 0, 1, 1], [], []>} : vector<4x16xbf16>, vector<16x128xbf16>, vector<4x128xf32> -> vector<4x128xf32>
    %288 = arith.maximumf %275, %287 : vector<4x128xf32>
    %289 = arith.truncf %288 : vector<4x128xf32> to vector<4x128xbf16>
    %c0_106 = arith.constant 0 : index
    %c0_107 = arith.constant 0 : index
    %290 = vector.load %arg10[%c0_106, %c0_107] : memref<128x1280xbf16, #tpu.memory_space<vmem>>, vector<128x1280xbf16>
    %cst_108 = arith.constant dense<0.000000e+00> : vector<4x1280xf32>
    %291 = tpu.matmul %289, %290, %cst_108 {dimension_numbers = #tpu.dot_dimension_numbers<[1], [0], [0], [1], [0, 0, 1, 1], [], []>} : vector<4x128xbf16>, vector<128x1280xbf16>, vector<4x1280xf32> -> vector<4x1280xf32>
    %292 = vector.extract_strided_slice %291 {offsets = [0, 0], sizes = [4, 256], strides = [1, 1]} : vector<4x1280xf32> to vector<4x256xf32>
    %293 = tpu.iota {dimensions = array<i32: 0>} : vector<4x4xi32>
    %294 = tpu.iota {dimensions = array<i32: 1>} : vector<4x4xi32>
    %c-2_i32_109 = arith.constant -2 : i32
    %295 = vector.broadcast %c-2_i32_109 : i32 to vector<4x4xi32>
    %296 = arith.addi %293, %295 : vector<4x4xi32>
    %297 = arith.cmpi eq, %294, %296 : vector<4x4xi32>
    %cst_110 = arith.constant 1.000000e+00 : f32
    %cst_111 = arith.constant 0.000000e+00 : f32
    %298 = vector.broadcast %cst_110 : f32 to vector<4x4xf32>
    %299 = vector.broadcast %cst_111 : f32 to vector<4x4xf32>
    %300 = arith.select %297, %298, %299 : vector<4x4xi1>, vector<4x4xf32>
    %cst_112 = arith.constant dense<0.000000e+00> : vector<4x256xf32>
    %301 = tpu.matmul %300, %292, %cst_112 {dimension_numbers = #tpu.dot_dimension_numbers<[1], [0], [0], [1], [0, 0, 1, 1], [], []>} : vector<4x4xf32>, vector<4x256xf32>, vector<4x256xf32> -> vector<4x256xf32>
    %302 = vector.extract_strided_slice %291 {offsets = [0, 256], sizes = [4, 256], strides = [1, 1]} : vector<4x1280xf32> to vector<4x256xf32>
    %303 = tpu.iota {dimensions = array<i32: 0>} : vector<4x4xi32>
    %304 = tpu.iota {dimensions = array<i32: 1>} : vector<4x4xi32>
    %c-1_i32_113 = arith.constant -1 : i32
    %305 = vector.broadcast %c-1_i32_113 : i32 to vector<4x4xi32>
    %306 = arith.addi %303, %305 : vector<4x4xi32>
    %307 = arith.cmpi eq, %304, %306 : vector<4x4xi32>
    %cst_114 = arith.constant 1.000000e+00 : f32
    %cst_115 = arith.constant 0.000000e+00 : f32
    %308 = vector.broadcast %cst_114 : f32 to vector<4x4xf32>
    %309 = vector.broadcast %cst_115 : f32 to vector<4x4xf32>
    %310 = arith.select %307, %308, %309 : vector<4x4xi1>, vector<4x4xf32>
    %cst_116 = arith.constant dense<0.000000e+00> : vector<4x256xf32>
    %311 = tpu.matmul %310, %302, %cst_116 {dimension_numbers = #tpu.dot_dimension_numbers<[1], [0], [0], [1], [0, 0, 1, 1], [], []>} : vector<4x4xf32>, vector<4x256xf32>, vector<4x256xf32> -> vector<4x256xf32>
    %312 = arith.addf %301, %311 : vector<4x256xf32>
    %313 = vector.extract_strided_slice %291 {offsets = [0, 512], sizes = [4, 256], strides = [1, 1]} : vector<4x1280xf32> to vector<4x256xf32>
    %314 = arith.addf %312, %313 : vector<4x256xf32>
    %315 = vector.extract_strided_slice %291 {offsets = [0, 768], sizes = [4, 256], strides = [1, 1]} : vector<4x1280xf32> to vector<4x256xf32>
    %316 = tpu.iota {dimensions = array<i32: 0>} : vector<4x4xi32>
    %317 = tpu.iota {dimensions = array<i32: 1>} : vector<4x4xi32>
    %c1_i32_117 = arith.constant 1 : i32
    %318 = vector.broadcast %c1_i32_117 : i32 to vector<4x4xi32>
    %319 = arith.addi %316, %318 : vector<4x4xi32>
    %320 = arith.cmpi eq, %317, %319 : vector<4x4xi32>
    %cst_118 = arith.constant 1.000000e+00 : f32
    %cst_119 = arith.constant 0.000000e+00 : f32
    %321 = vector.broadcast %cst_118 : f32 to vector<4x4xf32>
    %322 = vector.broadcast %cst_119 : f32 to vector<4x4xf32>
    %323 = arith.select %320, %321, %322 : vector<4x4xi1>, vector<4x4xf32>
    %cst_120 = arith.constant dense<0.000000e+00> : vector<4x256xf32>
    %324 = tpu.matmul %323, %315, %cst_120 {dimension_numbers = #tpu.dot_dimension_numbers<[1], [0], [0], [1], [0, 0, 1, 1], [], []>} : vector<4x4xf32>, vector<4x256xf32>, vector<4x256xf32> -> vector<4x256xf32>
    %325 = arith.addf %314, %324 : vector<4x256xf32>
    %326 = vector.extract_strided_slice %291 {offsets = [0, 1024], sizes = [4, 256], strides = [1, 1]} : vector<4x1280xf32> to vector<4x256xf32>
    %327 = tpu.iota {dimensions = array<i32: 0>} : vector<4x4xi32>
    %328 = tpu.iota {dimensions = array<i32: 1>} : vector<4x4xi32>
    %c2_i32_121 = arith.constant 2 : i32
    %329 = vector.broadcast %c2_i32_121 : i32 to vector<4x4xi32>
    %330 = arith.addi %327, %329 : vector<4x4xi32>
    %331 = arith.cmpi eq, %328, %330 : vector<4x4xi32>
    %cst_122 = arith.constant 1.000000e+00 : f32
    %cst_123 = arith.constant 0.000000e+00 : f32
    %332 = vector.broadcast %cst_122 : f32 to vector<4x4xf32>
    %333 = vector.broadcast %cst_123 : f32 to vector<4x4xf32>
    %334 = arith.select %331, %332, %333 : vector<4x4xi1>, vector<4x4xf32>
    %cst_124 = arith.constant dense<0.000000e+00> : vector<4x256xf32>
    %335 = tpu.matmul %334, %326, %cst_124 {dimension_numbers = #tpu.dot_dimension_numbers<[1], [0], [0], [1], [0, 0, 1, 1], [], []>} : vector<4x4xf32>, vector<4x256xf32>, vector<4x256xf32> -> vector<4x256xf32>
    %336 = arith.addf %325, %335 : vector<4x256xf32>
    %c0_125 = arith.constant 0 : index
    %c0_126 = arith.constant 0 : index
    %337 = vector.load %arg11[%c0_125, %c0_126] : memref<2x256xf32, #tpu.memory_space<vmem>>, vector<2x256xf32>
    %338 = vector.extract_strided_slice %337 {offsets = [0, 0], sizes = [1, 256], strides = [1, 1]} : vector<2x256xf32> to vector<1x256xf32>
    %339 = vector.broadcast %338 : vector<1x256xf32> to vector<4x256xf32>
    %340 = arith.mulf %336, %339 : vector<4x256xf32>
    %341 = vector.extract_strided_slice %337 {offsets = [1, 0], sizes = [1, 256], strides = [1, 1]} : vector<2x256xf32> to vector<1x256xf32>
    %342 = vector.broadcast %341 : vector<1x256xf32> to vector<4x256xf32>
    %343 = arith.addf %340, %342 : vector<4x256xf32>
    %cst_127 = arith.constant 0.000000e+00 : f32
    %344 = vector.broadcast %cst_127 : f32 to vector<4x256xf32>
    %345 = arith.maximumf %343, %344 : vector<4x256xf32>
    %346 = arith.truncf %345 : vector<4x256xf32> to vector<4x256xbf16>
    %c0_128 = arith.constant 0 : index
    %c0_129 = arith.constant 0 : index
    %347 = vector.load %arg12[%c0_128, %c0_129] : memref<256x768xbf16, #tpu.memory_space<vmem>>, vector<256x768xbf16>
    %cst_130 = arith.constant dense<0.000000e+00> : vector<4x768xf32>
    %348 = tpu.matmul %346, %347, %cst_130 {dimension_numbers = #tpu.dot_dimension_numbers<[1], [0], [0], [1], [0, 0, 1, 1], [], []>} : vector<4x256xbf16>, vector<256x768xbf16>, vector<4x768xf32> -> vector<4x768xf32>
    %349 = vector.extract_strided_slice %348 {offsets = [0, 0], sizes = [4, 256], strides = [1, 1]} : vector<4x768xf32> to vector<4x256xf32>
    %350 = tpu.iota {dimensions = array<i32: 0>} : vector<4x4xi32>
    %351 = tpu.iota {dimensions = array<i32: 1>} : vector<4x4xi32>
    %c-1_i32_131 = arith.constant -1 : i32
    %352 = vector.broadcast %c-1_i32_131 : i32 to vector<4x4xi32>
    %353 = arith.addi %350, %352 : vector<4x4xi32>
    %354 = arith.cmpi eq, %351, %353 : vector<4x4xi32>
    %cst_132 = arith.constant 1.000000e+00 : f32
    %cst_133 = arith.constant 0.000000e+00 : f32
    %355 = vector.broadcast %cst_132 : f32 to vector<4x4xf32>
    %356 = vector.broadcast %cst_133 : f32 to vector<4x4xf32>
    %357 = arith.select %354, %355, %356 : vector<4x4xi1>, vector<4x4xf32>
    %cst_134 = arith.constant dense<0.000000e+00> : vector<4x256xf32>
    %358 = tpu.matmul %357, %349, %cst_134 {dimension_numbers = #tpu.dot_dimension_numbers<[1], [0], [0], [1], [0, 0, 1, 1], [], []>} : vector<4x4xf32>, vector<4x256xf32>, vector<4x256xf32> -> vector<4x256xf32>
    %359 = vector.extract_strided_slice %348 {offsets = [0, 256], sizes = [4, 256], strides = [1, 1]} : vector<4x768xf32> to vector<4x256xf32>
    %360 = arith.addf %358, %359 : vector<4x256xf32>
    %361 = vector.extract_strided_slice %348 {offsets = [0, 512], sizes = [4, 256], strides = [1, 1]} : vector<4x768xf32> to vector<4x256xf32>
    %362 = tpu.iota {dimensions = array<i32: 0>} : vector<4x4xi32>
    %363 = tpu.iota {dimensions = array<i32: 1>} : vector<4x4xi32>
    %c1_i32_135 = arith.constant 1 : i32
    %364 = vector.broadcast %c1_i32_135 : i32 to vector<4x4xi32>
    %365 = arith.addi %362, %364 : vector<4x4xi32>
    %366 = arith.cmpi eq, %363, %365 : vector<4x4xi32>
    %cst_136 = arith.constant 1.000000e+00 : f32
    %cst_137 = arith.constant 0.000000e+00 : f32
    %367 = vector.broadcast %cst_136 : f32 to vector<4x4xf32>
    %368 = vector.broadcast %cst_137 : f32 to vector<4x4xf32>
    %369 = arith.select %366, %367, %368 : vector<4x4xi1>, vector<4x4xf32>
    %cst_138 = arith.constant dense<0.000000e+00> : vector<4x256xf32>
    %370 = tpu.matmul %369, %361, %cst_138 {dimension_numbers = #tpu.dot_dimension_numbers<[1], [0], [0], [1], [0, 0, 1, 1], [], []>} : vector<4x4xf32>, vector<4x256xf32>, vector<4x256xf32> -> vector<4x256xf32>
    %371 = arith.addf %360, %370 : vector<4x256xf32>
    %c0_139 = arith.constant 0 : index
    %c0_140 = arith.constant 0 : index
    %372 = vector.load %arg13[%c0_139, %c0_140] : memref<2x256xf32, #tpu.memory_space<vmem>>, vector<2x256xf32>
    %373 = vector.extract_strided_slice %372 {offsets = [0, 0], sizes = [1, 256], strides = [1, 1]} : vector<2x256xf32> to vector<1x256xf32>
    %374 = vector.broadcast %373 : vector<1x256xf32> to vector<4x256xf32>
    %375 = arith.mulf %371, %374 : vector<4x256xf32>
    %376 = vector.extract_strided_slice %372 {offsets = [1, 0], sizes = [1, 256], strides = [1, 1]} : vector<2x256xf32> to vector<1x256xf32>
    %377 = vector.broadcast %376 : vector<1x256xf32> to vector<4x256xf32>
    %378 = arith.addf %375, %377 : vector<4x256xf32>
    %cst_141 = arith.constant 0.000000e+00 : f32
    %379 = vector.broadcast %cst_141 : f32 to vector<4x256xf32>
    %380 = arith.maximumf %378, %379 : vector<4x256xf32>
    %381 = arith.truncf %380 : vector<4x256xf32> to vector<4x256xbf16>
    %382 = tpu.iota {dimensions = array<i32: 0>} : vector<1x4xi32>
    %383 = tpu.iota {dimensions = array<i32: 1>} : vector<1x4xi32>
    %c4_i32_142 = arith.constant 4 : i32
    %384 = vector.broadcast %c4_i32_142 : i32 to vector<1x4xi32>
    %385 = arith.muli %384, %382 : vector<1x4xi32>
    %c0_i32_143 = arith.constant 0 : i32
    %386 = vector.broadcast %c0_i32_143 : i32 to vector<1x4xi32>
    %387 = arith.addi %385, %386 : vector<1x4xi32>
    %388 = arith.cmpi eq, %383, %387 : vector<1x4xi32>
    %cst_144 = arith.constant 1.000000e+00 : f32
    %cst_145 = arith.constant 0.000000e+00 : f32
    %389 = vector.broadcast %cst_144 : f32 to vector<1x4xf32>
    %390 = vector.broadcast %cst_145 : f32 to vector<1x4xf32>
    %391 = arith.select %388, %389, %390 : vector<1x4xi1>, vector<1x4xf32>
    %392 = arith.truncf %391 : vector<1x4xf32> to vector<1x4xbf16>
    %cst_146 = arith.constant dense<0.000000e+00> : vector<1x256xf32>
    %393 = tpu.matmul %392, %381, %cst_146 {dimension_numbers = #tpu.dot_dimension_numbers<[1], [0], [0], [1], [0, 0, 1, 1], [], []>} : vector<1x4xbf16>, vector<4x256xbf16>, vector<1x256xf32> -> vector<1x256xf32>
    %394 = tpu.iota {dimensions = array<i32: 0>} : vector<1x4xi32>
    %395 = tpu.iota {dimensions = array<i32: 1>} : vector<1x4xi32>
    %c4_i32_147 = arith.constant 4 : i32
    %396 = vector.broadcast %c4_i32_147 : i32 to vector<1x4xi32>
    %397 = arith.muli %396, %394 : vector<1x4xi32>
    %c1_i32_148 = arith.constant 1 : i32
    %398 = vector.broadcast %c1_i32_148 : i32 to vector<1x4xi32>
    %399 = arith.addi %397, %398 : vector<1x4xi32>
    %400 = arith.cmpi eq, %395, %399 : vector<1x4xi32>
    %cst_149 = arith.constant 1.000000e+00 : f32
    %cst_150 = arith.constant 0.000000e+00 : f32
    %401 = vector.broadcast %cst_149 : f32 to vector<1x4xf32>
    %402 = vector.broadcast %cst_150 : f32 to vector<1x4xf32>
    %403 = arith.select %400, %401, %402 : vector<1x4xi1>, vector<1x4xf32>
    %404 = arith.truncf %403 : vector<1x4xf32> to vector<1x4xbf16>
    %cst_151 = arith.constant dense<0.000000e+00> : vector<1x256xf32>
    %405 = tpu.matmul %404, %381, %cst_151 {dimension_numbers = #tpu.dot_dimension_numbers<[1], [0], [0], [1], [0, 0, 1, 1], [], []>} : vector<1x4xbf16>, vector<4x256xbf16>, vector<1x256xf32> -> vector<1x256xf32>
    %406 = arith.maximumf %393, %405 : vector<1x256xf32>
    %407 = tpu.iota {dimensions = array<i32: 0>} : vector<1x4xi32>
    %408 = tpu.iota {dimensions = array<i32: 1>} : vector<1x4xi32>
    %c4_i32_152 = arith.constant 4 : i32
    %409 = vector.broadcast %c4_i32_152 : i32 to vector<1x4xi32>
    %410 = arith.muli %409, %407 : vector<1x4xi32>
    %c2_i32_153 = arith.constant 2 : i32
    %411 = vector.broadcast %c2_i32_153 : i32 to vector<1x4xi32>
    %412 = arith.addi %410, %411 : vector<1x4xi32>
    %413 = arith.cmpi eq, %408, %412 : vector<1x4xi32>
    %cst_154 = arith.constant 1.000000e+00 : f32
    %cst_155 = arith.constant 0.000000e+00 : f32
    %414 = vector.broadcast %cst_154 : f32 to vector<1x4xf32>
    %415 = vector.broadcast %cst_155 : f32 to vector<1x4xf32>
    %416 = arith.select %413, %414, %415 : vector<1x4xi1>, vector<1x4xf32>
    %417 = arith.truncf %416 : vector<1x4xf32> to vector<1x4xbf16>
    %cst_156 = arith.constant dense<0.000000e+00> : vector<1x256xf32>
    %418 = tpu.matmul %417, %381, %cst_156 {dimension_numbers = #tpu.dot_dimension_numbers<[1], [0], [0], [1], [0, 0, 1, 1], [], []>} : vector<1x4xbf16>, vector<4x256xbf16>, vector<1x256xf32> -> vector<1x256xf32>
    %419 = arith.maximumf %406, %418 : vector<1x256xf32>
    %420 = tpu.iota {dimensions = array<i32: 0>} : vector<1x4xi32>
    %421 = tpu.iota {dimensions = array<i32: 1>} : vector<1x4xi32>
    %c4_i32_157 = arith.constant 4 : i32
    %422 = vector.broadcast %c4_i32_157 : i32 to vector<1x4xi32>
    %423 = arith.muli %422, %420 : vector<1x4xi32>
    %c3_i32_158 = arith.constant 3 : i32
    %424 = vector.broadcast %c3_i32_158 : i32 to vector<1x4xi32>
    %425 = arith.addi %423, %424 : vector<1x4xi32>
    %426 = arith.cmpi eq, %421, %425 : vector<1x4xi32>
    %cst_159 = arith.constant 1.000000e+00 : f32
    %cst_160 = arith.constant 0.000000e+00 : f32
    %427 = vector.broadcast %cst_159 : f32 to vector<1x4xf32>
    %428 = vector.broadcast %cst_160 : f32 to vector<1x4xf32>
    %429 = arith.select %426, %427, %428 : vector<1x4xi1>, vector<1x4xf32>
    %430 = arith.truncf %429 : vector<1x4xf32> to vector<1x4xbf16>
    %cst_161 = arith.constant dense<0.000000e+00> : vector<1x256xf32>
    %431 = tpu.matmul %430, %381, %cst_161 {dimension_numbers = #tpu.dot_dimension_numbers<[1], [0], [0], [1], [0, 0, 1, 1], [], []>} : vector<1x4xbf16>, vector<4x256xbf16>, vector<1x256xf32> -> vector<1x256xf32>
    %432 = arith.maximumf %419, %431 : vector<1x256xf32>
    %433 = arith.truncf %432 : vector<1x256xf32> to vector<1x256xbf16>
    %c0_162 = arith.constant 0 : index
    %c0_163 = arith.constant 0 : index
    %434 = vector.load %arg14[%c0_162, %c0_163] : memref<256x512xbf16, #tpu.memory_space<vmem>>, vector<256x512xbf16>
    %cst_164 = arith.constant dense<0.000000e+00> : vector<1x512xf32>
    %435 = tpu.matmul %433, %434, %cst_164 {dimension_numbers = #tpu.dot_dimension_numbers<[1], [0], [0], [1], [0, 0, 1, 1], [], []>} : vector<1x256xbf16>, vector<256x512xbf16>, vector<1x512xf32> -> vector<1x512xf32>
    %436 = tpu.iota {dimensions = array<i32: 0>} : vector<4x128xi32>
    %c0_i32_165 = arith.constant 0 : i32
    %437 = vector.broadcast %c0_i32_165 : i32 to vector<4x128xi32>
    %438 = arith.cmpi eq, %436, %437 : vector<4x128xi32>
    %439 = vector.extract_strided_slice %435 {offsets = [0, 0], sizes = [1, 128], strides = [1, 1]} : vector<1x512xf32> to vector<1x128xf32>
    %cst_166 = arith.constant 0.000000e+00 : f32
    %440 = vector.shape_cast %439 : vector<1x128xf32> to vector<1x128xf32>
    %441 = vector.broadcast %440 : vector<1x128xf32> to vector<4x128xf32>
    %442 = vector.broadcast %cst_166 : f32 to vector<4x128xf32>
    %443 = arith.select %438, %441, %442 : vector<4x128xi1>, vector<4x128xf32>
    %c1_i32_167 = arith.constant 1 : i32
    %444 = vector.broadcast %c1_i32_167 : i32 to vector<4x128xi32>
    %445 = arith.cmpi eq, %436, %444 : vector<4x128xi32>
    %446 = vector.extract_strided_slice %435 {offsets = [0, 128], sizes = [1, 128], strides = [1, 1]} : vector<1x512xf32> to vector<1x128xf32>
    %cst_168 = arith.constant 0.000000e+00 : f32
    %447 = vector.shape_cast %446 : vector<1x128xf32> to vector<1x128xf32>
    %448 = vector.broadcast %447 : vector<1x128xf32> to vector<4x128xf32>
    %449 = vector.broadcast %cst_168 : f32 to vector<4x128xf32>
    %450 = arith.select %445, %448, %449 : vector<4x128xi1>, vector<4x128xf32>
    %451 = arith.addf %443, %450 : vector<4x128xf32>
    %c2_i32_169 = arith.constant 2 : i32
    %452 = vector.broadcast %c2_i32_169 : i32 to vector<4x128xi32>
    %453 = arith.cmpi eq, %436, %452 : vector<4x128xi32>
    %454 = vector.extract_strided_slice %435 {offsets = [0, 256], sizes = [1, 128], strides = [1, 1]} : vector<1x512xf32> to vector<1x128xf32>
    %cst_170 = arith.constant 0.000000e+00 : f32
    %455 = vector.shape_cast %454 : vector<1x128xf32> to vector<1x128xf32>
    %456 = vector.broadcast %455 : vector<1x128xf32> to vector<4x128xf32>
    %457 = vector.broadcast %cst_170 : f32 to vector<4x128xf32>
    %458 = arith.select %453, %456, %457 : vector<4x128xi1>, vector<4x128xf32>
    %459 = arith.addf %451, %458 : vector<4x128xf32>
    %c3_i32_171 = arith.constant 3 : i32
    %460 = vector.broadcast %c3_i32_171 : i32 to vector<4x128xi32>
    %461 = arith.cmpi eq, %436, %460 : vector<4x128xi32>
    %462 = vector.extract_strided_slice %435 {offsets = [0, 384], sizes = [1, 128], strides = [1, 1]} : vector<1x512xf32> to vector<1x128xf32>
    %cst_172 = arith.constant 0.000000e+00 : f32
    %463 = vector.shape_cast %462 : vector<1x128xf32> to vector<1x128xf32>
    %464 = vector.broadcast %463 : vector<1x128xf32> to vector<4x128xf32>
    %465 = vector.broadcast %cst_172 : f32 to vector<4x128xf32>
    %466 = arith.select %461, %464, %465 : vector<4x128xi1>, vector<4x128xf32>
    %467 = arith.addf %459, %466 : vector<4x128xf32>
    %c0_173 = arith.constant 0 : index
    %c0_174 = arith.constant 0 : index
    %468 = vector.load %arg15[%c0_173, %c0_174] : memref<2x128xf32, #tpu.memory_space<vmem>>, vector<2x128xf32>
    %469 = vector.extract_strided_slice %468 {offsets = [0, 0], sizes = [1, 128], strides = [1, 1]} : vector<2x128xf32> to vector<1x128xf32>
    %470 = vector.broadcast %469 : vector<1x128xf32> to vector<4x128xf32>
    %471 = arith.mulf %467, %470 : vector<4x128xf32>
    %472 = vector.extract_strided_slice %468 {offsets = [1, 0], sizes = [1, 128], strides = [1, 1]} : vector<2x128xf32> to vector<1x128xf32>
    %473 = vector.broadcast %472 : vector<1x128xf32> to vector<4x128xf32>
    %474 = arith.addf %471, %473 : vector<4x128xf32>
    %cst_175 = arith.constant 0.000000e+00 : f32
    %475 = vector.broadcast %cst_175 : f32 to vector<4x128xf32>
    %476 = arith.maximumf %474, %475 : vector<4x128xf32>
    %477 = arith.truncf %476 : vector<4x128xf32> to vector<4x128xbf16>
    %c0_176 = arith.constant 0 : index
    %c0_177 = arith.constant 0 : index
    %478 = vector.load %arg16[%c0_176, %c0_177] : memref<128x256xbf16, #tpu.memory_space<vmem>>, vector<128x256xbf16>
    %cst_178 = arith.constant dense<0.000000e+00> : vector<4x256xf32>
    %479 = tpu.matmul %477, %478, %cst_178 {dimension_numbers = #tpu.dot_dimension_numbers<[1], [0], [0], [1], [0, 0, 1, 1], [], []>} : vector<4x128xbf16>, vector<128x256xbf16>, vector<4x256xf32> -> vector<4x256xf32>
    %c0_179 = arith.constant 0 : index
    %c0_180 = arith.constant 0 : index
    %480 = vector.load %arg17[%c0_179, %c0_180] : memref<128x256xbf16, #tpu.memory_space<vmem>>, vector<128x256xbf16>
    %cst_181 = arith.constant dense<0.000000e+00> : vector<4x256xf32>
    %481 = tpu.matmul %289, %480, %cst_181 {dimension_numbers = #tpu.dot_dimension_numbers<[1], [0], [0], [1], [0, 0, 1, 1], [], []>} : vector<4x128xbf16>, vector<128x256xbf16>, vector<4x256xf32> -> vector<4x256xf32>
    %482 = arith.addf %479, %481 : vector<4x256xf32>
    %483 = tpu.iota {dimensions = array<i32: 0>} : vector<16x4xi32>
    %484 = tpu.iota {dimensions = array<i32: 1>} : vector<16x4xi32>
    %c4_i32_182 = arith.constant 4 : i32
    %485 = vector.broadcast %c4_i32_182 : i32 to vector<16x4xi32>
    %486 = arith.muli %485, %484 : vector<16x4xi32>
    %c0_i32_183 = arith.constant 0 : i32
    %487 = vector.broadcast %c0_i32_183 : i32 to vector<16x4xi32>
    %488 = arith.addi %486, %487 : vector<16x4xi32>
    %489 = arith.cmpi eq, %483, %488 : vector<16x4xi32>
    %cst_184 = arith.constant 1.000000e+00 : f32
    %cst_185 = arith.constant 0.000000e+00 : f32
    %490 = vector.broadcast %cst_184 : f32 to vector<16x4xf32>
    %491 = vector.broadcast %cst_185 : f32 to vector<16x4xf32>
    %492 = arith.select %489, %490, %491 : vector<16x4xi1>, vector<16x4xf32>
    %493 = vector.extract_strided_slice %482 {offsets = [0, 0], sizes = [4, 64], strides = [1, 1]} : vector<4x256xf32> to vector<4x64xf32>
    %cst_186 = arith.constant dense<0.000000e+00> : vector<16x64xf32>
    %494 = tpu.matmul %492, %493, %cst_186 {dimension_numbers = #tpu.dot_dimension_numbers<[1], [0], [0], [1], [0, 0, 1, 1], [], []>} : vector<16x4xf32>, vector<4x64xf32>, vector<16x64xf32> -> vector<16x64xf32>
    %495 = tpu.iota {dimensions = array<i32: 0>} : vector<16x4xi32>
    %496 = tpu.iota {dimensions = array<i32: 1>} : vector<16x4xi32>
    %c4_i32_187 = arith.constant 4 : i32
    %497 = vector.broadcast %c4_i32_187 : i32 to vector<16x4xi32>
    %498 = arith.muli %497, %496 : vector<16x4xi32>
    %c1_i32_188 = arith.constant 1 : i32
    %499 = vector.broadcast %c1_i32_188 : i32 to vector<16x4xi32>
    %500 = arith.addi %498, %499 : vector<16x4xi32>
    %501 = arith.cmpi eq, %495, %500 : vector<16x4xi32>
    %cst_189 = arith.constant 1.000000e+00 : f32
    %cst_190 = arith.constant 0.000000e+00 : f32
    %502 = vector.broadcast %cst_189 : f32 to vector<16x4xf32>
    %503 = vector.broadcast %cst_190 : f32 to vector<16x4xf32>
    %504 = arith.select %501, %502, %503 : vector<16x4xi1>, vector<16x4xf32>
    %505 = vector.extract_strided_slice %482 {offsets = [0, 64], sizes = [4, 64], strides = [1, 1]} : vector<4x256xf32> to vector<4x64xf32>
    %cst_191 = arith.constant dense<0.000000e+00> : vector<16x64xf32>
    %506 = tpu.matmul %504, %505, %cst_191 {dimension_numbers = #tpu.dot_dimension_numbers<[1], [0], [0], [1], [0, 0, 1, 1], [], []>} : vector<16x4xf32>, vector<4x64xf32>, vector<16x64xf32> -> vector<16x64xf32>
    %507 = arith.addf %494, %506 : vector<16x64xf32>
    %508 = tpu.iota {dimensions = array<i32: 0>} : vector<16x4xi32>
    %509 = tpu.iota {dimensions = array<i32: 1>} : vector<16x4xi32>
    %c4_i32_192 = arith.constant 4 : i32
    %510 = vector.broadcast %c4_i32_192 : i32 to vector<16x4xi32>
    %511 = arith.muli %510, %509 : vector<16x4xi32>
    %c2_i32_193 = arith.constant 2 : i32
    %512 = vector.broadcast %c2_i32_193 : i32 to vector<16x4xi32>
    %513 = arith.addi %511, %512 : vector<16x4xi32>
    %514 = arith.cmpi eq, %508, %513 : vector<16x4xi32>
    %cst_194 = arith.constant 1.000000e+00 : f32
    %cst_195 = arith.constant 0.000000e+00 : f32
    %515 = vector.broadcast %cst_194 : f32 to vector<16x4xf32>
    %516 = vector.broadcast %cst_195 : f32 to vector<16x4xf32>
    %517 = arith.select %514, %515, %516 : vector<16x4xi1>, vector<16x4xf32>
    %518 = vector.extract_strided_slice %482 {offsets = [0, 128], sizes = [4, 64], strides = [1, 1]} : vector<4x256xf32> to vector<4x64xf32>
    %cst_196 = arith.constant dense<0.000000e+00> : vector<16x64xf32>
    %519 = tpu.matmul %517, %518, %cst_196 {dimension_numbers = #tpu.dot_dimension_numbers<[1], [0], [0], [1], [0, 0, 1, 1], [], []>} : vector<16x4xf32>, vector<4x64xf32>, vector<16x64xf32> -> vector<16x64xf32>
    %520 = arith.addf %507, %519 : vector<16x64xf32>
    %521 = tpu.iota {dimensions = array<i32: 0>} : vector<16x4xi32>
    %522 = tpu.iota {dimensions = array<i32: 1>} : vector<16x4xi32>
    %c4_i32_197 = arith.constant 4 : i32
    %523 = vector.broadcast %c4_i32_197 : i32 to vector<16x4xi32>
    %524 = arith.muli %523, %522 : vector<16x4xi32>
    %c3_i32_198 = arith.constant 3 : i32
    %525 = vector.broadcast %c3_i32_198 : i32 to vector<16x4xi32>
    %526 = arith.addi %524, %525 : vector<16x4xi32>
    %527 = arith.cmpi eq, %521, %526 : vector<16x4xi32>
    %cst_199 = arith.constant 1.000000e+00 : f32
    %cst_200 = arith.constant 0.000000e+00 : f32
    %528 = vector.broadcast %cst_199 : f32 to vector<16x4xf32>
    %529 = vector.broadcast %cst_200 : f32 to vector<16x4xf32>
    %530 = arith.select %527, %528, %529 : vector<16x4xi1>, vector<16x4xf32>
    %531 = vector.extract_strided_slice %482 {offsets = [0, 192], sizes = [4, 64], strides = [1, 1]} : vector<4x256xf32> to vector<4x64xf32>
    %cst_201 = arith.constant dense<0.000000e+00> : vector<16x64xf32>
    %532 = tpu.matmul %530, %531, %cst_201 {dimension_numbers = #tpu.dot_dimension_numbers<[1], [0], [0], [1], [0, 0, 1, 1], [], []>} : vector<16x4xf32>, vector<4x64xf32>, vector<16x64xf32> -> vector<16x64xf32>
    %533 = arith.addf %520, %532 : vector<16x64xf32>
    %c0_202 = arith.constant 0 : index
    %c0_203 = arith.constant 0 : index
    %534 = vector.load %arg18[%c0_202, %c0_203] : memref<2x64xf32, #tpu.memory_space<vmem>>, vector<2x64xf32>
    %535 = vector.extract_strided_slice %534 {offsets = [0, 0], sizes = [1, 64], strides = [1, 1]} : vector<2x64xf32> to vector<1x64xf32>
    %536 = vector.broadcast %535 : vector<1x64xf32> to vector<16x64xf32>
    %537 = arith.mulf %533, %536 : vector<16x64xf32>
    %538 = vector.extract_strided_slice %534 {offsets = [1, 0], sizes = [1, 64], strides = [1, 1]} : vector<2x64xf32> to vector<1x64xf32>
    %539 = vector.broadcast %538 : vector<1x64xf32> to vector<16x64xf32>
    %540 = arith.addf %537, %539 : vector<16x64xf32>
    %cst_204 = arith.constant 0.000000e+00 : f32
    %541 = vector.broadcast %cst_204 : f32 to vector<16x64xf32>
    %542 = arith.maximumf %540, %541 : vector<16x64xf32>
    %543 = arith.truncf %542 : vector<16x64xf32> to vector<16x64xbf16>
    %c0_205 = arith.constant 0 : index
    %c0_206 = arith.constant 0 : index
    %544 = vector.load %arg19[%c0_205, %c0_206] : memref<64x128xbf16, #tpu.memory_space<vmem>>, vector<64x128xbf16>
    %cst_207 = arith.constant dense<0.000000e+00> : vector<16x128xf32>
    %545 = tpu.matmul %543, %544, %cst_207 {dimension_numbers = #tpu.dot_dimension_numbers<[1], [0], [0], [1], [0, 0, 1, 1], [], []>} : vector<16x64xbf16>, vector<64x128xbf16>, vector<16x128xf32> -> vector<16x128xf32>
    %c0_208 = arith.constant 0 : index
    %c0_209 = arith.constant 0 : index
    %546 = vector.load %arg20[%c0_208, %c0_209] : memref<64x128xbf16, #tpu.memory_space<vmem>>, vector<64x128xbf16>
    %cst_210 = arith.constant dense<0.000000e+00> : vector<16x128xf32>
    %547 = tpu.matmul %145, %546, %cst_210 {dimension_numbers = #tpu.dot_dimension_numbers<[1], [0], [0], [1], [0, 0, 1, 1], [], []>} : vector<16x64xbf16>, vector<64x128xbf16>, vector<16x128xf32> -> vector<16x128xf32>
    %548 = arith.addf %545, %547 : vector<16x128xf32>
    %549 = tpu.iota {dimensions = array<i32: 0>} : vector<64x16xi32>
    %550 = tpu.iota {dimensions = array<i32: 1>} : vector<64x16xi32>
    %c4_i32_211 = arith.constant 4 : i32
    %551 = vector.broadcast %c4_i32_211 : i32 to vector<64x16xi32>
    %552 = arith.muli %551, %550 : vector<64x16xi32>
    %c0_i32_212 = arith.constant 0 : i32
    %553 = vector.broadcast %c0_i32_212 : i32 to vector<64x16xi32>
    %554 = arith.addi %552, %553 : vector<64x16xi32>
    %555 = arith.cmpi eq, %549, %554 : vector<64x16xi32>
    %cst_213 = arith.constant 1.000000e+00 : f32
    %cst_214 = arith.constant 0.000000e+00 : f32
    %556 = vector.broadcast %cst_213 : f32 to vector<64x16xf32>
    %557 = vector.broadcast %cst_214 : f32 to vector<64x16xf32>
    %558 = arith.select %555, %556, %557 : vector<64x16xi1>, vector<64x16xf32>
    %559 = vector.extract_strided_slice %548 {offsets = [0, 0], sizes = [16, 32], strides = [1, 1]} : vector<16x128xf32> to vector<16x32xf32>
    %cst_215 = arith.constant dense<0.000000e+00> : vector<64x32xf32>
    %560 = tpu.matmul %558, %559, %cst_215 {dimension_numbers = #tpu.dot_dimension_numbers<[1], [0], [0], [1], [0, 0, 1, 1], [], []>} : vector<64x16xf32>, vector<16x32xf32>, vector<64x32xf32> -> vector<64x32xf32>
    %561 = tpu.iota {dimensions = array<i32: 0>} : vector<64x16xi32>
    %562 = tpu.iota {dimensions = array<i32: 1>} : vector<64x16xi32>
    %c4_i32_216 = arith.constant 4 : i32
    %563 = vector.broadcast %c4_i32_216 : i32 to vector<64x16xi32>
    %564 = arith.muli %563, %562 : vector<64x16xi32>
    %c1_i32_217 = arith.constant 1 : i32
    %565 = vector.broadcast %c1_i32_217 : i32 to vector<64x16xi32>
    %566 = arith.addi %564, %565 : vector<64x16xi32>
    %567 = arith.cmpi eq, %561, %566 : vector<64x16xi32>
    %cst_218 = arith.constant 1.000000e+00 : f32
    %cst_219 = arith.constant 0.000000e+00 : f32
    %568 = vector.broadcast %cst_218 : f32 to vector<64x16xf32>
    %569 = vector.broadcast %cst_219 : f32 to vector<64x16xf32>
    %570 = arith.select %567, %568, %569 : vector<64x16xi1>, vector<64x16xf32>
    %571 = vector.extract_strided_slice %548 {offsets = [0, 32], sizes = [16, 32], strides = [1, 1]} : vector<16x128xf32> to vector<16x32xf32>
    %cst_220 = arith.constant dense<0.000000e+00> : vector<64x32xf32>
    %572 = tpu.matmul %570, %571, %cst_220 {dimension_numbers = #tpu.dot_dimension_numbers<[1], [0], [0], [1], [0, 0, 1, 1], [], []>} : vector<64x16xf32>, vector<16x32xf32>, vector<64x32xf32> -> vector<64x32xf32>
    %573 = arith.addf %560, %572 : vector<64x32xf32>
    %574 = tpu.iota {dimensions = array<i32: 0>} : vector<64x16xi32>
    %575 = tpu.iota {dimensions = array<i32: 1>} : vector<64x16xi32>
    %c4_i32_221 = arith.constant 4 : i32
    %576 = vector.broadcast %c4_i32_221 : i32 to vector<64x16xi32>
    %577 = arith.muli %576, %575 : vector<64x16xi32>
    %c2_i32_222 = arith.constant 2 : i32
    %578 = vector.broadcast %c2_i32_222 : i32 to vector<64x16xi32>
    %579 = arith.addi %577, %578 : vector<64x16xi32>
    %580 = arith.cmpi eq, %574, %579 : vector<64x16xi32>
    %cst_223 = arith.constant 1.000000e+00 : f32
    %cst_224 = arith.constant 0.000000e+00 : f32
    %581 = vector.broadcast %cst_223 : f32 to vector<64x16xf32>
    %582 = vector.broadcast %cst_224 : f32 to vector<64x16xf32>
    %583 = arith.select %580, %581, %582 : vector<64x16xi1>, vector<64x16xf32>
    %584 = vector.extract_strided_slice %548 {offsets = [0, 64], sizes = [16, 32], strides = [1, 1]} : vector<16x128xf32> to vector<16x32xf32>
    %cst_225 = arith.constant dense<0.000000e+00> : vector<64x32xf32>
    %585 = tpu.matmul %583, %584, %cst_225 {dimension_numbers = #tpu.dot_dimension_numbers<[1], [0], [0], [1], [0, 0, 1, 1], [], []>} : vector<64x16xf32>, vector<16x32xf32>, vector<64x32xf32> -> vector<64x32xf32>
    %586 = arith.addf %573, %585 : vector<64x32xf32>
    %587 = tpu.iota {dimensions = array<i32: 0>} : vector<64x16xi32>
    %588 = tpu.iota {dimensions = array<i32: 1>} : vector<64x16xi32>
    %c4_i32_226 = arith.constant 4 : i32
    %589 = vector.broadcast %c4_i32_226 : i32 to vector<64x16xi32>
    %590 = arith.muli %589, %588 : vector<64x16xi32>
    %c3_i32_227 = arith.constant 3 : i32
    %591 = vector.broadcast %c3_i32_227 : i32 to vector<64x16xi32>
    %592 = arith.addi %590, %591 : vector<64x16xi32>
    %593 = arith.cmpi eq, %587, %592 : vector<64x16xi32>
    %cst_228 = arith.constant 1.000000e+00 : f32
    %cst_229 = arith.constant 0.000000e+00 : f32
    %594 = vector.broadcast %cst_228 : f32 to vector<64x16xf32>
    %595 = vector.broadcast %cst_229 : f32 to vector<64x16xf32>
    %596 = arith.select %593, %594, %595 : vector<64x16xi1>, vector<64x16xf32>
    %597 = vector.extract_strided_slice %548 {offsets = [0, 96], sizes = [16, 32], strides = [1, 1]} : vector<16x128xf32> to vector<16x32xf32>
    %cst_230 = arith.constant dense<0.000000e+00> : vector<64x32xf32>
    %598 = tpu.matmul %596, %597, %cst_230 {dimension_numbers = #tpu.dot_dimension_numbers<[1], [0], [0], [1], [0, 0, 1, 1], [], []>} : vector<64x16xf32>, vector<16x32xf32>, vector<64x32xf32> -> vector<64x32xf32>
    %599 = arith.addf %586, %598 : vector<64x32xf32>
    %c0_231 = arith.constant 0 : index
    %c0_232 = arith.constant 0 : index
    %600 = vector.load %arg21[%c0_231, %c0_232] : memref<2x32xf32, #tpu.memory_space<vmem>>, vector<2x32xf32>
    %601 = vector.extract_strided_slice %600 {offsets = [0, 0], sizes = [1, 32], strides = [1, 1]} : vector<2x32xf32> to vector<1x32xf32>
    %602 = vector.broadcast %601 : vector<1x32xf32> to vector<64x32xf32>
    %603 = arith.mulf %599, %602 : vector<64x32xf32>
    %604 = vector.extract_strided_slice %600 {offsets = [1, 0], sizes = [1, 32], strides = [1, 1]} : vector<2x32xf32> to vector<1x32xf32>
    %605 = vector.broadcast %604 : vector<1x32xf32> to vector<64x32xf32>
    %606 = arith.addf %603, %605 : vector<64x32xf32>
    %cst_233 = arith.constant 0.000000e+00 : f32
    %607 = vector.broadcast %cst_233 : f32 to vector<64x32xf32>
    %608 = arith.maximumf %606, %607 : vector<64x32xf32>
    %609 = arith.truncf %608 : vector<64x32xf32> to vector<64x32xbf16>
    %c0_234 = arith.constant 0 : index
    %c0_235 = arith.constant 0 : index
    %610 = vector.load %arg22[%c0_234, %c0_235] : memref<32x1xbf16, #tpu.memory_space<vmem>>, vector<32x1xbf16>
    %cst_236 = arith.constant dense<0.000000e+00> : vector<64x1xf32>
    %611 = tpu.matmul %609, %610, %cst_236 {dimension_numbers = #tpu.dot_dimension_numbers<[1], [0], [0], [1], [0, 0, 1, 1], [], []>} : vector<64x32xbf16>, vector<32x1xbf16>, vector<64x1xf32> -> vector<64x1xf32>
    %c0_237 = arith.constant 0 : index
    %c0_238 = arith.constant 0 : index
    %612 = vector.load %arg23[%c0_237, %c0_238] : memref<4x1xbf16, #tpu.memory_space<vmem>>, vector<4x1xbf16>
    %cst_239 = arith.constant dense<0.000000e+00> : vector<64x1xf32>
    %613 = tpu.matmul %1, %612, %cst_239 {dimension_numbers = #tpu.dot_dimension_numbers<[1], [0], [0], [1], [0, 0, 1, 1], [], []>} : vector<64x4xbf16>, vector<4x1xbf16>, vector<64x1xf32> -> vector<64x1xf32>
    %614 = arith.addf %611, %613 : vector<64x1xf32>
    %c0_240 = arith.constant 0 : index
    %c0_241 = arith.constant 0 : index
    %615 = vector.load %arg24[%c0_240, %c0_241] : memref<2x1xf32, #tpu.memory_space<vmem>>, vector<2x1xf32>
    %616 = vector.extract_strided_slice %615 {offsets = [0, 0], sizes = [1, 1], strides = [1, 1]} : vector<2x1xf32> to vector<1x1xf32>
    %617 = vector.broadcast %616 : vector<1x1xf32> to vector<64x1xf32>
    %618 = arith.mulf %614, %617 : vector<64x1xf32>
    %619 = vector.extract_strided_slice %615 {offsets = [1, 0], sizes = [1, 1], strides = [1, 1]} : vector<2x1xf32> to vector<1x1xf32>
    %620 = vector.broadcast %619 : vector<1x1xf32> to vector<64x1xf32>
    %621 = arith.addf %618, %620 : vector<64x1xf32>
    %c0_242 = arith.constant 0 : index
    %c0_243 = arith.constant 0 : index
    %c0_244 = arith.constant 0 : index
    %622 = vector.load %arg25[%c0_242, %c0_243, %c0_244] : memref<1x64x1xf32, #tpu.memory_space<vmem>>, vector<1x64x1xf32>
    %623 = vector.shape_cast %622 : vector<1x64x1xf32> to vector<64x1xf32>
    %624 = vector.shape_cast %621 : vector<64x1xf32> to vector<1x64x1xf32>
    tpu.vector_store %arg25[%c0_242, %c0_243, %c0_244], %624 {strides = array<i32>} : memref<1x64x1xf32, #tpu.memory_space<vmem>>, vector<1x64x1xf32>,
    return
  }
  func.func @transform_0(%arg0: i32) -> (i32, i32, i32) {
    %c0_i32 = arith.constant 0 : i32
    %c0_i32_0 = arith.constant 0 : i32
    %c0_i32_1 = arith.constant 0 : i32
    return %arg0, %c0_i32, %c0_i32_0 : i32, i32, i32
  }
  func.func @transform_1(%arg0: i32) -> (i32, i32) {
    %c0_i32 = arith.constant 0 : i32
    %c0_i32_0 = arith.constant 0 : i32
    %c0_i32_1 = arith.constant 0 : i32
    return %c0_i32, %c0_i32_0 : i32, i32
  }
  func.func @transform_2(%arg0: i32) -> (i32, i32) {
    %c0_i32 = arith.constant 0 : i32
    %c0_i32_0 = arith.constant 0 : i32
    %c0_i32_1 = arith.constant 0 : i32
    return %c0_i32, %c0_i32_0 : i32, i32
  }
  func.func @transform_3(%arg0: i32) -> (i32, i32) {
    %c0_i32 = arith.constant 0 : i32
    %c0_i32_0 = arith.constant 0 : i32
    %c0_i32_1 = arith.constant 0 : i32
    return %c0_i32, %c0_i32_0 : i32, i32
  }
  func.func @transform_4(%arg0: i32) -> (i32, i32) {
    %c0_i32 = arith.constant 0 : i32
    %c0_i32_0 = arith.constant 0 : i32
    %c0_i32_1 = arith.constant 0 : i32
    return %c0_i32, %c0_i32_0 : i32, i32
  }
  func.func @transform_5(%arg0: i32) -> (i32, i32) {
    %c0_i32 = arith.constant 0 : i32
    %c0_i32_0 = arith.constant 0 : i32
    %c0_i32_1 = arith.constant 0 : i32
    return %c0_i32, %c0_i32_0 : i32, i32
  }
  func.func @transform_6(%arg0: i32) -> (i32, i32) {
    %c0_i32 = arith.constant 0 : i32
    %c0_i32_0 = arith.constant 0 : i32
    %c0_i32_1 = arith.constant 0 : i32
    return %c0_i32, %c0_i32_0 : i32, i32
  }
  func.func @transform_7(%arg0: i32) -> (i32, i32) {
    %c0_i32 = arith.constant 0 : i32
    %c0_i32_0 = arith.constant 0 : i32
    %c0_i32_1 = arith.constant 0 : i32
    return %c0_i32, %c0_i32_0 : i32, i32
  }
  func.func @transform_8(%arg0: i32) -> (i32, i32) {
    %c0_i32 = arith.constant 0 : i32
    %c0_i32_0 = arith.constant 0 : i32
    %c0_i32_1 = arith.constant 0 : i32
    return %c0_i32, %c0_i32_0 : i32, i32
  }
  func.func @transform_9(%arg0: i32) -> (i32, i32) {
    %c0_i32 = arith.constant 0 : i32
    %c0_i32_0 = arith.constant 0 : i32
    %c0_i32_1 = arith.constant 0 : i32
    return %c0_i32, %c0_i32_0 : i32, i32
  }
  func.func @transform_10(%arg0: i32) -> (i32, i32) {
    %c0_i32 = arith.constant 0 : i32
    %c0_i32_0 = arith.constant 0 : i32
    %c0_i32_1 = arith.constant 0 : i32
    return %c0_i32, %c0_i32_0 : i32, i32
  }
  func.func @transform_11(%arg0: i32) -> (i32, i32) {
    %c0_i32 = arith.constant 0 : i32
    %c0_i32_0 = arith.constant 0 : i32
    %c0_i32_1 = arith.constant 0 : i32
    return %c0_i32, %c0_i32_0 : i32, i32
  }
  func.func @transform_12(%arg0: i32) -> (i32, i32) {
    %c0_i32 = arith.constant 0 : i32
    %c0_i32_0 = arith.constant 0 : i32
    %c0_i32_1 = arith.constant 0 : i32
    return %c0_i32, %c0_i32_0 : i32, i32
  }
  func.func @transform_13(%arg0: i32) -> (i32, i32) {
    %c0_i32 = arith.constant 0 : i32
    %c0_i32_0 = arith.constant 0 : i32
    %c0_i32_1 = arith.constant 0 : i32
    return %c0_i32, %c0_i32_0 : i32, i32
  }
  func.func @transform_14(%arg0: i32) -> (i32, i32) {
    %c0_i32 = arith.constant 0 : i32
    %c0_i32_0 = arith.constant 0 : i32
    %c0_i32_1 = arith.constant 0 : i32
    return %c0_i32, %c0_i32_0 : i32, i32
  }
  func.func @transform_15(%arg0: i32) -> (i32, i32) {
    %c0_i32 = arith.constant 0 : i32
    %c0_i32_0 = arith.constant 0 : i32
    %c0_i32_1 = arith.constant 0 : i32
    return %c0_i32, %c0_i32_0 : i32, i32
  }
  func.func @transform_16(%arg0: i32) -> (i32, i32) {
    %c0_i32 = arith.constant 0 : i32
    %c0_i32_0 = arith.constant 0 : i32
    %c0_i32_1 = arith.constant 0 : i32
    return %c0_i32, %c0_i32_0 : i32, i32
  }
  func.func @transform_17(%arg0: i32) -> (i32, i32) {
    %c0_i32 = arith.constant 0 : i32
    %c0_i32_0 = arith.constant 0 : i32
    %c0_i32_1 = arith.constant 0 : i32
    return %c0_i32, %c0_i32_0 : i32, i32
  }
  func.func @transform_18(%arg0: i32) -> (i32, i32) {
    %c0_i32 = arith.constant 0 : i32
    %c0_i32_0 = arith.constant 0 : i32
    %c0_i32_1 = arith.constant 0 : i32
    return %c0_i32, %c0_i32_0 : i32, i32
  }
  func.func @transform_19(%arg0: i32) -> (i32, i32) {
    %c0_i32 = arith.constant 0 : i32
    %c0_i32_0 = arith.constant 0 : i32
    %c0_i32_1 = arith.constant 0 : i32
    return %c0_i32, %c0_i32_0 : i32, i32
  }
  func.func @transform_20(%arg0: i32) -> (i32, i32) {
    %c0_i32 = arith.constant 0 : i32
    %c0_i32_0 = arith.constant 0 : i32
    %c0_i32_1 = arith.constant 0 : i32
    return %c0_i32, %c0_i32_0 : i32, i32
  }
  func.func @transform_21(%arg0: i32) -> (i32, i32) {
    %c0_i32 = arith.constant 0 : i32
    %c0_i32_0 = arith.constant 0 : i32
    %c0_i32_1 = arith.constant 0 : i32
    return %c0_i32, %c0_i32_0 : i32, i32
  }
  func.func @transform_22(%arg0: i32) -> (i32, i32) {
    %c0_i32 = arith.constant 0 : i32
    %c0_i32_0 = arith.constant 0 : i32
    %c0_i32_1 = arith.constant 0 : i32
    return %c0_i32, %c0_i32_0 : i32, i32
  }
  func.func @transform_23(%arg0: i32) -> (i32, i32) {
    %c0_i32 = arith.constant 0 : i32
    %c0_i32_0 = arith.constant 0 : i32
    %c0_i32_1 = arith.constant 0 : i32
    return %c0_i32, %c0_i32_0 : i32, i32
  }
  func.func @transform_24(%arg0: i32) -> (i32, i32, i32) {
    %c0_i32 = arith.constant 0 : i32
    %c0_i32_0 = arith.constant 0 : i32
    %c0_i32_1 = arith.constant 0 : i32
    return %arg0, %c0_i32, %c0_i32_0 : i32, i32, i32
  }
}

</mosaic_0001>

<llo_original>
// kernel: unet_forward.1
$region0: #{unet_forward.1}
  #allocation0 [shape = 'u32[]', space=smem, size = 0x4, offset = 0x4, fixed_abs, tag = 'smem constant byte address 0x4 - core index']
  #allocation1 [shape = 'u32[144,128]{1,0:T(1,128)}', space=vmem, size = 0x12000, scoped, tag = 'internal scratch']
  %s0 = inlined_call_operand.vmem [shape: bf16[2,64,4], index: 0, kind: input, shape index: {}]
  %s1 = inlined_call_operand.hbm [shape: bf16[4,320], index: 1, kind: input, shape index: {}]
  %s2 = inlined_call_operand.hbm [shape: f32[2,64], index: 2, kind: input, shape index: {}]
  %s3 = inlined_call_operand.hbm [shape: bf16[64,192], index: 3, kind: input, shape index: {}]
  %s4 = inlined_call_operand.hbm [shape: f32[2,64], index: 4, kind: input, shape index: {}]
  %s5 = inlined_call_operand.hbm [shape: bf16[64,640], index: 5, kind: input, shape index: {}]
  %s6 = inlined_call_operand.hbm [shape: f32[2,128], index: 6, kind: input, shape index: {}]
  %s7 = inlined_call_operand.hbm [shape: bf16[128,384], index: 7, kind: input, shape index: {}]
  %s8 = inlined_call_operand.hbm [shape: f32[2,128], index: 8, kind: input, shape index: {}]
  %s9 = inlined_call_operand.hbm [shape: bf16[128,1280], index: 9, kind: input, shape index: {}]
  %s10 = inlined_call_operand.vmem [shape: f32[2,256], index: 10, kind: input, shape index: {}]
  %s11 = inlined_call_operand.hbm [shape: bf16[256,768], index: 11, kind: input, shape index: {}]
  %s12 = inlined_call_operand.hbm [shape: f32[2,256], index: 12, kind: input, shape index: {}]
  %s13 = inlined_call_operand.hbm [shape: bf16[256,512], index: 13, kind: input, shape index: {}]
  %s14 = inlined_call_operand.hbm [shape: f32[2,128], index: 14, kind: input, shape index: {}]
  %s15 = inlined_call_operand.vmem [shape: bf16[128,256], index: 15, kind: input, shape index: {}]
  %s16 = inlined_call_operand.hbm [shape: bf16[128,256], index: 16, kind: input, shape index: {}]
  %s17 = inlined_call_operand.vmem [shape: f32[2,64], index: 17, kind: input, shape index: {}]
  %s18 = inlined_call_operand.vmem [shape: bf16[64,128], index: 18, kind: input, shape index: {}]
  %s19 = inlined_call_operand.hbm [shape: bf16[64,128], index: 19, kind: input, shape index: {}]
  %s20 = inlined_call_operand.vmem [shape: f32[2,32], index: 20, kind: input, shape index: {}]
  %s21 = inlined_call_operand.vmem [shape: bf16[32,1], index: 21, kind: input, shape index: {}]
  %s22 = inlined_call_operand.vmem [shape: bf16[4,1], index: 22, kind: input, shape index: {}]
  %s23 = inlined_call_operand.vmem [shape: f32[2,1], index: 23, kind: input, shape index: {}]
  %s24 = inlined_call_operand.vmem [shape: f32[2,64,1], index: 24, kind: output, shape index: {}]
  %s25 = sld [smem:[#allocation0]]
  $region189: #{unet_forward.1} parent=0
    _
  %s27 = ssub.s32 1, %s25
  %s28 = scalar_select 0, %s27, %s25
  $region1: #{unet_forward.1} parent=0
    #allocation2 [shape = 'u8[3072]{0}', space=vmem, size = 0xc00, scoped, tag = 'input window, operand 1, single buffered']
    #allocation3 [shape = 's32[2]{0}', space=sflag, size = 0x8, scoped, tag = 'scoped memory for unet_forward.1']
    #allocation4 [shape = 'u8[1024]{0}', space=vmem, size = 0x400, scoped, tag = 'input window, operand 2, single buffered']
    #allocation5 [shape = 's32[1]{0}', space=sflag, size = 0x4, scoped, tag = 'scoped memory for unet_forward.1']
    #allocation6 [shape = 'u8[32768]{0}', space=vmem, size = 0x8000, scoped, tag = 'input window, operand 3, single buffered']
    #allocation7 [shape = 'u8[1024]{0}', space=vmem, size = 0x400, scoped, tag = 'input window, operand 4, single buffered']
    #allocation8 [shape = 's32[1]{0}', space=sflag, size = 0x4, scoped, tag = 'scoped memory for unet_forward.1']
    #allocation9 [shape = 'u8[81920]{0}', space=vmem, size = 0x14000, scoped, tag = 'input window, operand 5, single buffered']
    #allocation10 [shape = 'u8[1024]{0}', space=vmem, size = 0x400, scoped, tag = 'input window, operand 6, single buffered']
    #allocation11 [shape = 's32[1]{0}', space=sflag, size = 0x4, scoped, tag = 'scoped memory for unet_forward.1']
    #allocation12 [shape = 'u8[98304]{0}', space=vmem, size = 0x18000, scoped, tag = 'input window, operand 7, single buffered']
    #allocation13 [shape = 'u8[1024]{0}', space=vmem, size = 0x400, scoped, tag = 'input window, operand 8, single buffered']
    #allocation14 [shape = 's32[1]{0}', space=sflag, size = 0x4, scoped, tag = 'scoped memory for unet_forward.1']
    #allocation15 [shape = 'u8[327680]{0}', space=vmem, size = 0x50000, scoped, tag = 'input window, operand 9, single buffered']
    #allocation16 [shape = 'u8[393216]{0}', space=vmem, size = 0x60000, scoped, tag = 'input window, operand 11, single buffered']
    #allocation17 [shape = 's32[1]{0}', space=sflag, size = 0x4, scoped, tag = 'scoped memory for unet_forward.1']
    #allocation18 [shape = 'u8[2048]{0}', space=vmem, size = 0x800, scoped, tag = 'input window, operand 12, single buffered']
    #allocation19 [shape = 'u8[262144]{0}', space=vmem, size = 0x40000, scoped, tag = 'input window, operand 13, single buffered']
    #allocation20 [shape = 's32[1]{0}', space=sflag, size = 0x4, scoped, tag = 'scoped memory for unet_forward.1']
    #allocation21 [shape = 'u8[1024]{0}', space=vmem, size = 0x400, scoped, tag = 'input window, operand 14, single buffered']
    #allocation22 [shape = 'u8[65536]{0}', space=vmem, size = 0x10000, scoped, tag = 'input window, operand 16, single buffered']
    #allocation23 [shape = 's32[1]{0}', space=sflag, size = 0x4, scoped, tag = 'scoped memory for unet_forward.1']
    #allocation24 [shape = 'u8[16384]{0}', space=vmem, size = 0x4000, scoped, tag = 'input window, operand 19, single buffered']
    %29 = vsyncpa [#allocation3], 0
    %30 = vsyncpa [#allocation5], 0
    %31 = vsyncpa [#allocation8], 0
    %32 = vsyncpa [#allocation11], 0
    %33 = vsyncpa [#allocation14], 0
    %34 = vsyncpa [#allocation17], 0
    %35 = vsyncpa [#allocation20], 0
    %36 = vsyncpa [#allocation23], 0
    loop: start=0, step=1, limit=4
    $region2: #{unet_forward.1} parent=1 // loop_pre_header
      _
    $region3: #{unet_forward.1} parent=1 // loop_header
      %s38 = sphi 0, %s42
      %p39 = scmp.ge.s32.totalorder %s38, 4
      %s48 = sphi 0, %s50
      %s51 = sphi 0, %s48
      %s52 = sphi 0, %s51
      %s68 = sphi 0, %s52
      %s72 = sphi 0, %s72
      %s74 = sphi 0, %s72
      %s75 = sphi 0, %s74
      %s89 = sphi 0, %s75
      %s93 = sphi 0, %s93
      %s95 = sphi 0, %s93
      %s96 = sphi 0, %s95
      %s110 = sphi 0, %s96
      %s114 = sphi 0, %s114
      %s116 = sphi 0, %s114
      %s117 = sphi 0, %s116
      %s131 = sphi 0, %s117
      %s135 = sphi 0, %s135
      %s137 = sphi 0, %s135
      %s138 = sphi 0, %s137
      %s152 = sphi 0, %s138
      %s156 = sphi 0, %s156
      %s158 = sphi 0, %s156
      %s159 = sphi 0, %s158
      %s173 = sphi 0, %s159
      %s177 = sphi 0, %s177
      %s179 = sphi 0, %s177
      %s180 = sphi 0, %s179
      %s194 = sphi 0, %s180
      %s198 = sphi 0, %s198
      %s200 = sphi 0, %s198
      %s201 = sphi 0, %s200
      %s215 = sphi 0, %s201
      %s219 = sphi 0, %s219
      %s221 = sphi 0, %s219
      %s222 = sphi 0, %s221
      %s236 = sphi 0, %s222
      %s240 = sphi 0, %s240
      %s242 = sphi 0, %s240
      %s243 = sphi 0, %s242
      %s257 = sphi 0, %s243
      %s261 = sphi 0, %s261
      %s263 = sphi 0, %s261
      %s264 = sphi 0, %s263
      %s278 = sphi 0, %s264
      %s282 = sphi 0, %s282
      %s284 = sphi 0, %s282
      %s285 = sphi 0, %s284
      %s299 = sphi 0, %s285
      %s303 = sphi 0, %s303
      %s305 = sphi 0, %s303
      %s306 = sphi 0, %s305
      %s320 = sphi 0, %s306
      %s324 = sphi 0, %s324
      %s326 = sphi 0, %s324
      %s327 = sphi 0, %s326
      %s341 = sphi 0, %s327
      %s345 = sphi 0, %s345
      %s347 = sphi 0, %s345
      %s348 = sphi 0, %s347
      %s362 = sphi 0, %s348
      %s366 = sphi 0, %s366
      %s368 = sphi 0, %s366
      %s369 = sphi 0, %s368
      %s383 = sphi 0, %s369
      %s387 = sphi 0, %s387
      %s389 = sphi 0, %s387
      %s390 = sphi 0, %s389
      %s404 = sphi 0, %s390
      %s408 = sphi 0, %s408
      %s410 = sphi 0, %s408
      %s411 = sphi 0, %s410
      %s425 = sphi 0, %s411
      %s429 = sphi 0, %s429
      %s431 = sphi 0, %s429
      %s432 = sphi 0, %s431
      %s446 = sphi 0, %s432
      %s450 = sphi 0, %s450
      %s452 = sphi 0, %s450
      %s453 = sphi 0, %s452
      %s467 = sphi 0, %s453
      %s471 = sphi 0, %s471
      %s473 = sphi 0, %s471
      %s474 = sphi 0, %s473
      %s488 = sphi 0, %s474
      %s492 = sphi 0, %s492
      %s494 = sphi 0, %s492
      %s495 = sphi 0, %s494
      %s509 = sphi 0, %s495
      %s513 = sphi 0, %s513
      %s515 = sphi 0, %s513
      %s516 = sphi 0, %s515
      %s530 = sphi 0, %s516
      %s534 = sphi 0, %s534
      %s536 = sphi 0, %s534
      %s537 = sphi 0, %s536
      %s551 = sphi 0, %s537
      %s557 = sphi 0, %s559
      %s560 = sphi 0, %s557
      %s561 = sphi 0, %s560
      %s577 = sphi 0, %s561
    $region4: #{unet_forward.1} parent=1 // loop_header_branch
      %41 = sbr.rel (%p39) target = $region8
    $region5: #{unet_forward.1} parent=1 // loop_body
      %s43 = ssub.s32 %s38, 1
      %s44 = ssub.s32 %s38, 2
      %s45 = sadd.s32 %s38, 1
      %s46 = ssub.s32 %s38, %s45
      %p47 = scmp.eq.s32.totalorder %s46, 0
      %s49 = sadd.s32 %s48, 1
      %s50 = scalar_select %p47, %s48, %s49
      %p53 = pneg %p47
      %p54 = scmp.eq.s32.totalorder %s38, 1
      %p55 = por %p53, %p54
      %p56 = scmp.ne.s32.totalorder %s48, %s51
      %p57 = scmp.eq.s32.totalorder %s38, 0
      %p58 = por %p56, %p57
      %p59 = scmp.ne.s32.totalorder %s48, %s51
      %p60 = scmp.eq.s32.totalorder %s43, 1
      %p61 = por %p59, %p60
      %p62 = scmp.ne.s32.totalorder %s51, %s52
      %p63 = scmp.eq.s32.totalorder %s43, 0
      %p64 = por %p62, %p63
      %p65 = scmp.ne.s32.totalorder %s51, %s52
      %p66 = scmp.eq.s32.totalorder %s44, 1
      %p67 = por %p65, %p66
      %p69 = scmp.ne.s32.totalorder %s52, %s68
      %p70 = scmp.eq.s32.totalorder %s44, 0
      %p71 = por %p69, %p70
      %s73 = sadd.s32 %s72, 1
      %p76 = scmp.eq.s32.totalorder %s38, 1
      %p77 = scmp.ne.s32.totalorder %s72, %s74
      %p78 = scmp.eq.s32.totalorder %s38, 0
      %p79 = por %p77, %p78
      %p80 = scmp.ne.s32.totalorder %s72, %s74
      %p81 = scmp.eq.s32.totalorder %s43, 1
      %p82 = por %p80, %p81
      %p83 = scmp.ne.s32.totalorder %s74, %s75
      %p84 = scmp.eq.s32.totalorder %s43, 0
      %p85 = por %p83, %p84
      %p86 = scmp.ne.s32.totalorder %s74, %s75
      %p87 = scmp.eq.s32.totalorder %s44, 1
      %p88 = por %p86, %p87
      %p90 = scmp.ne.s32.totalorder %s75, %s89
      %p91 = scmp.eq.s32.totalorder %s44, 0
      %p92 = por %p90, %p91
      %s94 = sadd.s32 %s93, 1
      %p97 = scmp.eq.s32.totalorder %s38, 1
      %p98 = scmp.ne.s32.totalorder %s93, %s95
      %p99 = scmp.eq.s32.totalorder %s38, 0
      %p100 = por %p98, %p99
      %p101 = scmp.ne.s32.totalorder %s93, %s95
      %p102 = scmp.eq.s32.totalorder %s43, 1
      %p103 = por %p101, %p102
      %p104 = scmp.ne.s32.totalorder %s95, %s96
      %p105 = scmp.eq.s32.totalorder %s43, 0
      %p106 = por %p104, %p105
      %p107 = scmp.ne.s32.totalorder %s95, %s96
      %p108 = scmp.eq.s32.totalorder %s44, 1
      %p109 = por %p107, %p108
      %p111 = scmp.ne.s32.totalorder %s96, %s110
      %p112 = scmp.eq.s32.totalorder %s44, 0
      %p113 = por %p111, %p112
      %s115 = sadd.s32 %s114, 1
      %p118 = scmp.eq.s32.totalorder %s38, 1
      %p119 = scmp.ne.s32.totalorder %s114, %s116
      %p120 = scmp.eq.s32.totalorder %s38, 0
      %p121 = por %p119, %p120
      %p122 = scmp.ne.s32.totalorder %s114, %s116
      %p123 = scmp.eq.s32.totalorder %s43, 1
      %p124 = por %p122, %p123
      %p125 = scmp.ne.s32.totalorder %s116, %s117
      %p126 = scmp.eq.s32.totalorder %s43, 0
      %p127 = por %p125, %p126
      %p128 = scmp.ne.s32.totalorder %s116, %s117
      %p129 = scmp.eq.s32.totalorder %s44, 1
      %p130 = por %p128, %p129
      %p132 = scmp.ne.s32.totalorder %s117, %s131
      %p133 = scmp.eq.s32.totalorder %s44, 0
      %p134 = por %p132, %p133
      %s136 = sadd.s32 %s135, 1
      %p139 = scmp.eq.s32.totalorder %s38, 1
      %p140 = scmp.ne.s32.totalorder %s135, %s137
      %p141 = scmp.eq.s32.totalorder %s38, 0
      %p142 = por %p140, %p141
      %p143 = scmp.ne.s32.totalorder %s135, %s137
      %p144 = scmp.eq.s32.totalorder %s43, 1
      %p145 = por %p143, %p144
      %p146 = scmp.ne.s32.totalorder %s137, %s138
      %p147 = scmp.eq.s32.totalorder %s43, 0
      %p148 = por %p146, %p147
      %p149 = scmp.ne.s32.totalorder %s137, %s138
      %p150 = scmp.eq.s32.totalorder %s44, 1
      %p151 = por %p149, %p150
      %p153 = scmp.ne.s32.totalorder %s138, %s152
      %p154 = scmp.eq.s32.totalorder %s44, 0
      %p155 = por %p153, %p154
      %s157 = sadd.s32 %s156, 1
      %p160 = scmp.eq.s32.totalorder %s38, 1
      %p161 = scmp.ne.s32.totalorder %s156, %s158
      %p162 = scmp.eq.s32.totalorder %s38, 0
      %p163 = por %p161, %p162
      %p164 = scmp.ne.s32.totalorder %s156, %s158
      %p165 = scmp.eq.s32.totalorder %s43, 1
      %p166 = por %p164, %p165
      %p167 = scmp.ne.s32.totalorder %s158, %s159
      %p168 = scmp.eq.s32.totalorder %s43, 0
      %p169 = por %p167, %p168
      %p170 = scmp.ne.s32.totalorder %s158, %s159
      %p171 = scmp.eq.s32.totalorder %s44, 1
      %p172 = por %p170, %p171
      %p174 = scmp.ne.s32.totalorder %s159, %s173
      %p175 = scmp.eq.s32.totalorder %s44, 0
      %p176 = por %p174, %p175
      %s178 = sadd.s32 %s177, 1
      %p181 = scmp.eq.s32.totalorder %s38, 1
      %p182 = scmp.ne.s32.totalorder %s177, %s179
      %p183 = scmp.eq.s32.totalorder %s38, 0
      %p184 = por %p182, %p183
      %p185 = scmp.ne.s32.totalorder %s177, %s179
      %p186 = scmp.eq.s32.totalorder %s43, 1
      %p187 = por %p185, %p186
      %p188 = scmp.ne.s32.totalorder %s179, %s180
      %p189 = scmp.eq.s32.totalorder %s43, 0
      %p190 = por %p188, %p189
      %p191 = scmp.ne.s32.totalorder %s179, %s180
      %p192 = scmp.eq.s32.totalorder %s44, 1
      %p193 = por %p191, %p192
      %p195 = scmp.ne.s32.totalorder %s180, %s194
      %p196 = scmp.eq.s32.totalorder %s44, 0
      %p197 = por %p195, %p196
      %s199 = sadd.s32 %s198, 1
      %p202 = scmp.eq.s32.totalorder %s38, 1
      %p203 = scmp.ne.s32.totalorder %s198, %s200
      %p204 = scmp.eq.s32.totalorder %s38, 0
      %p205 = por %p203, %p204
      %p206 = scmp.ne.s32.totalorder %s198, %s200
      %p207 = scmp.eq.s32.totalorder %s43, 1
      %p208 = por %p206, %p207
      %p209 = scmp.ne.s32.totalorder %s200, %s201
      %p210 = scmp.eq.s32.totalorder %s43, 0
      %p211 = por %p209, %p210
      %p212 = scmp.ne.s32.totalorder %s200, %s201
      %p213 = scmp.eq.s32.totalorder %s44, 1
      %p214 = por %p212, %p213
      %p216 = scmp.ne.s32.totalorder %s201, %s215
      %p217 = scmp.eq.s32.totalorder %s44, 0
      %p218 = por %p216, %p217
      %s220 = sadd.s32 %s219, 1
      %p223 = scmp.eq.s32.totalorder %s38, 1
      %p224 = scmp.ne.s32.totalorder %s219, %s221
      %p225 = scmp.eq.s32.totalorder %s38, 0
      %p226 = por %p224, %p225
      %p227 = scmp.ne.s32.totalorder %s219, %s221
      %p228 = scmp.eq.s32.totalorder %s43, 1
      %p229 = por %p227, %p228
      %p230 = scmp.ne.s32.totalorder %s221, %s222
      %p231 = scmp.eq.s32.totalorder %s43, 0
      %p232 = por %p230, %p231
      %p233 = scmp.ne.s32.totalorder %s221, %s222
      %p234 = scmp.eq.s32.totalorder %s44, 1
      %p235 = por %p233, %p234
      %p237 = scmp.ne.s32.totalorder %s222, %s236
      %p238 = scmp.eq.s32.totalorder %s44, 0
      %p239 = por %p237, %p238
      %s241 = sadd.s32 %s240, 1
      %p244 = scmp.eq.s32.totalorder %s38, 1
      %p245 = scmp.ne.s32.totalorder %s240, %s242
      %p246 = scmp.eq.s32.totalorder %s38, 0
      %p247 = por %p245, %p246
      %p248 = scmp.ne.s32.totalorder %s240, %s242
      %p249 = scmp.eq.s32.totalorder %s43, 1
      %p250 = por %p248, %p249
      %p251 = scmp.ne.s32.totalorder %s242, %s243
      %p252 = scmp.eq.s32.totalorder %s43, 0
      %p253 = por %p251, %p252
      %p254 = scmp.ne.s32.totalorder %s242, %s243
      %p255 = scmp.eq.s32.totalorder %s44, 1
      %p256 = por %p254, %p255
      %p258 = scmp.ne.s32.totalorder %s243, %s257
      %p259 = scmp.eq.s32.totalorder %s44, 0
      %p260 = por %p258, %p259
      %s262 = sadd.s32 %s261, 1
      %p265 = scmp.eq.s32.totalorder %s38, 1
      %p266 = scmp.ne.s32.totalorder %s261, %s263
      %p267 = scmp.eq.s32.totalorder %s38, 0
      %p268 = por %p266, %p267
      %p269 = scmp.ne.s32.totalorder %s261, %s263
      %p270 = scmp.eq.s32.totalorder %s43, 1
      %p271 = por %p269, %p270
      %p272 = scmp.ne.s32.totalorder %s263, %s264
      %p273 = scmp.eq.s32.totalorder %s43, 0
      %p274 = por %p272, %p273
      %p275 = scmp.ne.s32.totalorder %s263, %s264
      %p276 = scmp.eq.s32.totalorder %s44, 1
      %p277 = por %p275, %p276
      %p279 = scmp.ne.s32.totalorder %s264, %s278
      %p280 = scmp.eq.s32.totalorder %s44, 0
      %p281 = por %p279, %p280
      %s283 = sadd.s32 %s282, 1
      %p286 = scmp.eq.s32.totalorder %s38, 1
      %p287 = scmp.ne.s32.totalorder %s282, %s284
      %p288 = scmp.eq.s32.totalorder %s38, 0
      %p289 = por %p287, %p288
      %p290 = scmp.ne.s32.totalorder %s282, %s284
      %p291 = scmp.eq.s32.totalorder %s43, 1
      %p292 = por %p290, %p291
      %p293 = scmp.ne.s32.totalorder %s284, %s285
      %p294 = scmp.eq.s32.totalorder %s43, 0
      %p295 = por %p293, %p294
      %p296 = scmp.ne.s32.totalorder %s284, %s285
      %p297 = scmp.eq.s32.totalorder %s44, 1
      %p298 = por %p296, %p297
      %p300 = scmp.ne.s32.totalorder %s285, %s299
      %p301 = scmp.eq.s32.totalorder %s44, 0
      %p302 = por %p300, %p301
      %s304 = sadd.s32 %s303, 1
      %p307 = scmp.eq.s32.totalorder %s38, 1
      %p308 = scmp.ne.s32.totalorder %s303, %s305
      %p309 = scmp.eq.s32.totalorder %s38, 0
      %p310 = por %p308, %p309
      %p311 = scmp.ne.s32.totalorder %s303, %s305
      %p312 = scmp.eq.s32.totalorder %s43, 1
      %p313 = por %p311, %p312
      %p314 = scmp.ne.s32.totalorder %s305, %s306
      %p315 = scmp.eq.s32.totalorder %s43, 0
      %p316 = por %p314, %p315
      %p317 = scmp.ne.s32.totalorder %s305, %s306
      %p318 = scmp.eq.s32.totalorder %s44, 1
      %p319 = por %p317, %p318
      %p321 = scmp.ne.s32.totalorder %s306, %s320
      %p322 = scmp.eq.s32.totalorder %s44, 0
      %p323 = por %p321, %p322
      %s325 = sadd.s32 %s324, 1
      %p328 = scmp.eq.s32.totalorder %s38, 1
      %p329 = scmp.ne.s32.totalorder %s324, %s326
      %p330 = scmp.eq.s32.totalorder %s38, 0
      %p331 = por %p329, %p330
      %p332 = scmp.ne.s32.totalorder %s324, %s326
      %p333 = scmp.eq.s32.totalorder %s43, 1
      %p334 = por %p332, %p333
      %p335 = scmp.ne.s32.totalorder %s326, %s327
      %p336 = scmp.eq.s32.totalorder %s43, 0
      %p337 = por %p335, %p336
      %p338 = scmp.ne.s32.totalorder %s326, %s327
      %p339 = scmp.eq.s32.totalorder %s44, 1
      %p340 = por %p338, %p339
      %p342 = scmp.ne.s32.totalorder %s327, %s341
      %p343 = scmp.eq.s32.totalorder %s44, 0
      %p344 = por %p342, %p343
      %s346 = sadd.s32 %s345, 1
      %p349 = scmp.eq.s32.totalorder %s38, 1
      %p350 = scmp.ne.s32.totalorder %s345, %s347
      %p351 = scmp.eq.s32.totalorder %s38, 0
      %p352 = por %p350, %p351
      %p353 = scmp.ne.s32.totalorder %s345, %s347
      %p354 = scmp.eq.s32.totalorder %s43, 1
      %p355 = por %p353, %p354
      %p356 = scmp.ne.s32.totalorder %s347, %s348
      %p357 = scmp.eq.s32.totalorder %s43, 0
      %p358 = por %p356, %p357
      %p359 = scmp.ne.s32.totalorder %s347, %s348
      %p360 = scmp.eq.s32.totalorder %s44, 1
      %p361 = por %p359, %p360
      %p363 = scmp.ne.s32.totalorder %s348, %s362
      %p364 = scmp.eq.s32.totalorder %s44, 0
      %p365 = por %p363, %p364
      %s367 = sadd.s32 %s366, 1
      %p370 = scmp.eq.s32.totalorder %s38, 1
      %p371 = scmp.ne.s32.totalorder %s366, %s368
      %p372 = scmp.eq.s32.totalorder %s38, 0
      %p373 = por %p371, %p372
      %p374 = scmp.ne.s32.totalorder %s366, %s368
      %p375 = scmp.eq.s32.totalorder %s43, 1
      %p376 = por %p374, %p375
      %p377 = scmp.ne.s32.totalorder %s368, %s369
      %p378 = scmp.eq.s32.totalorder %s43, 0
      %p379 = por %p377, %p378
      %p380 = scmp.ne.s32.totalorder %s368, %s369
      %p381 = scmp.eq.s32.totalorder %s44, 1
      %p382 = por %p380, %p381
      %p384 = scmp.ne.s32.totalorder %s369, %s383
      %p385 = scmp.eq.s32.totalorder %s44, 0
      %p386 = por %p384, %p385
      %s388 = sadd.s32 %s387, 1
      %p391 = scmp.eq.s32.totalorder %s38, 1
      %p392 = scmp.ne.s32.totalorder %s387, %s389
      %p393 = scmp.eq.s32.totalorder %s38, 0
      %p394 = por %p392, %p393
      %p395 = scmp.ne.s32.totalorder %s387, %s389
      %p396 = scmp.eq.s32.totalorder %s43, 1
      %p397 = por %p395, %p396
      %p398 = scmp.ne.s32.totalorder %s389, %s390
      %p399 = scmp.eq.s32.totalorder %s43, 0
      %p400 = por %p398, %p399
      %p401 = scmp.ne.s32.totalorder %s389, %s390
      %p402 = scmp.eq.s32.totalorder %s44, 1
      %p403 = por %p401, %p402
      %p405 = scmp.ne.s32.totalorder %s390, %s404
      %p406 = scmp.eq.s32.totalorder %s44, 0
      %p407 = por %p405, %p406
      %s409 = sadd.s32 %s408, 1
      %p412 = scmp.eq.s32.totalorder %s38, 1
      %p413 = scmp.ne.s32.totalorder %s408, %s410
      %p414 = scmp.eq.s32.totalorder %s38, 0
      %p415 = por %p413, %p414
      %p416 = scmp.ne.s32.totalorder %s408, %s410
      %p417 = scmp.eq.s32.totalorder %s43, 1
      %p418 = por %p416, %p417
      %p419 = scmp.ne.s32.totalorder %s410, %s411
      %p420 = scmp.eq.s32.totalorder %s43, 0
      %p421 = por %p419, %p420
      %p422 = scmp.ne.s32.totalorder %s410, %s411
      %p423 = scmp.eq.s32.totalorder %s44, 1
      %p424 = por %p422, %p423
      %p426 = scmp.ne.s32.totalorder %s411, %s425
      %p427 = scmp.eq.s32.totalorder %s44, 0
      %p428 = por %p426, %p427
      %s430 = sadd.s32 %s429, 1
      %p433 = scmp.eq.s32.totalorder %s38, 1
      %p434 = scmp.ne.s32.totalorder %s429, %s431
      %p435 = scmp.eq.s32.totalorder %s38, 0
      %p436 = por %p434, %p435
      %p437 = scmp.ne.s32.totalorder %s429, %s431
      %p438 = scmp.eq.s32.totalorder %s43, 1
      %p439 = por %p437, %p438
      %p440 = scmp.ne.s32.totalorder %s431, %s432
      %p441 = scmp.eq.s32.totalorder %s43, 0
      %p442 = por %p440, %p441
      %p443 = scmp.ne.s32.totalorder %s431, %s432
      %p444 = scmp.eq.s32.totalorder %s44, 1
      %p445 = por %p443, %p444
      %p447 = scmp.ne.s32.totalorder %s432, %s446
      %p448 = scmp.eq.s32.totalorder %s44, 0
      %p449 = por %p447, %p448
      %s451 = sadd.s32 %s450, 1
      %p454 = scmp.eq.s32.totalorder %s38, 1
      %p455 = scmp.ne.s32.totalorder %s450, %s452
      %p456 = scmp.eq.s32.totalorder %s38, 0
      %p457 = por %p455, %p456
      %p458 = scmp.ne.s32.totalorder %s450, %s452
      %p459 = scmp.eq.s32.totalorder %s43, 1
      %p460 = por %p458, %p459
      %p461 = scmp.ne.s32.totalorder %s452, %s453
      %p462 = scmp.eq.s32.totalorder %s43, 0
      %p463 = por %p461, %p462
      %p464 = scmp.ne.s32.totalorder %s452, %s453
      %p465 = scmp.eq.s32.totalorder %s44, 1
      %p466 = por %p464, %p465
      %p468 = scmp.ne.s32.totalorder %s453, %s467
      %p469 = scmp.eq.s32.totalorder %s44, 0
      %p470 = por %p468, %p469
      %s472 = sadd.s32 %s471, 1
      %p475 = scmp.eq.s32.totalorder %s38, 1
      %p476 = scmp.ne.s32.totalorder %s471, %s473
      %p477 = scmp.eq.s32.totalorder %s38, 0
      %p478 = por %p476, %p477
      %p479 = scmp.ne.s32.totalorder %s471, %s473
      %p480 = scmp.eq.s32.totalorder %s43, 1
      %p481 = por %p479, %p480
      %p482 = scmp.ne.s32.totalorder %s473, %s474
      %p483 = scmp.eq.s32.totalorder %s43, 0
      %p484 = por %p482, %p483
      %p485 = scmp.ne.s32.totalorder %s473, %s474
      %p486 = scmp.eq.s32.totalorder %s44, 1
      %p487 = por %p485, %p486
      %p489 = scmp.ne.s32.totalorder %s474, %s488
      %p490 = scmp.eq.s32.totalorder %s44, 0
      %p491 = por %p489, %p490
      %s493 = sadd.s32 %s492, 1
      %p496 = scmp.eq.s32.totalorder %s38, 1
      %p497 = scmp.ne.s32.totalorder %s492, %s494
      %p498 = scmp.eq.s32.totalorder %s38, 0
      %p499 = por %p497, %p498
      %p500 = scmp.ne.s32.totalorder %s492, %s494
      %p501 = scmp.eq.s32.totalorder %s43, 1
      %p502 = por %p500, %p501
      %p503 = scmp.ne.s32.totalorder %s494, %s495
      %p504 = scmp.eq.s32.totalorder %s43, 0
      %p505 = por %p503, %p504
      %p506 = scmp.ne.s32.totalorder %s494, %s495
      %p507 = scmp.eq.s32.totalorder %s44, 1
      %p508 = por %p506, %p507
      %p510 = scmp.ne.s32.totalorder %s495, %s509
      %p511 = scmp.eq.s32.totalorder %s44, 0
      %p512 = por %p510, %p511
      %s514 = sadd.s32 %s513, 1
      %p517 = scmp.eq.s32.totalorder %s38, 1
      %p518 = scmp.ne.s32.totalorder %s513, %s515
      %p519 = scmp.eq.s32.totalorder %s38, 0
      %p520 = por %p518, %p519
      %p521 = scmp.ne.s32.totalorder %s513, %s515
      %p522 = scmp.eq.s32.totalorder %s43, 1
      %p523 = por %p521, %p522
      %p524 = scmp.ne.s32.totalorder %s515, %s516
      %p525 = scmp.eq.s32.totalorder %s43, 0
      %p526 = por %p524, %p525
      %p527 = scmp.ne.s32.totalorder %s515, %s516
      %p528 = scmp.eq.s32.totalorder %s44, 1
      %p529 = por %p527, %p528
      %p531 = scmp.ne.s32.totalorder %s516, %s530
      %p532 = scmp.eq.s32.totalorder %s44, 0
      %p533 = por %p531, %p532
      %s535 = sadd.s32 %s534, 1
      %p538 = scmp.eq.s32.totalorder %s38, 1
      %p539 = scmp.ne.s32.totalorder %s534, %s536
      %p540 = scmp.eq.s32.totalorder %s38, 0
      %p541 = por %p539, %p540
      %p542 = scmp.ne.s32.totalorder %s534, %s536
      %p543 = scmp.eq.s32.totalorder %s43, 1
      %p544 = por %p542, %p543
      %p545 = scmp.ne.s32.totalorder %s536, %s537
      %p546 = scmp.eq.s32.totalorder %s43, 0
      %p547 = por %p545, %p546
      %p548 = scmp.ne.s32.totalorder %s536, %s537
      %p549 = scmp.eq.s32.totalorder %s44, 1
      %p550 = por %p548, %p549
      %p552 = scmp.ne.s32.totalorder %s537, %s551
      %p553 = scmp.eq.s32.totalorder %s44, 0
      %p554 = por %p552, %p553
      %s555 = ssub.s32 %s38, %s45
      %p556 = scmp.eq.s32.totalorder %s555, 0
      %s558 = sadd.s32 %s557, 1
      %s559 = scalar_select %p556, %s557, %s558
      %p562 = pneg %p556
      %p563 = scmp.eq.s32.totalorder %s38, 1
      %p564 = por %p562, %p563
      %p565 = scmp.ne.s32.totalorder %s557, %s560
      %p566 = scmp.eq.s32.totalorder %s38, 0
      %p567 = por %p565, %p566
      %p568 = scmp.ne.s32.totalorder %s557, %s560
      %p569 = scmp.eq.s32.totalorder %s43, 1
      %p570 = por %p568, %p569
      %p571 = scmp.ne.s32.totalorder %s560, %s561
      %p572 = scmp.eq.s32.totalorder %s43, 0
      %p573 = por %p571, %p572
      %p574 = scmp.ne.s32.totalorder %s560, %s561
      %p575 = scmp.eq.s32.totalorder %s44, 1
      %p576 = por %p574, %p575
      %p578 = scmp.ne.s32.totalorder %s561, %s577
      %p579 = scmp.eq.s32.totalorder %s44, 0
      %p580 = por %p578, %p579
      %p581 = scmp.le.s32.totalorder 1, %s38
      %p582 = scmp.lt.s32.totalorder %s38, 3
      %p583 = pnand %p581, %p582
      %p584 = pneg %p583
      // Predicated region
      $region9: #{unet_forward.1} parent=5 // pred_check
        _
      $region10: #{unet_forward.1} parent=5 // pred_check_branch
        %586 = sbr.rel (%p583) target = $region12
      $region11: #{unet_forward.1} parent=5 // pred_region
        %s587 = ssub.s32 %s38, 1
        // Predicated region
        $region13: #{unet_forward.1} parent=11 // pred_check
          %p588 = pneg %p85
        $region14: #{unet_forward.1} parent=11 // pred_check_branch
          %590 = sbr.rel (%p588) target = $region16
        $region15: #{unet_forward.1} parent=11 // pred_region
          %s592 = ssub.s32 96, 96
          %593 = vsyncadd [#allocation3], %s592
          %s595 = sshll.u32 [#allocation2], 4
          %s596 = int_to_ptr.vmem [resolvable:$true] %s595
          %598 = dma.hbm_to_vmem [thread:$0]  %s1, 96, %s596, [#allocation3]
        $region16: #{unet_forward.1} parent=11 // pred_fallthru
          _
        // Predicated region
        $region17: #{unet_forward.1} parent=11 // pred_check
          %p599 = pneg %p106
        $region18: #{unet_forward.1} parent=11 // pred_check_branch
          %601 = sbr.rel (%p599) target = $region20
        $region19: #{unet_forward.1} parent=11 // pred_region
          %s603 = ssub.s32 32, 32
          %604 = vsyncadd [#allocation5], %s603
          %s606 = sshll.u32 [#allocation4], 4
          %s607 = int_to_ptr.vmem [resolvable:$true] %s606
          %609 = dma.hbm_to_vmem [thread:$0]  %s2, 32, %s607, [#allocation5]
        $region20: #{unet_forward.1} parent=11 // pred_fallthru
          _
        // Predicated region
        $region21: #{unet_forward.1} parent=11 // pred_check
          %p610 = pneg %p127
        $region22: #{unet_forward.1} parent=11 // pred_check_branch
          %612 = sbr.rel (%p610) target = $region24
        $region23: #{unet_forward.1} parent=11 // pred_region
          %s614 = ssub.s32 1024, 1024
          %615 = vsyncadd [#allocation5], %s614
          %s616 = sshll.u32 [#allocation6], 4
          %s617 = int_to_ptr.vmem [resolvable:$true] %s616
          %622 = dma.hbm_to_vmem [thread:$0]  %s3, 1024, %s617, [#allocation5], 128, 128, 8
        $region24: #{unet_forward.1} parent=11 // pred_fallthru
          _
        // Predicated region
        $region25: #{unet_forward.1} parent=11 // pred_check
          %p623 = pneg %p148
        $region26: #{unet_forward.1} parent=11 // pred_check_branch
          %625 = sbr.rel (%p623) target = $region28
        $region27: #{unet_forward.1} parent=11 // pred_region
          %s627 = ssub.s32 32, 32
          %628 = vsyncadd [#allocation8], %s627
          %s630 = sshll.u32 [#allocation7], 4
          %s631 = int_to_ptr.vmem [resolvable:$true] %s630
          %633 = dma.hbm_to_vmem [thread:$0]  %s4, 32, %s631, [#allocation8]
        $region28: #{unet_forward.1} parent=11 // pred_fallthru
          _
        // Predicated region
        $region29: #{unet_forward.1} parent=11 // pred_check
          %p634 = pneg %p169
        $region30: #{unet_forward.1} parent=11 // pred_check_branch
          %636 = sbr.rel (%p634) target = $region32
        $region31: #{unet_forward.1} parent=11 // pred_region
          %s638 = ssub.s32 2560, 2560
          %639 = vsyncadd [#allocation8], %s638
          %s640 = sshll.u32 [#allocation9], 4
          %s641 = int_to_ptr.vmem [resolvable:$true] %s640
          %646 = dma.hbm_to_vmem [thread:$0]  %s5, 2560, %s641, [#allocation8], 320, 320, 20
        $region32: #{unet_forward.1} parent=11 // pred_fallthru
          _
        // Predicated region
        $region33: #{unet_forward.1} parent=11 // pred_check
          %p647 = pneg %p190
        $region34: #{unet_forward.1} parent=11 // pred_check_branch
          %649 = sbr.rel (%p647) target = $region36
        $region35: #{unet_forward.1} parent=11 // pred_region
          %s651 = ssub.s32 32, 32
          %652 = vsyncadd [#allocation11], %s651
          %s654 = sshll.u32 [#allocation10], 4
          %s655 = int_to_ptr.vmem [resolvable:$true] %s654
          %657 = dma.hbm_to_vmem [thread:$0]  %s6, 32, %s655, [#allocation11]
        $region36: #{unet_forward.1} parent=11 // pred_fallthru
          _
        // Predicated region
        $region37: #{unet_forward.1} parent=11 // pred_check
          %p658 = pneg %p211
        $region38: #{unet_forward.1} parent=11 // pred_check_branch
          %660 = sbr.rel (%p658) target = $region40
        $region39: #{unet_forward.1} parent=11 // pred_region
          %s662 = ssub.s32 3072, 3072
          %663 = vsyncadd [#allocation11], %s662
          %s664 = sshll.u32 [#allocation12], 4
          %s665 = int_to_ptr.vmem [resolvable:$true] %s664
          %670 = dma.hbm_to_vmem [thread:$0]  %s7, 3072, %s665, [#allocation11], 192, 192, 12
        $region40: #{unet_forward.1} parent=11 // pred_fallthru
          _
        // Predicated region
        $region41: #{unet_forward.1} parent=11 // pred_check
          %p671 = pneg %p232
        $region42: #{unet_forward.1} parent=11 // pred_check_branch
          %673 = sbr.rel (%p671) target = $region44
        $region43: #{unet_forward.1} parent=11 // pred_region
          %s675 = ssub.s32 32, 32
          %676 = vsyncadd [#allocation14], %s675
          %s678 = sshll.u32 [#allocation13], 4
          %s679 = int_to_ptr.vmem [resolvable:$true] %s678
          %681 = dma.hbm_to_vmem [thread:$0]  %s8, 32, %s679, [#allocation14]
        $region44: #{unet_forward.1} parent=11 // pred_fallthru
          _
        // Predicated region
        $region45: #{unet_forward.1} parent=11 // pred_check
          %p682 = pneg %p253
        $region46: #{unet_forward.1} parent=11 // pred_check_branch
          %684 = sbr.rel (%p682) target = $region48
        $region47: #{unet_forward.1} parent=11 // pred_region
          %s686 = ssub.s32 10240, 10240
          %687 = vsyncadd [#allocation14], %s686
          %s688 = sshll.u32 [#allocation15], 4
          %s689 = int_to_ptr.vmem [resolvable:$true] %s688
          %694 = dma.hbm_to_vmem [thread:$0]  %s9, 10240, %s689, [#allocation14], 640, 640, 40
        $region48: #{unet_forward.1} parent=11 // pred_fallthru
          _
        // Predicated region
        $region49: #{unet_forward.1} parent=11 // pred_check
          %p695 = pneg %p274
        $region50: #{unet_forward.1} parent=11 // pred_check_branch
          %697 = sbr.rel (%p695) target = $region52
        $region51: #{unet_forward.1} parent=11 // pred_region
          _
        $region52: #{unet_forward.1} parent=11 // pred_fallthru
          _
        // Predicated region
        $region53: #{unet_forward.1} parent=11 // pred_check
          %p698 = pneg %p295
        $region54: #{unet_forward.1} parent=11 // pred_check_branch
          %700 = sbr.rel (%p698) target = $region56
        $region55: #{unet_forward.1} parent=11 // pred_region
          %s702 = ssub.s32 12288, 12288
          %703 = vsyncadd [#allocation17], %s702
          %s704 = sshll.u32 [#allocation16], 4
          %s705 = int_to_ptr.vmem [resolvable:$true] %s704
          %710 = dma.hbm_to_vmem [thread:$0]  %s11, 12288, %s705, [#allocation17], 384, 384, 24
        $region56: #{unet_forward.1} parent=11 // pred_fallthru
          _
        // Predicated region
        $region57: #{unet_forward.1} parent=11 // pred_check
          %p711 = pneg %p316
        $region58: #{unet_forward.1} parent=11 // pred_check_branch
          %713 = sbr.rel (%p711) target = $region60
        $region59: #{unet_forward.1} parent=11 // pred_region
          %s715 = ssub.s32 64, 64
          %716 = vsyncadd [#allocation17], %s715
          %s718 = sshll.u32 [#allocation18], 4
          %s719 = int_to_ptr.vmem [resolvable:$true] %s718
          %721 = dma.hbm_to_vmem [thread:$0]  %s12, 64, %s719, [#allocation17]
        $region60: #{unet_forward.1} parent=11 // pred_fallthru
          _
        // Predicated region
        $region61: #{unet_forward.1} parent=11 // pred_check
          %p722 = pneg %p337
        $region62: #{unet_forward.1} parent=11 // pred_check_branch
          %724 = sbr.rel (%p722) target = $region64
        $region63: #{unet_forward.1} parent=11 // pred_region
          %s726 = ssub.s32 8192, 8192
          %727 = vsyncadd [#allocation20], %s726
          %s728 = sshll.u32 [#allocation19], 4
          %s729 = int_to_ptr.vmem [resolvable:$true] %s728
          %734 = dma.hbm_to_vmem [thread:$0]  %s13, 8192, %s729, [#allocation20], 256, 256, 16
        $region64: #{unet_forward.1} parent=11 // pred_fallthru
          _
        // Predicated region
        $region65: #{unet_forward.1} parent=11 // pred_check
          %p735 = pneg %p358
        $region66: #{unet_forward.1} parent=11 // pred_check_branch
          %737 = sbr.rel (%p735) target = $region68
        $region67: #{unet_forward.1} parent=11 // pred_region
          %s739 = ssub.s32 32, 32
          %740 = vsyncadd [#allocation20], %s739
          %s742 = sshll.u32 [#allocation21], 4
          %s743 = int_to_ptr.vmem [resolvable:$true] %s742
          %745 = dma.hbm_to_vmem [thread:$0]  %s14, 32, %s743, [#allocation20]
        $region68: #{unet_forward.1} parent=11 // pred_fallthru
          _
        // Predicated region
        $region69: #{unet_forward.1} parent=11 // pred_check
          %p746 = pneg %p379
        $region70: #{unet_forward.1} parent=11 // pred_check_branch
          %748 = sbr.rel (%p746) target = $region72
        $region71: #{unet_forward.1} parent=11 // pred_region
          _
        $region72: #{unet_forward.1} parent=11 // pred_fallthru
          _
        // Predicated region
        $region73: #{unet_forward.1} parent=11 // pred_check
          %p749 = pneg %p400
        $region74: #{unet_forward.1} parent=11 // pred_check_branch
          %751 = sbr.rel (%p749) target = $region76
        $region75: #{unet_forward.1} parent=11 // pred_region
          %s753 = ssub.s32 2048, 2048
          %754 = vsyncadd [#allocation23], %s753
          %s755 = sshll.u32 [#allocation22], 4
          %s756 = int_to_ptr.vmem [resolvable:$true] %s755
          %761 = dma.hbm_to_vmem [thread:$0]  %s16, 2048, %s756, [#allocation23], 128, 128, 8
        $region76: #{unet_forward.1} parent=11 // pred_fallthru
          _
        // Predicated region
        $region77: #{unet_forward.1} parent=11 // pred_check
          %p762 = pneg %p421
        $region78: #{unet_forward.1} parent=11 // pred_check_branch
          %764 = sbr.rel (%p762) target = $region80
        $region79: #{unet_forward.1} parent=11 // pred_region
          _
        $region80: #{unet_forward.1} parent=11 // pred_fallthru
          _
        // Predicated region
        $region81: #{unet_forward.1} parent=11 // pred_check
          %p765 = pneg %p442
        $region82: #{unet_forward.1} parent=11 // pred_check_branch
          %767 = sbr.rel (%p765) target = $region84
        $region83: #{unet_forward.1} parent=11 // pred_region
          _
        $region84: #{unet_forward.1} parent=11 // pred_fallthru
          _
        // Predicated region
        $region85: #{unet_forward.1} parent=11 // pred_check
          %p768 = pneg %p463
        $region86: #{unet_forward.1} parent=11 // pred_check_branch
          %770 = sbr.rel (%p768) target = $region88
        $region87: #{unet_forward.1} parent=11 // pred_region
          %s772 = ssub.s32 512, 512
          %773 = vsyncadd [#allocation23], %s772
          %s774 = sshll.u32 [#allocation24], 4
          %s775 = int_to_ptr.vmem [resolvable:$true] %s774
          %780 = dma.hbm_to_vmem [thread:$0]  %s19, 512, %s775, [#allocation23], 64, 64, 4
        $region88: #{unet_forward.1} parent=11 // pred_fallthru
          _
        // Predicated region
        $region89: #{unet_forward.1} parent=11 // pred_check
          %p781 = pneg %p484
        $region90: #{unet_forward.1} parent=11 // pred_check_branch
          %783 = sbr.rel (%p781) target = $region92
        $region91: #{unet_forward.1} parent=11 // pred_region
          _
        $region92: #{unet_forward.1} parent=11 // pred_fallthru
          _
        // Predicated region
        $region93: #{unet_forward.1} parent=11 // pred_check
          %p784 = pneg %p505
        $region94: #{unet_forward.1} parent=11 // pred_check_branch
          %786 = sbr.rel (%p784) target = $region96
        $region95: #{unet_forward.1} parent=11 // pred_region
          _
        $region96: #{unet_forward.1} parent=11 // pred_fallthru
          _
        // Predicated region
        $region97: #{unet_forward.1} parent=11 // pred_check
          %p787 = pneg %p526
        $region98: #{unet_forward.1} parent=11 // pred_check_branch
          %789 = sbr.rel (%p787) target = $region100
        $region99: #{unet_forward.1} parent=11 // pred_region
          _
        $region100: #{unet_forward.1} parent=11 // pred_fallthru
          _
        // Predicated region
        $region101: #{unet_forward.1} parent=11 // pred_check
          %p790 = pneg %p547
        $region102: #{unet_forward.1} parent=11 // pred_check_branch
          %792 = sbr.rel (%p790) target = $region104
        $region103: #{unet_forward.1} parent=11 // pred_region
          _
        $region104: #{unet_forward.1} parent=11 // pred_fallthru
          _
      $region12: #{unet_forward.1} parent=5 // pred_fallthru
        _
      %p793 = scmp.lt.s32.totalorder %s38, 2
      // Predicated region
      $region105: #{unet_forward.1} parent=5 // pred_check
        %p794 = pneg %p793
      $region106: #{unet_forward.1} parent=5 // pred_check_branch
        %796 = sbr.rel (%p794) target = $region108
      $region107: #{unet_forward.1} parent=5 // pred_region
        // Predicated region
        $region109: #{unet_forward.1} parent=107 // pred_check
          %p797 = pneg %p58
        $region110: #{unet_forward.1} parent=107 // pred_check_branch
          %799 = sbr.rel (%p797) target = $region112
        $region111: #{unet_forward.1} parent=107 // pred_region
          %p800 = scmp.lt.s32.totalorder %s38, 1
          %s801 = scalar_select %p800, %s38, 1
          %s802 = smul.addr %s801, 8
          %s803 = smul.addr %s802, 4
          %s804 = scalar_lea.vmem %s0, %s803
        $region112: #{unet_forward.1} parent=107 // pred_fallthru
          _
      $region108: #{unet_forward.1} parent=5 // pred_fallthru
        _
      %p805 = scmp.le.s32.totalorder 1, %s38
      %p806 = scmp.lt.s32.totalorder %s38, 3
      %p807 = pnand %p805, %p806
      %p808 = pneg %p807
      // Predicated region
      $region113: #{unet_forward.1} parent=5 // pred_check
        _
      $region114: #{unet_forward.1} parent=5 // pred_check_branch
        %810 = sbr.rel (%p807) target = $region116
      $region115: #{unet_forward.1} parent=5 // pred_region
        %s811 = ssub.s32 %s38, 1
        // Predicated region
        $region117: #{unet_forward.1} parent=115 // pred_check
          %p812 = pneg %p85
        $region118: #{unet_forward.1} parent=115 // pred_check_branch
          %814 = sbr.rel (%p812) target = $region120
        $region119: #{unet_forward.1} parent=115 // pred_region
          %815 = dma.done [#allocation3], 96
        $region120: #{unet_forward.1} parent=115 // pred_fallthru
          _
        // Predicated region
        $region121: #{unet_forward.1} parent=115 // pred_check
          %p816 = pneg %p106
        $region122: #{unet_forward.1} parent=115 // pred_check_branch
          %818 = sbr.rel (%p816) target = $region124
        $region123: #{unet_forward.1} parent=115 // pred_region
          %819 = dma.done [#allocation5], 32
        $region124: #{unet_forward.1} parent=115 // pred_fallthru
          _
        // Predicated region
        $region125: #{unet_forward.1} parent=115 // pred_check
          %p820 = pneg %p127
        $region126: #{unet_forward.1} parent=115 // pred_check_branch
          %822 = sbr.rel (%p820) target = $region128
        $region127: #{unet_forward.1} parent=115 // pred_region
          %823 = dma.done [#allocation5], 1024
        $region128: #{unet_forward.1} parent=115 // pred_fallthru
          _
        // Predicated region
        $region129: #{unet_forward.1} parent=115 // pred_check
          %p824 = pneg %p148
        $region130: #{unet_forward.1} parent=115 // pred_check_branch
          %826 = sbr.rel (%p824) target = $region132
        $region131: #{unet_forward.1} parent=115 // pred_region
          %827 = dma.done [#allocation8], 32
        $region132: #{unet_forward.1} parent=115 // pred_fallthru
          _
        // Predicated region
        $region133: #{unet_forward.1} parent=115 // pred_check
          %p828 = pneg %p169
        $region134: #{unet_forward.1} parent=115 // pred_check_branch
          %830 = sbr.rel (%p828) target = $region136
        $region135: #{unet_forward.1} parent=115 // pred_region
          %831 = dma.done [#allocation8], 2560
        $region136: #{unet_forward.1} parent=115 // pred_fallthru
          _
        // Predicated region
        $region137: #{unet_forward.1} parent=115 // pred_check
          %p832 = pneg %p190
        $region138: #{unet_forward.1} parent=115 // pred_check_branch
          %834 = sbr.rel (%p832) target = $region140
        $region139: #{unet_forward.1} parent=115 // pred_region
          %835 = dma.done [#allocation11], 32
        $region140: #{unet_forward.1} parent=115 // pred_fallthru
          _
        // Predicated region
        $region141: #{unet_forward.1} parent=115 // pred_check
          %p836 = pneg %p211
        $region142: #{unet_forward.1} parent=115 // pred_check_branch
          %838 = sbr.rel (%p836) target = $region144
        $region143: #{unet_forward.1} parent=115 // pred_region
          %839 = dma.done [#allocation11], 3072
        $region144: #{unet_forward.1} parent=115 // pred_fallthru
          _
        // Predicated region
        $region145: #{unet_forward.1} parent=115 // pred_check
          %p840 = pneg %p232
        $region146: #{unet_forward.1} parent=115 // pred_check_branch
          %842 = sbr.rel (%p840) target = $region148
        $region147: #{unet_forward.1} parent=115 // pred_region
          %843 = dma.done [#allocation14], 32
        $region148: #{unet_forward.1} parent=115 // pred_fallthru
          _
        // Predicated region
        $region149: #{unet_forward.1} parent=115 // pred_check
          %p844 = pneg %p253
        $region150: #{unet_forward.1} parent=115 // pred_check_branch
          %846 = sbr.rel (%p844) target = $region152
        $region151: #{unet_forward.1} parent=115 // pred_region
          %847 = dma.done [#allocation14], 10240
        $region152: #{unet_forward.1} parent=115 // pred_fallthru
          _
        // Predicated region
        $region153: #{unet_forward.1} parent=115 // pred_check
          %p848 = pneg %p295
        $region154: #{unet_forward.1} parent=115 // pred_check_branch
          %850 = sbr.rel (%p848) target = $region156
        $region155: #{unet_forward.1} parent=115 // pred_region
          %851 = dma.done [#allocation17], 12288
        $region156: #{unet_forward.1} parent=115 // pred_fallthru
          _
        // Predicated region
        $region157: #{unet_forward.1} parent=115 // pred_check
          %p852 = pneg %p316
        $region158: #{unet_forward.1} parent=115 // pred_check_branch
          %854 = sbr.rel (%p852) target = $region160
        $region159: #{unet_forward.1} parent=115 // pred_region
          %855 = dma.done [#allocation17], 64
        $region160: #{unet_forward.1} parent=115 // pred_fallthru
          _
        // Predicated region
        $region161: #{unet_forward.1} parent=115 // pred_check
          %p856 = pneg %p337
        $region162: #{unet_forward.1} parent=115 // pred_check_branch
          %858 = sbr.rel (%p856) target = $region164
        $region163: #{unet_forward.1} parent=115 // pred_region
          %859 = dma.done [#allocation20], 8192
        $region164: #{unet_forward.1} parent=115 // pred_fallthru
          _
        // Predicated region
        $region165: #{unet_forward.1} parent=115 // pred_check
          %p860 = pneg %p358
        $region166: #{unet_forward.1} parent=115 // pred_check_branch
          %862 = sbr.rel (%p860) target = $region168
        $region167: #{unet_forward.1} parent=115 // pred_region
          %863 = dma.done [#allocation20], 32
        $region168: #{unet_forward.1} parent=115 // pred_fallthru
          _
        // Predicated region
        $region169: #{unet_forward.1} parent=115 // pred_check
          %p864 = pneg %p400
        $region170: #{unet_forward.1} parent=115 // pred_check_branch
          %866 = sbr.rel (%p864) target = $region172
        $region171: #{unet_forward.1} parent=115 // pred_region
          %867 = dma.done [#allocation23], 2048
        $region172: #{unet_forward.1} parent=115 // pred_fallthru
          _
        // Predicated region
        $region173: #{unet_forward.1} parent=115 // pred_check
          %p868 = pneg %p463
        $region174: #{unet_forward.1} parent=115 // pred_check_branch
          %870 = sbr.rel (%p868) target = $region176
        $region175: #{unet_forward.1} parent=115 // pred_region
          %871 = dma.done [#allocation23], 512
        $region176: #{unet_forward.1} parent=115 // pred_fallthru
          _
        %p872 = scmp.lt.s32.totalorder %s43, 1
        %s873 = scalar_select %p872, %s43, 1
        %s874 = smul.addr %s873, 8
        %s875 = smul.addr %s874, 4
        %s876 = scalar_lea.vmem %s0, %s875
        %p877 = pneg %p64
        %p878 = pneg %p61
        %p879 = pneg %p85
        %p880 = pneg %p82
        %p881 = pneg %p106
        %p882 = pneg %p103
        %p883 = pneg %p127
        %p884 = pneg %p124
        %p885 = pneg %p148
        %p886 = pneg %p145
        %p887 = pneg %p169
        %p888 = pneg %p166
        %p889 = pneg %p190
        %p890 = pneg %p187
        %p891 = pneg %p211
        %p892 = pneg %p208
        %p893 = pneg %p232
        %p894 = pneg %p229
        %p895 = pneg %p253
        %p896 = pneg %p250
        %p897 = pneg %p274
        %p898 = pneg %p271
        %p899 = pneg %p295
        %p900 = pneg %p292
        %p901 = pneg %p316
        %p902 = pneg %p313
        %p903 = pneg %p337
        %p904 = pneg %p334
        %p905 = pneg %p358
        %p906 = pneg %p355
        %p907 = pneg %p379
        %p908 = pneg %p376
        %p909 = pneg %p400
        %p910 = pneg %p397
        %p911 = pneg %p421
        %p912 = pneg %p418
        %p913 = pneg %p442
        %p914 = pneg %p439
        %p915 = pneg %p463
        %p916 = pneg %p460
        %p917 = pneg %p484
        %p918 = pneg %p481
        %p919 = pneg %p505
        %p920 = pneg %p502
        %p921 = pneg %p526
        %p922 = pneg %p523
        %p923 = pneg %p547
        %p924 = pneg %p544
        %p925 = pneg %p573
        %p926 = pneg %p570
        %p927 = scmp.lt.s32.totalorder %s43, 1
        %s928 = scalar_select %p927, %s43, 1
        %s929 = smul.addr %s928, 8
        %s930 = smul.addr %s929, 8
        %s931 = scalar_lea.vmem %s24, %s930
        %p932 = scmp.lt.s32.totalorder %s43, 1
        %s933 = scalar_select %p932, %s43, 1
        %s934 = smul.addr %s933, 8
        %s935 = smul.addr %s934, 4
        %s936 = scalar_lea.vmem %s0, %s935
        %p937 = scmp.lt.s32.totalorder %s43, 1
        %s938 = scalar_select %p937, %s43, 1
        %s939 = smul.addr %s938, 8
        %s940 = smul.addr %s939, 8
        %s941 = scalar_lea.vmem %s24, %s940
        %v943 = vld [vmem:[%s936] sm:$0xf]
        %v944 = vld [vmem:[%s936 + $0x4] sm:$0xf]
        %v945 = vld [vmem:[%s936 + $0x8] sm:$0xf]
        %v946 = vld [vmem:[%s936 + $0xc] sm:$0xf]
        %v947 = vld [vmem:[%s936 + $0x10] sm:$0xf]
        %v948 = vld [vmem:[%s936 + $0x14] sm:$0xf]
        %v949 = vld [vmem:[%s936 + $0x18] sm:$0xf]
        %v950 = vld [vmem:[%s936 + $0x1c] sm:$0xf]
        %v951 = vld [vmem:[#allocation2] sm:$0x3f]
        %v960 = vunpack.c.l.b16 %v943
        %v961 = vunpack.c.l.b16 %v944
        %v962 = vunpack.c.l.b16 %v945
        %v963 = vunpack.c.l.b16 %v946
        %v964 = vunpack.c.l.b16 %v947
        %v965 = vunpack.c.l.b16 %v948
        %v966 = vunpack.c.l.b16 %v949
        %v967 = vunpack.c.l.b16 %v950
        %v968 = vpack.c.b16 %v961, %v960
        %v969 = vpack.c.b16 %v963, %v962
        %v970 = vpack.c.b16 %v965, %v964
        %v971 = vpack.c.b16 %v967, %v966
        %v973 = vcombine.high %v951, %v951
        %v975 = vunpack.c.l.s4 1983009808
        %v976 = vunpack.c.0.s8 %v975
        %v977 = vlaneseq
        %v978 = vshrl.u32 %v977, 7
        %v979 = vsub.s32 %v976, %v978
        %v980 = vrot.slane %v951, %v979
        %v982 = vunpack.c.l.s4 1983009808
        %v983 = vunpack.c.0.s8 %v982
        %v984 = vlaneseq
        %v985 = vshrl.u32 %v984, 7
        %v986 = vsub.s32 %v983, %v985
        %v987 = vrot.slane %v973, %v986
        %v988 = vcombine.high %v980, %v980
        %vm989 = vcmask 31744
        %v991 = vsel %vm989, %v968, 0
        %v994 = vsel %vm989, %v969, 0
        %v997 = vsel %vm989, %v970, 0
        %v1000 = vsel %vm989, %v971, 0
        %vm1002 = vcmask 1041408
        %v1004 = vsel %vm1002, %v980, 0
        %v1007 = vsel %vm1002, %v988, 0
        %v1010 = vsel %vm1002, %v987, 0
        %1012 = vmatprep.subr.bf16.mxu0 %v1007
        %1013 = vmatpush1.bf16.msra.mxu0 %v1004
        %1014 = vmatprep.subr.bf16.mxu0 0
        %1015 = vmatpush1.bf16.msra.mxu0 0
        %1016 = vmatprep.subr.bf16.mxu0 0
        %1017 = vmatpush1.bf16.msra.mxu0 0
        %1018 = vmatprep.subr.bf16.mxu0 0
        %1019 = vmatpush1.bf16.msra.mxu0 0
        %1020 = vmatprep.subr.bf16.mxu0 0
        %1021 = vmatpush1.bf16.msra.mxu0 0
        %1022 = vmatprep.subr.bf16.mxu0 0
        %1023 = vmatpush1.bf16.msra.mxu0 0
        %1024 = vmatprep.subr.bf16.mxu0 0
        %1025 = vmatpush1.bf16.msra.mxu0 0
        %1026 = vmatprep.subr.bf16.mxu0 0
        %1027 = vmatpush1.bf16.msra.mxu0 0
        %1028 = vmatprep.subr.bf16.mxu0 0
        %1029 = vmatpush1.bf16.msra.mxu0 0
        %1030 = vmatprep.subr.bf16.mxu0 0
        %1031 = vmatpush1.bf16.msra.mxu0 0
        %1032 = vmatprep.subr.bf16.mxu0 0
        %1033 = vmatpush1.bf16.msra.mxu0 0
        %1034 = vmatprep.subr.bf16.mxu0 0
        %1035 = vmatpush1.bf16.msra.mxu0 0
        %1036 = vmatprep.subr.bf16.mxu0 0
        %1037 = vmatpush1.bf16.msra.mxu0 0
        %1038 = vmatprep.subr.bf16.mxu0 0
        %1039 = vmatpush1.bf16.msra.mxu0 0
        %1040 = vmatprep.subr.bf16.mxu0 0
        %1041 = vmatpush1.bf16.msra.mxu0 0
        %1042 = vmatprep.subr.bf16.mxu0 0
        %1043 = vmatpush1.bf16.msra.mxu0 0
        %1044 = vmatprep.mubr.bf16.mxu0 0
        %1045 = vmatmul.mubr.bf16.gmra.mrb[0].mxu0 %v991
        %v1046 = vpop.f32.mrb[0].mxu0
        %v1047 = vadd.f32 0.0, %v1046
        %v1048 = vpop.f32.mrb[0].mxu0
        %v1049 = vadd.f32 0.0, %v1048
        %v1050 = vpop.f32.mrb[0].mxu0
        %v1051 = vadd.f32 0.0, %v1050
        %v1052 = vpop.f32.mrb[0].mxu0
        %v1053 = vadd.f32 0.0, %v1052
        %1054 = vmatprep.mubr.bf16.mxu0 0
        %1055 = vmatmul.mubr.bf16.gmra.mrb[0].mxu0 %v994
        %v1056 = vpop.f32.mrb[0].mxu0
        %v1057 = vadd.f32 0.0, %v1056
        %v1058 = vpop.f32.mrb[0].mxu0
        %v1059 = vadd.f32 0.0, %v1058
        %v1060 = vpop.f32.mrb[0].mxu0
        %v1061 = vadd.f32 0.0, %v1060
        %v1062 = vpop.f32.mrb[0].mxu0
        %v1063 = vadd.f32 0.0, %v1062
        %1064 = vmatprep.mubr.bf16.mxu0 0
        %1065 = vmatmul.mubr.bf16.gmra.mrb[0].mxu0 %v997
        %v1066 = vpop.f32.mrb[0].mxu0
        %v1067 = vadd.f32 0.0, %v1066
        %v1068 = vpop.f32.mrb[0].mxu0
        %v1069 = vadd.f32 0.0, %v1068
        %v1070 = vpop.f32.mrb[0].mxu0
        %v1071 = vadd.f32 0.0, %v1070
        %v1072 = vpop.f32.mrb[0].mxu0
        %v1073 = vadd.f32 0.0, %v1072
        %1074 = vmatprep.mubr.bf16.mxu0 0
        %1075 = vmatmul.mubr.bf16.gmra.mrb[0].mxu0 %v1000
        %v1076 = vpop.f32.mrb[0].mxu0
        %v1077 = vadd.f32 0.0, %v1076
        %v1078 = vpop.f32.mrb[0].mxu0
        %v1079 = vadd.f32 0.0, %v1078
        %v1080 = vpop.f32.mrb[0].mxu0
        %v1081 = vadd.f32 0.0, %v1080
        %v1082 = vpop.f32.mrb[0].mxu0
        %v1083 = vadd.f32 0.0, %v1082
        %1084 = vdwg.mxu0
        %1085 = vmatprep.subr.bf16.mxu0 0
        %1086 = vmatpush1.bf16.msra.mxu0 %v1010
        %1087 = vmatprep.subr.bf16.mxu0 0
        %1088 = vmatpush1.bf16.msra.mxu0 0
        %1089 = vmatprep.subr.bf16.mxu0 0
        %1090 = vmatpush1.bf16.msra.mxu0 0
        %1091 = vmatprep.subr.bf16.mxu0 0
        %1092 = vmatpush1.bf16.msra.mxu0 0
        %1093 = vmatprep.subr.bf16.mxu0 0
        %1094 = vmatpush1.bf16.msra.mxu0 0
        %1095 = vmatprep.subr.bf16.mxu0 0
        %1096 = vmatpush1.bf16.msra.mxu0 0
        %1097 = vmatprep.subr.bf16.mxu0 0
        %1098 = vmatpush1.bf16.msra.mxu0 0
        %1099 = vmatprep.subr.bf16.mxu0 0
        %1100 = vmatpush1.bf16.msra.mxu0 0
        %1101 = vmatprep.subr.bf16.mxu0 0
        %1102 = vmatpush1.bf16.msra.mxu0 0
        %1103 = vmatprep.subr.bf16.mxu0 0
        %1104 = vmatpush1.bf16.msra.mxu0 0
        %1105 = vmatprep.subr.bf16.mxu0 0
        %1106 = vmatpush1.bf16.msra.mxu0 0
        %1107 = vmatprep.subr.bf16.mxu0 0
        %1108 = vmatpush1.bf16.msra.mxu0 0
        %1109 = vmatprep.subr.bf16.mxu0 0
        %1110 = vmatpush1.bf16.msra.mxu0 0
        %1111 = vmatprep.subr.bf16.mxu0 0
        %1112 = vmatpush1.bf16.msra.mxu0 0
        %1113 = vmatprep.subr.bf16.mxu0 0
        %1114 = vmatpush1.bf16.msra.mxu0 0
        %1115 = vmatprep.subr.bf16.mxu0 0
        %1116 = vmatpush1.bf16.msra.mxu0 0
        %1117 = vmatprep.mubr.bf16.mxu0 0
        %1118 = vmatmul.mubr.bf16.gmra.mrb[0].mxu0 %v991
        %v1119 = vpop.f32.mrb[0].mxu0
        %v1120 = vadd.f32 0.0, %v1119
        %v1121 = vpop.f32.mrb[0].mxu0
        %v1122 = vpop.f32.mrb[0].mxu0
        %v1123 = vadd.f32 0.0, %v1122
        %v1124 = vpop.f32.mrb[0].mxu0
        %1125 = vmatprep.mubr.bf16.mxu0 0
        %1126 = vmatmul.mubr.bf16.gmra.mrb[0].mxu0 %v994
        %v1127 = vpop.f32.mrb[0].mxu0
        %v1128 = vadd.f32 0.0, %v1127
        %v1129 = vpop.f32.mrb[0].mxu0
        %v1130 = vpop.f32.mrb[0].mxu0
        %v1131 = vadd.f32 0.0, %v1130
        %v1132 = vpop.f32.mrb[0].mxu0
        %1133 = vmatprep.mubr.bf16.mxu0 0
        %1134 = vmatmul.mubr.bf16.gmra.mrb[0].mxu0 %v997
        %v1135 = vpop.f32.mrb[0].mxu0
        %v1136 = vadd.f32 0.0, %v1135
        %v1137 = vpop.f32.mrb[0].mxu0
        %v1138 = vpop.f32.mrb[0].mxu0
        %v1139 = vadd.f32 0.0, %v1138
        %v1140 = vpop.f32.mrb[0].mxu0
        %1141 = vmatprep.mubr.bf16.mxu0 0
        %1142 = vmatmul.mubr.bf16.gmra.mrb[0].mxu0 %v1000
        %v1143 = vpop.f32.mrb[0].mxu0
        %v1144 = vadd.f32 0.0, %v1143
        %v1145 = vpop.f32.mrb[0].mxu0
        %v1146 = vpop.f32.mrb[0].mxu0
        %v1147 = vadd.f32 0.0, %v1146
        %v1148 = vpop.f32.mrb[0].mxu0
        %1149 = vdwg.mxu0
        %v1150 = vlaneseq
        %v1151 = vshrl.u32 %v1150, 7
        %v1152 = vadd.s32 %v1151, 8
        %v1153 = vadd.s32 %v1151, 16
        %v1154 = vadd.s32 %v1151, 24
        %v1155 = vadd.s32 %v1151, 32
        %v1156 = vadd.s32 %v1151, 40
        %v1157 = vadd.s32 %v1151, 48
        %v1158 = vadd.s32 %v1151, 56
        %v1159 = vlaneseq
        %v1160 = vand.u32 %v1159, 127
        %v1161 = vadd.s32 %v1151, 4294967294
        %v1162 = vadd.s32 %v1152, 4294967294
        %v1163 = vadd.s32 %v1153, 4294967294
        %v1164 = vadd.s32 %v1154, 4294967294
        %v1165 = vadd.s32 %v1155, 4294967294
        %v1166 = vadd.s32 %v1156, 4294967294
        %v1167 = vadd.s32 %v1157, 4294967294
        %v1168 = vadd.s32 %v1158, 4294967294
        %vm1169 = vcmp.eq.s32.totalorder %v1160, %v1161
        %vm1170 = vcmp.eq.s32.totalorder %v1160, %v1162
        %vm1171 = vcmp.eq.s32.totalorder %v1160, %v1163
        %vm1172 = vcmp.eq.s32.totalorder %v1160, %v1164
        %vm1173 = vcmp.eq.s32.totalorder %v1160, %v1165
        %vm1174 = vcmp.eq.s32.totalorder %v1160, %v1166
        %vm1175 = vcmp.eq.s32.totalorder %v1160, %v1167
        %vm1176 = vcmp.eq.s32.totalorder %v1160, %v1168
        %v1177 = vsel %vm1169, 1.0, 0.0
        %v1178 = vsel %vm1170, 1.0, 0.0
        %v1179 = vsel %vm1171, 1.0, 0.0
        %v1180 = vsel %vm1172, 1.0, 0.0
        %v1181 = vsel %vm1173, 1.0, 0.0
        %v1182 = vsel %vm1174, 1.0, 0.0
        %v1183 = vsel %vm1175, 1.0, 0.0
        %v1184 = vsel %vm1176, 1.0, 0.0
        %v1185 = vadd.s32 %v1151, 4294967295
        %v1186 = vadd.s32 %v1152, 4294967295
        %v1187 = vadd.s32 %v1153, 4294967295
        %v1188 = vadd.s32 %v1154, 4294967295
        %v1189 = vadd.s32 %v1155, 4294967295
        %v1190 = vadd.s32 %v1156, 4294967295
        %v1191 = vadd.s32 %v1157, 4294967295
        %v1192 = vadd.s32 %v1158, 4294967295
        %vm1193 = vcmp.eq.s32.totalorder %v1160, %v1185
        %vm1194 = vcmp.eq.s32.totalorder %v1160, %v1186
        %vm1195 = vcmp.eq.s32.totalorder %v1160, %v1187
        %vm1196 = vcmp.eq.s32.totalorder %v1160, %v1188
        %vm1197 = vcmp.eq.s32.totalorder %v1160, %v1189
        %vm1198 = vcmp.eq.s32.totalorder %v1160, %v1190
        %vm1199 = vcmp.eq.s32.totalorder %v1160, %v1191
        %vm1200 = vcmp.eq.s32.totalorder %v1160, %v1192
        %v1201 = vsel %vm1193, 1.0, 0.0
        %v1202 = vsel %vm1194, 1.0, 0.0
        %v1203 = vsel %vm1195, 1.0, 0.0
        %v1204 = vsel %vm1196, 1.0, 0.0
        %v1205 = vsel %vm1197, 1.0, 0.0
        %v1206 = vsel %vm1198, 1.0, 0.0
        %v1207 = vsel %vm1199, 1.0, 0.0
        %v1208 = vsel %vm1200, 1.0, 0.0
        %1217 = vrot.lane.b32.xlu0 %v1047, 64
        %v1218 = vpop.permute.xlu0 %1217
        %1219 = vrot.lane.b32.xlu0 %v1051, 64
        %v1220 = vpop.permute.xlu0 %1219
        %1221 = vrot.lane.b32.xlu0 %v1057, 64
        %v1222 = vpop.permute.xlu0 %1221
        %1223 = vrot.lane.b32.xlu0 %v1061, 64
        %v1224 = vpop.permute.xlu0 %1223
        %1225 = vrot.lane.b32.xlu0 %v1067, 64
        %v1226 = vpop.permute.xlu0 %1225
        %1227 = vrot.lane.b32.xlu0 %v1071, 64
        %v1228 = vpop.permute.xlu0 %1227
        %1229 = vrot.lane.b32.xlu0 %v1077, 64
        %v1230 = vpop.permute.xlu0 %1229
        %1231 = vrot.lane.b32.xlu0 %v1081, 64
        %v1232 = vpop.permute.xlu0 %1231
        %vm1241 = vcmask 523264
        %v1243 = vsel %vm1241, %v1201, 0
        %v1246 = vsel %vm1241, %v1202, 0
        %v1249 = vsel %vm1241, %v1203, 0
        %v1252 = vsel %vm1241, %v1204, 0
        %v1255 = vsel %vm1241, %v1205, 0
        %v1258 = vsel %vm1241, %v1206, 0
        %v1261 = vsel %vm1241, %v1207, 0
        %v1264 = vsel %vm1241, %v1208, 0
        %1266 = vmatprep.subr.mxu0 0.0
        %1267 = vmatpush1.msra.mxu0 %v1218
        %1268 = vmatprep.subr.mxu0 0.0
        %1269 = vmatpush1.msra.mxu0 %v1220
        %1270 = vmatprep.subr.mxu0 0.0
        %1271 = vmatpush1.msra.mxu0 %v1222
        %1272 = vmatprep.subr.mxu0 0.0
        %1273 = vmatpush1.msra.mxu0 %v1224
        %1274 = vmatprep.subr.mxu0 0.0
        %1275 = vmatpush1.msra.mxu0 %v1226
        %1276 = vmatprep.subr.mxu0 0.0
        %1277 = vmatpush1.msra.mxu0 %v1228
        %1278 = vmatprep.subr.mxu0 0.0
        %1279 = vmatpush1.msra.mxu0 %v1230
        %1280 = vmatprep.subr.mxu0 0.0
        %1281 = vmatpush1.msra.mxu0 %v1232
        %1282 = vmatprep.subr.mxu0 0.0
        %1283 = vmatpush1.msra.mxu0 0.0
        %1284 = vmatprep.subr.mxu0 0.0
        %1285 = vmatpush1.msra.mxu0 0.0
        %1286 = vmatprep.subr.mxu0 0.0
        %1287 = vmatpush1.msra.mxu0 0.0
        %1288 = vmatprep.subr.mxu0 0.0
        %1289 = vmatpush1.msra.mxu0 0.0
        %1290 = vmatprep.subr.mxu0 0.0
        %1291 = vmatpush1.msra.mxu0 0.0
        %1292 = vmatprep.subr.mxu0 0.0
        %1293 = vmatpush1.msra.mxu0 0.0
        %1294 = vmatprep.subr.mxu0 0.0
        %1295 = vmatpush1.msra.mxu0 0.0
        %1296 = vmatprep.subr.mxu0 0.0
        %1297 = vmatpush1.msra.mxu0 0.0
        %1298 = vmatprep.subr.mxu0 0.0
        %1299 = vmatpush1.msra.mxu0 0.0
        %1300 = vmatprep.subr.mxu0 0.0
        %1301 = vmatpush1.msra.mxu0 0.0
        %1302 = vmatprep.subr.mxu0 0.0
        %1303 = vmatpush1.msra.mxu0 0.0
        %1304 = vmatprep.subr.mxu0 0.0
        %1305 = vmatpush1.msra.mxu0 0.0
        %1306 = vmatprep.subr.mxu0 0.0
        %1307 = vmatpush1.msra.mxu0 0.0
        %1308 = vmatprep.subr.mxu0 0.0
        %1309 = vmatpush1.msra.mxu0 0.0
        %1310 = vmatprep.subr.mxu0 0.0
        %1311 = vmatpush1.msra.mxu0 0.0
        %1312 = vmatprep.subr.mxu0 0.0
        %1313 = vmatpush1.msra.mxu0 0.0
        %1314 = vmatprep.subr.mxu0 0.0
        %1315 = vmatpush1.msra.mxu0 0.0
        %1316 = vmatprep.subr.mxu0 0.0
        %1317 = vmatpush1.msra.mxu0 0.0
        %1318 = vmatprep.subr.mxu0 0.0
        %1319 = vmatpush1.msra.mxu0 0.0
        %1320 = vmatprep.subr.mxu0 0.0
        %1321 = vmatpush1.msra.mxu0 0.0
        %1322 = vmatprep.subr.mxu0 0.0
        %1323 = vmatpush1.msra.mxu0 0.0
        %1324 = vmatprep.subr.mxu0 0.0
        %1325 = vmatpush1.msra.mxu0 0.0
        %1326 = vmatprep.subr.mxu0 0.0
        %1327 = vmatpush1.msra.mxu0 0.0
        %1328 = vmatprep.subr.mxu0 0.0
        %1329 = vmatpush1.msra.mxu0 0.0
        %1330 = vmatprep.mubr.f32.mxu0 0.0
        %1331 = vmatmul.mubr.f32.gmra.mrb[0].mxu0 %v1243
        %v1332 = vpop.f32.mrb[0].mxu0
        %v1333 = vadd.f32 0.0, %v1332
        %v1334 = vpop.f32.mrb[0].mxu0
        %1335 = vmatprep.mubr.f32.mxu0 0.0
        %1336 = vmatmul.mubr.f32.gmra.mrb[0].mxu0 %v1246
        %v1337 = vpop.f32.mrb[0].mxu0
        %v1338 = vadd.f32 0.0, %v1337
        %v1339 = vpop.f32.mrb[0].mxu0
        %1340 = vmatprep.mubr.f32.mxu0 0.0
        %1341 = vmatmul.mubr.f32.gmra.mrb[0].mxu0 %v1249
        %v1342 = vpop.f32.mrb[0].mxu0
        %v1343 = vadd.f32 0.0, %v1342
        %v1344 = vpop.f32.mrb[0].mxu0
        %1345 = vmatprep.mubr.f32.mxu0 0.0
        %1346 = vmatmul.mubr.f32.gmra.mrb[0].mxu0 %v1252
        %v1347 = vpop.f32.mrb[0].mxu0
        %v1348 = vadd.f32 0.0, %v1347
        %v1349 = vpop.f32.mrb[0].mxu0
        %1350 = vmatprep.mubr.f32.mxu0 0.0
        %1351 = vmatmul.mubr.f32.gmra.mrb[0].mxu0 %v1255
        %v1352 = vpop.f32.mrb[0].mxu0
        %v1353 = vadd.f32 0.0, %v1352
        %v1354 = vpop.f32.mrb[0].mxu0
        %1355 = vmatprep.mubr.f32.mxu0 0.0
        %1356 = vmatmul.mubr.f32.gmra.mrb[0].mxu0 %v1258
        %v1357 = vpop.f32.mrb[0].mxu0
        %v1358 = vadd.f32 0.0, %v1357
        %v1359 = vpop.f32.mrb[0].mxu0
        %1360 = vmatprep.mubr.f32.mxu0 0.0
        %1361 = vmatmul.mubr.f32.gmra.mrb[0].mxu0 %v1261
        %v1362 = vpop.f32.mrb[0].mxu0
        %v1363 = vadd.f32 0.0, %v1362
        %v1364 = vpop.f32.mrb[0].mxu0
        %1365 = vmatprep.mubr.f32.mxu0 0.0
        %1366 = vmatmul.mubr.f32.gmra.mrb[0].mxu0 %v1264
        %v1367 = vpop.f32.mrb[0].mxu0
        %v1368 = vadd.f32 0.0, %v1367
        %v1369 = vpop.f32.mrb[0].mxu0
        %1370 = vdwg.mxu0
        %v1372 = vsel %vm1241, %v1177, 0
        %v1375 = vsel %vm1241, %v1178, 0
        %v1378 = vsel %vm1241, %v1179, 0
        %v1381 = vsel %vm1241, %v1180, 0
        %v1384 = vsel %vm1241, %v1181, 0
        %v1387 = vsel %vm1241, %v1182, 0
        %v1390 = vsel %vm1241, %v1183, 0
        %v1393 = vsel %vm1241, %v1184, 0
        %1395 = vmatprep.subr.mxu0 0.0
        %1396 = vmatpush1.msra.mxu0 %v1047
        %1397 = vmatprep.subr.mxu0 0.0
        %1398 = vmatpush1.msra.mxu0 %v1051
        %1399 = vmatprep.subr.mxu0 0.0
        %1400 = vmatpush1.msra.mxu0 %v1057
        %1401 = vmatprep.subr.mxu0 0.0
        %1402 = vmatpush1.msra.mxu0 %v1061
        %1403 = vmatprep.subr.mxu0 0.0
        %1404 = vmatpush1.msra.mxu0 %v1067
        %1405 = vmatprep.subr.mxu0 0.0
        %1406 = vmatpush1.msra.mxu0 %v1071
        %1407 = vmatprep.subr.mxu0 0.0
        %1408 = vmatpush1.msra.mxu0 %v1077
        %1409 = vmatprep.subr.mxu0 0.0
        %1410 = vmatpush1.msra.mxu0 %v1081
        %1411 = vmatprep.subr.mxu0 0.0
        %1412 = vmatpush1.msra.mxu0 0.0
        %1413 = vmatprep.subr.mxu0 0.0
        %1414 = vmatpush1.msra.mxu0 0.0
        %1415 = vmatprep.subr.mxu0 0.0
        %1416 = vmatpush1.msra.mxu0 0.0
        %1417 = vmatprep.subr.mxu0 0.0
        %1418 = vmatpush1.msra.mxu0 0.0
        %1419 = vmatprep.subr.mxu0 0.0
        %1420 = vmatpush1.msra.mxu0 0.0
        %1421 = vmatprep.subr.mxu0 0.0
        %1422 = vmatpush1.msra.mxu0 0.0
        %1423 = vmatprep.subr.mxu0 0.0
        %1424 = vmatpush1.msra.mxu0 0.0
        %1425 = vmatprep.subr.mxu0 0.0
        %1426 = vmatpush1.msra.mxu0 0.0
        %1427 = vmatprep.subr.mxu0 0.0
        %1428 = vmatpush1.msra.mxu0 0.0
        %1429 = vmatprep.subr.mxu0 0.0
        %1430 = vmatpush1.msra.mxu0 0.0
        %1431 = vmatprep.subr.mxu0 0.0
        %1432 = vmatpush1.msra.mxu0 0.0
        %1433 = vmatprep.subr.mxu0 0.0
        %1434 = vmatpush1.msra.mxu0 0.0
        %1435 = vmatprep.subr.mxu0 0.0
        %1436 = vmatpush1.msra.mxu0 0.0
        %1437 = vmatprep.subr.mxu0 0.0
        %1438 = vmatpush1.msra.mxu0 0.0
        %1439 = vmatprep.subr.mxu0 0.0
        %1440 = vmatpush1.msra.mxu0 0.0
        %1441 = vmatprep.subr.mxu0 0.0
        %1442 = vmatpush1.msra.mxu0 0.0
        %1443 = vmatprep.subr.mxu0 0.0
        %1444 = vmatpush1.msra.mxu0 0.0
        %1445 = vmatprep.subr.mxu0 0.0
        %1446 = vmatpush1.msra.mxu0 0.0
        %1447 = vmatprep.subr.mxu0 0.0
        %1448 = vmatpush1.msra.mxu0 0.0
        %1449 = vmatprep.subr.mxu0 0.0
        %1450 = vmatpush1.msra.mxu0 0.0
        %1451 = vmatprep.subr.mxu0 0.0
        %1452 = vmatpush1.msra.mxu0 0.0
        %1453 = vmatprep.subr.mxu0 0.0
        %1454 = vmatpush1.msra.mxu0 0.0
        %1455 = vmatprep.subr.mxu0 0.0
        %1456 = vmatpush1.msra.mxu0 0.0
        %1457 = vmatprep.subr.mxu0 0.0
        %1458 = vmatpush1.msra.mxu0 0.0
        %1459 = vmatprep.mubr.f32.mxu0 0.0
        %1460 = vmatmul.mubr.f32.gmra.mrb[0].mxu0 %v1372
        %v1461 = vpop.f32.mrb[0].mxu0
        %v1462 = vadd.f32 %v1333, %v1461
        %v1463 = vpop.f32.mrb[0].mxu0
        %1464 = vmatprep.mubr.f32.mxu0 0.0
        %1465 = vmatmul.mubr.f32.gmra.mrb[0].mxu0 %v1375
        %v1466 = vpop.f32.mrb[0].mxu0
        %v1467 = vadd.f32 %v1338, %v1466
        %v1468 = vpop.f32.mrb[0].mxu0
        %1469 = vmatprep.mubr.f32.mxu0 0.0
        %1470 = vmatmul.mubr.f32.gmra.mrb[0].mxu0 %v1378
        %v1471 = vpop.f32.mrb[0].mxu0
        %v1472 = vadd.f32 %v1343, %v1471
        %v1473 = vpop.f32.mrb[0].mxu0
        %1474 = vmatprep.mubr.f32.mxu0 0.0
        %1475 = vmatmul.mubr.f32.gmra.mrb[0].mxu0 %v1381
        %v1476 = vpop.f32.mrb[0].mxu0
        %v1477 = vadd.f32 %v1348, %v1476
        %v1478 = vpop.f32.mrb[0].mxu0
        %1479 = vmatprep.mubr.f32.mxu0 0.0
        %1480 = vmatmul.mubr.f32.gmra.mrb[0].mxu0 %v1384
        %v1481 = vpop.f32.mrb[0].mxu0
        %v1482 = vadd.f32 %v1353, %v1481
        %v1483 = vpop.f32.mrb[0].mxu0
        %1484 = vmatprep.mubr.f32.mxu0 0.0
        %1485 = vmatmul.mubr.f32.gmra.mrb[0].mxu0 %v1387
        %v1486 = vpop.f32.mrb[0].mxu0
        %v1487 = vadd.f32 %v1358, %v1486
        %v1488 = vpop.f32.mrb[0].mxu0
        %1489 = vmatprep.mubr.f32.mxu0 0.0
        %1490 = vmatmul.mubr.f32.gmra.mrb[0].mxu0 %v1390
        %v1491 = vpop.f32.mrb[0].mxu0
        %v1492 = vadd.f32 %v1363, %v1491
        %v1493 = vpop.f32.mrb[0].mxu0
        %1494 = vmatprep.mubr.f32.mxu0 0.0
        %1495 = vmatmul.mubr.f32.gmra.mrb[0].mxu0 %v1393
        %v1496 = vpop.f32.mrb[0].mxu0
        %v1497 = vadd.f32 %v1368, %v1496
        %v1498 = vpop.f32.mrb[0].mxu0
        %1499 = vdwg.mxu0
        %v1500 = vadd.f32 %v1462, %v1049
        %v1501 = vadd.f32 %v1467, %v1053
        %v1502 = vadd.f32 %v1472, %v1059
        %v1503 = vadd.f32 %v1477, %v1063
        %v1504 = vadd.f32 %v1482, %v1069
        %v1505 = vadd.f32 %v1487, %v1073
        %v1506 = vadd.f32 %v1492, %v1079
        %v1507 = vadd.f32 %v1497, %v1083
        %v1508 = vadd.s32 %v1151, 1
        %v1509 = vadd.s32 %v1152, 1
        %v1510 = vadd.s32 %v1153, 1
        %v1511 = vadd.s32 %v1154, 1
        %v1512 = vadd.s32 %v1155, 1
        %v1513 = vadd.s32 %v1156, 1
        %v1514 = vadd.s32 %v1157, 1
        %v1515 = vadd.s32 %v1158, 1
        %vm1516 = vcmp.eq.s32.totalorder %v1160, %v1508
        %vm1517 = vcmp.eq.s32.totalorder %v1160, %v1509
        %vm1518 = vcmp.eq.s32.totalorder %v1160, %v1510
        %vm1519 = vcmp.eq.s32.totalorder %v1160, %v1511
        %vm1520 = vcmp.eq.s32.totalorder %v1160, %v1512
        %vm1521 = vcmp.eq.s32.totalorder %v1160, %v1513
        %vm1522 = vcmp.eq.s32.totalorder %v1160, %v1514
        %vm1523 = vcmp.eq.s32.totalorder %v1160, %v1515
        %v1524 = vsel %vm1516, 1.0, 0.0
        %v1525 = vsel %vm1517, 1.0, 0.0
        %v1526 = vsel %vm1518, 1.0, 0.0
        %v1527 = vsel %vm1519, 1.0, 0.0
        %v1528 = vsel %vm1520, 1.0, 0.0
        %v1529 = vsel %vm1521, 1.0, 0.0
        %v1530 = vsel %vm1522, 1.0, 0.0
        %v1531 = vsel %vm1523, 1.0, 0.0
        %1540 = vrot.lane.b32.xlu0 %v1049, 64
        %v1541 = vpop.permute.xlu0 %1540
        %1542 = vrot.lane.b32.xlu0 %v1053, 64
        %v1543 = vpop.permute.xlu0 %1542
        %1544 = vrot.lane.b32.xlu0 %v1059, 64
        %v1545 = vpop.permute.xlu0 %1544
        %1546 = vrot.lane.b32.xlu0 %v1063, 64
        %v1547 = vpop.permute.xlu0 %1546
        %1548 = vrot.lane.b32.xlu0 %v1069, 64
        %v1549 = vpop.permute.xlu0 %1548
        %1550 = vrot.lane.b32.xlu0 %v1073, 64
        %v1551 = vpop.permute.xlu0 %1550
        %1552 = vrot.lane.b32.xlu0 %v1079, 64
        %v1553 = vpop.permute.xlu0 %1552
        %1554 = vrot.lane.b32.xlu0 %v1083, 64
        %v1555 = vpop.permute.xlu0 %1554
        %v1565 = vsel %vm1241, %v1524, 0
        %v1568 = vsel %vm1241, %v1525, 0
        %v1571 = vsel %vm1241, %v1526, 0
        %v1574 = vsel %vm1241, %v1527, 0
        %v1577 = vsel %vm1241, %v1528, 0
        %v1580 = vsel %vm1241, %v1529, 0
        %v1583 = vsel %vm1241, %v1530, 0
        %v1586 = vsel %vm1241, %v1531, 0
        %1588 = vmatprep.subr.mxu0 0.0
        %1589 = vmatpush1.msra.mxu0 %v1541
        %1590 = vmatprep.subr.mxu0 0.0
        %1591 = vmatpush1.msra.mxu0 %v1543
        %1592 = vmatprep.subr.mxu0 0.0
        %1593 = vmatpush1.msra.mxu0 %v1545
        %1594 = vmatprep.subr.mxu0 0.0
        %1595 = vmatpush1.msra.mxu0 %v1547
        %1596 = vmatprep.subr.mxu0 0.0
        %1597 = vmatpush1.msra.mxu0 %v1549
        %1598 = vmatprep.subr.mxu0 0.0
        %1599 = vmatpush1.msra.mxu0 %v1551
        %1600 = vmatprep.subr.mxu0 0.0
        %1601 = vmatpush1.msra.mxu0 %v1553
        %1602 = vmatprep.subr.mxu0 0.0
        %1603 = vmatpush1.msra.mxu0 %v1555
        %1604 = vmatprep.subr.mxu0 0.0
        %1605 = vmatpush1.msra.mxu0 0.0
        %1606 = vmatprep.subr.mxu0 0.0
        %1607 = vmatpush1.msra.mxu0 0.0
        %1608 = vmatprep.subr.mxu0 0.0
        %1609 = vmatpush1.msra.mxu0 0.0
        %1610 = vmatprep.subr.mxu0 0.0
        %1611 = vmatpush1.msra.mxu0 0.0
        %1612 = vmatprep.subr.mxu0 0.0
        %1613 = vmatpush1.msra.mxu0 0.0
        %1614 = vmatprep.subr.mxu0 0.0
        %1615 = vmatpush1.msra.mxu0 0.0
        %1616 = vmatprep.subr.mxu0 0.0
        %1617 = vmatpush1.msra.mxu0 0.0
        %1618 = vmatprep.subr.mxu0 0.0
        %1619 = vmatpush1.msra.mxu0 0.0
        %1620 = vmatprep.subr.mxu0 0.0
        %1621 = vmatpush1.msra.mxu0 0.0
        %1622 = vmatprep.subr.mxu0 0.0
        %1623 = vmatpush1.msra.mxu0 0.0
        %1624 = vmatprep.subr.mxu0 0.0
        %1625 = vmatpush1.msra.mxu0 0.0
        %1626 = vmatprep.subr.mxu0 0.0
        %1627 = vmatpush1.msra.mxu0 0.0
        %1628 = vmatprep.subr.mxu0 0.0
        %1629 = vmatpush1.msra.mxu0 0.0
        %1630 = vmatprep.subr.mxu0 0.0
        %1631 = vmatpush1.msra.mxu0 0.0
        %1632 = vmatprep.subr.mxu0 0.0
        %1633 = vmatpush1.msra.mxu0 0.0
        %1634 = vmatprep.subr.mxu0 0.0
        %1635 = vmatpush1.msra.mxu0 0.0
        %1636 = vmatprep.subr.mxu0 0.0
        %1637 = vmatpush1.msra.mxu0 0.0
        %1638 = vmatprep.subr.mxu0 0.0
        %1639 = vmatpush1.msra.mxu0 0.0
        %1640 = vmatprep.subr.mxu0 0.0
        %1641 = vmatpush1.msra.mxu0 0.0
        %1642 = vmatprep.subr.mxu0 0.0
        %1643 = vmatpush1.msra.mxu0 0.0
        %1644 = vmatprep.subr.mxu0 0.0
        %1645 = vmatpush1.msra.mxu0 0.0
        %1646 = vmatprep.subr.mxu0 0.0
        %1647 = vmatpush1.msra.mxu0 0.0
        %1648 = vmatprep.subr.mxu0 0.0
        %1649 = vmatpush1.msra.mxu0 0.0
        %1650 = vmatprep.subr.mxu0 0.0
        %1651 = vmatpush1.msra.mxu0 0.0
        %1652 = vmatprep.mubr.f32.mxu0 0.0
        %1653 = vmatmul.mubr.f32.gmra.mrb[0].mxu0 %v1565
        %v1654 = vpop.f32.mrb[0].mxu0
        %v1655 = vadd.f32 0.0, %v1654
        %v1656 = vpop.f32.mrb[0].mxu0
        %1657 = vmatprep.mubr.f32.mxu0 0.0
        %1658 = vmatmul.mubr.f32.gmra.mrb[0].mxu0 %v1568
        %v1659 = vpop.f32.mrb[0].mxu0
        %v1660 = vadd.f32 0.0, %v1659
        %v1661 = vpop.f32.mrb[0].mxu0
        %1662 = vmatprep.mubr.f32.mxu0 0.0
        %1663 = vmatmul.mubr.f32.gmra.mrb[0].mxu0 %v1571
        %v1664 = vpop.f32.mrb[0].mxu0
        %v1665 = vadd.f32 0.0, %v1664
        %v1666 = vpop.f32.mrb[0].mxu0
        %1667 = vmatprep.mubr.f32.mxu0 0.0
        %1668 = vmatmul.mubr.f32.gmra.mrb[0].mxu0 %v1574
        %v1669 = vpop.f32.mrb[0].mxu0
        %v1670 = vadd.f32 0.0, %v1669
        %v1671 = vpop.f32.mrb[0].mxu0
        %1672 = vmatprep.mubr.f32.mxu0 0.0
        %1673 = vmatmul.mubr.f32.gmra.mrb[0].mxu0 %v1577
        %v1674 = vpop.f32.mrb[0].mxu0
        %v1675 = vadd.f32 0.0, %v1674
        %v1676 = vpop.f32.mrb[0].mxu0
        %1677 = vmatprep.mubr.f32.mxu0 0.0
        %1678 = vmatmul.mubr.f32.gmra.mrb[0].mxu0 %v1580
        %v1679 = vpop.f32.mrb[0].mxu0
        %v1680 = vadd.f32 0.0, %v1679
        %v1681 = vpop.f32.mrb[0].mxu0
        %1682 = vmatprep.mubr.f32.mxu0 0.0
        %1683 = vmatmul.mubr.f32.gmra.mrb[0].mxu0 %v1583
        %v1684 = vpop.f32.mrb[0].mxu0
        %v1685 = vadd.f32 0.0, %v1684
        %v1686 = vpop.f32.mrb[0].mxu0
        %1687 = vmatprep.mubr.f32.mxu0 0.0
        %1688 = vmatmul.mubr.f32.gmra.mrb[0].mxu0 %v1586
        %v1689 = vpop.f32.mrb[0].mxu0
        %v1690 = vadd.f32 0.0, %v1689
        %v1691 = vpop.f32.mrb[0].mxu0
        %1692 = vdwg.mxu0
        %v1693 = vadd.f32 %v1500, %v1655
        %v1694 = vadd.f32 %v1501, %v1660
        %v1695 = vadd.f32 %v1502, %v1665
        %v1696 = vadd.f32 %v1503, %v1670
        %v1697 = vadd.f32 %v1504, %v1675
        %v1698 = vadd.f32 %v1505, %v1680
        %v1699 = vadd.f32 %v1506, %v1685
        %v1700 = vadd.f32 %v1507, %v1690
        %v1701 = vadd.s32 %v1151, 2
        %v1702 = vadd.s32 %v1152, 2
        %v1703 = vadd.s32 %v1153, 2
        %v1704 = vadd.s32 %v1154, 2
        %v1705 = vadd.s32 %v1155, 2
        %v1706 = vadd.s32 %v1156, 2
        %v1707 = vadd.s32 %v1157, 2
        %v1708 = vadd.s32 %v1158, 2
        %vm1709 = vcmp.eq.s32.totalorder %v1160, %v1701
        %vm1710 = vcmp.eq.s32.totalorder %v1160, %v1702
        %vm1711 = vcmp.eq.s32.totalorder %v1160, %v1703
        %vm1712 = vcmp.eq.s32.totalorder %v1160, %v1704
        %vm1713 = vcmp.eq.s32.totalorder %v1160, %v1705
        %vm1714 = vcmp.eq.s32.totalorder %v1160, %v1706
        %vm1715 = vcmp.eq.s32.totalorder %v1160, %v1707
        %vm1716 = vcmp.eq.s32.totalorder %v1160, %v1708
        %v1717 = vsel %vm1709, 1.0, 0.0
        %v1718 = vsel %vm1710, 1.0, 0.0
        %v1719 = vsel %vm1711, 1.0, 0.0
        %v1720 = vsel %vm1712, 1.0, 0.0
        %v1721 = vsel %vm1713, 1.0, 0.0
        %v1722 = vsel %vm1714, 1.0, 0.0
        %v1723 = vsel %vm1715, 1.0, 0.0
        %v1724 = vsel %vm1716, 1.0, 0.0
        %v1726 = vsel %vm1241, %v1717, 0
        %v1729 = vsel %vm1241, %v1718, 0
        %v1732 = vsel %vm1241, %v1719, 0
        %v1735 = vsel %vm1241, %v1720, 0
        %v1738 = vsel %vm1241, %v1721, 0
        %v1741 = vsel %vm1241, %v1722, 0
        %v1744 = vsel %vm1241, %v1723, 0
        %v1747 = vsel %vm1241, %v1724, 0
        %1749 = vmatprep.subr.mxu0 0.0
        %1750 = vmatpush1.msra.mxu0 %v1120
        %1751 = vmatprep.subr.mxu0 0.0
        %1752 = vmatpush1.msra.mxu0 %v1123
        %1753 = vmatprep.subr.mxu0 0.0
        %1754 = vmatpush1.msra.mxu0 %v1128
        %1755 = vmatprep.subr.mxu0 0.0
        %1756 = vmatpush1.msra.mxu0 %v1131
        %1757 = vmatprep.subr.mxu0 0.0
        %1758 = vmatpush1.msra.mxu0 %v1136
        %1759 = vmatprep.subr.mxu0 0.0
        %1760 = vmatpush1.msra.mxu0 %v1139
        %1761 = vmatprep.subr.mxu0 0.0
        %1762 = vmatpush1.msra.mxu0 %v1144
        %1763 = vmatprep.subr.mxu0 0.0
        %1764 = vmatpush1.msra.mxu0 %v1147
        %1765 = vmatprep.subr.mxu0 0.0
        %1766 = vmatpush1.msra.mxu0 0.0
        %1767 = vmatprep.subr.mxu0 0.0
        %1768 = vmatpush1.msra.mxu0 0.0
        %1769 = vmatprep.subr.mxu0 0.0
        %1770 = vmatpush1.msra.mxu0 0.0
        %1771 = vmatprep.subr.mxu0 0.0
        %1772 = vmatpush1.msra.mxu0 0.0
        %1773 = vmatprep.subr.mxu0 0.0
        %1774 = vmatpush1.msra.mxu0 0.0
        %1775 = vmatprep.subr.mxu0 0.0
        %1776 = vmatpush1.msra.mxu0 0.0
        %1777 = vmatprep.subr.mxu0 0.0
        %1778 = vmatpush1.msra.mxu0 0.0
        %1779 = vmatprep.subr.mxu0 0.0
        %1780 = vmatpush1.msra.mxu0 0.0
        %1781 = vmatprep.subr.mxu0 0.0
        %1782 = vmatpush1.msra.mxu0 0.0
        %1783 = vmatprep.subr.mxu0 0.0
        %1784 = vmatpush1.msra.mxu0 0.0
        %1785 = vmatprep.subr.mxu0 0.0
        %1786 = vmatpush1.msra.mxu0 0.0
        %1787 = vmatprep.subr.mxu0 0.0
        %1788 = vmatpush1.msra.mxu0 0.0
        %1789 = vmatprep.subr.mxu0 0.0
        %1790 = vmatpush1.msra.mxu0 0.0
        %1791 = vmatprep.subr.mxu0 0.0
        %1792 = vmatpush1.msra.mxu0 0.0
        %1793 = vmatprep.subr.mxu0 0.0
        %1794 = vmatpush1.msra.mxu0 0.0
        %1795 = vmatprep.subr.mxu0 0.0
        %1796 = vmatpush1.msra.mxu0 0.0
        %1797 = vmatprep.subr.mxu0 0.0
        %1798 = vmatpush1.msra.mxu0 0.0
        %1799 = vmatprep.subr.mxu0 0.0
        %1800 = vmatpush1.msra.mxu0 0.0
        %1801 = vmatprep.subr.mxu0 0.0
        %1802 = vmatpush1.msra.mxu0 0.0
        %1803 = vmatprep.subr.mxu0 0.0
        %1804 = vmatpush1.msra.mxu0 0.0
        %1805 = vmatprep.subr.mxu0 0.0
        %1806 = vmatpush1.msra.mxu0 0.0
        %1807 = vmatprep.subr.mxu0 0.0
        %1808 = vmatpush1.msra.mxu0 0.0
        %1809 = vmatprep.subr.mxu0 0.0
        %1810 = vmatpush1.msra.mxu0 0.0
        %1811 = vmatprep.subr.mxu0 0.0
        %1812 = vmatpush1.msra.mxu0 0.0
        %1813 = vmatprep.mubr.f32.mxu0 0.0
        %1814 = vmatmul.mubr.f32.gmra.mrb[0].mxu0 %v1726
        %v1815 = vpop.f32.mrb[0].mxu0
        %v1816 = vadd.f32 0.0, %v1815
        %v1817 = vpop.f32.mrb[0].mxu0
        %1818 = vmatprep.mubr.f32.mxu0 0.0
        %1819 = vmatmul.mubr.f32.gmra.mrb[0].mxu0 %v1729
        %v1820 = vpop.f32.mrb[0].mxu0
        %v1821 = vadd.f32 0.0, %v1820
        %v1822 = vpop.f32.mrb[0].mxu0
        %1823 = vmatprep.mubr.f32.mxu0 0.0
        %1824 = vmatmul.mubr.f32.gmra.mrb[0].mxu0 %v1732
        %v1825 = vpop.f32.mrb[0].mxu0
        %v1826 = vadd.f32 0.0, %v1825
        %v1827 = vpop.f32.mrb[0].mxu0
        %1828 = vmatprep.mubr.f32.mxu0 0.0
        %1829 = vmatmul.mubr.f32.gmra.mrb[0].mxu0 %v1735
        %v1830 = vpop.f32.mrb[0].mxu0
        %v1831 = vadd.f32 0.0, %v1830
        %v1832 = vpop.f32.mrb[0].mxu0
        %1833 = vmatprep.mubr.f32.mxu0 0.0
        %1834 = vmatmul.mubr.f32.gmra.mrb[0].mxu0 %v1738
        %v1835 = vpop.f32.mrb[0].mxu0
        %v1836 = vadd.f32 0.0, %v1835
        %v1837 = vpop.f32.mrb[0].mxu0
        %1838 = vmatprep.mubr.f32.mxu0 0.0
        %1839 = vmatmul.mubr.f32.gmra.mrb[0].mxu0 %v1741
        %v1840 = vpop.f32.mrb[0].mxu0
        %v1841 = vadd.f32 0.0, %v1840
        %v1842 = vpop.f32.mrb[0].mxu0
        %1843 = vmatprep.mubr.f32.mxu0 0.0
        %1844 = vmatmul.mubr.f32.gmra.mrb[0].mxu0 %v1744
        %v1845 = vpop.f32.mrb[0].mxu0
        %v1846 = vadd.f32 0.0, %v1845
        %v1847 = vpop.f32.mrb[0].mxu0
        %1848 = vmatprep.mubr.f32.mxu0 0.0
        %1849 = vmatmul.mubr.f32.gmra.mrb[0].mxu0 %v1747
        %v1850 = vpop.f32.mrb[0].mxu0
        %v1851 = vadd.f32 0.0, %v1850
        %v1852 = vpop.f32.mrb[0].mxu0
        %1853 = vdwg.mxu0
        %v1854 = vadd.f32 %v1693, %v1816
        %v1855 = vadd.f32 %v1694, %v1821
        %v1856 = vadd.f32 %v1695, %v1826
        %v1857 = vadd.f32 %v1696, %v1831
        %v1858 = vadd.f32 %v1697, %v1836
        %v1859 = vadd.f32 %v1698, %v1841
        %v1860 = vadd.f32 %v1699, %v1846
        %v1861 = vadd.f32 %v1700, %v1851
        %v1862 = vld [vmem:[#allocation4] sm:$0x3]
        %v1863 = vlaneseq
        %v1864 = vshrl.u32 %v1863, 7
        %v1865 = vsub.s32 0, %v1864
        %v1866 = vrot.slane %v1862, %v1865
        %v1867 = vmul.f32 %v1854, %v1866
        %v1868 = vmul.f32 %v1855, %v1866
        %v1869 = vmul.f32 %v1856, %v1866
        %v1870 = vmul.f32 %v1857, %v1866
        %v1871 = vmul.f32 %v1858, %v1866
        %v1872 = vmul.f32 %v1859, %v1866
        %v1873 = vmul.f32 %v1860, %v1866
        %v1874 = vmul.f32 %v1861, %v1866
        %v1875 = vlaneseq
        %v1876 = vshrl.u32 %v1875, 7
        %v1877 = vsub.s32 1, %v1876
        %v1878 = vrot.slane %v1862, %v1877
        %v1879 = vadd.f32 %v1867, %v1878
        %v1880 = vadd.f32 %v1868, %v1878
        %v1881 = vadd.f32 %v1869, %v1878
        %v1882 = vadd.f32 %v1870, %v1878
        %v1883 = vadd.f32 %v1871, %v1878
        %v1884 = vadd.f32 %v1872, %v1878
        %v1885 = vadd.f32 %v1873, %v1878
        %v1886 = vadd.f32 %v1874, %v1878
        %v1887 = vmax.f32 %v1879, 0.0
        %v1888 = vmax.f32 %v1880, 0.0
        %v1889 = vmax.f32 %v1881, 0.0
        %v1890 = vmax.f32 %v1882, 0.0
        %v1891 = vmax.f32 %v1883, 0.0
        %v1892 = vmax.f32 %v1884, 0.0
        %v1893 = vmax.f32 %v1885, 0.0
        %v1894 = vmax.f32 %v1886, 0.0
        %v1895 = vpack.c.bf16 %v1888, %v1887
        %v1896 = vpack.c.bf16 %v1890, %v1889
        %v1897 = vpack.c.bf16 %v1892, %v1891
        %v1898 = vpack.c.bf16 %v1894, %v1893
        %v1899 = vld [vmem:[#allocation6] sm:$0xff]
        %v1900 = vld [vmem:[#allocation6 + $0x8] sm:$0xff]
        %v1901 = vld [vmem:[#allocation6 + $0x10] sm:$0xff]
        %v1902 = vld [vmem:[#allocation6 + $0x18] sm:$0xff]
        %v1903 = vld [vmem:[#allocation6 + $0x20] sm:$0xff]
        %v1904 = vld [vmem:[#allocation6 + $0x28] sm:$0xff]
        %v1905 = vld [vmem:[#allocation6 + $0x30] sm:$0xff]
        %v1906 = vld [vmem:[#allocation6 + $0x38] sm:$0xff]
        %v1915 = vunpack.c.l.b16 %v1899
        %v1916 = vunpack.c.h.b16 %v1899
        %v1917 = vunpack.c.l.b16 %v1900
        %v1918 = vunpack.c.h.b16 %v1900
        %v1919 = vunpack.c.l.b16 %v1901
        %v1920 = vunpack.c.h.b16 %v1901
        %v1921 = vunpack.c.l.b16 %v1902
        %v1922 = vunpack.c.h.b16 %v1902
        %v1923 = vunpack.c.l.b16 %v1903
        %v1924 = vunpack.c.h.b16 %v1903
        %v1925 = vunpack.c.l.b16 %v1904
        %v1926 = vunpack.c.h.b16 %v1904
        %v1927 = vunpack.c.l.b16 %v1905
        %v1928 = vunpack.c.h.b16 %v1905
        %v1929 = vunpack.c.l.b16 %v1906
        %v1930 = vunpack.c.h.b16 %v1906
        %v1931 = vpack.c.b16 %v1917, %v1915
        %v1932 = vpack.c.b16 %v1918, %v1916
        %v1933 = vpack.c.b16 %v1921, %v1919
        %v1934 = vpack.c.b16 %v1922, %v1920
        %v1935 = vpack.c.b16 %v1925, %v1923
        %v1936 = vpack.c.b16 %v1926, %v1924
        %v1937 = vpack.c.b16 %v1929, %v1927
        %v1938 = vpack.c.b16 %v1930, %v1928
        %v1948 = vsel %vm1241, %v1895, 0
        %v1951 = vsel %vm1241, %v1896, 0
        %v1954 = vsel %vm1241, %v1897, 0
        %v1957 = vsel %vm1241, %v1898, 0
        %1959 = vmatprep.subr.bf16.mxu0 %v1932
        %1960 = vmatpush1.bf16.msra.mxu0 %v1931
        %1961 = vmatprep.subr.bf16.mxu0 %v1934
        %1962 = vmatpush1.bf16.msra.mxu0 %v1933
        %1963 = vmatprep.subr.bf16.mxu0 %v1936
        %1964 = vmatpush1.bf16.msra.mxu0 %v1935
        %1965 = vmatprep.subr.bf16.mxu0 %v1938
        %1966 = vmatpush1.bf16.msra.mxu0 %v1937
        %1967 = vmatprep.subr.bf16.mxu0 0
        %1968 = vmatpush1.bf16.msra.mxu0 0
        %1969 = vmatprep.subr.bf16.mxu0 0
        %1970 = vmatpush1.bf16.msra.mxu0 0
        %1971 = vmatprep.subr.bf16.mxu0 0
        %1972 = vmatpush1.bf16.msra.mxu0 0
        %1973 = vmatprep.subr.bf16.mxu0 0
        %1974 = vmatpush1.bf16.msra.mxu0 0
        %1975 = vmatprep.subr.bf16.mxu0 0
        %1976 = vmatpush1.bf16.msra.mxu0 0
        %1977 = vmatprep.subr.bf16.mxu0 0
        %1978 = vmatpush1.bf16.msra.mxu0 0
        %1979 = vmatprep.subr.bf16.mxu0 0
        %1980 = vmatpush1.bf16.msra.mxu0 0
        %1981 = vmatprep.subr.bf16.mxu0 0
        %1982 = vmatpush1.bf16.msra.mxu0 0
        %1983 = vmatprep.subr.bf16.mxu0 0
        %1984 = vmatpush1.bf16.msra.mxu0 0
        %1985 = vmatprep.subr.bf16.mxu0 0
        %1986 = vmatpush1.bf16.msra.mxu0 0
        %1987 = vmatprep.subr.bf16.mxu0 0
        %1988 = vmatpush1.bf16.msra.mxu0 0
        %1989 = vmatprep.subr.bf16.mxu0 0
        %1990 = vmatpush1.bf16.msra.mxu0 0
        %1991 = vmatprep.mubr.bf16.mxu0 0
        %1992 = vmatmul.mubr.bf16.gmra.mrb[0].mxu0 %v1948
        %v1993 = vpop.f32.mrb[0].mxu0
        %v1994 = vadd.f32 0.0, %v1993
        %v1995 = vpop.f32.mrb[0].mxu0
        %v1996 = vadd.f32 0.0, %v1995
        %v1997 = vpop.f32.mrb[0].mxu0
        %v1998 = vadd.f32 0.0, %v1997
        %v1999 = vpop.f32.mrb[0].mxu0
        %v2000 = vadd.f32 0.0, %v1999
        %2001 = vmatprep.mubr.bf16.mxu0 0
        %2002 = vmatmul.mubr.bf16.gmra.mrb[0].mxu0 %v1951
        %v2003 = vpop.f32.mrb[0].mxu0
        %v2004 = vadd.f32 0.0, %v2003
        %v2005 = vpop.f32.mrb[0].mxu0
        %v2006 = vadd.f32 0.0, %v2005
        %v2007 = vpop.f32.mrb[0].mxu0
        %v2008 = vadd.f32 0.0, %v2007
        %v2009 = vpop.f32.mrb[0].mxu0
        %v2010 = vadd.f32 0.0, %v2009
        %2011 = vmatprep.mubr.bf16.mxu0 0
        %2012 = vmatmul.mubr.bf16.gmra.mrb[0].mxu0 %v1954
        %v2013 = vpop.f32.mrb[0].mxu0
        %v2014 = vadd.f32 0.0, %v2013
        %v2015 = vpop.f32.mrb[0].mxu0
        %v2016 = vadd.f32 0.0, %v2015
        %v2017 = vpop.f32.mrb[0].mxu0
        %v2018 = vadd.f32 0.0, %v2017
        %v2019 = vpop.f32.mrb[0].mxu0
        %v2020 = vadd.f32 0.0, %v2019
        %2021 = vmatprep.mubr.bf16.mxu0 0
        %2022 = vmatmul.mubr.bf16.gmra.mrb[0].mxu0 %v1957
        %v2023 = vpop.f32.mrb[0].mxu0
        %v2024 = vadd.f32 0.0, %v2023
        %v2025 = vpop.f32.mrb[0].mxu0
        %v2026 = vadd.f32 0.0, %v2025
        %v2027 = vpop.f32.mrb[0].mxu0
        %v2028 = vadd.f32 0.0, %v2027
        %v2029 = vpop.f32.mrb[0].mxu0
        %v2030 = vadd.f32 0.0, %v2029
        %2031 = vdwg.mxu0
        %2040 = vrot.lane.b32.xlu0 %v1994, 64
        %v2041 = vpop.permute.xlu0 %2040
        %2042 = vrot.lane.b32.xlu0 %v1998, 64
        %v2043 = vpop.permute.xlu0 %2042
        %2044 = vrot.lane.b32.xlu0 %v2004, 64
        %v2045 = vpop.permute.xlu0 %2044
        %2046 = vrot.lane.b32.xlu0 %v2008, 64
        %v2047 = vpop.permute.xlu0 %2046
        %2048 = vrot.lane.b32.xlu0 %v2014, 64
        %v2049 = vpop.permute.xlu0 %2048
        %2050 = vrot.lane.b32.xlu0 %v2018, 64
        %v2051 = vpop.permute.xlu0 %2050
        %2052 = vrot.lane.b32.xlu0 %v2024, 64
        %v2053 = vpop.permute.xlu0 %2052
        %2054 = vrot.lane.b32.xlu0 %v2028, 64
        %v2055 = vpop.permute.xlu0 %2054
        %2064 = vmatprep.subr.mxu0 0.0
        %2065 = vmatpush1.msra.mxu0 %v1994
        %2066 = vmatprep.subr.mxu0 0.0
        %2067 = vmatpush1.msra.mxu0 %v1998
        %2068 = vmatprep.subr.mxu0 0.0
        %2069 = vmatpush1.msra.mxu0 %v2004
        %2070 = vmatprep.subr.mxu0 0.0
        %2071 = vmatpush1.msra.mxu0 %v2008
        %2072 = vmatprep.subr.mxu0 0.0
        %2073 = vmatpush1.msra.mxu0 %v2014
        %2074 = vmatprep.subr.mxu0 0.0
        %2075 = vmatpush1.msra.mxu0 %v2018
        %2076 = vmatprep.subr.mxu0 0.0
        %2077 = vmatpush1.msra.mxu0 %v2024
        %2078 = vmatprep.subr.mxu0 0.0
        %2079 = vmatpush1.msra.mxu0 %v2028
        %2080 = vmatprep.subr.mxu0 0.0
        %2081 = vmatpush1.msra.mxu0 0.0
        %2082 = vmatprep.subr.mxu0 0.0
        %2083 = vmatpush1.msra.mxu0 0.0
        %2084 = vmatprep.subr.mxu0 0.0
        %2085 = vmatpush1.msra.mxu0 0.0
        %2086 = vmatprep.subr.mxu0 0.0
        %2087 = vmatpush1.msra.mxu0 0.0
        %2088 = vmatprep.subr.mxu0 0.0
        %2089 = vmatpush1.msra.mxu0 0.0
        %2090 = vmatprep.subr.mxu0 0.0
        %2091 = vmatpush1.msra.mxu0 0.0
        %2092 = vmatprep.subr.mxu0 0.0
        %2093 = vmatpush1.msra.mxu0 0.0
        %2094 = vmatprep.subr.mxu0 0.0
        %2095 = vmatpush1.msra.mxu0 0.0
        %2096 = vmatprep.subr.mxu0 0.0
        %2097 = vmatpush1.msra.mxu0 0.0
        %2098 = vmatprep.subr.mxu0 0.0
        %2099 = vmatpush1.msra.mxu0 0.0
        %2100 = vmatprep.subr.mxu0 0.0
        %2101 = vmatpush1.msra.mxu0 0.0
        %2102 = vmatprep.subr.mxu0 0.0
        %2103 = vmatpush1.msra.mxu0 0.0
        %2104 = vmatprep.subr.mxu0 0.0
        %2105 = vmatpush1.msra.mxu0 0.0
        %2106 = vmatprep.subr.mxu0 0.0
        %2107 = vmatpush1.msra.mxu0 0.0
        %2108 = vmatprep.subr.mxu0 0.0
        %2109 = vmatpush1.msra.mxu0 0.0
        %2110 = vmatprep.subr.mxu0 0.0
        %2111 = vmatpush1.msra.mxu0 0.0
        %2112 = vmatprep.subr.mxu0 0.0
        %2113 = vmatpush1.msra.mxu0 0.0
        %2114 = vmatprep.subr.mxu0 0.0
        %2115 = vmatpush1.msra.mxu0 0.0
        %2116 = vmatprep.subr.mxu0 0.0
        %2117 = vmatpush1.msra.mxu0 0.0
        %2118 = vmatprep.subr.mxu0 0.0
        %2119 = vmatpush1.msra.mxu0 0.0
        %2120 = vmatprep.subr.mxu0 0.0
        %2121 = vmatpush1.msra.mxu0 0.0
        %2122 = vmatprep.subr.mxu0 0.0
        %2123 = vmatpush1.msra.mxu0 0.0
        %2124 = vmatprep.subr.mxu0 0.0
        %2125 = vmatpush1.msra.mxu0 0.0
        %2126 = vmatprep.subr.mxu0 0.0
        %2127 = vmatpush1.msra.mxu0 0.0
        %2128 = vmatprep.mubr.f32.mxu0 0.0
        %2129 = vmatmul.mubr.f32.gmra.mrb[0].mxu0 %v1243
        %v2130 = vpop.f32.mrb[0].mxu0
        %v2131 = vadd.f32 %v2041, %v2130
        %v2132 = vpop.f32.mrb[0].mxu0
        %2133 = vmatprep.mubr.f32.mxu0 0.0
        %2134 = vmatmul.mubr.f32.gmra.mrb[0].mxu0 %v1246
        %v2135 = vpop.f32.mrb[0].mxu0
        %v2136 = vadd.f32 %v2043, %v2135
        %v2137 = vpop.f32.mrb[0].mxu0
        %2138 = vmatprep.mubr.f32.mxu0 0.0
        %2139 = vmatmul.mubr.f32.gmra.mrb[0].mxu0 %v1249
        %v2140 = vpop.f32.mrb[0].mxu0
        %v2141 = vadd.f32 %v2045, %v2140
        %v2142 = vpop.f32.mrb[0].mxu0
        %2143 = vmatprep.mubr.f32.mxu0 0.0
        %2144 = vmatmul.mubr.f32.gmra.mrb[0].mxu0 %v1252
        %v2145 = vpop.f32.mrb[0].mxu0
        %v2146 = vadd.f32 %v2047, %v2145
        %v2147 = vpop.f32.mrb[0].mxu0
        %2148 = vmatprep.mubr.f32.mxu0 0.0
        %2149 = vmatmul.mubr.f32.gmra.mrb[0].mxu0 %v1255
        %v2150 = vpop.f32.mrb[0].mxu0
        %v2151 = vadd.f32 %v2049, %v2150
        %v2152 = vpop.f32.mrb[0].mxu0
        %2153 = vmatprep.mubr.f32.mxu0 0.0
        %2154 = vmatmul.mubr.f32.gmra.mrb[0].mxu0 %v1258
        %v2155 = vpop.f32.mrb[0].mxu0
        %v2156 = vadd.f32 %v2051, %v2155
        %v2157 = vpop.f32.mrb[0].mxu0
        %2158 = vmatprep.mubr.f32.mxu0 0.0
        %2159 = vmatmul.mubr.f32.gmra.mrb[0].mxu0 %v1261
        %v2160 = vpop.f32.mrb[0].mxu0
        %v2161 = vadd.f32 %v2053, %v2160
        %v2162 = vpop.f32.mrb[0].mxu0
        %2163 = vmatprep.mubr.f32.mxu0 0.0
        %2164 = vmatmul.mubr.f32.gmra.mrb[0].mxu0 %v1264
        %v2165 = vpop.f32.mrb[0].mxu0
        %v2166 = vadd.f32 %v2055, %v2165
        %v2167 = vpop.f32.mrb[0].mxu0
        %2168 = vdwg.mxu0
        %2169 = vmatprep.subr.mxu0 0.0
        %2170 = vmatpush1.msra.mxu0 %v1996
        %2171 = vmatprep.subr.mxu0 0.0
        %2172 = vmatpush1.msra.mxu0 %v2000
        %2173 = vmatprep.subr.mxu0 0.0
        %2174 = vmatpush1.msra.mxu0 %v2006
        %2175 = vmatprep.subr.mxu0 0.0
        %2176 = vmatpush1.msra.mxu0 %v2010
        %2177 = vmatprep.subr.mxu0 0.0
        %2178 = vmatpush1.msra.mxu0 %v2016
        %2179 = vmatprep.subr.mxu0 0.0
        %2180 = vmatpush1.msra.mxu0 %v2020
        %2181 = vmatprep.subr.mxu0 0.0
        %2182 = vmatpush1.msra.mxu0 %v2026
        %2183 = vmatprep.subr.mxu0 0.0
        %2184 = vmatpush1.msra.mxu0 %v2030
        %2185 = vmatprep.subr.mxu0 0.0
        %2186 = vmatpush1.msra.mxu0 0.0
        %2187 = vmatprep.subr.mxu0 0.0
        %2188 = vmatpush1.msra.mxu0 0.0
        %2189 = vmatprep.subr.mxu0 0.0
        %2190 = vmatpush1.msra.mxu0 0.0
        %2191 = vmatprep.subr.mxu0 0.0
        %2192 = vmatpush1.msra.mxu0 0.0
        %2193 = vmatprep.subr.mxu0 0.0
        %2194 = vmatpush1.msra.mxu0 0.0
        %2195 = vmatprep.subr.mxu0 0.0
        %2196 = vmatpush1.msra.mxu0 0.0
        %2197 = vmatprep.subr.mxu0 0.0
        %2198 = vmatpush1.msra.mxu0 0.0
        %2199 = vmatprep.subr.mxu0 0.0
        %2200 = vmatpush1.msra.mxu0 0.0
        %2201 = vmatprep.subr.mxu0 0.0
        %2202 = vmatpush1.msra.mxu0 0.0
        %2203 = vmatprep.subr.mxu0 0.0
        %2204 = vmatpush1.msra.mxu0 0.0
        %2205 = vmatprep.subr.mxu0 0.0
        %2206 = vmatpush1.msra.mxu0 0.0
        %2207 = vmatprep.subr.mxu0 0.0
        %2208 = vmatpush1.msra.mxu0 0.0
        %2209 = vmatprep.subr.mxu0 0.0
        %2210 = vmatpush1.msra.mxu0 0.0
        %2211 = vmatprep.subr.mxu0 0.0
        %2212 = vmatpush1.msra.mxu0 0.0
        %2213 = vmatprep.subr.mxu0 0.0
        %2214 = vmatpush1.msra.mxu0 0.0
        %2215 = vmatprep.subr.mxu0 0.0
        %2216 = vmatpush1.msra.mxu0 0.0
        %2217 = vmatprep.subr.mxu0 0.0
        %2218 = vmatpush1.msra.mxu0 0.0
        %2219 = vmatprep.subr.mxu0 0.0
        %2220 = vmatpush1.msra.mxu0 0.0
        %2221 = vmatprep.subr.mxu0 0.0
        %2222 = vmatpush1.msra.mxu0 0.0
        %2223 = vmatprep.subr.mxu0 0.0
        %2224 = vmatpush1.msra.mxu0 0.0
        %2225 = vmatprep.subr.mxu0 0.0
        %2226 = vmatpush1.msra.mxu0 0.0
        %2227 = vmatprep.subr.mxu0 0.0
        %2228 = vmatpush1.msra.mxu0 0.0
        %2229 = vmatprep.subr.mxu0 0.0
        %2230 = vmatpush1.msra.mxu0 0.0
        %2231 = vmatprep.subr.mxu0 0.0
        %2232 = vmatpush1.msra.mxu0 0.0
        %2233 = vmatprep.mubr.f32.mxu0 0.0
        %2234 = vmatmul.mubr.f32.gmra.mrb[0].mxu0 %v1565
        %v2235 = vpop.f32.mrb[0].mxu0
        %v2236 = vadd.f32 0.0, %v2235
        %v2237 = vpop.f32.mrb[0].mxu0
        %2238 = vmatprep.mubr.f32.mxu0 0.0
        %2239 = vmatmul.mubr.f32.gmra.mrb[0].mxu0 %v1568
        %v2240 = vpop.f32.mrb[0].mxu0
        %v2241 = vadd.f32 0.0, %v2240
        %v2242 = vpop.f32.mrb[0].mxu0
        %2243 = vmatprep.mubr.f32.mxu0 0.0
        %2244 = vmatmul.mubr.f32.gmra.mrb[0].mxu0 %v1571
        %v2245 = vpop.f32.mrb[0].mxu0
        %v2246 = vadd.f32 0.0, %v2245
        %v2247 = vpop.f32.mrb[0].mxu0
        %2248 = vmatprep.mubr.f32.mxu0 0.0
        %2249 = vmatmul.mubr.f32.gmra.mrb[0].mxu0 %v1574
        %v2250 = vpop.f32.mrb[0].mxu0
        %v2251 = vadd.f32 0.0, %v2250
        %v2252 = vpop.f32.mrb[0].mxu0
        %2253 = vmatprep.mubr.f32.mxu0 0.0
        %2254 = vmatmul.mubr.f32.gmra.mrb[0].mxu0 %v1577
        %v2255 = vpop.f32.mrb[0].mxu0
        %v2256 = vadd.f32 0.0, %v2255
        %v2257 = vpop.f32.mrb[0].mxu0
        %2258 = vmatprep.mubr.f32.mxu0 0.0
        %2259 = vmatmul.mubr.f32.gmra.mrb[0].mxu0 %v1580
        %v2260 = vpop.f32.mrb[0].mxu0
        %v2261 = vadd.f32 0.0, %v2260
        %v2262 = vpop.f32.mrb[0].mxu0
        %2263 = vmatprep.mubr.f32.mxu0 0.0
        %2264 = vmatmul.mubr.f32.gmra.mrb[0].mxu0 %v1583
        %v2265 = vpop.f32.mrb[0].mxu0
        %v2266 = vadd.f32 0.0, %v2265
        %v2267 = vpop.f32.mrb[0].mxu0
        %2268 = vmatprep.mubr.f32.mxu0 0.0
        %2269 = vmatmul.mubr.f32.gmra.mrb[0].mxu0 %v1586
        %v2270 = vpop.f32.mrb[0].mxu0
        %v2271 = vadd.f32 0.0, %v2270
        %v2272 = vpop.f32.mrb[0].mxu0
        %2273 = vdwg.mxu0
        %v2274 = vadd.f32 %v2131, %v2236
        %v2275 = vadd.f32 %v2136, %v2241
        %v2276 = vadd.f32 %v2141, %v2246
        %v2277 = vadd.f32 %v2146, %v2251
        %v2278 = vadd.f32 %v2151, %v2256
        %v2279 = vadd.f32 %v2156, %v2261
        %v2280 = vadd.f32 %v2161, %v2266
        %v2281 = vadd.f32 %v2166, %v2271
        %v2282 = vld [vmem:[#allocation7] sm:$0x3]
        %v2283 = vlaneseq
        %v2284 = vshrl.u32 %v2283, 7
        %v2285 = vsub.s32 0, %v2284
        %v2286 = vrot.slane %v2282, %v2285
        %v2287 = vmul.f32 %v2274, %v2286
        %v2288 = vmul.f32 %v2275, %v2286
        %v2289 = vmul.f32 %v2276, %v2286
        %v2290 = vmul.f32 %v2277, %v2286
        %v2291 = vmul.f32 %v2278, %v2286
        %v2292 = vmul.f32 %v2279, %v2286
        %v2293 = vmul.f32 %v2280, %v2286
        %v2294 = vmul.f32 %v2281, %v2286
        %v2295 = vlaneseq
        %v2296 = vshrl.u32 %v2295, 7
        %v2297 = vsub.s32 1, %v2296
        %v2298 = vrot.slane %v2282, %v2297
        %v2299 = vadd.f32 %v2287, %v2298
        %v2300 = vadd.f32 %v2288, %v2298
        %v2301 = vadd.f32 %v2289, %v2298
        %v2302 = vadd.f32 %v2290, %v2298
        %v2303 = vadd.f32 %v2291, %v2298
        %v2304 = vadd.f32 %v2292, %v2298
        %v2305 = vadd.f32 %v2293, %v2298
        %v2306 = vadd.f32 %v2294, %v2298
        %v2307 = vmax.f32 %v2299, 0.0
        %v2308 = vmax.f32 %v2300, 0.0
        %v2309 = vmax.f32 %v2301, 0.0
        %v2310 = vmax.f32 %v2302, 0.0
        %v2311 = vmax.f32 %v2303, 0.0
        %v2312 = vmax.f32 %v2304, 0.0
        %v2313 = vmax.f32 %v2305, 0.0
        %v2314 = vmax.f32 %v2306, 0.0
        %v2315 = vpack.c.bf16 %v2308, %v2307
        %v2316 = vpack.c.bf16 %v2310, %v2309
        %v2317 = vpack.c.bf16 %v2312, %v2311
        %v2318 = vpack.c.bf16 %v2314, %v2313
        %v2319 = vmul.u32 %v1151, 4
        %v2320 = vmul.u32 %v1152, 4
        %vm2321 = vcmp.eq.s32.totalorder %v1160, %v2319
        %vm2322 = vcmp.eq.s32.totalorder %v1160, %v2320
        %v2323 = vsel %vm2321, 1.0, 0.0
        %v2324 = vsel %vm2322, 1.0, 0.0
        %v2325 = vpack.c.bf16 %v2324, %v2323
        %v2327 = vsel %vm1241, %v2325, 0
        %2329 = vmatprep.subr.bf16.mxu0 0
        %2330 = vmatpush1.bf16.msra.mxu0 %v2315
        %2331 = vmatprep.subr.bf16.mxu0 0
        %2332 = vmatpush1.bf16.msra.mxu0 %v2316
        %2333 = vmatprep.subr.bf16.mxu0 0
        %2334 = vmatpush1.bf16.msra.mxu0 %v2317
        %2335 = vmatprep.subr.bf16.mxu0 0
        %2336 = vmatpush1.bf16.msra.mxu0 %v2318
        %2337 = vmatprep.subr.bf16.mxu0 0
        %2338 = vmatpush1.bf16.msra.mxu0 0
        %2339 = vmatprep.subr.bf16.mxu0 0
        %2340 = vmatpush1.bf16.msra.mxu0 0
        %2341 = vmatprep.subr.bf16.mxu0 0
        %2342 = vmatpush1.bf16.msra.mxu0 0
        %2343 = vmatprep.subr.bf16.mxu0 0
        %2344 = vmatpush1.bf16.msra.mxu0 0
        %2345 = vmatprep.subr.bf16.mxu0 0
        %2346 = vmatpush1.bf16.msra.mxu0 0
        %2347 = vmatprep.subr.bf16.mxu0 0
        %2348 = vmatpush1.bf16.msra.mxu0 0
        %2349 = vmatprep.subr.bf16.mxu0 0
        %2350 = vmatpush1.bf16.msra.mxu0 0
        %2351 = vmatprep.subr.bf16.mxu0 0
        %2352 = vmatpush1.bf16.msra.mxu0 0
        %2353 = vmatprep.subr.bf16.mxu0 0
        %2354 = vmatpush1.bf16.msra.mxu0 0
        %2355 = vmatprep.subr.bf16.mxu0 0
        %2356 = vmatpush1.bf16.msra.mxu0 0
        %2357 = vmatprep.subr.bf16.mxu0 0
        %2358 = vmatpush1.bf16.msra.mxu0 0
        %2359 = vmatprep.subr.bf16.mxu0 0
        %2360 = vmatpush1.bf16.msra.mxu0 0
        %2361 = vmatprep.mubr.bf16.mxu0 0
        %2362 = vmatmul.mubr.bf16.gmra.mrb[0].mxu0 %v2327
        %v2363 = vpop.f32.mrb[0].mxu0
        %v2364 = vadd.f32 0.0, %v2363
        %v2365 = vpop.f32.mrb[0].mxu0
        %v2366 = vpop.f32.mrb[0].mxu0
        %v2367 = vadd.f32 0.0, %v2366
        %v2368 = vpop.f32.mrb[0].mxu0
        %2369 = vdwg.mxu0
        %v2370 = vadd.s32 %v2319, 1
        %v2371 = vadd.s32 %v2320, 1
        %vm2372 = vcmp.eq.s32.totalorder %v1160, %v2370
        %vm2373 = vcmp.eq.s32.totalorder %v1160, %v2371
        %v2374 = vsel %vm2372, 1.0, 0.0
        %v2375 = vsel %vm2373, 1.0, 0.0
        %v2376 = vpack.c.bf16 %v2375, %v2374
        %v2378 = vsel %vm1241, %v2376, 0
        %2380 = vmatprep.subr.bf16.mxu0 0
        %2381 = vmatpush1.bf16.msra.mxu0 %v2315
        %2382 = vmatprep.subr.bf16.mxu0 0
        %2383 = vmatpush1.bf16.msra.mxu0 %v2316
        %2384 = vmatprep.subr.bf16.mxu0 0
        %2385 = vmatpush1.bf16.msra.mxu0 %v2317
        %2386 = vmatprep.subr.bf16.mxu0 0
        %2387 = vmatpush1.bf16.msra.mxu0 %v2318
        %2388 = vmatprep.subr.bf16.mxu0 0
        %2389 = vmatpush1.bf16.msra.mxu0 0
        %2390 = vmatprep.subr.bf16.mxu0 0
        %2391 = vmatpush1.bf16.msra.mxu0 0
        %2392 = vmatprep.subr.bf16.mxu0 0
        %2393 = vmatpush1.bf16.msra.mxu0 0
        %2394 = vmatprep.subr.bf16.mxu0 0
        %2395 = vmatpush1.bf16.msra.mxu0 0
        %2396 = vmatprep.subr.bf16.mxu0 0
        %2397 = vmatpush1.bf16.msra.mxu0 0
        %2398 = vmatprep.subr.bf16.mxu0 0
        %2399 = vmatpush1.bf16.msra.mxu0 0
        %2400 = vmatprep.subr.bf16.mxu0 0
        %2401 = vmatpush1.bf16.msra.mxu0 0
        %2402 = vmatprep.subr.bf16.mxu0 0
        %2403 = vmatpush1.bf16.msra.mxu0 0
        %2404 = vmatprep.subr.bf16.mxu0 0
        %2405 = vmatpush1.bf16.msra.mxu0 0
        %2406 = vmatprep.subr.bf16.mxu0 0
        %2407 = vmatpush1.bf16.msra.mxu0 0
        %2408 = vmatprep.subr.bf16.mxu0 0
        %2409 = vmatpush1.bf16.msra.mxu0 0
        %2410 = vmatprep.subr.bf16.mxu0 0
        %2411 = vmatpush1.bf16.msra.mxu0 0
        %2412 = vmatprep.mubr.bf16.mxu0 0
        %2413 = vmatmul.mubr.bf16.gmra.mrb[0].mxu0 %v2378
        %v2414 = vpop.f32.mrb[0].mxu0
        %v2415 = vadd.f32 0.0, %v2414
        %v2416 = vpop.f32.mrb[0].mxu0
        %v2417 = vpop.f32.mrb[0].mxu0
        %v2418 = vadd.f32 0.0, %v2417
        %v2419 = vpop.f32.mrb[0].mxu0
        %2420 = vdwg.mxu0
        %v2421 = vmax.f32 %v2364, %v2415
        %v2422 = vmax.f32 %v2367, %v2418
        %v2423 = vadd.s32 %v2319, 2
        %v2424 = vadd.s32 %v2320, 2
        %vm2425 = vcmp.eq.s32.totalorder %v1160, %v2423
        %vm2426 = vcmp.eq.s32.totalorder %v1160, %v2424
        %v2427 = vsel %vm2425, 1.0, 0.0
        %v2428 = vsel %vm2426, 1.0, 0.0
        %v2429 = vpack.c.bf16 %v2428, %v2427
        %v2431 = vsel %vm1241, %v2429, 0
        %2433 = vmatprep.subr.bf16.mxu0 0
        %2434 = vmatpush1.bf16.msra.mxu0 %v2315
        %2435 = vmatprep.subr.bf16.mxu0 0
        %2436 = vmatpush1.bf16.msra.mxu0 %v2316
        %2437 = vmatprep.subr.bf16.mxu0 0
        %2438 = vmatpush1.bf16.msra.mxu0 %v2317
        %2439 = vmatprep.subr.bf16.mxu0 0
        %2440 = vmatpush1.bf16.msra.mxu0 %v2318
        %2441 = vmatprep.subr.bf16.mxu0 0
        %2442 = vmatpush1.bf16.msra.mxu0 0
        %2443 = vmatprep.subr.bf16.mxu0 0
        %2444 = vmatpush1.bf16.msra.mxu0 0
        %2445 = vmatprep.subr.bf16.mxu0 0
        %2446 = vmatpush1.bf16.msra.mxu0 0
        %2447 = vmatprep.subr.bf16.mxu0 0
        %2448 = vmatpush1.bf16.msra.mxu0 0
        %2449 = vmatprep.subr.bf16.mxu0 0
        %2450 = vmatpush1.bf16.msra.mxu0 0
        %2451 = vmatprep.subr.bf16.mxu0 0
        %2452 = vmatpush1.bf16.msra.mxu0 0
        %2453 = vmatprep.subr.bf16.mxu0 0
        %2454 = vmatpush1.bf16.msra.mxu0 0
        %2455 = vmatprep.subr.bf16.mxu0 0
        %2456 = vmatpush1.bf16.msra.mxu0 0
        %2457 = vmatprep.subr.bf16.mxu0 0
        %2458 = vmatpush1.bf16.msra.mxu0 0
        %2459 = vmatprep.subr.bf16.mxu0 0
        %2460 = vmatpush1.bf16.msra.mxu0 0
        %2461 = vmatprep.subr.bf16.mxu0 0
        %2462 = vmatpush1.bf16.msra.mxu0 0
        %2463 = vmatprep.subr.bf16.mxu0 0
        %2464 = vmatpush1.bf16.msra.mxu0 0
        %2465 = vmatprep.mubr.bf16.mxu0 0
        %2466 = vmatmul.mubr.bf16.gmra.mrb[0].mxu0 %v2431
        %v2467 = vpop.f32.mrb[0].mxu0
        %v2468 = vadd.f32 0.0, %v2467
        %v2469 = vpop.f32.mrb[0].mxu0
        %v2470 = vpop.f32.mrb[0].mxu0
        %v2471 = vadd.f32 0.0, %v2470
        %v2472 = vpop.f32.mrb[0].mxu0
        %2473 = vdwg.mxu0
        %v2474 = vmax.f32 %v2421, %v2468
        %v2475 = vmax.f32 %v2422, %v2471
        %v2476 = vadd.s32 %v2319, 3
        %v2477 = vadd.s32 %v2320, 3
        %vm2478 = vcmp.eq.s32.totalorder %v1160, %v2476
        %vm2479 = vcmp.eq.s32.totalorder %v1160, %v2477
        %v2480 = vsel %vm2478, 1.0, 0.0
        %v2481 = vsel %vm2479, 1.0, 0.0
        %v2482 = vpack.c.bf16 %v2481, %v2480
        %v2484 = vsel %vm1241, %v2482, 0
        %2486 = vmatprep.subr.bf16.mxu0 0
        %2487 = vmatpush1.bf16.msra.mxu0 %v2315
        %2488 = vmatprep.subr.bf16.mxu0 0
        %2489 = vmatpush1.bf16.msra.mxu0 %v2316
        %2490 = vmatprep.subr.bf16.mxu0 0
        %2491 = vmatpush1.bf16.msra.mxu0 %v2317
        %2492 = vmatprep.subr.bf16.mxu0 0
        %2493 = vmatpush1.bf16.msra.mxu0 %v2318
        %2494 = vmatprep.subr.bf16.mxu0 0
        %2495 = vmatpush1.bf16.msra.mxu0 0
        %2496 = vmatprep.subr.bf16.mxu0 0
        %2497 = vmatpush1.bf16.msra.mxu0 0
        %2498 = vmatprep.subr.bf16.mxu0 0
        %2499 = vmatpush1.bf16.msra.mxu0 0
        %2500 = vmatprep.subr.bf16.mxu0 0
        %2501 = vmatpush1.bf16.msra.mxu0 0
        %2502 = vmatprep.subr.bf16.mxu0 0
        %2503 = vmatpush1.bf16.msra.mxu0 0
        %2504 = vmatprep.subr.bf16.mxu0 0
        %2505 = vmatpush1.bf16.msra.mxu0 0
        %2506 = vmatprep.subr.bf16.mxu0 0
        %2507 = vmatpush1.bf16.msra.mxu0 0
        %2508 = vmatprep.subr.bf16.mxu0 0
        %2509 = vmatpush1.bf16.msra.mxu0 0
        %2510 = vmatprep.subr.bf16.mxu0 0
        %2511 = vmatpush1.bf16.msra.mxu0 0
        %2512 = vmatprep.subr.bf16.mxu0 0
        %2513 = vmatpush1.bf16.msra.mxu0 0
        %2514 = vmatprep.subr.bf16.mxu0 0
        %2515 = vmatpush1.bf16.msra.mxu0 0
        %2516 = vmatprep.subr.bf16.mxu0 0
        %2517 = vmatpush1.bf16.msra.mxu0 0
        %2518 = vmatprep.mubr.bf16.mxu0 0
        %2519 = vmatmul.mubr.bf16.gmra.mrb[0].mxu0 %v2484
        %v2520 = vpop.f32.mrb[0].mxu0
        %v2521 = vadd.f32 0.0, %v2520
        %v2522 = vpop.f32.mrb[0].mxu0
        %v2523 = vpop.f32.mrb[0].mxu0
        %v2524 = vadd.f32 0.0, %v2523
        %v2525 = vpop.f32.mrb[0].mxu0
        %2526 = vdwg.mxu0
        %v2527 = vmax.f32 %v2474, %v2521
        %v2528 = vmax.f32 %v2475, %v2524
        %v2529 = vpack.c.bf16 %v2528, %v2527
        %v2530 = vld [vmem:[#allocation9] sm:$0xff]
        %v2531 = vld [vmem:[#allocation9 + $0x8] sm:$0xff]
        %v2532 = vld [vmem:[#allocation9 + $0x10] sm:$0xf]
        %v2533 = vld [vmem:[#allocation9 + $0x14] sm:$0xff]
        %v2534 = vld [vmem:[#allocation9 + $0x1c] sm:$0xff]
        %v2535 = vld [vmem:[#allocation9 + $0x24] sm:$0xf]
        %v2536 = vld [vmem:[#allocation9 + $0x28] sm:$0xff]
        %v2537 = vld [vmem:[#allocation9 + $0x30] sm:$0xff]
        %v2538 = vld [vmem:[#allocation9 + $0x38] sm:$0xf]
        %v2539 = vld [vmem:[#allocation9 + $0x3c] sm:$0xff]
        %v2540 = vld [vmem:[#allocation9 + $0x44] sm:$0xff]
        %v2541 = vld [vmem:[#allocation9 + $0x4c] sm:$0xf]
        %v2542 = vld [vmem:[#allocation9 + $0x50] sm:$0xff]
        %v2543 = vld [vmem:[#allocation9 + $0x58] sm:$0xff]
        %v2544 = vld [vmem:[#allocation9 + $0x60] sm:$0xf]
        %v2545 = vld [vmem:[#allocation9 + $0x64] sm:$0xff]
        %v2546 = vld [vmem:[#allocation9 + $0x6c] sm:$0xff]
        %v2547 = vld [vmem:[#allocation9 + $0x74] sm:$0xf]
        %v2548 = vld [vmem:[#allocation9 + $0x78] sm:$0xff]
        %v2549 = vld [vmem:[#allocation9 + $0x80] sm:$0xff]
        %v2550 = vld [vmem:[#allocation9 + $0x88] sm:$0xf]
        %v2551 = vld [vmem:[#allocation9 + $0x8c] sm:$0xff]
        %v2552 = vld [vmem:[#allocation9 + $0x94] sm:$0xff]
        %v2553 = vld [vmem:[#allocation9 + $0x9c] sm:$0xf]
        %v2578 = vunpack.c.l.b16 %v2530
        %v2579 = vunpack.c.h.b16 %v2530
        %v2580 = vunpack.c.l.b16 %v2531
        %v2581 = vunpack.c.h.b16 %v2531
        %v2582 = vunpack.c.l.b16 %v2532
        %v2583 = vunpack.c.l.b16 %v2533
        %v2584 = vunpack.c.h.b16 %v2533
        %v2585 = vunpack.c.l.b16 %v2534
        %v2586 = vunpack.c.h.b16 %v2534
        %v2587 = vunpack.c.l.b16 %v2535
        %v2588 = vunpack.c.l.b16 %v2536
        %v2589 = vunpack.c.h.b16 %v2536
        %v2590 = vunpack.c.l.b16 %v2537
        %v2591 = vunpack.c.h.b16 %v2537
        %v2592 = vunpack.c.l.b16 %v2538
        %v2593 = vunpack.c.l.b16 %v2539
        %v2594 = vunpack.c.h.b16 %v2539
        %v2595 = vunpack.c.l.b16 %v2540
        %v2596 = vunpack.c.h.b16 %v2540
        %v2597 = vunpack.c.l.b16 %v2541
        %v2598 = vunpack.c.l.b16 %v2542
        %v2599 = vunpack.c.h.b16 %v2542
        %v2600 = vunpack.c.l.b16 %v2543
        %v2601 = vunpack.c.h.b16 %v2543
        %v2602 = vunpack.c.l.b16 %v2544
        %v2603 = vunpack.c.l.b16 %v2545
        %v2604 = vunpack.c.h.b16 %v2545
        %v2605 = vunpack.c.l.b16 %v2546
        %v2606 = vunpack.c.h.b16 %v2546
        %v2607 = vunpack.c.l.b16 %v2547
        %v2608 = vunpack.c.l.b16 %v2548
        %v2609 = vunpack.c.h.b16 %v2548
        %v2610 = vunpack.c.l.b16 %v2549
        %v2611 = vunpack.c.h.b16 %v2549
        %v2612 = vunpack.c.l.b16 %v2550
        %v2613 = vunpack.c.l.b16 %v2551
        %v2614 = vunpack.c.h.b16 %v2551
        %v2615 = vunpack.c.l.b16 %v2552
        %v2616 = vunpack.c.h.b16 %v2552
        %v2617 = vunpack.c.l.b16 %v2553
        %v2618 = vpack.c.b16 %v2583, %v2578
        %v2619 = vpack.c.b16 %v2584, %v2579
        %v2620 = vpack.c.b16 %v2585, %v2580
        %v2621 = vpack.c.b16 %v2586, %v2581
        %v2622 = vpack.c.b16 %v2587, %v2582
        %v2623 = vpack.c.b16 %v2593, %v2588
        %v2624 = vpack.c.b16 %v2594, %v2589
        %v2625 = vpack.c.b16 %v2595, %v2590
        %v2626 = vpack.c.b16 %v2596, %v2591
        %v2627 = vpack.c.b16 %v2597, %v2592
        %v2628 = vpack.c.b16 %v2603, %v2598
        %v2629 = vpack.c.b16 %v2604, %v2599
        %v2630 = vpack.c.b16 %v2605, %v2600
        %v2631 = vpack.c.b16 %v2606, %v2601
        %v2632 = vpack.c.b16 %v2607, %v2602
        %v2633 = vpack.c.b16 %v2613, %v2608
        %v2634 = vpack.c.b16 %v2614, %v2609
        %v2635 = vpack.c.b16 %v2615, %v2610
        %v2636 = vpack.c.b16 %v2616, %v2611
        %v2637 = vpack.c.b16 %v2617, %v2612
        %v2659 = vsel %vm1241, %v2529, 0
        %2661 = vmatprep.subr.bf16.mxu0 %v2619
        %2662 = vmatpush1.bf16.msra.mxu0 %v2618
        %2663 = vmatprep.subr.bf16.mxu0 %v2624
        %2664 = vmatpush1.bf16.msra.mxu0 %v2623
        %2665 = vmatprep.subr.bf16.mxu0 %v2629
        %2666 = vmatpush1.bf16.msra.mxu0 %v2628
        %2667 = vmatprep.subr.bf16.mxu0 %v2634
        %2668 = vmatpush1.bf16.msra.mxu0 %v2633
        %2669 = vmatprep.subr.bf16.mxu0 0
        %2670 = vmatpush1.bf16.msra.mxu0 0
        %2671 = vmatprep.subr.bf16.mxu0 0
        %2672 = vmatpush1.bf16.msra.mxu0 0
        %2673 = vmatprep.subr.bf16.mxu0 0
        %2674 = vmatpush1.bf16.msra.mxu0 0
        %2675 = vmatprep.subr.bf16.mxu0 0
        %2676 = vmatpush1.bf16.msra.mxu0 0
        %2677 = vmatprep.subr.bf16.mxu0 0
        %2678 = vmatpush1.bf16.msra.mxu0 0
        %2679 = vmatprep.subr.bf16.mxu0 0
        %2680 = vmatpush1.bf16.msra.mxu0 0
        %2681 = vmatprep.subr.bf16.mxu0 0
        %2682 = vmatpush1.bf16.msra.mxu0 0
        %2683 = vmatprep.subr.bf16.mxu0 0
        %2684 = vmatpush1.bf16.msra.mxu0 0
        %2685 = vmatprep.subr.bf16.mxu0 0
        %2686 = vmatpush1.bf16.msra.mxu0 0
        %2687 = vmatprep.subr.bf16.mxu0 0
        %2688 = vmatpush1.bf16.msra.mxu0 0
        %2689 = vmatprep.subr.bf16.mxu0 0
        %2690 = vmatpush1.bf16.msra.mxu0 0
        %2691 = vmatprep.subr.bf16.mxu0 0
        %2692 = vmatpush1.bf16.msra.mxu0 0
        %2693 = vmatprep.mubr.bf16.mxu0 0
        %2694 = vmatmul.mubr.bf16.gmra.mrb[0].mxu0 %v2659
        %v2695 = vpop.f32.mrb[0].mxu0
        %v2696 = vadd.f32 0.0, %v2695
        %v2697 = vpop.f32.mrb[0].mxu0
        %v2698 = vadd.f32 0.0, %v2697
        %v2699 = vpop.f32.mrb[0].mxu0
        %v2700 = vadd.f32 0.0, %v2699
        %v2701 = vpop.f32.mrb[0].mxu0
        %v2702 = vadd.f32 0.0, %v2701
        %2703 = vdwg.mxu0
        %2704 = vmatprep.subr.bf16.mxu0 %v2621
        %2705 = vmatpush1.bf16.msra.mxu0 %v2620
        %2706 = vmatprep.subr.bf16.mxu0 %v2626
        %2707 = vmatpush1.bf16.msra.mxu0 %v2625
        %2708 = vmatprep.subr.bf16.mxu0 %v2631
        %2709 = vmatpush1.bf16.msra.mxu0 %v2630
        %2710 = vmatprep.subr.bf16.mxu0 %v2636
        %2711 = vmatpush1.bf16.msra.mxu0 %v2635
        %2712 = vmatprep.subr.bf16.mxu0 0
        %2713 = vmatpush1.bf16.msra.mxu0 0
        %2714 = vmatprep.subr.bf16.mxu0 0
        %2715 = vmatpush1.bf16.msra.mxu0 0
        %2716 = vmatprep.subr.bf16.mxu0 0
        %2717 = vmatpush1.bf16.msra.mxu0 0
        %2718 = vmatprep.subr.bf16.mxu0 0
        %2719 = vmatpush1.bf16.msra.mxu0 0
        %2720 = vmatprep.subr.bf16.mxu0 0
        %2721 = vmatpush1.bf16.msra.mxu0 0
        %2722 = vmatprep.subr.bf16.mxu0 0
        %2723 = vmatpush1.bf16.msra.mxu0 0
        %2724 = vmatprep.subr.bf16.mxu0 0
        %2725 = vmatpush1.bf16.msra.mxu0 0
        %2726 = vmatprep.subr.bf16.mxu0 0
        %2727 = vmatpush1.bf16.msra.mxu0 0
        %2728 = vmatprep.subr.bf16.mxu0 0
        %2729 = vmatpush1.bf16.msra.mxu0 0
        %2730 = vmatprep.subr.bf16.mxu0 0
        %2731 = vmatpush1.bf16.msra.mxu0 0
        %2732 = vmatprep.subr.bf16.mxu0 0
        %2733 = vmatpush1.bf16.msra.mxu0 0
        %2734 = vmatprep.subr.bf16.mxu0 0
        %2735 = vmatpush1.bf16.msra.mxu0 0
        %2736 = vmatprep.mubr.bf16.mxu0 0
        %2737 = vmatmul.mubr.bf16.gmra.mrb[0].mxu0 %v2659
        %v2738 = vpop.f32.mrb[0].mxu0
        %v2739 = vadd.f32 0.0, %v2738
        %v2740 = vpop.f32.mrb[0].mxu0
        %v2741 = vadd.f32 0.0, %v2740
        %v2742 = vpop.f32.mrb[0].mxu0
        %v2743 = vadd.f32 0.0, %v2742
        %v2744 = vpop.f32.mrb[0].mxu0
        %v2745 = vadd.f32 0.0, %v2744
        %2746 = vdwg.mxu0
        %2747 = vmatprep.subr.bf16.mxu0 0
        %2748 = vmatpush1.bf16.msra.mxu0 %v2622
        %2749 = vmatprep.subr.bf16.mxu0 0
        %2750 = vmatpush1.bf16.msra.mxu0 %v2627
        %2751 = vmatprep.subr.bf16.mxu0 0
        %2752 = vmatpush1.bf16.msra.mxu0 %v2632
        %2753 = vmatprep.subr.bf16.mxu0 0
        %2754 = vmatpush1.bf16.msra.mxu0 %v2637
        %2755 = vmatprep.subr.bf16.mxu0 0
        %2756 = vmatpush1.bf16.msra.mxu0 0
        %2757 = vmatprep.subr.bf16.mxu0 0
        %2758 = vmatpush1.bf16.msra.mxu0 0
        %2759 = vmatprep.subr.bf16.mxu0 0
        %2760 = vmatpush1.bf16.msra.mxu0 0
        %2761 = vmatprep.subr.bf16.mxu0 0
        %2762 = vmatpush1.bf16.msra.mxu0 0
        %2763 = vmatprep.subr.bf16.mxu0 0
        %2764 = vmatpush1.bf16.msra.mxu0 0
        %2765 = vmatprep.subr.bf16.mxu0 0
        %2766 = vmatpush1.bf16.msra.mxu0 0
        %2767 = vmatprep.subr.bf16.mxu0 0
        %2768 = vmatpush1.bf16.msra.mxu0 0
        %2769 = vmatprep.subr.bf16.mxu0 0
        %2770 = vmatpush1.bf16.msra.mxu0 0
        %2771 = vmatprep.subr.bf16.mxu0 0
        %2772 = vmatpush1.bf16.msra.mxu0 0
        %2773 = vmatprep.subr.bf16.mxu0 0
        %2774 = vmatpush1.bf16.msra.mxu0 0
        %2775 = vmatprep.subr.bf16.mxu0 0
        %2776 = vmatpush1.bf16.msra.mxu0 0
        %2777 = vmatprep.subr.bf16.mxu0 0
        %2778 = vmatpush1.bf16.msra.mxu0 0
        %2779 = vmatprep.mubr.bf16.mxu0 0
        %2780 = vmatmul.mubr.bf16.gmra.mrb[0].mxu0 %v2659
        %v2781 = vpop.f32.mrb[0].mxu0
        %v2782 = vadd.f32 0.0, %v2781
        %v2783 = vpop.f32.mrb[0].mxu0
        %v2784 = vpop.f32.mrb[0].mxu0
        %v2785 = vadd.f32 0.0, %v2784
        %v2786 = vpop.f32.mrb[0].mxu0
        %2787 = vdwg.mxu0
        %vm2788 = vcmask 130048
        %v2789 = vsel %vm2788, %v1201, 0
        %v2791 = vsel %vm2788, %v1202, 0
        %2793 = vmatprep.subr.mxu0 0.0
        %2794 = vmatpush1.msra.mxu0 %v2698
        %2795 = vmatprep.subr.mxu0 0.0
        %2796 = vmatpush1.msra.mxu0 %v2702
        %2797 = vmatprep.subr.mxu0 0.0
        %2798 = vmatpush1.msra.mxu0 0.0
        %2799 = vmatprep.subr.mxu0 0.0
        %2800 = vmatpush1.msra.mxu0 0.0
        %2801 = vmatprep.subr.mxu0 0.0
        %2802 = vmatpush1.msra.mxu0 0.0
        %2803 = vmatprep.subr.mxu0 0.0
        %2804 = vmatpush1.msra.mxu0 0.0
        %2805 = vmatprep.subr.mxu0 0.0
        %2806 = vmatpush1.msra.mxu0 0.0
        %2807 = vmatprep.subr.mxu0 0.0
        %2808 = vmatpush1.msra.mxu0 0.0
        %2809 = vmatprep.subr.mxu0 0.0
        %2810 = vmatpush1.msra.mxu0 0.0
        %2811 = vmatprep.subr.mxu0 0.0
        %2812 = vmatpush1.msra.mxu0 0.0
        %2813 = vmatprep.subr.mxu0 0.0
        %2814 = vmatpush1.msra.mxu0 0.0
        %2815 = vmatprep.subr.mxu0 0.0
        %2816 = vmatpush1.msra.mxu0 0.0
        %2817 = vmatprep.subr.mxu0 0.0
        %2818 = vmatpush1.msra.mxu0 0.0
        %2819 = vmatprep.subr.mxu0 0.0
        %2820 = vmatpush1.msra.mxu0 0.0
        %2821 = vmatprep.subr.mxu0 0.0
        %2822 = vmatpush1.msra.mxu0 0.0
        %2823 = vmatprep.subr.mxu0 0.0
        %2824 = vmatpush1.msra.mxu0 0.0
        %2825 = vmatprep.subr.mxu0 0.0
        %2826 = vmatpush1.msra.mxu0 0.0
        %2827 = vmatprep.subr.mxu0 0.0
        %2828 = vmatpush1.msra.mxu0 0.0
        %2829 = vmatprep.subr.mxu0 0.0
        %2830 = vmatpush1.msra.mxu0 0.0
        %2831 = vmatprep.subr.mxu0 0.0
        %2832 = vmatpush1.msra.mxu0 0.0
        %2833 = vmatprep.subr.mxu0 0.0
        %2834 = vmatpush1.msra.mxu0 0.0
        %2835 = vmatprep.subr.mxu0 0.0
        %2836 = vmatpush1.msra.mxu0 0.0
        %2837 = vmatprep.subr.mxu0 0.0
        %2838 = vmatpush1.msra.mxu0 0.0
        %2839 = vmatprep.subr.mxu0 0.0
        %2840 = vmatpush1.msra.mxu0 0.0
        %2841 = vmatprep.subr.mxu0 0.0
        %2842 = vmatpush1.msra.mxu0 0.0
        %2843 = vmatprep.subr.mxu0 0.0
        %2844 = vmatpush1.msra.mxu0 0.0
        %2845 = vmatprep.subr.mxu0 0.0
        %2846 = vmatpush1.msra.mxu0 0.0
        %2847 = vmatprep.subr.mxu0 0.0
        %2848 = vmatpush1.msra.mxu0 0.0
        %2849 = vmatprep.subr.mxu0 0.0
        %2850 = vmatpush1.msra.mxu0 0.0
        %2851 = vmatprep.subr.mxu0 0.0
        %2852 = vmatpush1.msra.mxu0 0.0
        %2853 = vmatprep.subr.mxu0 0.0
        %2854 = vmatpush1.msra.mxu0 0.0
        %2855 = vmatprep.subr.mxu0 0.0
        %2856 = vmatpush1.msra.mxu0 0.0
        %2857 = vmatprep.mubr.f32.mxu0 0.0
        %2858 = vmatmul.mubr.f32.gmra.mrb[0].mxu0 %v2789
        %v2859 = vpop.f32.mrb[0].mxu0
        %v2860 = vadd.f32 0.0, %v2859
        %v2861 = vpop.f32.mrb[0].mxu0
        %2862 = vmatprep.mubr.f32.mxu0 0.0
        %2863 = vmatmul.mubr.f32.gmra.mrb[0].mxu0 %v2791
        %v2864 = vpop.f32.mrb[0].mxu0
        %v2865 = vadd.f32 0.0, %v2864
        %v2866 = vpop.f32.mrb[0].mxu0
        %2867 = vdwg.mxu0
        %v2868 = vsel %vm2788, %v1177, 0
        %v2870 = vsel %vm2788, %v1178, 0
        %2872 = vmatprep.subr.mxu0 0.0
        %2873 = vmatpush1.msra.mxu0 %v2696
        %2874 = vmatprep.subr.mxu0 0.0
        %2875 = vmatpush1.msra.mxu0 %v2700
        %2876 = vmatprep.subr.mxu0 0.0
        %2877 = vmatpush1.msra.mxu0 0.0
        %2878 = vmatprep.subr.mxu0 0.0
        %2879 = vmatpush1.msra.mxu0 0.0
        %2880 = vmatprep.subr.mxu0 0.0
        %2881 = vmatpush1.msra.mxu0 0.0
        %2882 = vmatprep.subr.mxu0 0.0
        %2883 = vmatpush1.msra.mxu0 0.0
        %2884 = vmatprep.subr.mxu0 0.0
        %2885 = vmatpush1.msra.mxu0 0.0
        %2886 = vmatprep.subr.mxu0 0.0
        %2887 = vmatpush1.msra.mxu0 0.0
        %2888 = vmatprep.subr.mxu0 0.0
        %2889 = vmatpush1.msra.mxu0 0.0
        %2890 = vmatprep.subr.mxu0 0.0
        %2891 = vmatpush1.msra.mxu0 0.0
        %2892 = vmatprep.subr.mxu0 0.0
        %2893 = vmatpush1.msra.mxu0 0.0
        %2894 = vmatprep.subr.mxu0 0.0
        %2895 = vmatpush1.msra.mxu0 0.0
        %2896 = vmatprep.subr.mxu0 0.0
        %2897 = vmatpush1.msra.mxu0 0.0
        %2898 = vmatprep.subr.mxu0 0.0
        %2899 = vmatpush1.msra.mxu0 0.0
        %2900 = vmatprep.subr.mxu0 0.0
        %2901 = vmatpush1.msra.mxu0 0.0
        %2902 = vmatprep.subr.mxu0 0.0
        %2903 = vmatpush1.msra.mxu0 0.0
        %2904 = vmatprep.subr.mxu0 0.0
        %2905 = vmatpush1.msra.mxu0 0.0
        %2906 = vmatprep.subr.mxu0 0.0
        %2907 = vmatpush1.msra.mxu0 0.0
        %2908 = vmatprep.subr.mxu0 0.0
        %2909 = vmatpush1.msra.mxu0 0.0
        %2910 = vmatprep.subr.mxu0 0.0
        %2911 = vmatpush1.msra.mxu0 0.0
        %2912 = vmatprep.subr.mxu0 0.0
        %2913 = vmatpush1.msra.mxu0 0.0
        %2914 = vmatprep.subr.mxu0 0.0
        %2915 = vmatpush1.msra.mxu0 0.0
        %2916 = vmatprep.subr.mxu0 0.0
        %2917 = vmatpush1.msra.mxu0 0.0
        %2918 = vmatprep.subr.mxu0 0.0
        %2919 = vmatpush1.msra.mxu0 0.0
        %2920 = vmatprep.subr.mxu0 0.0
        %2921 = vmatpush1.msra.mxu0 0.0
        %2922 = vmatprep.subr.mxu0 0.0
        %2923 = vmatpush1.msra.mxu0 0.0
        %2924 = vmatprep.subr.mxu0 0.0
        %2925 = vmatpush1.msra.mxu0 0.0
        %2926 = vmatprep.subr.mxu0 0.0
        %2927 = vmatpush1.msra.mxu0 0.0
        %2928 = vmatprep.subr.mxu0 0.0
        %2929 = vmatpush1.msra.mxu0 0.0
        %2930 = vmatprep.subr.mxu0 0.0
        %2931 = vmatpush1.msra.mxu0 0.0
        %2932 = vmatprep.subr.mxu0 0.0
        %2933 = vmatpush1.msra.mxu0 0.0
        %2934 = vmatprep.subr.mxu0 0.0
        %2935 = vmatpush1.msra.mxu0 0.0
        %2936 = vmatprep.mubr.f32.mxu0 0.0
        %2937 = vmatmul.mubr.f32.gmra.mrb[0].mxu0 %v2868
        %v2938 = vpop.f32.mrb[0].mxu0
        %v2939 = vadd.f32 %v2860, %v2938
        %v2940 = vpop.f32.mrb[0].mxu0
        %2941 = vmatprep.mubr.f32.mxu0 0.0
        %2942 = vmatmul.mubr.f32.gmra.mrb[0].mxu0 %v2870
        %v2943 = vpop.f32.mrb[0].mxu0
        %v2944 = vadd.f32 %v2865, %v2943
        %v2945 = vpop.f32.mrb[0].mxu0
        %2946 = vdwg.mxu0
        %v2947 = vadd.f32 %v2939, %v2739
        %v2948 = vadd.f32 %v2944, %v2743
        %v2949 = vsel %vm2788, %v1524, 0
        %v2951 = vsel %vm2788, %v1525, 0
        %2953 = vmatprep.subr.mxu0 0.0
        %2954 = vmatpush1.msra.mxu0 %v2741
        %2955 = vmatprep.subr.mxu0 0.0
        %2956 = vmatpush1.msra.mxu0 %v2745
        %2957 = vmatprep.subr.mxu0 0.0
        %2958 = vmatpush1.msra.mxu0 0.0
        %2959 = vmatprep.subr.mxu0 0.0
        %2960 = vmatpush1.msra.mxu0 0.0
        %2961 = vmatprep.subr.mxu0 0.0
        %2962 = vmatpush1.msra.mxu0 0.0
        %2963 = vmatprep.subr.mxu0 0.0
        %2964 = vmatpush1.msra.mxu0 0.0
        %2965 = vmatprep.subr.mxu0 0.0
        %2966 = vmatpush1.msra.mxu0 0.0
        %2967 = vmatprep.subr.mxu0 0.0
        %2968 = vmatpush1.msra.mxu0 0.0
        %2969 = vmatprep.subr.mxu0 0.0
        %2970 = vmatpush1.msra.mxu0 0.0
        %2971 = vmatprep.subr.mxu0 0.0
        %2972 = vmatpush1.msra.mxu0 0.0
        %2973 = vmatprep.subr.mxu0 0.0
        %2974 = vmatpush1.msra.mxu0 0.0
        %2975 = vmatprep.subr.mxu0 0.0
        %2976 = vmatpush1.msra.mxu0 0.0
        %2977 = vmatprep.subr.mxu0 0.0
        %2978 = vmatpush1.msra.mxu0 0.0
        %2979 = vmatprep.subr.mxu0 0.0
        %2980 = vmatpush1.msra.mxu0 0.0
        %2981 = vmatprep.subr.mxu0 0.0
        %2982 = vmatpush1.msra.mxu0 0.0
        %2983 = vmatprep.subr.mxu0 0.0
        %2984 = vmatpush1.msra.mxu0 0.0
        %2985 = vmatprep.subr.mxu0 0.0
        %2986 = vmatpush1.msra.mxu0 0.0
        %2987 = vmatprep.subr.mxu0 0.0
        %2988 = vmatpush1.msra.mxu0 0.0
        %2989 = vmatprep.subr.mxu0 0.0
        %2990 = vmatpush1.msra.mxu0 0.0
        %2991 = vmatprep.subr.mxu0 0.0
        %2992 = vmatpush1.msra.mxu0 0.0
        %2993 = vmatprep.subr.mxu0 0.0
        %2994 = vmatpush1.msra.mxu0 0.0
        %2995 = vmatprep.subr.mxu0 0.0
        %2996 = vmatpush1.msra.mxu0 0.0
        %2997 = vmatprep.subr.mxu0 0.0
        %2998 = vmatpush1.msra.mxu0 0.0
        %2999 = vmatprep.subr.mxu0 0.0
        %3000 = vmatpush1.msra.mxu0 0.0
        %3001 = vmatprep.subr.mxu0 0.0
        %3002 = vmatpush1.msra.mxu0 0.0
        %3003 = vmatprep.subr.mxu0 0.0
        %3004 = vmatpush1.msra.mxu0 0.0
        %3005 = vmatprep.subr.mxu0 0.0
        %3006 = vmatpush1.msra.mxu0 0.0
        %3007 = vmatprep.subr.mxu0 0.0
        %3008 = vmatpush1.msra.mxu0 0.0
        %3009 = vmatprep.subr.mxu0 0.0
        %3010 = vmatpush1.msra.mxu0 0.0
        %3011 = vmatprep.subr.mxu0 0.0
        %3012 = vmatpush1.msra.mxu0 0.0
        %3013 = vmatprep.subr.mxu0 0.0
        %3014 = vmatpush1.msra.mxu0 0.0
        %3015 = vmatprep.subr.mxu0 0.0
        %3016 = vmatpush1.msra.mxu0 0.0
        %3017 = vmatprep.mubr.f32.mxu0 0.0
        %3018 = vmatmul.mubr.f32.gmra.mrb[0].mxu0 %v2949
        %v3019 = vpop.f32.mrb[0].mxu0
        %v3020 = vadd.f32 0.0, %v3019
        %v3021 = vpop.f32.mrb[0].mxu0
        %3022 = vmatprep.mubr.f32.mxu0 0.0
        %3023 = vmatmul.mubr.f32.gmra.mrb[0].mxu0 %v2951
        %v3024 = vpop.f32.mrb[0].mxu0
        %v3025 = vadd.f32 0.0, %v3024
        %v3026 = vpop.f32.mrb[0].mxu0
        %3027 = vdwg.mxu0
        %v3028 = vadd.f32 %v2947, %v3020
        %v3029 = vadd.f32 %v2948, %v3025
        %v3030 = vsel %vm2788, %v1717, 0
        %v3032 = vsel %vm2788, %v1718, 0
        %3034 = vmatprep.subr.mxu0 0.0
        %3035 = vmatpush1.msra.mxu0 %v2782
        %3036 = vmatprep.subr.mxu0 0.0
        %3037 = vmatpush1.msra.mxu0 %v2785
        %3038 = vmatprep.subr.mxu0 0.0
        %3039 = vmatpush1.msra.mxu0 0.0
        %3040 = vmatprep.subr.mxu0 0.0
        %3041 = vmatpush1.msra.mxu0 0.0
        %3042 = vmatprep.subr.mxu0 0.0
        %3043 = vmatpush1.msra.mxu0 0.0
        %3044 = vmatprep.subr.mxu0 0.0
        %3045 = vmatpush1.msra.mxu0 0.0
        %3046 = vmatprep.subr.mxu0 0.0
        %3047 = vmatpush1.msra.mxu0 0.0
        %3048 = vmatprep.subr.mxu0 0.0
        %3049 = vmatpush1.msra.mxu0 0.0
        %3050 = vmatprep.subr.mxu0 0.0
        %3051 = vmatpush1.msra.mxu0 0.0
        %3052 = vmatprep.subr.mxu0 0.0
        %3053 = vmatpush1.msra.mxu0 0.0
        %3054 = vmatprep.subr.mxu0 0.0
        %3055 = vmatpush1.msra.mxu0 0.0
        %3056 = vmatprep.subr.mxu0 0.0
        %3057 = vmatpush1.msra.mxu0 0.0
        %3058 = vmatprep.subr.mxu0 0.0
        %3059 = vmatpush1.msra.mxu0 0.0
        %3060 = vmatprep.subr.mxu0 0.0
        %3061 = vmatpush1.msra.mxu0 0.0
        %3062 = vmatprep.subr.mxu0 0.0
        %3063 = vmatpush1.msra.mxu0 0.0
        %3064 = vmatprep.subr.mxu0 0.0
        %3065 = vmatpush1.msra.mxu0 0.0
        %3066 = vmatprep.subr.mxu0 0.0
        %3067 = vmatpush1.msra.mxu0 0.0
        %3068 = vmatprep.subr.mxu0 0.0
        %3069 = vmatpush1.msra.mxu0 0.0
        %3070 = vmatprep.subr.mxu0 0.0
        %3071 = vmatpush1.msra.mxu0 0.0
        %3072 = vmatprep.subr.mxu0 0.0
        %3073 = vmatpush1.msra.mxu0 0.0
        %3074 = vmatprep.subr.mxu0 0.0
        %3075 = vmatpush1.msra.mxu0 0.0
        %3076 = vmatprep.subr.mxu0 0.0
        %3077 = vmatpush1.msra.mxu0 0.0
        %3078 = vmatprep.subr.mxu0 0.0
        %3079 = vmatpush1.msra.mxu0 0.0
        %3080 = vmatprep.subr.mxu0 0.0
        %3081 = vmatpush1.msra.mxu0 0.0
        %3082 = vmatprep.subr.mxu0 0.0
        %3083 = vmatpush1.msra.mxu0 0.0
        %3084 = vmatprep.subr.mxu0 0.0
        %3085 = vmatpush1.msra.mxu0 0.0
        %3086 = vmatprep.subr.mxu0 0.0
        %3087 = vmatpush1.msra.mxu0 0.0
        %3088 = vmatprep.subr.mxu0 0.0
        %3089 = vmatpush1.msra.mxu0 0.0
        %3090 = vmatprep.subr.mxu0 0.0
        %3091 = vmatpush1.msra.mxu0 0.0
        %3092 = vmatprep.subr.mxu0 0.0
        %3093 = vmatpush1.msra.mxu0 0.0
        %3094 = vmatprep.subr.mxu0 0.0
        %3095 = vmatpush1.msra.mxu0 0.0
        %3096 = vmatprep.subr.mxu0 0.0
        %3097 = vmatpush1.msra.mxu0 0.0
        %3098 = vmatprep.mubr.f32.mxu0 0.0
        %3099 = vmatmul.mubr.f32.gmra.mrb[0].mxu0 %v3030
        %v3100 = vpop.f32.mrb[0].mxu0
        %v3101 = vadd.f32 0.0, %v3100
        %v3102 = vpop.f32.mrb[0].mxu0
        %3103 = vmatprep.mubr.f32.mxu0 0.0
        %3104 = vmatmul.mubr.f32.gmra.mrb[0].mxu0 %v3032
        %v3105 = vpop.f32.mrb[0].mxu0
        %v3106 = vadd.f32 0.0, %v3105
        %v3107 = vpop.f32.mrb[0].mxu0
        %3108 = vdwg.mxu0
        %v3109 = vadd.f32 %v3028, %v3101
        %v3110 = vadd.f32 %v3029, %v3106
        %v3111 = vld [vmem:[#allocation10] sm:$0x3]
        %v3112 = vlaneseq
        %v3113 = vshrl.u32 %v3112, 7
        %v3114 = vsub.s32 0, %v3113
        %v3115 = vrot.slane %v3111, %v3114
        %v3116 = vmul.f32 %v3109, %v3115
        %v3117 = vmul.f32 %v3110, %v3115
        %v3118 = vlaneseq
        %v3119 = vshrl.u32 %v3118, 7
        %v3120 = vsub.s32 1, %v3119
        %v3121 = vrot.slane %v3111, %v3120
        %v3122 = vadd.f32 %v3116, %v3121
        %v3123 = vadd.f32 %v3117, %v3121
        %v3124 = vmax.f32 %v3122, 0.0
        %v3125 = vmax.f32 %v3123, 0.0
        %v3126 = vpack.c.bf16 %v3125, %v3124
        %v3127 = vld [vmem:[#allocation12] sm:$0xff]
        %v3128 = vld [vmem:[#allocation12 + $0x8] sm:$0xf]
        %v3129 = vld [vmem:[#allocation12 + $0xc] sm:$0xff]
        %v3130 = vld [vmem:[#allocation12 + $0x14] sm:$0xf]
        %v3131 = vld [vmem:[#allocation12 + $0x18] sm:$0xff]
        %v3132 = vld [vmem:[#allocation12 + $0x20] sm:$0xf]
        %v3133 = vld [vmem:[#allocation12 + $0x24] sm:$0xff]
        %v3134 = vld [vmem:[#allocation12 + $0x2c] sm:$0xf]
        %v3135 = vld [vmem:[#allocation12 + $0x30] sm:$0xff]
        %v3136 = vld [vmem:[#allocation12 + $0x38] sm:$0xf]
        %v3137 = vld [vmem:[#allocation12 + $0x3c] sm:$0xff]
        %v3138 = vld [vmem:[#allocation12 + $0x44] sm:$0xf]
        %v3139 = vld [vmem:[#allocation12 + $0x48] sm:$0xff]
        %v3140 = vld [vmem:[#allocation12 + $0x50] sm:$0xf]
        %v3141 = vld [vmem:[#allocation12 + $0x54] sm:$0xff]
        %v3142 = vld [vmem:[#allocation12 + $0x5c] sm:$0xf]
        %v3143 = vld [vmem:[#allocation12 + $0x60] sm:$0xff]
        %v3144 = vld [vmem:[#allocation12 + $0x68] sm:$0xf]
        %v3145 = vld [vmem:[#allocation12 + $0x6c] sm:$0xff]
        %v3146 = vld [vmem:[#allocation12 + $0x74] sm:$0xf]
        %v3147 = vld [vmem:[#allocation12 + $0x78] sm:$0xff]
        %v3148 = vld [vmem:[#allocation12 + $0x80] sm:$0xf]
        %v3149 = vld [vmem:[#allocation12 + $0x84] sm:$0xff]
        %v3150 = vld [vmem:[#allocation12 + $0x8c] sm:$0xf]
        %v3151 = vld [vmem:[#allocation12 + $0x90] sm:$0xff]
        %v3152 = vld [vmem:[#allocation12 + $0x98] sm:$0xf]
        %v3153 = vld [vmem:[#allocation12 + $0x9c] sm:$0xff]
        %v3154 = vld [vmem:[#allocation12 + $0xa4] sm:$0xf]
        %v3155 = vld [vmem:[#allocation12 + $0xa8] sm:$0xff]
        %v3156 = vld [vmem:[#allocation12 + $0xb0] sm:$0xf]
        %v3157 = vld [vmem:[#allocation12 + $0xb4] sm:$0xff]
        %v3158 = vld [vmem:[#allocation12 + $0xbc] sm:$0xf]
        %v3191 = vunpack.c.l.b16 %v3127
        %v3192 = vunpack.c.h.b16 %v3127
        %v3193 = vunpack.c.l.b16 %v3128
        %v3194 = vunpack.c.l.b16 %v3129
        %v3195 = vunpack.c.h.b16 %v3129
        %v3196 = vunpack.c.l.b16 %v3130
        %v3197 = vunpack.c.l.b16 %v3131
        %v3198 = vunpack.c.h.b16 %v3131
        %v3199 = vunpack.c.l.b16 %v3132
        %v3200 = vunpack.c.l.b16 %v3133
        %v3201 = vunpack.c.h.b16 %v3133
        %v3202 = vunpack.c.l.b16 %v3134
        %v3203 = vunpack.c.l.b16 %v3135
        %v3204 = vunpack.c.h.b16 %v3135
        %v3205 = vunpack.c.l.b16 %v3136
        %v3206 = vunpack.c.l.b16 %v3137
        %v3207 = vunpack.c.h.b16 %v3137
        %v3208 = vunpack.c.l.b16 %v3138
        %v3209 = vunpack.c.l.b16 %v3139
        %v3210 = vunpack.c.h.b16 %v3139
        %v3211 = vunpack.c.l.b16 %v3140
        %v3212 = vunpack.c.l.b16 %v3141
        %v3213 = vunpack.c.h.b16 %v3141
        %v3214 = vunpack.c.l.b16 %v3142
        %v3215 = vunpack.c.l.b16 %v3143
        %v3216 = vunpack.c.h.b16 %v3143
        %v3217 = vunpack.c.l.b16 %v3144
        %v3218 = vunpack.c.l.b16 %v3145
        %v3219 = vunpack.c.h.b16 %v3145
        %v3220 = vunpack.c.l.b16 %v3146
        %v3221 = vunpack.c.l.b16 %v3147
        %v3222 = vunpack.c.h.b16 %v3147
        %v3223 = vunpack.c.l.b16 %v3148
        %v3224 = vunpack.c.l.b16 %v3149
        %v3225 = vunpack.c.h.b16 %v3149
        %v3226 = vunpack.c.l.b16 %v3150
        %v3227 = vunpack.c.l.b16 %v3151
        %v3228 = vunpack.c.h.b16 %v3151
        %v3229 = vunpack.c.l.b16 %v3152
        %v3230 = vunpack.c.l.b16 %v3153
        %v3231 = vunpack.c.h.b16 %v3153
        %v3232 = vunpack.c.l.b16 %v3154
        %v3233 = vunpack.c.l.b16 %v3155
        %v3234 = vunpack.c.h.b16 %v3155
        %v3235 = vunpack.c.l.b16 %v3156
        %v3236 = vunpack.c.l.b16 %v3157
        %v3237 = vunpack.c.h.b16 %v3157
        %v3238 = vunpack.c.l.b16 %v3158
        %v3239 = vpack.c.b16 %v3194, %v3191
        %v3240 = vpack.c.b16 %v3195, %v3192
        %v3241 = vpack.c.b16 %v3196, %v3193
        %v3242 = vpack.c.b16 %v3200, %v3197
        %v3243 = vpack.c.b16 %v3201, %v3198
        %v3244 = vpack.c.b16 %v3202, %v3199
        %v3245 = vpack.c.b16 %v3206, %v3203
        %v3246 = vpack.c.b16 %v3207, %v3204
        %v3247 = vpack.c.b16 %v3208, %v3205
        %v3248 = vpack.c.b16 %v3212, %v3209
        %v3249 = vpack.c.b16 %v3213, %v3210
        %v3250 = vpack.c.b16 %v3214, %v3211
        %v3251 = vpack.c.b16 %v3218, %v3215
        %v3252 = vpack.c.b16 %v3219, %v3216
        %v3253 = vpack.c.b16 %v3220, %v3217
        %v3254 = vpack.c.b16 %v3224, %v3221
        %v3255 = vpack.c.b16 %v3225, %v3222
        %v3256 = vpack.c.b16 %v3226, %v3223
        %v3257 = vpack.c.b16 %v3230, %v3227
        %v3258 = vpack.c.b16 %v3231, %v3228
        %v3259 = vpack.c.b16 %v3232, %v3229
        %v3260 = vpack.c.b16 %v3236, %v3233
        %v3261 = vpack.c.b16 %v3237, %v3234
        %v3262 = vpack.c.b16 %v3238, %v3235
        %3287 = vmatprep.subr.bf16.mxu0 %v3240
        %3288 = vmatpush1.bf16.msra.mxu0 %v3239
        %3289 = vmatprep.subr.bf16.mxu0 %v3243
        %3290 = vmatpush1.bf16.msra.mxu0 %v3242
        %3291 = vmatprep.subr.bf16.mxu0 %v3246
        %3292 = vmatpush1.bf16.msra.mxu0 %v3245
        %3293 = vmatprep.subr.bf16.mxu0 %v3249
        %3294 = vmatpush1.bf16.msra.mxu0 %v3248
        %3295 = vmatprep.subr.bf16.mxu0 %v3252
        %3296 = vmatpush1.bf16.msra.mxu0 %v3251
        %3297 = vmatprep.subr.bf16.mxu0 %v3255
        %3298 = vmatpush1.bf16.msra.mxu0 %v3254
        %3299 = vmatprep.subr.bf16.mxu0 %v3258
        %3300 = vmatpush1.bf16.msra.mxu0 %v3257
        %3301 = vmatprep.subr.bf16.mxu0 %v3261
        %3302 = vmatpush1.bf16.msra.mxu0 %v3260
        %3303 = vmatprep.subr.bf16.mxu0 0
        %3304 = vmatpush1.bf16.msra.mxu0 0
        %3305 = vmatprep.subr.bf16.mxu0 0
        %3306 = vmatpush1.bf16.msra.mxu0 0
        %3307 = vmatprep.subr.bf16.mxu0 0
        %3308 = vmatpush1.bf16.msra.mxu0 0
        %3309 = vmatprep.subr.bf16.mxu0 0
        %3310 = vmatpush1.bf16.msra.mxu0 0
        %3311 = vmatprep.subr.bf16.mxu0 0
        %3312 = vmatpush1.bf16.msra.mxu0 0
        %3313 = vmatprep.subr.bf16.mxu0 0
        %3314 = vmatpush1.bf16.msra.mxu0 0
        %3315 = vmatprep.subr.bf16.mxu0 0
        %3316 = vmatpush1.bf16.msra.mxu0 0
        %3317 = vmatprep.subr.bf16.mxu0 0
        %3318 = vmatpush1.bf16.msra.mxu0 0
        %3319 = vmatprep.mubr.bf16.mxu0 0
        %3320 = vmatmul.mubr.bf16.gmra.mrb[0].mxu0 %v3126
        %v3321 = vpop.f32.mrb[0].mxu0
        %v3322 = vadd.f32 0.0, %v3321
        %v3323 = vpop.f32.mrb[0].mxu0
        %v3324 = vadd.f32 0.0, %v3323
        %v3325 = vpop.f32.mrb[0].mxu0
        %v3326 = vadd.f32 0.0, %v3325
        %v3327 = vpop.f32.mrb[0].mxu0
        %v3328 = vadd.f32 0.0, %v3327
        %3329 = vdwg.mxu0
        %3330 = vmatprep.subr.bf16.mxu0 0
        %3331 = vmatpush1.bf16.msra.mxu0 %v3241
        %3332 = vmatprep.subr.bf16.mxu0 0
        %3333 = vmatpush1.bf16.msra.mxu0 %v3244
        %3334 = vmatprep.subr.bf16.mxu0 0
        %3335 = vmatpush1.bf16.msra.mxu0 %v3247
        %3336 = vmatprep.subr.bf16.mxu0 0
        %3337 = vmatpush1.bf16.msra.mxu0 %v3250
        %3338 = vmatprep.subr.bf16.mxu0 0
        %3339 = vmatpush1.bf16.msra.mxu0 %v3253
        %3340 = vmatprep.subr.bf16.mxu0 0
        %3341 = vmatpush1.bf16.msra.mxu0 %v3256
        %3342 = vmatprep.subr.bf16.mxu0 0
        %3343 = vmatpush1.bf16.msra.mxu0 %v3259
        %3344 = vmatprep.subr.bf16.mxu0 0
        %3345 = vmatpush1.bf16.msra.mxu0 %v3262
        %3346 = vmatprep.subr.bf16.mxu0 0
        %3347 = vmatpush1.bf16.msra.mxu0 0
        %3348 = vmatprep.subr.bf16.mxu0 0
        %3349 = vmatpush1.bf16.msra.mxu0 0
        %3350 = vmatprep.subr.bf16.mxu0 0
        %3351 = vmatpush1.bf16.msra.mxu0 0
        %3352 = vmatprep.subr.bf16.mxu0 0
        %3353 = vmatpush1.bf16.msra.mxu0 0
        %3354 = vmatprep.subr.bf16.mxu0 0
        %3355 = vmatpush1.bf16.msra.mxu0 0
        %3356 = vmatprep.subr.bf16.mxu0 0
        %3357 = vmatpush1.bf16.msra.mxu0 0
        %3358 = vmatprep.subr.bf16.mxu0 0
        %3359 = vmatpush1.bf16.msra.mxu0 0
        %3360 = vmatprep.subr.bf16.mxu0 0
        %3361 = vmatpush1.bf16.msra.mxu0 0
        %3362 = vmatprep.mubr.bf16.mxu0 0
        %3363 = vmatmul.mubr.bf16.gmra.mrb[0].mxu0 %v3126
        %v3364 = vpop.f32.mrb[0].mxu0
        %v3365 = vadd.f32 0.0, %v3364
        %v3366 = vpop.f32.mrb[0].mxu0
        %v3367 = vpop.f32.mrb[0].mxu0
        %v3368 = vadd.f32 0.0, %v3367
        %v3369 = vpop.f32.mrb[0].mxu0
        %3370 = vdwg.mxu0
        %3371 = vmatprep.subr.mxu0 0.0
        %3372 = vmatpush1.msra.mxu0 %v3322
        %3373 = vmatprep.subr.mxu0 0.0
        %3374 = vmatpush1.msra.mxu0 %v3326
        %3375 = vmatprep.subr.mxu0 0.0
        %3376 = vmatpush1.msra.mxu0 0.0
        %3377 = vmatprep.subr.mxu0 0.0
        %3378 = vmatpush1.msra.mxu0 0.0
        %3379 = vmatprep.subr.mxu0 0.0
        %3380 = vmatpush1.msra.mxu0 0.0
        %3381 = vmatprep.subr.mxu0 0.0
        %3382 = vmatpush1.msra.mxu0 0.0
        %3383 = vmatprep.subr.mxu0 0.0
        %3384 = vmatpush1.msra.mxu0 0.0
        %3385 = vmatprep.subr.mxu0 0.0
        %3386 = vmatpush1.msra.mxu0 0.0
        %3387 = vmatprep.subr.mxu0 0.0
        %3388 = vmatpush1.msra.mxu0 0.0
        %3389 = vmatprep.subr.mxu0 0.0
        %3390 = vmatpush1.msra.mxu0 0.0
        %3391 = vmatprep.subr.mxu0 0.0
        %3392 = vmatpush1.msra.mxu0 0.0
        %3393 = vmatprep.subr.mxu0 0.0
        %3394 = vmatpush1.msra.mxu0 0.0
        %3395 = vmatprep.subr.mxu0 0.0
        %3396 = vmatpush1.msra.mxu0 0.0
        %3397 = vmatprep.subr.mxu0 0.0
        %3398 = vmatpush1.msra.mxu0 0.0
        %3399 = vmatprep.subr.mxu0 0.0
        %3400 = vmatpush1.msra.mxu0 0.0
        %3401 = vmatprep.subr.mxu0 0.0
        %3402 = vmatpush1.msra.mxu0 0.0
        %3403 = vmatprep.subr.mxu0 0.0
        %3404 = vmatpush1.msra.mxu0 0.0
        %3405 = vmatprep.subr.mxu0 0.0
        %3406 = vmatpush1.msra.mxu0 0.0
        %3407 = vmatprep.subr.mxu0 0.0
        %3408 = vmatpush1.msra.mxu0 0.0
        %3409 = vmatprep.subr.mxu0 0.0
        %3410 = vmatpush1.msra.mxu0 0.0
        %3411 = vmatprep.subr.mxu0 0.0
        %3412 = vmatpush1.msra.mxu0 0.0
        %3413 = vmatprep.subr.mxu0 0.0
        %3414 = vmatpush1.msra.mxu0 0.0
        %3415 = vmatprep.subr.mxu0 0.0
        %3416 = vmatpush1.msra.mxu0 0.0
        %3417 = vmatprep.subr.mxu0 0.0
        %3418 = vmatpush1.msra.mxu0 0.0
        %3419 = vmatprep.subr.mxu0 0.0
        %3420 = vmatpush1.msra.mxu0 0.0
        %3421 = vmatprep.subr.mxu0 0.0
        %3422 = vmatpush1.msra.mxu0 0.0
        %3423 = vmatprep.subr.mxu0 0.0
        %3424 = vmatpush1.msra.mxu0 0.0
        %3425 = vmatprep.subr.mxu0 0.0
        %3426 = vmatpush1.msra.mxu0 0.0
        %3427 = vmatprep.subr.mxu0 0.0
        %3428 = vmatpush1.msra.mxu0 0.0
        %3429 = vmatprep.subr.mxu0 0.0
        %3430 = vmatpush1.msra.mxu0 0.0
        %3431 = vmatprep.subr.mxu0 0.0
        %3432 = vmatpush1.msra.mxu0 0.0
        %3433 = vmatprep.subr.mxu0 0.0
        %3434 = vmatpush1.msra.mxu0 0.0
        %3435 = vmatprep.mubr.f32.mxu0 0.0
        %3436 = vmatmul.mubr.f32.gmra.mrb[0].mxu0 %v2789
        %v3437 = vpop.f32.mrb[0].mxu0
        %v3438 = vadd.f32 %v3324, %v3437
        %v3439 = vpop.f32.mrb[0].mxu0
        %3440 = vmatprep.mubr.f32.mxu0 0.0
        %3441 = vmatmul.mubr.f32.gmra.mrb[0].mxu0 %v2791
        %v3442 = vpop.f32.mrb[0].mxu0
        %v3443 = vadd.f32 %v3328, %v3442
        %v3444 = vpop.f32.mrb[0].mxu0
        %3445 = vdwg.mxu0
        %3446 = vmatprep.subr.mxu0 0.0
        %3447 = vmatpush1.msra.mxu0 %v3365
        %3448 = vmatprep.subr.mxu0 0.0
        %3449 = vmatpush1.msra.mxu0 %v3368
        %3450 = vmatprep.subr.mxu0 0.0
        %3451 = vmatpush1.msra.mxu0 0.0
        %3452 = vmatprep.subr.mxu0 0.0
        %3453 = vmatpush1.msra.mxu0 0.0
        %3454 = vmatprep.subr.mxu0 0.0
        %3455 = vmatpush1.msra.mxu0 0.0
        %3456 = vmatprep.subr.mxu0 0.0
        %3457 = vmatpush1.msra.mxu0 0.0
        %3458 = vmatprep.subr.mxu0 0.0
        %3459 = vmatpush1.msra.mxu0 0.0
        %3460 = vmatprep.subr.mxu0 0.0
        %3461 = vmatpush1.msra.mxu0 0.0
        %3462 = vmatprep.subr.mxu0 0.0
        %3463 = vmatpush1.msra.mxu0 0.0
        %3464 = vmatprep.subr.mxu0 0.0
        %3465 = vmatpush1.msra.mxu0 0.0
        %3466 = vmatprep.subr.mxu0 0.0
        %3467 = vmatpush1.msra.mxu0 0.0
        %3468 = vmatprep.subr.mxu0 0.0
        %3469 = vmatpush1.msra.mxu0 0.0
        %3470 = vmatprep.subr.mxu0 0.0
        %3471 = vmatpush1.msra.mxu0 0.0
        %3472 = vmatprep.subr.mxu0 0.0
        %3473 = vmatpush1.msra.mxu0 0.0
        %3474 = vmatprep.subr.mxu0 0.0
        %3475 = vmatpush1.msra.mxu0 0.0
        %3476 = vmatprep.subr.mxu0 0.0
        %3477 = vmatpush1.msra.mxu0 0.0
        %3478 = vmatprep.subr.mxu0 0.0
        %3479 = vmatpush1.msra.mxu0 0.0
        %3480 = vmatprep.subr.mxu0 0.0
        %3481 = vmatpush1.msra.mxu0 0.0
        %3482 = vmatprep.subr.mxu0 0.0
        %3483 = vmatpush1.msra.mxu0 0.0
        %3484 = vmatprep.subr.mxu0 0.0
        %3485 = vmatpush1.msra.mxu0 0.0
        %3486 = vmatprep.subr.mxu0 0.0
        %3487 = vmatpush1.msra.mxu0 0.0
        %3488 = vmatprep.subr.mxu0 0.0
        %3489 = vmatpush1.msra.mxu0 0.0
        %3490 = vmatprep.subr.mxu0 0.0
        %3491 = vmatpush1.msra.mxu0 0.0
        %3492 = vmatprep.subr.mxu0 0.0
        %3493 = vmatpush1.msra.mxu0 0.0
        %3494 = vmatprep.subr.mxu0 0.0
        %3495 = vmatpush1.msra.mxu0 0.0
        %3496 = vmatprep.subr.mxu0 0.0
        %3497 = vmatpush1.msra.mxu0 0.0
        %3498 = vmatprep.subr.mxu0 0.0
        %3499 = vmatpush1.msra.mxu0 0.0
        %3500 = vmatprep.subr.mxu0 0.0
        %3501 = vmatpush1.msra.mxu0 0.0
        %3502 = vmatprep.subr.mxu0 0.0
        %3503 = vmatpush1.msra.mxu0 0.0
        %3504 = vmatprep.subr.mxu0 0.0
        %3505 = vmatpush1.msra.mxu0 0.0
        %3506 = vmatprep.subr.mxu0 0.0
        %3507 = vmatpush1.msra.mxu0 0.0
        %3508 = vmatprep.subr.mxu0 0.0
        %3509 = vmatpush1.msra.mxu0 0.0
        %3510 = vmatprep.mubr.f32.mxu0 0.0
        %3511 = vmatmul.mubr.f32.gmra.mrb[0].mxu0 %v2949
        %v3512 = vpop.f32.mrb[0].mxu0
        %v3513 = vadd.f32 0.0, %v3512
        %v3514 = vpop.f32.mrb[0].mxu0
        %3515 = vmatprep.mubr.f32.mxu0 0.0
        %3516 = vmatmul.mubr.f32.gmra.mrb[0].mxu0 %v2951
        %v3517 = vpop.f32.mrb[0].mxu0
        %v3518 = vadd.f32 0.0, %v3517
        %v3519 = vpop.f32.mrb[0].mxu0
        %3520 = vdwg.mxu0
        %v3521 = vadd.f32 %v3438, %v3513
        %v3522 = vadd.f32 %v3443, %v3518
        %v3523 = vld [vmem:[#allocation13] sm:$0x3]
        %v3524 = vlaneseq
        %v3525 = vshrl.u32 %v3524, 7
        %v3526 = vsub.s32 0, %v3525
        %v3527 = vrot.slane %v3523, %v3526
        %v3528 = vmul.f32 %v3521, %v3527
        %v3529 = vmul.f32 %v3522, %v3527
        %v3530 = vlaneseq
        %v3531 = vshrl.u32 %v3530, 7
        %v3532 = vsub.s32 1, %v3531
        %v3533 = vrot.slane %v3523, %v3532
        %v3534 = vadd.f32 %v3528, %v3533
        %v3535 = vadd.f32 %v3529, %v3533
        %v3536 = vmax.f32 %v3534, 0.0
        %v3537 = vmax.f32 %v3535, 0.0
        %v3538 = vpack.c.bf16 %v3537, %v3536
        %v3539 = vpack.c.bf16 %v2323, %v2323
        %v3541 = vsel %vm2788, %v3539, 0
        %3543 = vmatprep.subr.bf16.mxu0 0
        %3544 = vmatpush1.bf16.msra.mxu0 %v3538
        %3545 = vmatprep.subr.bf16.mxu0 0
        %3546 = vmatpush1.bf16.msra.mxu0 0
        %3547 = vmatprep.subr.bf16.mxu0 0
        %3548 = vmatpush1.bf16.msra.mxu0 0
        %3549 = vmatprep.subr.bf16.mxu0 0
        %3550 = vmatpush1.bf16.msra.mxu0 0
        %3551 = vmatprep.subr.bf16.mxu0 0
        %3552 = vmatpush1.bf16.msra.mxu0 0
        %3553 = vmatprep.subr.bf16.mxu0 0
        %3554 = vmatpush1.bf16.msra.mxu0 0
        %3555 = vmatprep.subr.bf16.mxu0 0
        %3556 = vmatpush1.bf16.msra.mxu0 0
        %3557 = vmatprep.subr.bf16.mxu0 0
        %3558 = vmatpush1.bf16.msra.mxu0 0
        %3559 = vmatprep.subr.bf16.mxu0 0
        %3560 = vmatpush1.bf16.msra.mxu0 0
        %3561 = vmatprep.subr.bf16.mxu0 0
        %3562 = vmatpush1.bf16.msra.mxu0 0
        %3563 = vmatprep.subr.bf16.mxu0 0
        %3564 = vmatpush1.bf16.msra.mxu0 0
        %3565 = vmatprep.subr.bf16.mxu0 0
        %3566 = vmatpush1.bf16.msra.mxu0 0
        %3567 = vmatprep.subr.bf16.mxu0 0
        %3568 = vmatpush1.bf16.msra.mxu0 0
        %3569 = vmatprep.subr.bf16.mxu0 0
        %3570 = vmatpush1.bf16.msra.mxu0 0
        %3571 = vmatprep.subr.bf16.mxu0 0
        %3572 = vmatpush1.bf16.msra.mxu0 0
        %3573 = vmatprep.subr.bf16.mxu0 0
        %3574 = vmatpush1.bf16.msra.mxu0 0
        %3575 = vmatprep.mubr.bf16.mxu0 0
        %3576 = vmatmul.mubr.bf16.gmra.mrb[0].mxu0 %v3541
        %v3577 = vpop.f32.mrb[0].mxu0
        %v3578 = vadd.f32 0.0, %v3577
        %v3579 = vpop.f32.mrb[0].mxu0
        %v3580 = vpop.f32.mrb[0].mxu0
        %v3581 = vpop.f32.mrb[0].mxu0
        %3582 = vdwg.mxu0
        %v3583 = vpack.c.bf16 %v2374, %v2374
        %v3585 = vsel %vm2788, %v3583, 0
        %3587 = vmatprep.subr.bf16.mxu0 0
        %3588 = vmatpush1.bf16.msra.mxu0 %v3538
        %3589 = vmatprep.subr.bf16.mxu0 0
        %3590 = vmatpush1.bf16.msra.mxu0 0
        %3591 = vmatprep.subr.bf16.mxu0 0
        %3592 = vmatpush1.bf16.msra.mxu0 0
        %3593 = vmatprep.subr.bf16.mxu0 0
        %3594 = vmatpush1.bf16.msra.mxu0 0
        %3595 = vmatprep.subr.bf16.mxu0 0
        %3596 = vmatpush1.bf16.msra.mxu0 0
        %3597 = vmatprep.subr.bf16.mxu0 0
        %3598 = vmatpush1.bf16.msra.mxu0 0
        %3599 = vmatprep.subr.bf16.mxu0 0
        %3600 = vmatpush1.bf16.msra.mxu0 0
        %3601 = vmatprep.subr.bf16.mxu0 0
        %3602 = vmatpush1.bf16.msra.mxu0 0
        %3603 = vmatprep.subr.bf16.mxu0 0
        %3604 = vmatpush1.bf16.msra.mxu0 0
        %3605 = vmatprep.subr.bf16.mxu0 0
        %3606 = vmatpush1.bf16.msra.mxu0 0
        %3607 = vmatprep.subr.bf16.mxu0 0
        %3608 = vmatpush1.bf16.msra.mxu0 0
        %3609 = vmatprep.subr.bf16.mxu0 0
        %3610 = vmatpush1.bf16.msra.mxu0 0
        %3611 = vmatprep.subr.bf16.mxu0 0
        %3612 = vmatpush1.bf16.msra.mxu0 0
        %3613 = vmatprep.subr.bf16.mxu0 0
        %3614 = vmatpush1.bf16.msra.mxu0 0
        %3615 = vmatprep.subr.bf16.mxu0 0
        %3616 = vmatpush1.bf16.msra.mxu0 0
        %3617 = vmatprep.subr.bf16.mxu0 0
        %3618 = vmatpush1.bf16.msra.mxu0 0
        %3619 = vmatprep.mubr.bf16.mxu0 0
        %3620 = vmatmul.mubr.bf16.gmra.mrb[0].mxu0 %v3585
        %v3621 = vpop.f32.mrb[0].mxu0
        %v3622 = vadd.f32 0.0, %v3621
        %v3623 = vpop.f32.mrb[0].mxu0
        %v3624 = vpop.f32.mrb[0].mxu0
        %v3625 = vpop.f32.mrb[0].mxu0
        %3626 = vdwg.mxu0
        %v3627 = vmax.f32 %v3578, %v3622
        %v3628 = vpack.c.bf16 %v2427, %v2427
        %v3630 = vsel %vm2788, %v3628, 0
        %3632 = vmatprep.subr.bf16.mxu0 0
        %3633 = vmatpush1.bf16.msra.mxu0 %v3538
        %3634 = vmatprep.subr.bf16.mxu0 0
        %3635 = vmatpush1.bf16.msra.mxu0 0
        %3636 = vmatprep.subr.bf16.mxu0 0
        %3637 = vmatpush1.bf16.msra.mxu0 0
        %3638 = vmatprep.subr.bf16.mxu0 0
        %3639 = vmatpush1.bf16.msra.mxu0 0
        %3640 = vmatprep.subr.bf16.mxu0 0
        %3641 = vmatpush1.bf16.msra.mxu0 0
        %3642 = vmatprep.subr.bf16.mxu0 0
        %3643 = vmatpush1.bf16.msra.mxu0 0
        %3644 = vmatprep.subr.bf16.mxu0 0
        %3645 = vmatpush1.bf16.msra.mxu0 0
        %3646 = vmatprep.subr.bf16.mxu0 0
        %3647 = vmatpush1.bf16.msra.mxu0 0
        %3648 = vmatprep.subr.bf16.mxu0 0
        %3649 = vmatpush1.bf16.msra.mxu0 0
        %3650 = vmatprep.subr.bf16.mxu0 0
        %3651 = vmatpush1.bf16.msra.mxu0 0
        %3652 = vmatprep.subr.bf16.mxu0 0
        %3653 = vmatpush1.bf16.msra.mxu0 0
        %3654 = vmatprep.subr.bf16.mxu0 0
        %3655 = vmatpush1.bf16.msra.mxu0 0
        %3656 = vmatprep.subr.bf16.mxu0 0
        %3657 = vmatpush1.bf16.msra.mxu0 0
        %3658 = vmatprep.subr.bf16.mxu0 0
        %3659 = vmatpush1.bf16.msra.mxu0 0
        %3660 = vmatprep.subr.bf16.mxu0 0
        %3661 = vmatpush1.bf16.msra.mxu0 0
        %3662 = vmatprep.subr.bf16.mxu0 0
        %3663 = vmatpush1.bf16.msra.mxu0 0
        %3664 = vmatprep.mubr.bf16.mxu0 0
        %3665 = vmatmul.mubr.bf16.gmra.mrb[0].mxu0 %v3630
        %v3666 = vpop.f32.mrb[0].mxu0
        %v3667 = vadd.f32 0.0, %v3666
        %v3668 = vpop.f32.mrb[0].mxu0
        %v3669 = vpop.f32.mrb[0].mxu0
        %v3670 = vpop.f32.mrb[0].mxu0
        %3671 = vdwg.mxu0
        %v3672 = vmax.f32 %v3627, %v3667
        %v3673 = vpack.c.bf16 %v2480, %v2480
        %v3675 = vsel %vm2788, %v3673, 0
        %3677 = vmatprep.subr.bf16.mxu0 0
        %3678 = vmatpush1.bf16.msra.mxu0 %v3538
        %3679 = vmatprep.subr.bf16.mxu0 0
        %3680 = vmatpush1.bf16.msra.mxu0 0
        %3681 = vmatprep.subr.bf16.mxu0 0
        %3682 = vmatpush1.bf16.msra.mxu0 0
        %3683 = vmatprep.subr.bf16.mxu0 0
        %3684 = vmatpush1.bf16.msra.mxu0 0
        %3685 = vmatprep.subr.bf16.mxu0 0
        %3686 = vmatpush1.bf16.msra.mxu0 0
        %3687 = vmatprep.subr.bf16.mxu0 0
        %3688 = vmatpush1.bf16.msra.mxu0 0
        %3689 = vmatprep.subr.bf16.mxu0 0
        %3690 = vmatpush1.bf16.msra.mxu0 0
        %3691 = vmatprep.subr.bf16.mxu0 0
        %3692 = vmatpush1.bf16.msra.mxu0 0
        %3693 = vmatprep.subr.bf16.mxu0 0
        %3694 = vmatpush1.bf16.msra.mxu0 0
        %3695 = vmatprep.subr.bf16.mxu0 0
        %3696 = vmatpush1.bf16.msra.mxu0 0
        %3697 = vmatprep.subr.bf16.mxu0 0
        %3698 = vmatpush1.bf16.msra.mxu0 0
        %3699 = vmatprep.subr.bf16.mxu0 0
        %3700 = vmatpush1.bf16.msra.mxu0 0
        %3701 = vmatprep.subr.bf16.mxu0 0
        %3702 = vmatpush1.bf16.msra.mxu0 0
        %3703 = vmatprep.subr.bf16.mxu0 0
        %3704 = vmatpush1.bf16.msra.mxu0 0
        %3705 = vmatprep.subr.bf16.mxu0 0
        %3706 = vmatpush1.bf16.msra.mxu0 0
        %3707 = vmatprep.subr.bf16.mxu0 0
        %3708 = vmatpush1.bf16.msra.mxu0 0
        %3709 = vmatprep.mubr.bf16.mxu0 0
        %3710 = vmatmul.mubr.bf16.gmra.mrb[0].mxu0 %v3675
        %v3711 = vpop.f32.mrb[0].mxu0
        %v3712 = vadd.f32 0.0, %v3711
        %v3713 = vpop.f32.mrb[0].mxu0
        %v3714 = vpop.f32.mrb[0].mxu0
        %v3715 = vpop.f32.mrb[0].mxu0
        %3716 = vdwg.mxu0
        %v3717 = vmax.f32 %v3672, %v3712
        %v3718 = vpack.c.bf16 %v3717, %v3717
        %v3719 = vld [vmem:[#allocation15] sm:$0xff]
        %v3720 = vld [vmem:[#allocation15 + $0x8] sm:$0xff]
        %v3721 = vld [vmem:[#allocation15 + $0x10] sm:$0xff]
        %v3722 = vld [vmem:[#allocation15 + $0x18] sm:$0xff]
        %v3723 = vld [vmem:[#allocation15 + $0x20] sm:$0xff]
        %v3724 = vld [vmem:[#allocation15 + $0x28] sm:$0xff]
        %v3725 = vld [vmem:[#allocation15 + $0x30] sm:$0xff]
        %v3726 = vld [vmem:[#allocation15 + $0x38] sm:$0xff]
        %v3727 = vld [vmem:[#allocation15 + $0x40] sm:$0xff]
        %v3728 = vld [vmem:[#allocation15 + $0x48] sm:$0xff]
        %v3729 = vld [vmem:[#allocation15 + $0x50] sm:$0xff]
        %v3730 = vld [vmem:[#allocation15 + $0x58] sm:$0xff]
        %v3731 = vld [vmem:[#allocation15 + $0x60] sm:$0xff]
        %v3732 = vld [vmem:[#allocation15 + $0x68] sm:$0xff]
        %v3733 = vld [vmem:[#allocation15 + $0x70] sm:$0xff]
        %v3734 = vld [vmem:[#allocation15 + $0x78] sm:$0xff]
        %v3735 = vld [vmem:[#allocation15 + $0x80] sm:$0xff]
        %v3736 = vld [vmem:[#allocation15 + $0x88] sm:$0xff]
        %v3737 = vld [vmem:[#allocation15 + $0x90] sm:$0xff]
        %v3738 = vld [vmem:[#allocation15 + $0x98] sm:$0xff]
        %v3739 = vld [vmem:[#allocation15 + $0xa0] sm:$0xff]
        %v3740 = vld [vmem:[#allocation15 + $0xa8] sm:$0xff]
        %v3741 = vld [vmem:[#allocation15 + $0xb0] sm:$0xff]
        %v3742 = vld [vmem:[#allocation15 + $0xb8] sm:$0xff]
        %v3743 = vld [vmem:[#allocation15 + $0xc0] sm:$0xff]
        %v3744 = vld [vmem:[#allocation15 + $0xc8] sm:$0xff]
        %v3745 = vld [vmem:[#allocation15 + $0xd0] sm:$0xff]
        %v3746 = vld [vmem:[#allocation15 + $0xd8] sm:$0xff]
        %v3747 = vld [vmem:[#allocation15 + $0xe0] sm:$0xff]
        %v3748 = vld [vmem:[#allocation15 + $0xe8] sm:$0xff]
        %v3749 = vld [vmem:[#allocation15 + $0xf0] sm:$0xff]
        %v3750 = vld [vmem:[#allocation15 + $0xf8] sm:$0xff]
        %v3751 = vld [vmem:[#allocation15 + $0x100] sm:$0xff]
        %v3752 = vld [vmem:[#allocation15 + $0x108] sm:$0xff]
        %v3753 = vld [vmem:[#allocation15 + $0x110] sm:$0xff]
        %v3754 = vld [vmem:[#allocation15 + $0x118] sm:$0xff]
        %v3755 = vld [vmem:[#allocation15 + $0x120] sm:$0xff]
        %v3756 = vld [vmem:[#allocation15 + $0x128] sm:$0xff]
        %v3757 = vld [vmem:[#allocation15 + $0x130] sm:$0xff]
        %v3758 = vld [vmem:[#allocation15 + $0x138] sm:$0xff]
        %v3759 = vld [vmem:[#allocation15 + $0x140] sm:$0xff]
        %v3760 = vld [vmem:[#allocation15 + $0x148] sm:$0xff]
        %v3761 = vld [vmem:[#allocation15 + $0x150] sm:$0xff]
        %v3762 = vld [vmem:[#allocation15 + $0x158] sm:$0xff]
        %v3763 = vld [vmem:[#allocation15 + $0x160] sm:$0xff]
        %v3764 = vld [vmem:[#allocation15 + $0x168] sm:$0xff]
        %v3765 = vld [vmem:[#allocation15 + $0x170] sm:$0xff]
        %v3766 = vld [vmem:[#allocation15 + $0x178] sm:$0xff]
        %v3767 = vld [vmem:[#allocation15 + $0x180] sm:$0xff]
        %v3768 = vld [vmem:[#allocation15 + $0x188] sm:$0xff]
        %v3769 = vld [vmem:[#allocation15 + $0x190] sm:$0xff]
        %v3770 = vld [vmem:[#allocation15 + $0x198] sm:$0xff]
        %v3771 = vld [vmem:[#allocation15 + $0x1a0] sm:$0xff]
        %v3772 = vld [vmem:[#allocation15 + $0x1a8] sm:$0xff]
        %v3773 = vld [vmem:[#allocation15 + $0x1b0] sm:$0xff]
        %v3774 = vld [vmem:[#allocation15 + $0x1b8] sm:$0xff]
        %v3775 = vld [vmem:[#allocation15 + $0x1c0] sm:$0xff]
        %v3776 = vld [vmem:[#allocation15 + $0x1c8] sm:$0xff]
        %v3777 = vld [vmem:[#allocation15 + $0x1d0] sm:$0xff]
        %v3778 = vld [vmem:[#allocation15 + $0x1d8] sm:$0xff]
        %v3779 = vld [vmem:[#allocation15 + $0x1e0] sm:$0xff]
        %v3780 = vld [vmem:[#allocation15 + $0x1e8] sm:$0xff]
        %v3781 = vld [vmem:[#allocation15 + $0x1f0] sm:$0xff]
        %v3782 = vld [vmem:[#allocation15 + $0x1f8] sm:$0xff]
        %v3783 = vld [vmem:[#allocation15 + $0x200] sm:$0xff]
        %v3784 = vld [vmem:[#allocation15 + $0x208] sm:$0xff]
        %v3785 = vld [vmem:[#allocation15 + $0x210] sm:$0xff]
        %v3786 = vld [vmem:[#allocation15 + $0x218] sm:$0xff]
        %v3787 = vld [vmem:[#allocation15 + $0x220] sm:$0xff]
        %v3788 = vld [vmem:[#allocation15 + $0x228] sm:$0xff]
        %v3789 = vld [vmem:[#allocation15 + $0x230] sm:$0xff]
        %v3790 = vld [vmem:[#allocation15 + $0x238] sm:$0xff]
        %v3791 = vld [vmem:[#allocation15 + $0x240] sm:$0xff]
        %v3792 = vld [vmem:[#allocation15 + $0x248] sm:$0xff]
        %v3793 = vld [vmem:[#allocation15 + $0x250] sm:$0xff]
        %v3794 = vld [vmem:[#allocation15 + $0x258] sm:$0xff]
        %v3795 = vld [vmem:[#allocation15 + $0x260] sm:$0xff]
        %v3796 = vld [vmem:[#allocation15 + $0x268] sm:$0xff]
        %v3797 = vld [vmem:[#allocation15 + $0x270] sm:$0xff]
        %v3798 = vld [vmem:[#allocation15 + $0x278] sm:$0xff]
        %v3879 = vunpack.c.l.b16 %v3719
        %v3880 = vunpack.c.h.b16 %v3719
        %v3881 = vunpack.c.l.b16 %v3720
        %v3882 = vunpack.c.h.b16 %v3720
        %v3883 = vunpack.c.l.b16 %v3721
        %v3884 = vunpack.c.h.b16 %v3721
        %v3885 = vunpack.c.l.b16 %v3722
        %v3886 = vunpack.c.h.b16 %v3722
        %v3887 = vunpack.c.l.b16 %v3723
        %v3888 = vunpack.c.h.b16 %v3723
        %v3889 = vunpack.c.l.b16 %v3724
        %v3890 = vunpack.c.h.b16 %v3724
        %v3891 = vunpack.c.l.b16 %v3725
        %v3892 = vunpack.c.h.b16 %v3725
        %v3893 = vunpack.c.l.b16 %v3726
        %v3894 = vunpack.c.h.b16 %v3726
        %v3895 = vunpack.c.l.b16 %v3727
        %v3896 = vunpack.c.h.b16 %v3727
        %v3897 = vunpack.c.l.b16 %v3728
        %v3898 = vunpack.c.h.b16 %v3728
        %v3899 = vunpack.c.l.b16 %v3729
        %v3900 = vunpack.c.h.b16 %v3729
        %v3901 = vunpack.c.l.b16 %v3730
        %v3902 = vunpack.c.h.b16 %v3730
        %v3903 = vunpack.c.l.b16 %v3731
        %v3904 = vunpack.c.h.b16 %v3731
        %v3905 = vunpack.c.l.b16 %v3732
        %v3906 = vunpack.c.h.b16 %v3732
        %v3907 = vunpack.c.l.b16 %v3733
        %v3908 = vunpack.c.h.b16 %v3733
        %v3909 = vunpack.c.l.b16 %v3734
        %v3910 = vunpack.c.h.b16 %v3734
        %v3911 = vunpack.c.l.b16 %v3735
        %v3912 = vunpack.c.h.b16 %v3735
        %v3913 = vunpack.c.l.b16 %v3736
        %v3914 = vunpack.c.h.b16 %v3736
        %v3915 = vunpack.c.l.b16 %v3737
        %v3916 = vunpack.c.h.b16 %v3737
        %v3917 = vunpack.c.l.b16 %v3738
        %v3918 = vunpack.c.h.b16 %v3738
        %v3919 = vunpack.c.l.b16 %v3739
        %v3920 = vunpack.c.h.b16 %v3739
        %v3921 = vunpack.c.l.b16 %v3740
        %v3922 = vunpack.c.h.b16 %v3740
        %v3923 = vunpack.c.l.b16 %v3741
        %v3924 = vunpack.c.h.b16 %v3741
        %v3925 = vunpack.c.l.b16 %v3742
        %v3926 = vunpack.c.h.b16 %v3742
        %v3927 = vunpack.c.l.b16 %v3743
        %v3928 = vunpack.c.h.b16 %v3743
        %v3929 = vunpack.c.l.b16 %v3744
        %v3930 = vunpack.c.h.b16 %v3744
        %v3931 = vunpack.c.l.b16 %v3745
        %v3932 = vunpack.c.h.b16 %v3745
        %v3933 = vunpack.c.l.b16 %v3746
        %v3934 = vunpack.c.h.b16 %v3746
        %v3935 = vunpack.c.l.b16 %v3747
        %v3936 = vunpack.c.h.b16 %v3747
        %v3937 = vunpack.c.l.b16 %v3748
        %v3938 = vunpack.c.h.b16 %v3748
        %v3939 = vunpack.c.l.b16 %v3749
        %v3940 = vunpack.c.h.b16 %v3749
        %v3941 = vunpack.c.l.b16 %v3750
        %v3942 = vunpack.c.h.b16 %v3750
        %v3943 = vunpack.c.l.b16 %v3751
        %v3944 = vunpack.c.h.b16 %v3751
        %v3945 = vunpack.c.l.b16 %v3752
        %v3946 = vunpack.c.h.b16 %v3752
        %v3947 = vunpack.c.l.b16 %v3753
        %v3948 = vunpack.c.h.b16 %v3753
        %v3949 = vunpack.c.l.b16 %v3754
        %v3950 = vunpack.c.h.b16 %v3754
        %v3951 = vunpack.c.l.b16 %v3755
        %v3952 = vunpack.c.h.b16 %v3755
        %v3953 = vunpack.c.l.b16 %v3756
        %v3954 = vunpack.c.h.b16 %v3756
        %v3955 = vunpack.c.l.b16 %v3757
        %v3956 = vunpack.c.h.b16 %v3757
        %v3957 = vunpack.c.l.b16 %v3758
        %v3958 = vunpack.c.h.b16 %v3758
        %v3959 = vunpack.c.l.b16 %v3759
        %v3960 = vunpack.c.h.b16 %v3759
        %v3961 = vunpack.c.l.b16 %v3760
        %v3962 = vunpack.c.h.b16 %v3760
        %v3963 = vunpack.c.l.b16 %v3761
        %v3964 = vunpack.c.h.b16 %v3761
        %v3965 = vunpack.c.l.b16 %v3762
        %v3966 = vunpack.c.h.b16 %v3762
        %v3967 = vunpack.c.l.b16 %v3763
        %v3968 = vunpack.c.h.b16 %v3763
        %v3969 = vunpack.c.l.b16 %v3764
        %v3970 = vunpack.c.h.b16 %v3764
        %v3971 = vunpack.c.l.b16 %v3765
        %v3972 = vunpack.c.h.b16 %v3765
        %v3973 = vunpack.c.l.b16 %v3766
        %v3974 = vunpack.c.h.b16 %v3766
        %v3975 = vunpack.c.l.b16 %v3767
        %v3976 = vunpack.c.h.b16 %v3767
        %v3977 = vunpack.c.l.b16 %v3768
        %v3978 = vunpack.c.h.b16 %v3768
        %v3979 = vunpack.c.l.b16 %v3769
        %v3980 = vunpack.c.h.b16 %v3769
        %v3981 = vunpack.c.l.b16 %v3770
        %v3982 = vunpack.c.h.b16 %v3770
        %v3983 = vunpack.c.l.b16 %v3771
        %v3984 = vunpack.c.h.b16 %v3771
        %v3985 = vunpack.c.l.b16 %v3772
        %v3986 = vunpack.c.h.b16 %v3772
        %v3987 = vunpack.c.l.b16 %v3773
        %v3988 = vunpack.c.h.b16 %v3773
        %v3989 = vunpack.c.l.b16 %v3774
        %v3990 = vunpack.c.h.b16 %v3774
        %v3991 = vunpack.c.l.b16 %v3775
        %v3992 = vunpack.c.h.b16 %v3775
        %v3993 = vunpack.c.l.b16 %v3776
        %v3994 = vunpack.c.h.b16 %v3776
        %v3995 = vunpack.c.l.b16 %v3777
        %v3996 = vunpack.c.h.b16 %v3777
        %v3997 = vunpack.c.l.b16 %v3778
        %v3998 = vunpack.c.h.b16 %v3778
        %v3999 = vunpack.c.l.b16 %v3779
        %v4000 = vunpack.c.h.b16 %v3779
        %v4001 = vunpack.c.l.b16 %v3780
        %v4002 = vunpack.c.h.b16 %v3780
        %v4003 = vunpack.c.l.b16 %v3781
        %v4004 = vunpack.c.h.b16 %v3781
        %v4005 = vunpack.c.l.b16 %v3782
        %v4006 = vunpack.c.h.b16 %v3782
        %v4007 = vunpack.c.l.b16 %v3783
        %v4008 = vunpack.c.h.b16 %v3783
        %v4009 = vunpack.c.l.b16 %v3784
        %v4010 = vunpack.c.h.b16 %v3784
        %v4011 = vunpack.c.l.b16 %v3785
        %v4012 = vunpack.c.h.b16 %v3785
        %v4013 = vunpack.c.l.b16 %v3786
        %v4014 = vunpack.c.h.b16 %v3786
        %v4015 = vunpack.c.l.b16 %v3787
        %v4016 = vunpack.c.h.b16 %v3787
        %v4017 = vunpack.c.l.b16 %v3788
        %v4018 = vunpack.c.h.b16 %v3788
        %v4019 = vunpack.c.l.b16 %v3789
        %v4020 = vunpack.c.h.b16 %v3789
        %v4021 = vunpack.c.l.b16 %v3790
        %v4022 = vunpack.c.h.b16 %v3790
        %v4023 = vunpack.c.l.b16 %v3791
        %v4024 = vunpack.c.h.b16 %v3791
        %v4025 = vunpack.c.l.b16 %v3792
        %v4026 = vunpack.c.h.b16 %v3792
        %v4027 = vunpack.c.l.b16 %v3793
        %v4028 = vunpack.c.h.b16 %v3793
        %v4029 = vunpack.c.l.b16 %v3794
        %v4030 = vunpack.c.h.b16 %v3794
        %v4031 = vunpack.c.l.b16 %v3795
        %v4032 = vunpack.c.h.b16 %v3795
        %v4033 = vunpack.c.l.b16 %v3796
        %v4034 = vunpack.c.h.b16 %v3796
        %v4035 = vunpack.c.l.b16 %v3797
        %v4036 = vunpack.c.h.b16 %v3797
        %v4037 = vunpack.c.l.b16 %v3798
        %v4038 = vunpack.c.h.b16 %v3798
        %v4039 = vpack.c.b16 %v3889, %v3879
        %v4040 = vpack.c.b16 %v3890, %v3880
        %v4041 = vpack.c.b16 %v3891, %v3881
        %v4042 = vpack.c.b16 %v3892, %v3882
        %v4043 = vpack.c.b16 %v3893, %v3883
        %v4044 = vpack.c.b16 %v3894, %v3884
        %v4045 = vpack.c.b16 %v3895, %v3885
        %v4046 = vpack.c.b16 %v3896, %v3886
        %v4047 = vpack.c.b16 %v3897, %v3887
        %v4048 = vpack.c.b16 %v3898, %v3888
        %v4049 = vpack.c.b16 %v3909, %v3899
        %v4050 = vpack.c.b16 %v3910, %v3900
        %v4051 = vpack.c.b16 %v3911, %v3901
        %v4052 = vpack.c.b16 %v3912, %v3902
        %v4053 = vpack.c.b16 %v3913, %v3903
        %v4054 = vpack.c.b16 %v3914, %v3904
        %v4055 = vpack.c.b16 %v3915, %v3905
        %v4056 = vpack.c.b16 %v3916, %v3906
        %v4057 = vpack.c.b16 %v3917, %v3907
        %v4058 = vpack.c.b16 %v3918, %v3908
        %v4059 = vpack.c.b16 %v3929, %v3919
        %v4060 = vpack.c.b16 %v3930, %v3920
        %v4061 = vpack.c.b16 %v3931, %v3921
        %v4062 = vpack.c.b16 %v3932, %v3922
        %v4063 = vpack.c.b16 %v3933, %v3923
        %v4064 = vpack.c.b16 %v3934, %v3924
        %v4065 = vpack.c.b16 %v3935, %v3925
        %v4066 = vpack.c.b16 %v3936, %v3926
        %v4067 = vpack.c.b16 %v3937, %v3927
        %v4068 = vpack.c.b16 %v3938, %v3928
        %v4069 = vpack.c.b16 %v3949, %v3939
        %v4070 = vpack.c.b16 %v3950, %v3940
        %v4071 = vpack.c.b16 %v3951, %v3941
        %v4072 = vpack.c.b16 %v3952, %v3942
        %v4073 = vpack.c.b16 %v3953, %v3943
        %v4074 = vpack.c.b16 %v3954, %v3944
        %v4075 = vpack.c.b16 %v3955, %v3945
        %v4076 = vpack.c.b16 %v3956, %v3946
        %v4077 = vpack.c.b16 %v3957, %v3947
        %v4078 = vpack.c.b16 %v3958, %v3948
        %v4079 = vpack.c.b16 %v3969, %v3959
        %v4080 = vpack.c.b16 %v3970, %v3960
        %v4081 = vpack.c.b16 %v3971, %v3961
        %v4082 = vpack.c.b16 %v3972, %v3962
        %v4083 = vpack.c.b16 %v3973, %v3963
        %v4084 = vpack.c.b16 %v3974, %v3964
        %v4085 = vpack.c.b16 %v3975, %v3965
        %v4086 = vpack.c.b16 %v3976, %v3966
        %v4087 = vpack.c.b16 %v3977, %v3967
        %v4088 = vpack.c.b16 %v3978, %v3968
        %v4089 = vpack.c.b16 %v3989, %v3979
        %v4090 = vpack.c.b16 %v3990, %v3980
        %v4091 = vpack.c.b16 %v3991, %v3981
        %v4092 = vpack.c.b16 %v3992, %v3982
        %v4093 = vpack.c.b16 %v3993, %v3983
        %v4094 = vpack.c.b16 %v3994, %v3984
        %v4095 = vpack.c.b16 %v3995, %v3985
        %v4096 = vpack.c.b16 %v3996, %v3986
        %v4097 = vpack.c.b16 %v3997, %v3987
        %v4098 = vpack.c.b16 %v3998, %v3988
        %v4099 = vpack.c.b16 %v4009, %v3999
        %v4100 = vpack.c.b16 %v4010, %v4000
        %v4101 = vpack.c.b16 %v4011, %v4001
        %v4102 = vpack.c.b16 %v4012, %v4002
        %v4103 = vpack.c.b16 %v4013, %v4003
        %v4104 = vpack.c.b16 %v4014, %v4004
        %v4105 = vpack.c.b16 %v4015, %v4005
        %v4106 = vpack.c.b16 %v4016, %v4006
        %v4107 = vpack.c.b16 %v4017, %v4007
        %v4108 = vpack.c.b16 %v4018, %v4008
        %v4109 = vpack.c.b16 %v4029, %v4019
        %v4110 = vpack.c.b16 %v4030, %v4020
        %v4111 = vpack.c.b16 %v4031, %v4021
        %v4112 = vpack.c.b16 %v4032, %v4022
        %v4113 = vpack.c.b16 %v4033, %v4023
        %v4114 = vpack.c.b16 %v4034, %v4024
        %v4115 = vpack.c.b16 %v4035, %v4025
        %v4116 = vpack.c.b16 %v4036, %v4026
        %v4117 = vpack.c.b16 %v4037, %v4027
        %v4118 = vpack.c.b16 %v4038, %v4028
        %4199 = vmatprep.subr.bf16.mxu0 %v4040
        %4200 = vmatpush1.bf16.msra.mxu0 %v4039
        %4201 = vmatprep.subr.bf16.mxu0 %v4050
        %4202 = vmatpush1.bf16.msra.mxu0 %v4049
        %4203 = vmatprep.subr.bf16.mxu0 %v4060
        %4204 = vmatpush1.bf16.msra.mxu0 %v4059
        %4205 = vmatprep.subr.bf16.mxu0 %v4070
        %4206 = vmatpush1.bf16.msra.mxu0 %v4069
        %4207 = vmatprep.subr.bf16.mxu0 %v4080
        %4208 = vmatpush1.bf16.msra.mxu0 %v4079
        %4209 = vmatprep.subr.bf16.mxu0 %v4090
        %4210 = vmatpush1.bf16.msra.mxu0 %v4089
        %4211 = vmatprep.subr.bf16.mxu0 %v4100
        %4212 = vmatpush1.bf16.msra.mxu0 %v4099
        %4213 = vmatprep.subr.bf16.mxu0 %v4110
        %4214 = vmatpush1.bf16.msra.mxu0 %v4109
        %4215 = vmatprep.subr.bf16.mxu0 0
        %4216 = vmatpush1.bf16.msra.mxu0 0
        %4217 = vmatprep.subr.bf16.mxu0 0
        %4218 = vmatpush1.bf16.msra.mxu0 0
        %4219 = vmatprep.subr.bf16.mxu0 0
        %4220 = vmatpush1.bf16.msra.mxu0 0
        %4221 = vmatprep.subr.bf16.mxu0 0
        %4222 = vmatpush1.bf16.msra.mxu0 0
        %4223 = vmatprep.subr.bf16.mxu0 0
        %4224 = vmatpush1.bf16.msra.mxu0 0
        %4225 = vmatprep.subr.bf16.mxu0 0
        %4226 = vmatpush1.bf16.msra.mxu0 0
        %4227 = vmatprep.subr.bf16.mxu0 0
        %4228 = vmatpush1.bf16.msra.mxu0 0
        %4229 = vmatprep.subr.bf16.mxu0 0
        %4230 = vmatpush1.bf16.msra.mxu0 0
        %4231 = vmatprep.mubr.bf16.mxu0 0
        %4232 = vmatmul.mubr.bf16.gmra.mrb[0].mxu0 %v3718
        %v4233 = vpop.f32.mrb[0].mxu0
        %v4234 = vadd.f32 0.0, %v4233
        %v4235 = vpop.f32.mrb[0].mxu0
        %v4236 = vadd.f32 0.0, %v4235
        %v4237 = vpop.f32.mrb[0].mxu0
        %v4238 = vpop.f32.mrb[0].mxu0
        %4239 = vdwg.mxu0
        %4240 = vmatprep.subr.bf16.mxu0 %v4042
        %4241 = vmatpush1.bf16.msra.mxu0 %v4041
        %4242 = vmatprep.subr.bf16.mxu0 %v4052
        %4243 = vmatpush1.bf16.msra.mxu0 %v4051
        %4244 = vmatprep.subr.bf16.mxu0 %v4062
        %4245 = vmatpush1.bf16.msra.mxu0 %v4061
        %4246 = vmatprep.subr.bf16.mxu0 %v4072
        %4247 = vmatpush1.bf16.msra.mxu0 %v4071
        %4248 = vmatprep.subr.bf16.mxu0 %v4082
        %4249 = vmatpush1.bf16.msra.mxu0 %v4081
        %4250 = vmatprep.subr.bf16.mxu0 %v4092
        %4251 = vmatpush1.bf16.msra.mxu0 %v4091
        %4252 = vmatprep.subr.bf16.mxu0 %v4102
        %4253 = vmatpush1.bf16.msra.mxu0 %v4101
        %4254 = vmatprep.subr.bf16.mxu0 %v4112
        %4255 = vmatpush1.bf16.msra.mxu0 %v4111
        %4256 = vmatprep.subr.bf16.mxu0 0
        %4257 = vmatpush1.bf16.msra.mxu0 0
        %4258 = vmatprep.subr.bf16.mxu0 0
        %4259 = vmatpush1.bf16.msra.mxu0 0
        %4260 = vmatprep.subr.bf16.mxu0 0
        %4261 = vmatpush1.bf16.msra.mxu0 0
        %4262 = vmatprep.subr.bf16.mxu0 0
        %4263 = vmatpush1.bf16.msra.mxu0 0
        %4264 = vmatprep.subr.bf16.mxu0 0
        %4265 = vmatpush1.bf16.msra.mxu0 0
        %4266 = vmatprep.subr.bf16.mxu0 0
        %4267 = vmatpush1.bf16.msra.mxu0 0
        %4268 = vmatprep.subr.bf16.mxu0 0
        %4269 = vmatpush1.bf16.msra.mxu0 0
        %4270 = vmatprep.subr.bf16.mxu0 0
        %4271 = vmatpush1.bf16.msra.mxu0 0
        %4272 = vmatprep.mubr.bf16.mxu0 0
        %4273 = vmatmul.mubr.bf16.gmra.mrb[0].mxu0 %v3718
        %v4274 = vpop.f32.mrb[0].mxu0
        %v4275 = vadd.f32 0.0, %v4274
        %v4276 = vpop.f32.mrb[0].mxu0
        %v4277 = vadd.f32 0.0, %v4276
        %v4278 = vpop.f32.mrb[0].mxu0
        %v4279 = vpop.f32.mrb[0].mxu0
        %4280 = vdwg.mxu0
        %4281 = vmatprep.subr.bf16.mxu0 %v4044
        %4282 = vmatpush1.bf16.msra.mxu0 %v4043
        %4283 = vmatprep.subr.bf16.mxu0 %v4054
        %4284 = vmatpush1.bf16.msra.mxu0 %v4053
        %4285 = vmatprep.subr.bf16.mxu0 %v4064
        %4286 = vmatpush1.bf16.msra.mxu0 %v4063
        %4287 = vmatprep.subr.bf16.mxu0 %v4074
        %4288 = vmatpush1.bf16.msra.mxu0 %v4073
        %4289 = vmatprep.subr.bf16.mxu0 %v4084
        %4290 = vmatpush1.bf16.msra.mxu0 %v4083
        %4291 = vmatprep.subr.bf16.mxu0 %v4094
        %4292 = vmatpush1.bf16.msra.mxu0 %v4093
        %4293 = vmatprep.subr.bf16.mxu0 %v4104
        %4294 = vmatpush1.bf16.msra.mxu0 %v4103
        %4295 = vmatprep.subr.bf16.mxu0 %v4114
        %4296 = vmatpush1.bf16.msra.mxu0 %v4113
        %4297 = vmatprep.subr.bf16.mxu0 0
        %4298 = vmatpush1.bf16.msra.mxu0 0
        %4299 = vmatprep.subr.bf16.mxu0 0
        %4300 = vmatpush1.bf16.msra.mxu0 0
        %4301 = vmatprep.subr.bf16.mxu0 0
        %4302 = vmatpush1.bf16.msra.mxu0 0
        %4303 = vmatprep.subr.bf16.mxu0 0
        %4304 = vmatpush1.bf16.msra.mxu0 0
        %4305 = vmatprep.subr.bf16.mxu0 0
        %4306 = vmatpush1.bf16.msra.mxu0 0
        %4307 = vmatprep.subr.bf16.mxu0 0
        %4308 = vmatpush1.bf16.msra.mxu0 0
        %4309 = vmatprep.subr.bf16.mxu0 0
        %4310 = vmatpush1.bf16.msra.mxu0 0
        %4311 = vmatprep.subr.bf16.mxu0 0
        %4312 = vmatpush1.bf16.msra.mxu0 0
        %4313 = vmatprep.mubr.bf16.mxu0 0
        %4314 = vmatmul.mubr.bf16.gmra.mrb[0].mxu0 %v3718
        %v4315 = vpop.f32.mrb[0].mxu0
        %v4316 = vadd.f32 0.0, %v4315
        %v4317 = vpop.f32.mrb[0].mxu0
        %v4318 = vadd.f32 0.0, %v4317
        %v4319 = vpop.f32.mrb[0].mxu0
        %v4320 = vpop.f32.mrb[0].mxu0
        %4321 = vdwg.mxu0
        %4322 = vmatprep.subr.bf16.mxu0 %v4046
        %4323 = vmatpush1.bf16.msra.mxu0 %v4045
        %4324 = vmatprep.subr.bf16.mxu0 %v4056
        %4325 = vmatpush1.bf16.msra.mxu0 %v4055
        %4326 = vmatprep.subr.bf16.mxu0 %v4066
        %4327 = vmatpush1.bf16.msra.mxu0 %v4065
        %4328 = vmatprep.subr.bf16.mxu0 %v4076
        %4329 = vmatpush1.bf16.msra.mxu0 %v4075
        %4330 = vmatprep.subr.bf16.mxu0 %v4086
        %4331 = vmatpush1.bf16.msra.mxu0 %v4085
        %4332 = vmatprep.subr.bf16.mxu0 %v4096
        %4333 = vmatpush1.bf16.msra.mxu0 %v4095
        %4334 = vmatprep.subr.bf16.mxu0 %v4106
        %4335 = vmatpush1.bf16.msra.mxu0 %v4105
        %4336 = vmatprep.subr.bf16.mxu0 %v4116
        %4337 = vmatpush1.bf16.msra.mxu0 %v4115
        %4338 = vmatprep.subr.bf16.mxu0 0
        %4339 = vmatpush1.bf16.msra.mxu0 0
        %4340 = vmatprep.subr.bf16.mxu0 0
        %4341 = vmatpush1.bf16.msra.mxu0 0
        %4342 = vmatprep.subr.bf16.mxu0 0
        %4343 = vmatpush1.bf16.msra.mxu0 0
        %4344 = vmatprep.subr.bf16.mxu0 0
        %4345 = vmatpush1.bf16.msra.mxu0 0
        %4346 = vmatprep.subr.bf16.mxu0 0
        %4347 = vmatpush1.bf16.msra.mxu0 0
        %4348 = vmatprep.subr.bf16.mxu0 0
        %4349 = vmatpush1.bf16.msra.mxu0 0
        %4350 = vmatprep.subr.bf16.mxu0 0
        %4351 = vmatpush1.bf16.msra.mxu0 0
        %4352 = vmatprep.subr.bf16.mxu0 0
        %4353 = vmatpush1.bf16.msra.mxu0 0
        %4354 = vmatprep.mubr.bf16.mxu0 0
        %4355 = vmatmul.mubr.bf16.gmra.mrb[0].mxu0 %v3718
        %v4356 = vpop.f32.mrb[0].mxu0
        %v4357 = vadd.f32 0.0, %v4356
        %v4358 = vpop.f32.mrb[0].mxu0
        %v4359 = vadd.f32 0.0, %v4358
        %v4360 = vpop.f32.mrb[0].mxu0
        %v4361 = vpop.f32.mrb[0].mxu0
        %4362 = vdwg.mxu0
        %4363 = vmatprep.subr.bf16.mxu0 %v4048
        %4364 = vmatpush1.bf16.msra.mxu0 %v4047
        %4365 = vmatprep.subr.bf16.mxu0 %v4058
        %4366 = vmatpush1.bf16.msra.mxu0 %v4057
        %4367 = vmatprep.subr.bf16.mxu0 %v4068
        %4368 = vmatpush1.bf16.msra.mxu0 %v4067
        %4369 = vmatprep.subr.bf16.mxu0 %v4078
        %4370 = vmatpush1.bf16.msra.mxu0 %v4077
        %4371 = vmatprep.subr.bf16.mxu0 %v4088
        %4372 = vmatpush1.bf16.msra.mxu0 %v4087
        %4373 = vmatprep.subr.bf16.mxu0 %v4098
        %4374 = vmatpush1.bf16.msra.mxu0 %v4097
        %4375 = vmatprep.subr.bf16.mxu0 %v4108
        %4376 = vmatpush1.bf16.msra.mxu0 %v4107
        %4377 = vmatprep.subr.bf16.mxu0 %v4118
        %4378 = vmatpush1.bf16.msra.mxu0 %v4117
        %4379 = vmatprep.subr.bf16.mxu0 0
        %4380 = vmatpush1.bf16.msra.mxu0 0
        %4381 = vmatprep.subr.bf16.mxu0 0
        %4382 = vmatpush1.bf16.msra.mxu0 0
        %4383 = vmatprep.subr.bf16.mxu0 0
        %4384 = vmatpush1.bf16.msra.mxu0 0
        %4385 = vmatprep.subr.bf16.mxu0 0
        %4386 = vmatpush1.bf16.msra.mxu0 0
        %4387 = vmatprep.subr.bf16.mxu0 0
        %4388 = vmatpush1.bf16.msra.mxu0 0
        %4389 = vmatprep.subr.bf16.mxu0 0
        %4390 = vmatpush1.bf16.msra.mxu0 0
        %4391 = vmatprep.subr.bf16.mxu0 0
        %4392 = vmatpush1.bf16.msra.mxu0 0
        %4393 = vmatprep.subr.bf16.mxu0 0
        %4394 = vmatpush1.bf16.msra.mxu0 0
        %4395 = vmatprep.mubr.bf16.mxu0 0
        %4396 = vmatmul.mubr.bf16.gmra.mrb[0].mxu0 %v3718
        %v4397 = vpop.f32.mrb[0].mxu0
        %v4398 = vadd.f32 0.0, %v4397
        %v4399 = vpop.f32.mrb[0].mxu0
        %v4400 = vadd.f32 0.0, %v4399
        %v4401 = vpop.f32.mrb[0].mxu0
        %v4402 = vpop.f32.mrb[0].mxu0
        %4403 = vdwg.mxu0
        %v4404 = vsel %vm989, %v1201, 0
        %vm4406 = vcmask 1043456
        %v4408 = vsel %vm4406, %v4275, 0
        %v4411 = vsel %vm4406, %v4277, 0
        %4413 = vmatprep.subr.mxu0 %v4411
        %4414 = vmatpush1.msra.mxu0 %v4408
        %4415 = vmatprep.subr.mxu0 0.0
        %4416 = vmatpush1.msra.mxu0 0.0
        %4417 = vmatprep.subr.mxu0 0.0
        %4418 = vmatpush1.msra.mxu0 0.0
        %4419 = vmatprep.subr.mxu0 0.0
        %4420 = vmatpush1.msra.mxu0 0.0
        %4421 = vmatprep.subr.mxu0 0.0
        %4422 = vmatpush1.msra.mxu0 0.0
        %4423 = vmatprep.subr.mxu0 0.0
        %4424 = vmatpush1.msra.mxu0 0.0
        %4425 = vmatprep.subr.mxu0 0.0
        %4426 = vmatpush1.msra.mxu0 0.0
        %4427 = vmatprep.subr.mxu0 0.0
        %4428 = vmatpush1.msra.mxu0 0.0
        %4429 = vmatprep.subr.mxu0 0.0
        %4430 = vmatpush1.msra.mxu0 0.0
        %4431 = vmatprep.subr.mxu0 0.0
        %4432 = vmatpush1.msra.mxu0 0.0
        %4433 = vmatprep.subr.mxu0 0.0
        %4434 = vmatpush1.msra.mxu0 0.0
        %4435 = vmatprep.subr.mxu0 0.0
        %4436 = vmatpush1.msra.mxu0 0.0
        %4437 = vmatprep.subr.mxu0 0.0
        %4438 = vmatpush1.msra.mxu0 0.0
        %4439 = vmatprep.subr.mxu0 0.0
        %4440 = vmatpush1.msra.mxu0 0.0
        %4441 = vmatprep.subr.mxu0 0.0
        %4442 = vmatpush1.msra.mxu0 0.0
        %4443 = vmatprep.subr.mxu0 0.0
        %4444 = vmatpush1.msra.mxu0 0.0
        %4445 = vmatprep.subr.mxu0 0.0
        %4446 = vmatpush1.msra.mxu0 0.0
        %4447 = vmatprep.subr.mxu0 0.0
        %4448 = vmatpush1.msra.mxu0 0.0
        %4449 = vmatprep.subr.mxu0 0.0
        %4450 = vmatpush1.msra.mxu0 0.0
        %4451 = vmatprep.subr.mxu0 0.0
        %4452 = vmatpush1.msra.mxu0 0.0
        %4453 = vmatprep.subr.mxu0 0.0
        %4454 = vmatpush1.msra.mxu0 0.0
        %4455 = vmatprep.subr.mxu0 0.0
        %4456 = vmatpush1.msra.mxu0 0.0
        %4457 = vmatprep.subr.mxu0 0.0
        %4458 = vmatpush1.msra.mxu0 0.0
        %4459 = vmatprep.subr.mxu0 0.0
        %4460 = vmatpush1.msra.mxu0 0.0
        %4461 = vmatprep.subr.mxu0 0.0
        %4462 = vmatpush1.msra.mxu0 0.0
        %4463 = vmatprep.subr.mxu0 0.0
        %4464 = vmatpush1.msra.mxu0 0.0
        %4465 = vmatprep.subr.mxu0 0.0
        %4466 = vmatpush1.msra.mxu0 0.0
        %4467 = vmatprep.subr.mxu0 0.0
        %4468 = vmatpush1.msra.mxu0 0.0
        %4469 = vmatprep.subr.mxu0 0.0
        %4470 = vmatpush1.msra.mxu0 0.0
        %4471 = vmatprep.subr.mxu0 0.0
        %4472 = vmatpush1.msra.mxu0 0.0
        %4473 = vmatprep.subr.mxu0 0.0
        %4474 = vmatpush1.msra.mxu0 0.0
        %4475 = vmatprep.subr.mxu0 0.0
        %4476 = vmatpush1.msra.mxu0 0.0
        %4477 = vmatprep.mubr.f32.mxu0 0.0
        %4478 = vmatmul.mubr.f32.gmra.mrb[0].mxu0 %v4404
        %v4479 = vpop.f32.mrb[0].mxu0
        %v4480 = vadd.f32 0.0, %v4479
        %v4481 = vpop.f32.mrb[0].mxu0
        %v4482 = vadd.f32 0.0, %v4481
        %4483 = vdwg.mxu0
        %v4484 = vsel %vm989, %v1177, 0
        %v4487 = vsel %vm4406, %v4234, 0
        %v4490 = vsel %vm4406, %v4236, 0
        %4492 = vmatprep.subr.mxu0 %v4490
        %4493 = vmatpush1.msra.mxu0 %v4487
        %4494 = vmatprep.subr.mxu0 0.0
        %4495 = vmatpush1.msra.mxu0 0.0
        %4496 = vmatprep.subr.mxu0 0.0
        %4497 = vmatpush1.msra.mxu0 0.0
        %4498 = vmatprep.subr.mxu0 0.0
        %4499 = vmatpush1.msra.mxu0 0.0
        %4500 = vmatprep.subr.mxu0 0.0
        %4501 = vmatpush1.msra.mxu0 0.0
        %4502 = vmatprep.subr.mxu0 0.0
        %4503 = vmatpush1.msra.mxu0 0.0
        %4504 = vmatprep.subr.mxu0 0.0
        %4505 = vmatpush1.msra.mxu0 0.0
        %4506 = vmatprep.subr.mxu0 0.0
        %4507 = vmatpush1.msra.mxu0 0.0
        %4508 = vmatprep.subr.mxu0 0.0
        %4509 = vmatpush1.msra.mxu0 0.0
        %4510 = vmatprep.subr.mxu0 0.0
        %4511 = vmatpush1.msra.mxu0 0.0
        %4512 = vmatprep.subr.mxu0 0.0
        %4513 = vmatpush1.msra.mxu0 0.0
        %4514 = vmatprep.subr.mxu0 0.0
        %4515 = vmatpush1.msra.mxu0 0.0
        %4516 = vmatprep.subr.mxu0 0.0
        %4517 = vmatpush1.msra.mxu0 0.0
        %4518 = vmatprep.subr.mxu0 0.0
        %4519 = vmatpush1.msra.mxu0 0.0
        %4520 = vmatprep.subr.mxu0 0.0
        %4521 = vmatpush1.msra.mxu0 0.0
        %4522 = vmatprep.subr.mxu0 0.0
        %4523 = vmatpush1.msra.mxu0 0.0
        %4524 = vmatprep.subr.mxu0 0.0
        %4525 = vmatpush1.msra.mxu0 0.0
        %4526 = vmatprep.subr.mxu0 0.0
        %4527 = vmatpush1.msra.mxu0 0.0
        %4528 = vmatprep.subr.mxu0 0.0
        %4529 = vmatpush1.msra.mxu0 0.0
        %4530 = vmatprep.subr.mxu0 0.0
        %4531 = vmatpush1.msra.mxu0 0.0
        %4532 = vmatprep.subr.mxu0 0.0
        %4533 = vmatpush1.msra.mxu0 0.0
        %4534 = vmatprep.subr.mxu0 0.0
        %4535 = vmatpush1.msra.mxu0 0.0
        %4536 = vmatprep.subr.mxu0 0.0
        %4537 = vmatpush1.msra.mxu0 0.0
        %4538 = vmatprep.subr.mxu0 0.0
        %4539 = vmatpush1.msra.mxu0 0.0
        %4540 = vmatprep.subr.mxu0 0.0
        %4541 = vmatpush1.msra.mxu0 0.0
        %4542 = vmatprep.subr.mxu0 0.0
        %4543 = vmatpush1.msra.mxu0 0.0
        %4544 = vmatprep.subr.mxu0 0.0
        %4545 = vmatpush1.msra.mxu0 0.0
        %4546 = vmatprep.subr.mxu0 0.0
        %4547 = vmatpush1.msra.mxu0 0.0
        %4548 = vmatprep.subr.mxu0 0.0
        %4549 = vmatpush1.msra.mxu0 0.0
        %4550 = vmatprep.subr.mxu0 0.0
        %4551 = vmatpush1.msra.mxu0 0.0
        %4552 = vmatprep.subr.mxu0 0.0
        %4553 = vmatpush1.msra.mxu0 0.0
        %4554 = vmatprep.subr.mxu0 0.0
        %4555 = vmatpush1.msra.mxu0 0.0
        %4556 = vmatprep.mubr.f32.mxu0 0.0
        %4557 = vmatmul.mubr.f32.gmra.mrb[0].mxu0 %v4484
        %v4558 = vpop.f32.mrb[0].mxu0
        %v4559 = vadd.f32 %v4480, %v4558
        %v4560 = vpop.f32.mrb[0].mxu0
        %v4561 = vadd.f32 %v4482, %v4560
        %4562 = vdwg.mxu0
        %v4563 = vadd.f32 %v4559, %v4316
        %v4564 = vadd.f32 %v4561, %v4318
        %v4565 = vsel %vm989, %v1524, 0
        %v4568 = vsel %vm4406, %v4357, 0
        %v4571 = vsel %vm4406, %v4359, 0
        %4573 = vmatprep.subr.mxu0 %v4571
        %4574 = vmatpush1.msra.mxu0 %v4568
        %4575 = vmatprep.subr.mxu0 0.0
        %4576 = vmatpush1.msra.mxu0 0.0
        %4577 = vmatprep.subr.mxu0 0.0
        %4578 = vmatpush1.msra.mxu0 0.0
        %4579 = vmatprep.subr.mxu0 0.0
        %4580 = vmatpush1.msra.mxu0 0.0
        %4581 = vmatprep.subr.mxu0 0.0
        %4582 = vmatpush1.msra.mxu0 0.0
        %4583 = vmatprep.subr.mxu0 0.0
        %4584 = vmatpush1.msra.mxu0 0.0
        %4585 = vmatprep.subr.mxu0 0.0
        %4586 = vmatpush1.msra.mxu0 0.0
        %4587 = vmatprep.subr.mxu0 0.0
        %4588 = vmatpush1.msra.mxu0 0.0
        %4589 = vmatprep.subr.mxu0 0.0
        %4590 = vmatpush1.msra.mxu0 0.0
        %4591 = vmatprep.subr.mxu0 0.0
        %4592 = vmatpush1.msra.mxu0 0.0
        %4593 = vmatprep.subr.mxu0 0.0
        %4594 = vmatpush1.msra.mxu0 0.0
        %4595 = vmatprep.subr.mxu0 0.0
        %4596 = vmatpush1.msra.mxu0 0.0
        %4597 = vmatprep.subr.mxu0 0.0
        %4598 = vmatpush1.msra.mxu0 0.0
        %4599 = vmatprep.subr.mxu0 0.0
        %4600 = vmatpush1.msra.mxu0 0.0
        %4601 = vmatprep.subr.mxu0 0.0
        %4602 = vmatpush1.msra.mxu0 0.0
        %4603 = vmatprep.subr.mxu0 0.0
        %4604 = vmatpush1.msra.mxu0 0.0
        %4605 = vmatprep.subr.mxu0 0.0
        %4606 = vmatpush1.msra.mxu0 0.0
        %4607 = vmatprep.subr.mxu0 0.0
        %4608 = vmatpush1.msra.mxu0 0.0
        %4609 = vmatprep.subr.mxu0 0.0
        %4610 = vmatpush1.msra.mxu0 0.0
        %4611 = vmatprep.subr.mxu0 0.0
        %4612 = vmatpush1.msra.mxu0 0.0
        %4613 = vmatprep.subr.mxu0 0.0
        %4614 = vmatpush1.msra.mxu0 0.0
        %4615 = vmatprep.subr.mxu0 0.0
        %4616 = vmatpush1.msra.mxu0 0.0
        %4617 = vmatprep.subr.mxu0 0.0
        %4618 = vmatpush1.msra.mxu0 0.0
        %4619 = vmatprep.subr.mxu0 0.0
        %4620 = vmatpush1.msra.mxu0 0.0
        %4621 = vmatprep.subr.mxu0 0.0
        %4622 = vmatpush1.msra.mxu0 0.0
        %4623 = vmatprep.subr.mxu0 0.0
        %4624 = vmatpush1.msra.mxu0 0.0
        %4625 = vmatprep.subr.mxu0 0.0
        %4626 = vmatpush1.msra.mxu0 0.0
        %4627 = vmatprep.subr.mxu0 0.0
        %4628 = vmatpush1.msra.mxu0 0.0
        %4629 = vmatprep.subr.mxu0 0.0
        %4630 = vmatpush1.msra.mxu0 0.0
        %4631 = vmatprep.subr.mxu0 0.0
        %4632 = vmatpush1.msra.mxu0 0.0
        %4633 = vmatprep.subr.mxu0 0.0
        %4634 = vmatpush1.msra.mxu0 0.0
        %4635 = vmatprep.subr.mxu0 0.0
        %4636 = vmatpush1.msra.mxu0 0.0
        %4637 = vmatprep.mubr.f32.mxu0 0.0
        %4638 = vmatmul.mubr.f32.gmra.mrb[0].mxu0 %v4565
        %v4639 = vpop.f32.mrb[0].mxu0
        %v4640 = vadd.f32 0.0, %v4639
        %v4641 = vpop.f32.mrb[0].mxu0
        %v4642 = vadd.f32 0.0, %v4641
        %4643 = vdwg.mxu0
        %v4644 = vadd.f32 %v4563, %v4640
        %v4645 = vadd.f32 %v4564, %v4642
        %v4646 = vsel %vm989, %v1717, 0
        %v4649 = vsel %vm4406, %v4398, 0
        %v4652 = vsel %vm4406, %v4400, 0
        %4654 = vmatprep.subr.mxu0 %v4652
        %4655 = vmatpush1.msra.mxu0 %v4649
        %4656 = vmatprep.subr.mxu0 0.0
        %4657 = vmatpush1.msra.mxu0 0.0
        %4658 = vmatprep.subr.mxu0 0.0
        %4659 = vmatpush1.msra.mxu0 0.0
        %4660 = vmatprep.subr.mxu0 0.0
        %4661 = vmatpush1.msra.mxu0 0.0
        %4662 = vmatprep.subr.mxu0 0.0
        %4663 = vmatpush1.msra.mxu0 0.0
        %4664 = vmatprep.subr.mxu0 0.0
        %4665 = vmatpush1.msra.mxu0 0.0
        %4666 = vmatprep.subr.mxu0 0.0
        %4667 = vmatpush1.msra.mxu0 0.0
        %4668 = vmatprep.subr.mxu0 0.0
        %4669 = vmatpush1.msra.mxu0 0.0
        %4670 = vmatprep.subr.mxu0 0.0
        %4671 = vmatpush1.msra.mxu0 0.0
        %4672 = vmatprep.subr.mxu0 0.0
        %4673 = vmatpush1.msra.mxu0 0.0
        %4674 = vmatprep.subr.mxu0 0.0
        %4675 = vmatpush1.msra.mxu0 0.0
        %4676 = vmatprep.subr.mxu0 0.0
        %4677 = vmatpush1.msra.mxu0 0.0
        %4678 = vmatprep.subr.mxu0 0.0
        %4679 = vmatpush1.msra.mxu0 0.0
        %4680 = vmatprep.subr.mxu0 0.0
        %4681 = vmatpush1.msra.mxu0 0.0
        %4682 = vmatprep.subr.mxu0 0.0
        %4683 = vmatpush1.msra.mxu0 0.0
        %4684 = vmatprep.subr.mxu0 0.0
        %4685 = vmatpush1.msra.mxu0 0.0
        %4686 = vmatprep.subr.mxu0 0.0
        %4687 = vmatpush1.msra.mxu0 0.0
        %4688 = vmatprep.subr.mxu0 0.0
        %4689 = vmatpush1.msra.mxu0 0.0
        %4690 = vmatprep.subr.mxu0 0.0
        %4691 = vmatpush1.msra.mxu0 0.0
        %4692 = vmatprep.subr.mxu0 0.0
        %4693 = vmatpush1.msra.mxu0 0.0
        %4694 = vmatprep.subr.mxu0 0.0
        %4695 = vmatpush1.msra.mxu0 0.0
        %4696 = vmatprep.subr.mxu0 0.0
        %4697 = vmatpush1.msra.mxu0 0.0
        %4698 = vmatprep.subr.mxu0 0.0
        %4699 = vmatpush1.msra.mxu0 0.0
        %4700 = vmatprep.subr.mxu0 0.0
        %4701 = vmatpush1.msra.mxu0 0.0
        %4702 = vmatprep.subr.mxu0 0.0
        %4703 = vmatpush1.msra.mxu0 0.0
        %4704 = vmatprep.subr.mxu0 0.0
        %4705 = vmatpush1.msra.mxu0 0.0
        %4706 = vmatprep.subr.mxu0 0.0
        %4707 = vmatpush1.msra.mxu0 0.0
        %4708 = vmatprep.subr.mxu0 0.0
        %4709 = vmatpush1.msra.mxu0 0.0
        %4710 = vmatprep.subr.mxu0 0.0
        %4711 = vmatpush1.msra.mxu0 0.0
        %4712 = vmatprep.subr.mxu0 0.0
        %4713 = vmatpush1.msra.mxu0 0.0
        %4714 = vmatprep.subr.mxu0 0.0
        %4715 = vmatpush1.msra.mxu0 0.0
        %4716 = vmatprep.subr.mxu0 0.0
        %4717 = vmatpush1.msra.mxu0 0.0
        %4718 = vmatprep.mubr.f32.mxu0 0.0
        %4719 = vmatmul.mubr.f32.gmra.mrb[0].mxu0 %v4646
        %v4720 = vpop.f32.mrb[0].mxu0
        %v4721 = vadd.f32 0.0, %v4720
        %v4722 = vpop.f32.mrb[0].mxu0
        %v4723 = vadd.f32 0.0, %v4722
        %4724 = vdwg.mxu0
        %v4725 = vadd.f32 %v4644, %v4721
        %v4726 = vadd.f32 %v4645, %v4723
        %v4727 = vld [vmem:[%s10] sm:$0xf]
        %v4729 = vlaneseq
        %v4730 = vshrl.u32 %v4729, 7
        %v4731 = vsub.s32 0, %v4730
        %v4732 = vrot.slane %v4727, %v4731
        %v4733 = vlaneseq
        %v4734 = vshrl.u32 %v4733, 7
        %v4735 = vsub.s32 2, %v4734
        %v4736 = vrot.slane %v4727, %v4735
        %v4739 = vlaneseq
        %v4740 = vshrl.u32 %v4739, 7
        %v4741 = vsub.s32 0, %v4740
        %v4742 = vrot.slane %v4732, %v4741
        %v4743 = vlaneseq
        %v4744 = vshrl.u32 %v4743, 7
        %v4745 = vsub.s32 0, %v4744
        %v4746 = vrot.slane %v4736, %v4745
        %v4747 = vmul.f32 %v4725, %v4742
        %v4748 = vmul.f32 %v4726, %v4746
        %v4749 = vlaneseq
        %v4750 = vshrl.u32 %v4749, 7
        %v4751 = vsub.s32 1, %v4750
        %v4752 = vrot.slane %v4727, %v4751
        %v4753 = vlaneseq
        %v4754 = vshrl.u32 %v4753, 7
        %v4755 = vsub.s32 3, %v4754
        %v4756 = vrot.slane %v4727, %v4755
        %v4759 = vlaneseq
        %v4760 = vshrl.u32 %v4759, 7
        %v4761 = vsub.s32 1, %v4760
        %v4762 = vrot.slane %v4752, %v4761
        %v4763 = vlaneseq
        %v4764 = vshrl.u32 %v4763, 7
        %v4765 = vsub.s32 1, %v4764
        %v4766 = vrot.slane %v4756, %v4765
        %v4767 = vadd.f32 %v4747, %v4762
        %v4768 = vadd.f32 %v4748, %v4766
        %v4769 = vmax.f32 %v4767, 0.0
        %v4770 = vmax.f32 %v4768, 0.0
        %v4771 = vpack.c.bf16 %v4769, %v4769
        %v4772 = vpack.c.bf16 %v4770, %v4770
        %v4773 = vld [vmem:[#allocation16] sm:$0xff]
        %v4774 = vld [vmem:[#allocation16 + $0x8] sm:$0xff]
        %v4775 = vld [vmem:[#allocation16 + $0x10] sm:$0xff]
        %v4776 = vld [vmem:[#allocation16 + $0x18] sm:$0xff]
        %v4777 = vld [vmem:[#allocation16 + $0x20] sm:$0xff]
        %v4778 = vld [vmem:[#allocation16 + $0x28] sm:$0xff]
        %v4779 = vld [vmem:[#allocation16 + $0x30] sm:$0xff]
        %v4780 = vld [vmem:[#allocation16 + $0x38] sm:$0xff]
        %v4781 = vld [vmem:[#allocation16 + $0x40] sm:$0xff]
        %v4782 = vld [vmem:[#allocation16 + $0x48] sm:$0xff]
        %v4783 = vld [vmem:[#allocation16 + $0x50] sm:$0xff]
        %v4784 = vld [vmem:[#allocation16 + $0x58] sm:$0xff]
        %v4785 = vld [vmem:[#allocation16 + $0x60] sm:$0xff]
        %v4786 = vld [vmem:[#allocation16 + $0x68] sm:$0xff]
        %v4787 = vld [vmem:[#allocation16 + $0x70] sm:$0xff]
        %v4788 = vld [vmem:[#allocation16 + $0x78] sm:$0xff]
        %v4789 = vld [vmem:[#allocation16 + $0x80] sm:$0xff]
        %v4790 = vld [vmem:[#allocation16 + $0x88] sm:$0xff]
        %v4791 = vld [vmem:[#allocation16 + $0x90] sm:$0xff]
        %v4792 = vld [vmem:[#allocation16 + $0x98] sm:$0xff]
        %v4793 = vld [vmem:[#allocation16 + $0xa0] sm:$0xff]
        %v4794 = vld [vmem:[#allocation16 + $0xa8] sm:$0xff]
        %v4795 = vld [vmem:[#allocation16 + $0xb0] sm:$0xff]
        %v4796 = vld [vmem:[#allocation16 + $0xb8] sm:$0xff]
        %v4797 = vld [vmem:[#allocation16 + $0xc0] sm:$0xff]
        %v4798 = vld [vmem:[#allocation16 + $0xc8] sm:$0xff]
        %v4799 = vld [vmem:[#allocation16 + $0xd0] sm:$0xff]
        %v4800 = vld [vmem:[#allocation16 + $0xd8] sm:$0xff]
        %v4801 = vld [vmem:[#allocation16 + $0xe0] sm:$0xff]
        %v4802 = vld [vmem:[#allocation16 + $0xe8] sm:$0xff]
        %v4803 = vld [vmem:[#allocation16 + $0xf0] sm:$0xff]
        %v4804 = vld [vmem:[#allocation16 + $0xf8] sm:$0xff]
        %v4805 = vld [vmem:[#allocation16 + $0x100] sm:$0xff]
        %v4806 = vld [vmem:[#allocation16 + $0x108] sm:$0xff]
        %v4807 = vld [vmem:[#allocation16 + $0x110] sm:$0xff]
        %v4808 = vld [vmem:[#allocation16 + $0x118] sm:$0xff]
        %v4809 = vld [vmem:[#allocation16 + $0x120] sm:$0xff]
        %v4810 = vld [vmem:[#allocation16 + $0x128] sm:$0xff]
        %v4811 = vld [vmem:[#allocation16 + $0x130] sm:$0xff]
        %v4812 = vld [vmem:[#allocation16 + $0x138] sm:$0xff]
        %v4813 = vld [vmem:[#allocation16 + $0x140] sm:$0xff]
        %v4814 = vld [vmem:[#allocation16 + $0x148] sm:$0xff]
        %v4815 = vld [vmem:[#allocation16 + $0x150] sm:$0xff]
        %v4816 = vld [vmem:[#allocation16 + $0x158] sm:$0xff]
        %v4817 = vld [vmem:[#allocation16 + $0x160] sm:$0xff]
        %v4818 = vld [vmem:[#allocation16 + $0x168] sm:$0xff]
        %v4819 = vld [vmem:[#allocation16 + $0x170] sm:$0xff]
        %v4820 = vld [vmem:[#allocation16 + $0x178] sm:$0xff]
        %v4821 = vld [vmem:[#allocation16 + $0x180] sm:$0xff]
        %v4822 = vld [vmem:[#allocation16 + $0x188] sm:$0xff]
        %v4823 = vld [vmem:[#allocation16 + $0x190] sm:$0xff]
        %v4824 = vld [vmem:[#allocation16 + $0x198] sm:$0xff]
        %v4825 = vld [vmem:[#allocation16 + $0x1a0] sm:$0xff]
        %v4826 = vld [vmem:[#allocation16 + $0x1a8] sm:$0xff]
        %v4827 = vld [vmem:[#allocation16 + $0x1b0] sm:$0xff]
        %v4828 = vld [vmem:[#allocation16 + $0x1b8] sm:$0xff]
        %v4829 = vld [vmem:[#allocation16 + $0x1c0] sm:$0xff]
        %v4830 = vld [vmem:[#allocation16 + $0x1c8] sm:$0xff]
        %v4831 = vld [vmem:[#allocation16 + $0x1d0] sm:$0xff]
        %v4832 = vld [vmem:[#allocation16 + $0x1d8] sm:$0xff]
        %v4833 = vld [vmem:[#allocation16 + $0x1e0] sm:$0xff]
        %v4834 = vld [vmem:[#allocation16 + $0x1e8] sm:$0xff]
        %v4835 = vld [vmem:[#allocation16 + $0x1f0] sm:$0xff]
        %v4836 = vld [vmem:[#allocation16 + $0x1f8] sm:$0xff]
        %v4837 = vld [vmem:[#allocation16 + $0x200] sm:$0xff]
        %v4838 = vld [vmem:[#allocation16 + $0x208] sm:$0xff]
        %v4839 = vld [vmem:[#allocation16 + $0x210] sm:$0xff]
        %v4840 = vld [vmem:[#allocation16 + $0x218] sm:$0xff]
        %v4841 = vld [vmem:[#allocation16 + $0x220] sm:$0xff]
        %v4842 = vld [vmem:[#allocation16 + $0x228] sm:$0xff]
        %v4843 = vld [vmem:[#allocation16 + $0x230] sm:$0xff]
        %v4844 = vld [vmem:[#allocation16 + $0x238] sm:$0xff]
        %v4845 = vld [vmem:[#allocation16 + $0x240] sm:$0xff]
        %v4846 = vld [vmem:[#allocation16 + $0x248] sm:$0xff]
        %v4847 = vld [vmem:[#allocation16 + $0x250] sm:$0xff]
        %v4848 = vld [vmem:[#allocation16 + $0x258] sm:$0xff]
        %v4849 = vld [vmem:[#allocation16 + $0x260] sm:$0xff]
        %v4850 = vld [vmem:[#allocation16 + $0x268] sm:$0xff]
        %v4851 = vld [vmem:[#allocation16 + $0x270] sm:$0xff]
        %v4852 = vld [vmem:[#allocation16 + $0x278] sm:$0xff]
        %v4853 = vld [vmem:[#allocation16 + $0x280] sm:$0xff]
        %v4854 = vld [vmem:[#allocation16 + $0x288] sm:$0xff]
        %v4855 = vld [vmem:[#allocation16 + $0x290] sm:$0xff]
        %v4856 = vld [vmem:[#allocation16 + $0x298] sm:$0xff]
        %v4857 = vld [vmem:[#allocation16 + $0x2a0] sm:$0xff]
        %v4858 = vld [vmem:[#allocation16 + $0x2a8] sm:$0xff]
        %v4859 = vld [vmem:[#allocation16 + $0x2b0] sm:$0xff]
        %v4860 = vld [vmem:[#allocation16 + $0x2b8] sm:$0xff]
        %v4861 = vld [vmem:[#allocation16 + $0x2c0] sm:$0xff]
        %v4862 = vld [vmem:[#allocation16 + $0x2c8] sm:$0xff]
        %v4863 = vld [vmem:[#allocation16 + $0x2d0] sm:$0xff]
        %v4864 = vld [vmem:[#allocation16 + $0x2d8] sm:$0xff]
        %v4865 = vld [vmem:[#allocation16 + $0x2e0] sm:$0xff]
        %v4866 = vld [vmem:[#allocation16 + $0x2e8] sm:$0xff]
        %v4867 = vld [vmem:[#allocation16 + $0x2f0] sm:$0xff]
        %v4868 = vld [vmem:[#allocation16 + $0x2f8] sm:$0xff]
        %v4965 = vunpack.c.l.b16 %v4773
        %v4966 = vunpack.c.h.b16 %v4773
        %v4967 = vunpack.c.l.b16 %v4774
        %v4968 = vunpack.c.h.b16 %v4774
        %v4969 = vunpack.c.l.b16 %v4775
        %v4970 = vunpack.c.h.b16 %v4775
        %v4971 = vunpack.c.l.b16 %v4776
        %v4972 = vunpack.c.h.b16 %v4776
        %v4973 = vunpack.c.l.b16 %v4777
        %v4974 = vunpack.c.h.b16 %v4777
        %v4975 = vunpack.c.l.b16 %v4778
        %v4976 = vunpack.c.h.b16 %v4778
        %v4977 = vunpack.c.l.b16 %v4779
        %v4978 = vunpack.c.h.b16 %v4779
        %v4979 = vunpack.c.l.b16 %v4780
        %v4980 = vunpack.c.h.b16 %v4780
        %v4981 = vunpack.c.l.b16 %v4781
        %v4982 = vunpack.c.h.b16 %v4781
        %v4983 = vunpack.c.l.b16 %v4782
        %v4984 = vunpack.c.h.b16 %v4782
        %v4985 = vunpack.c.l.b16 %v4783
        %v4986 = vunpack.c.h.b16 %v4783
        %v4987 = vunpack.c.l.b16 %v4784
        %v4988 = vunpack.c.h.b16 %v4784
        %v4989 = vunpack.c.l.b16 %v4785
        %v4990 = vunpack.c.h.b16 %v4785
        %v4991 = vunpack.c.l.b16 %v4786
        %v4992 = vunpack.c.h.b16 %v4786
        %v4993 = vunpack.c.l.b16 %v4787
        %v4994 = vunpack.c.h.b16 %v4787
        %v4995 = vunpack.c.l.b16 %v4788
        %v4996 = vunpack.c.h.b16 %v4788
        %v4997 = vunpack.c.l.b16 %v4789
        %v4998 = vunpack.c.h.b16 %v4789
        %v4999 = vunpack.c.l.b16 %v4790
        %v5000 = vunpack.c.h.b16 %v4790
        %v5001 = vunpack.c.l.b16 %v4791
        %v5002 = vunpack.c.h.b16 %v4791
        %v5003 = vunpack.c.l.b16 %v4792
        %v5004 = vunpack.c.h.b16 %v4792
        %v5005 = vunpack.c.l.b16 %v4793
        %v5006 = vunpack.c.h.b16 %v4793
        %v5007 = vunpack.c.l.b16 %v4794
        %v5008 = vunpack.c.h.b16 %v4794
        %v5009 = vunpack.c.l.b16 %v4795
        %v5010 = vunpack.c.h.b16 %v4795
        %v5011 = vunpack.c.l.b16 %v4796
        %v5012 = vunpack.c.h.b16 %v4796
        %v5013 = vunpack.c.l.b16 %v4797
        %v5014 = vunpack.c.h.b16 %v4797
        %v5015 = vunpack.c.l.b16 %v4798
        %v5016 = vunpack.c.h.b16 %v4798
        %v5017 = vunpack.c.l.b16 %v4799
        %v5018 = vunpack.c.h.b16 %v4799
        %v5019 = vunpack.c.l.b16 %v4800
        %v5020 = vunpack.c.h.b16 %v4800
        %v5021 = vunpack.c.l.b16 %v4801
        %v5022 = vunpack.c.h.b16 %v4801
        %v5023 = vunpack.c.l.b16 %v4802
        %v5024 = vunpack.c.h.b16 %v4802
        %v5025 = vunpack.c.l.b16 %v4803
        %v5026 = vunpack.c.h.b16 %v4803
        %v5027 = vunpack.c.l.b16 %v4804
        %v5028 = vunpack.c.h.b16 %v4804
        %v5029 = vunpack.c.l.b16 %v4805
        %v5030 = vunpack.c.h.b16 %v4805
        %v5031 = vunpack.c.l.b16 %v4806
        %v5032 = vunpack.c.h.b16 %v4806
        %v5033 = vunpack.c.l.b16 %v4807
        %v5034 = vunpack.c.h.b16 %v4807
        %v5035 = vunpack.c.l.b16 %v4808
        %v5036 = vunpack.c.h.b16 %v4808
        %v5037 = vunpack.c.l.b16 %v4809
        %v5038 = vunpack.c.h.b16 %v4809
        %v5039 = vunpack.c.l.b16 %v4810
        %v5040 = vunpack.c.h.b16 %v4810
        %v5041 = vunpack.c.l.b16 %v4811
        %v5042 = vunpack.c.h.b16 %v4811
        %v5043 = vunpack.c.l.b16 %v4812
        %v5044 = vunpack.c.h.b16 %v4812
        %v5045 = vunpack.c.l.b16 %v4813
        %v5046 = vunpack.c.h.b16 %v4813
        %v5047 = vunpack.c.l.b16 %v4814
        %v5048 = vunpack.c.h.b16 %v4814
        %v5049 = vunpack.c.l.b16 %v4815
        %v5050 = vunpack.c.h.b16 %v4815
        %v5051 = vunpack.c.l.b16 %v4816
        %v5052 = vunpack.c.h.b16 %v4816
        %v5053 = vunpack.c.l.b16 %v4817
        %v5054 = vunpack.c.h.b16 %v4817
        %v5055 = vunpack.c.l.b16 %v4818
        %v5056 = vunpack.c.h.b16 %v4818
        %v5057 = vunpack.c.l.b16 %v4819
        %v5058 = vunpack.c.h.b16 %v4819
        %v5059 = vunpack.c.l.b16 %v4820
        %v5060 = vunpack.c.h.b16 %v4820
        %v5061 = vunpack.c.l.b16 %v4821
        %v5062 = vunpack.c.h.b16 %v4821
        %v5063 = vunpack.c.l.b16 %v4822
        %v5064 = vunpack.c.h.b16 %v4822
        %v5065 = vunpack.c.l.b16 %v4823
        %v5066 = vunpack.c.h.b16 %v4823
        %v5067 = vunpack.c.l.b16 %v4824
        %v5068 = vunpack.c.h.b16 %v4824
        %v5069 = vunpack.c.l.b16 %v4825
        %v5070 = vunpack.c.h.b16 %v4825
        %v5071 = vunpack.c.l.b16 %v4826
        %v5072 = vunpack.c.h.b16 %v4826
        %v5073 = vunpack.c.l.b16 %v4827
        %v5074 = vunpack.c.h.b16 %v4827
        %v5075 = vunpack.c.l.b16 %v4828
        %v5076 = vunpack.c.h.b16 %v4828
        %v5077 = vunpack.c.l.b16 %v4829
        %v5078 = vunpack.c.h.b16 %v4829
        %v5079 = vunpack.c.l.b16 %v4830
        %v5080 = vunpack.c.h.b16 %v4830
        %v5081 = vunpack.c.l.b16 %v4831
        %v5082 = vunpack.c.h.b16 %v4831
        %v5083 = vunpack.c.l.b16 %v4832
        %v5084 = vunpack.c.h.b16 %v4832
        %v5085 = vunpack.c.l.b16 %v4833
        %v5086 = vunpack.c.h.b16 %v4833
        %v5087 = vunpack.c.l.b16 %v4834
        %v5088 = vunpack.c.h.b16 %v4834
        %v5089 = vunpack.c.l.b16 %v4835
        %v5090 = vunpack.c.h.b16 %v4835
        %v5091 = vunpack.c.l.b16 %v4836
        %v5092 = vunpack.c.h.b16 %v4836
        %v5093 = vunpack.c.l.b16 %v4837
        %v5094 = vunpack.c.h.b16 %v4837
        %v5095 = vunpack.c.l.b16 %v4838
        %v5096 = vunpack.c.h.b16 %v4838
        %v5097 = vunpack.c.l.b16 %v4839
        %v5098 = vunpack.c.h.b16 %v4839
        %v5099 = vunpack.c.l.b16 %v4840
        %v5100 = vunpack.c.h.b16 %v4840
        %v5101 = vunpack.c.l.b16 %v4841
        %v5102 = vunpack.c.h.b16 %v4841
        %v5103 = vunpack.c.l.b16 %v4842
        %v5104 = vunpack.c.h.b16 %v4842
        %v5105 = vunpack.c.l.b16 %v4843
        %v5106 = vunpack.c.h.b16 %v4843
        %v5107 = vunpack.c.l.b16 %v4844
        %v5108 = vunpack.c.h.b16 %v4844
        %v5109 = vunpack.c.l.b16 %v4845
        %v5110 = vunpack.c.h.b16 %v4845
        %v5111 = vunpack.c.l.b16 %v4846
        %v5112 = vunpack.c.h.b16 %v4846
        %v5113 = vunpack.c.l.b16 %v4847
        %v5114 = vunpack.c.h.b16 %v4847
        %v5115 = vunpack.c.l.b16 %v4848
        %v5116 = vunpack.c.h.b16 %v4848
        %v5117 = vunpack.c.l.b16 %v4849
        %v5118 = vunpack.c.h.b16 %v4849
        %v5119 = vunpack.c.l.b16 %v4850
        %v5120 = vunpack.c.h.b16 %v4850
        %v5121 = vunpack.c.l.b16 %v4851
        %v5122 = vunpack.c.h.b16 %v4851
        %v5123 = vunpack.c.l.b16 %v4852
        %v5124 = vunpack.c.h.b16 %v4852
        %v5125 = vunpack.c.l.b16 %v4853
        %v5126 = vunpack.c.h.b16 %v4853
        %v5127 = vunpack.c.l.b16 %v4854
        %v5128 = vunpack.c.h.b16 %v4854
        %v5129 = vunpack.c.l.b16 %v4855
        %v5130 = vunpack.c.h.b16 %v4855
        %v5131 = vunpack.c.l.b16 %v4856
        %v5132 = vunpack.c.h.b16 %v4856
        %v5133 = vunpack.c.l.b16 %v4857
        %v5134 = vunpack.c.h.b16 %v4857
        %v5135 = vunpack.c.l.b16 %v4858
        %v5136 = vunpack.c.h.b16 %v4858
        %v5137 = vunpack.c.l.b16 %v4859
        %v5138 = vunpack.c.h.b16 %v4859
        %v5139 = vunpack.c.l.b16 %v4860
        %v5140 = vunpack.c.h.b16 %v4860
        %v5141 = vunpack.c.l.b16 %v4861
        %v5142 = vunpack.c.h.b16 %v4861
        %v5143 = vunpack.c.l.b16 %v4862
        %v5144 = vunpack.c.h.b16 %v4862
        %v5145 = vunpack.c.l.b16 %v4863
        %v5146 = vunpack.c.h.b16 %v4863
        %v5147 = vunpack.c.l.b16 %v4864
        %v5148 = vunpack.c.h.b16 %v4864
        %v5149 = vunpack.c.l.b16 %v4865
        %v5150 = vunpack.c.h.b16 %v4865
        %v5151 = vunpack.c.l.b16 %v4866
        %v5152 = vunpack.c.h.b16 %v4866
        %v5153 = vunpack.c.l.b16 %v4867
        %v5154 = vunpack.c.h.b16 %v4867
        %v5155 = vunpack.c.l.b16 %v4868
        %v5156 = vunpack.c.h.b16 %v4868
        %v5157 = vpack.c.b16 %v4971, %v4965
        %v5158 = vpack.c.b16 %v4972, %v4966
        %v5159 = vpack.c.b16 %v4973, %v4967
        %v5160 = vpack.c.b16 %v4974, %v4968
        %v5161 = vpack.c.b16 %v4975, %v4969
        %v5162 = vpack.c.b16 %v4976, %v4970
        %v5163 = vpack.c.b16 %v4983, %v4977
        %v5164 = vpack.c.b16 %v4984, %v4978
        %v5165 = vpack.c.b16 %v4985, %v4979
        %v5166 = vpack.c.b16 %v4986, %v4980
        %v5167 = vpack.c.b16 %v4987, %v4981
        %v5168 = vpack.c.b16 %v4988, %v4982
        %v5169 = vpack.c.b16 %v4995, %v4989
        %v5170 = vpack.c.b16 %v4996, %v4990
        %v5171 = vpack.c.b16 %v4997, %v4991
        %v5172 = vpack.c.b16 %v4998, %v4992
        %v5173 = vpack.c.b16 %v4999, %v4993
        %v5174 = vpack.c.b16 %v5000, %v4994
        %v5175 = vpack.c.b16 %v5007, %v5001
        %v5176 = vpack.c.b16 %v5008, %v5002
        %v5177 = vpack.c.b16 %v5009, %v5003
        %v5178 = vpack.c.b16 %v5010, %v5004
        %v5179 = vpack.c.b16 %v5011, %v5005
        %v5180 = vpack.c.b16 %v5012, %v5006
        %v5181 = vpack.c.b16 %v5019, %v5013
        %v5182 = vpack.c.b16 %v5020, %v5014
        %v5183 = vpack.c.b16 %v5021, %v5015
        %v5184 = vpack.c.b16 %v5022, %v5016
        %v5185 = vpack.c.b16 %v5023, %v5017
        %v5186 = vpack.c.b16 %v5024, %v5018
        %v5187 = vpack.c.b16 %v5031, %v5025
        %v5188 = vpack.c.b16 %v5032, %v5026
        %v5189 = vpack.c.b16 %v5033, %v5027
        %v5190 = vpack.c.b16 %v5034, %v5028
        %v5191 = vpack.c.b16 %v5035, %v5029
        %v5192 = vpack.c.b16 %v5036, %v5030
        %v5193 = vpack.c.b16 %v5043, %v5037
        %v5194 = vpack.c.b16 %v5044, %v5038
        %v5195 = vpack.c.b16 %v5045, %v5039
        %v5196 = vpack.c.b16 %v5046, %v5040
        %v5197 = vpack.c.b16 %v5047, %v5041
        %v5198 = vpack.c.b16 %v5048, %v5042
        %v5199 = vpack.c.b16 %v5055, %v5049
        %v5200 = vpack.c.b16 %v5056, %v5050
        %v5201 = vpack.c.b16 %v5057, %v5051
        %v5202 = vpack.c.b16 %v5058, %v5052
        %v5203 = vpack.c.b16 %v5059, %v5053
        %v5204 = vpack.c.b16 %v5060, %v5054
        %v5205 = vpack.c.b16 %v5067, %v5061
        %v5206 = vpack.c.b16 %v5068, %v5062
        %v5207 = vpack.c.b16 %v5069, %v5063
        %v5208 = vpack.c.b16 %v5070, %v5064
        %v5209 = vpack.c.b16 %v5071, %v5065
        %v5210 = vpack.c.b16 %v5072, %v5066
        %v5211 = vpack.c.b16 %v5079, %v5073
        %v5212 = vpack.c.b16 %v5080, %v5074
        %v5213 = vpack.c.b16 %v5081, %v5075
        %v5214 = vpack.c.b16 %v5082, %v5076
        %v5215 = vpack.c.b16 %v5083, %v5077
        %v5216 = vpack.c.b16 %v5084, %v5078
        %v5217 = vpack.c.b16 %v5091, %v5085
        %v5218 = vpack.c.b16 %v5092, %v5086
        %v5219 = vpack.c.b16 %v5093, %v5087
        %v5220 = vpack.c.b16 %v5094, %v5088
        %v5221 = vpack.c.b16 %v5095, %v5089
        %v5222 = vpack.c.b16 %v5096, %v5090
        %v5223 = vpack.c.b16 %v5103, %v5097
        %v5224 = vpack.c.b16 %v5104, %v5098
        %v5225 = vpack.c.b16 %v5105, %v5099
        %v5226 = vpack.c.b16 %v5106, %v5100
        %v5227 = vpack.c.b16 %v5107, %v5101
        %v5228 = vpack.c.b16 %v5108, %v5102
        %v5229 = vpack.c.b16 %v5115, %v5109
        %v5230 = vpack.c.b16 %v5116, %v5110
        %v5231 = vpack.c.b16 %v5117, %v5111
        %v5232 = vpack.c.b16 %v5118, %v5112
        %v5233 = vpack.c.b16 %v5119, %v5113
        %v5234 = vpack.c.b16 %v5120, %v5114
        %v5235 = vpack.c.b16 %v5127, %v5121
        %v5236 = vpack.c.b16 %v5128, %v5122
        %v5237 = vpack.c.b16 %v5129, %v5123
        %v5238 = vpack.c.b16 %v5130, %v5124
        %v5239 = vpack.c.b16 %v5131, %v5125
        %v5240 = vpack.c.b16 %v5132, %v5126
        %v5241 = vpack.c.b16 %v5139, %v5133
        %v5242 = vpack.c.b16 %v5140, %v5134
        %v5243 = vpack.c.b16 %v5141, %v5135
        %v5244 = vpack.c.b16 %v5142, %v5136
        %v5245 = vpack.c.b16 %v5143, %v5137
        %v5246 = vpack.c.b16 %v5144, %v5138
        %v5247 = vpack.c.b16 %v5151, %v5145
        %v5248 = vpack.c.b16 %v5152, %v5146
        %v5249 = vpack.c.b16 %v5153, %v5147
        %v5250 = vpack.c.b16 %v5154, %v5148
        %v5251 = vpack.c.b16 %v5155, %v5149
        %v5252 = vpack.c.b16 %v5156, %v5150
        %5349 = vmatprep.subr.bf16.mxu0 %v5158
        %5350 = vmatpush1.bf16.msra.mxu0 %v5157
        %5351 = vmatprep.subr.bf16.mxu0 %v5164
        %5352 = vmatpush1.bf16.msra.mxu0 %v5163
        %5353 = vmatprep.subr.bf16.mxu0 %v5170
        %5354 = vmatpush1.bf16.msra.mxu0 %v5169
        %5355 = vmatprep.subr.bf16.mxu0 %v5176
        %5356 = vmatpush1.bf16.msra.mxu0 %v5175
        %5357 = vmatprep.subr.bf16.mxu0 %v5182
        %5358 = vmatpush1.bf16.msra.mxu0 %v5181
        %5359 = vmatprep.subr.bf16.mxu0 %v5188
        %5360 = vmatpush1.bf16.msra.mxu0 %v5187
        %5361 = vmatprep.subr.bf16.mxu0 %v5194
        %5362 = vmatpush1.bf16.msra.mxu0 %v5193
        %5363 = vmatprep.subr.bf16.mxu0 %v5200
        %5364 = vmatpush1.bf16.msra.mxu0 %v5199
        %5365 = vmatprep.subr.bf16.mxu0 %v5206
        %5366 = vmatpush1.bf16.msra.mxu0 %v5205
        %5367 = vmatprep.subr.bf16.mxu0 %v5212
        %5368 = vmatpush1.bf16.msra.mxu0 %v5211
        %5369 = vmatprep.subr.bf16.mxu0 %v5218
        %5370 = vmatpush1.bf16.msra.mxu0 %v5217
        %5371 = vmatprep.subr.bf16.mxu0 %v5224
        %5372 = vmatpush1.bf16.msra.mxu0 %v5223
        %5373 = vmatprep.subr.bf16.mxu0 %v5230
        %5374 = vmatpush1.bf16.msra.mxu0 %v5229
        %5375 = vmatprep.subr.bf16.mxu0 %v5236
        %5376 = vmatpush1.bf16.msra.mxu0 %v5235
        %5377 = vmatprep.subr.bf16.mxu0 %v5242
        %5378 = vmatpush1.bf16.msra.mxu0 %v5241
        %5379 = vmatprep.subr.bf16.mxu0 %v5248
        %5380 = vmatpush1.bf16.msra.mxu0 %v5247
        %5381 = vmatprep.mubr.bf16.mxu0 %v4772
        %5382 = vmatmul.mubr.bf16.gmra.mrb[0].mxu0 %v4771
        %v5383 = vpop.f32.mrb[0].mxu0
        %v5384 = vadd.f32 0.0, %v5383
        %v5385 = vpop.f32.mrb[0].mxu0
        %v5386 = vadd.f32 0.0, %v5385
        %v5387 = vpop.f32.mrb[0].mxu0
        %v5388 = vpop.f32.mrb[0].mxu0
        %5389 = vdwg.mxu0
        %5390 = vmatprep.subr.bf16.mxu0 %v5160
        %5391 = vmatpush1.bf16.msra.mxu0 %v5159
        %5392 = vmatprep.subr.bf16.mxu0 %v5166
        %5393 = vmatpush1.bf16.msra.mxu0 %v5165
        %5394 = vmatprep.subr.bf16.mxu0 %v5172
        %5395 = vmatpush1.bf16.msra.mxu0 %v5171
        %5396 = vmatprep.subr.bf16.mxu0 %v5178
        %5397 = vmatpush1.bf16.msra.mxu0 %v5177
        %5398 = vmatprep.subr.bf16.mxu0 %v5184
        %5399 = vmatpush1.bf16.msra.mxu0 %v5183
        %5400 = vmatprep.subr.bf16.mxu0 %v5190
        %5401 = vmatpush1.bf16.msra.mxu0 %v5189
        %5402 = vmatprep.subr.bf16.mxu0 %v5196
        %5403 = vmatpush1.bf16.msra.mxu0 %v5195
        %5404 = vmatprep.subr.bf16.mxu0 %v5202
        %5405 = vmatpush1.bf16.msra.mxu0 %v5201
        %5406 = vmatprep.subr.bf16.mxu0 %v5208
        %5407 = vmatpush1.bf16.msra.mxu0 %v5207
        %5408 = vmatprep.subr.bf16.mxu0 %v5214
        %5409 = vmatpush1.bf16.msra.mxu0 %v5213
        %5410 = vmatprep.subr.bf16.mxu0 %v5220
        %5411 = vmatpush1.bf16.msra.mxu0 %v5219
        %5412 = vmatprep.subr.bf16.mxu0 %v5226
        %5413 = vmatpush1.bf16.msra.mxu0 %v5225
        %5414 = vmatprep.subr.bf16.mxu0 %v5232
        %5415 = vmatpush1.bf16.msra.mxu0 %v5231
        %5416 = vmatprep.subr.bf16.mxu0 %v5238
        %5417 = vmatpush1.bf16.msra.mxu0 %v5237
        %5418 = vmatprep.subr.bf16.mxu0 %v5244
        %5419 = vmatpush1.bf16.msra.mxu0 %v5243
        %5420 = vmatprep.subr.bf16.mxu0 %v5250
        %5421 = vmatpush1.bf16.msra.mxu0 %v5249
        %5422 = vmatprep.mubr.bf16.mxu0 %v4772
        %5423 = vmatmul.mubr.bf16.gmra.mrb[0].mxu0 %v4771
        %v5424 = vpop.f32.mrb[0].mxu0
        %v5425 = vadd.f32 0.0, %v5424
        %v5426 = vpop.f32.mrb[0].mxu0
        %v5427 = vadd.f32 0.0, %v5426
        %v5428 = vpop.f32.mrb[0].mxu0
        %v5429 = vpop.f32.mrb[0].mxu0
        %5430 = vdwg.mxu0
        %5431 = vmatprep.subr.bf16.mxu0 %v5162
        %5432 = vmatpush1.bf16.msra.mxu0 %v5161
        %5433 = vmatprep.subr.bf16.mxu0 %v5168
        %5434 = vmatpush1.bf16.msra.mxu0 %v5167
        %5435 = vmatprep.subr.bf16.mxu0 %v5174
        %5436 = vmatpush1.bf16.msra.mxu0 %v5173
        %5437 = vmatprep.subr.bf16.mxu0 %v5180
        %5438 = vmatpush1.bf16.msra.mxu0 %v5179
        %5439 = vmatprep.subr.bf16.mxu0 %v5186
        %5440 = vmatpush1.bf16.msra.mxu0 %v5185
        %5441 = vmatprep.subr.bf16.mxu0 %v5192
        %5442 = vmatpush1.bf16.msra.mxu0 %v5191
        %5443 = vmatprep.subr.bf16.mxu0 %v5198
        %5444 = vmatpush1.bf16.msra.mxu0 %v5197
        %5445 = vmatprep.subr.bf16.mxu0 %v5204
        %5446 = vmatpush1.bf16.msra.mxu0 %v5203
        %5447 = vmatprep.subr.bf16.mxu0 %v5210
        %5448 = vmatpush1.bf16.msra.mxu0 %v5209
        %5449 = vmatprep.subr.bf16.mxu0 %v5216
        %5450 = vmatpush1.bf16.msra.mxu0 %v5215
        %5451 = vmatprep.subr.bf16.mxu0 %v5222
        %5452 = vmatpush1.bf16.msra.mxu0 %v5221
        %5453 = vmatprep.subr.bf16.mxu0 %v5228
        %5454 = vmatpush1.bf16.msra.mxu0 %v5227
        %5455 = vmatprep.subr.bf16.mxu0 %v5234
        %5456 = vmatpush1.bf16.msra.mxu0 %v5233
        %5457 = vmatprep.subr.bf16.mxu0 %v5240
        %5458 = vmatpush1.bf16.msra.mxu0 %v5239
        %5459 = vmatprep.subr.bf16.mxu0 %v5246
        %5460 = vmatpush1.bf16.msra.mxu0 %v5245
        %5461 = vmatprep.subr.bf16.mxu0 %v5252
        %5462 = vmatpush1.bf16.msra.mxu0 %v5251
        %5463 = vmatprep.mubr.bf16.mxu0 %v4772
        %5464 = vmatmul.mubr.bf16.gmra.mrb[0].mxu0 %v4771
        %v5465 = vpop.f32.mrb[0].mxu0
        %v5466 = vadd.f32 0.0, %v5465
        %v5467 = vpop.f32.mrb[0].mxu0
        %v5468 = vadd.f32 0.0, %v5467
        %v5469 = vpop.f32.mrb[0].mxu0
        %v5470 = vpop.f32.mrb[0].mxu0
        %5471 = vdwg.mxu0
        %v5473 = vsel %vm4406, %v5384, 0
        %v5476 = vsel %vm4406, %v5386, 0
        %5478 = vmatprep.subr.mxu0 %v5476
        %5479 = vmatpush1.msra.mxu0 %v5473
        %5480 = vmatprep.subr.mxu0 0.0
        %5481 = vmatpush1.msra.mxu0 0.0
        %5482 = vmatprep.subr.mxu0 0.0
        %5483 = vmatpush1.msra.mxu0 0.0
        %5484 = vmatprep.subr.mxu0 0.0
        %5485 = vmatpush1.msra.mxu0 0.0
        %5486 = vmatprep.subr.mxu0 0.0
        %5487 = vmatpush1.msra.mxu0 0.0
        %5488 = vmatprep.subr.mxu0 0.0
        %5489 = vmatpush1.msra.mxu0 0.0
        %5490 = vmatprep.subr.mxu0 0.0
        %5491 = vmatpush1.msra.mxu0 0.0
        %5492 = vmatprep.subr.mxu0 0.0
        %5493 = vmatpush1.msra.mxu0 0.0
        %5494 = vmatprep.subr.mxu0 0.0
        %5495 = vmatpush1.msra.mxu0 0.0
        %5496 = vmatprep.subr.mxu0 0.0
        %5497 = vmatpush1.msra.mxu0 0.0
        %5498 = vmatprep.subr.mxu0 0.0
        %5499 = vmatpush1.msra.mxu0 0.0
        %5500 = vmatprep.subr.mxu0 0.0
        %5501 = vmatpush1.msra.mxu0 0.0
        %5502 = vmatprep.subr.mxu0 0.0
        %5503 = vmatpush1.msra.mxu0 0.0
        %5504 = vmatprep.subr.mxu0 0.0
        %5505 = vmatpush1.msra.mxu0 0.0
        %5506 = vmatprep.subr.mxu0 0.0
        %5507 = vmatpush1.msra.mxu0 0.0
        %5508 = vmatprep.subr.mxu0 0.0
        %5509 = vmatpush1.msra.mxu0 0.0
        %5510 = vmatprep.subr.mxu0 0.0
        %5511 = vmatpush1.msra.mxu0 0.0
        %5512 = vmatprep.subr.mxu0 0.0
        %5513 = vmatpush1.msra.mxu0 0.0
        %5514 = vmatprep.subr.mxu0 0.0
        %5515 = vmatpush1.msra.mxu0 0.0
        %5516 = vmatprep.subr.mxu0 0.0
        %5517 = vmatpush1.msra.mxu0 0.0
        %5518 = vmatprep.subr.mxu0 0.0
        %5519 = vmatpush1.msra.mxu0 0.0
        %5520 = vmatprep.subr.mxu0 0.0
        %5521 = vmatpush1.msra.mxu0 0.0
        %5522 = vmatprep.subr.mxu0 0.0
        %5523 = vmatpush1.msra.mxu0 0.0
        %5524 = vmatprep.subr.mxu0 0.0
        %5525 = vmatpush1.msra.mxu0 0.0
        %5526 = vmatprep.subr.mxu0 0.0
        %5527 = vmatpush1.msra.mxu0 0.0
        %5528 = vmatprep.subr.mxu0 0.0
        %5529 = vmatpush1.msra.mxu0 0.0
        %5530 = vmatprep.subr.mxu0 0.0
        %5531 = vmatpush1.msra.mxu0 0.0
        %5532 = vmatprep.subr.mxu0 0.0
        %5533 = vmatpush1.msra.mxu0 0.0
        %5534 = vmatprep.subr.mxu0 0.0
        %5535 = vmatpush1.msra.mxu0 0.0
        %5536 = vmatprep.subr.mxu0 0.0
        %5537 = vmatpush1.msra.mxu0 0.0
        %5538 = vmatprep.subr.mxu0 0.0
        %5539 = vmatpush1.msra.mxu0 0.0
        %5540 = vmatprep.subr.mxu0 0.0
        %5541 = vmatpush1.msra.mxu0 0.0
        %5542 = vmatprep.mubr.f32.mxu0 0.0
        %5543 = vmatmul.mubr.f32.gmra.mrb[0].mxu0 %v4404
        %v5544 = vpop.f32.mrb[0].mxu0
        %v5545 = vadd.f32 %v5425, %v5544
        %v5546 = vpop.f32.mrb[0].mxu0
        %v5547 = vadd.f32 %v5427, %v5546
        %5548 = vdwg.mxu0
        %v5550 = vsel %vm4406, %v5466, 0
        %v5553 = vsel %vm4406, %v5468, 0
        %5555 = vmatprep.subr.mxu0 %v5553
        %5556 = vmatpush1.msra.mxu0 %v5550
        %5557 = vmatprep.subr.mxu0 0.0
        %5558 = vmatpush1.msra.mxu0 0.0
        %5559 = vmatprep.subr.mxu0 0.0
        %5560 = vmatpush1.msra.mxu0 0.0
        %5561 = vmatprep.subr.mxu0 0.0
        %5562 = vmatpush1.msra.mxu0 0.0
        %5563 = vmatprep.subr.mxu0 0.0
        %5564 = vmatpush1.msra.mxu0 0.0
        %5565 = vmatprep.subr.mxu0 0.0
        %5566 = vmatpush1.msra.mxu0 0.0
        %5567 = vmatprep.subr.mxu0 0.0
        %5568 = vmatpush1.msra.mxu0 0.0
        %5569 = vmatprep.subr.mxu0 0.0
        %5570 = vmatpush1.msra.mxu0 0.0
        %5571 = vmatprep.subr.mxu0 0.0
        %5572 = vmatpush1.msra.mxu0 0.0
        %5573 = vmatprep.subr.mxu0 0.0
        %5574 = vmatpush1.msra.mxu0 0.0
        %5575 = vmatprep.subr.mxu0 0.0
        %5576 = vmatpush1.msra.mxu0 0.0
        %5577 = vmatprep.subr.mxu0 0.0
        %5578 = vmatpush1.msra.mxu0 0.0
        %5579 = vmatprep.subr.mxu0 0.0
        %5580 = vmatpush1.msra.mxu0 0.0
        %5581 = vmatprep.subr.mxu0 0.0
        %5582 = vmatpush1.msra.mxu0 0.0
        %5583 = vmatprep.subr.mxu0 0.0
        %5584 = vmatpush1.msra.mxu0 0.0
        %5585 = vmatprep.subr.mxu0 0.0
        %5586 = vmatpush1.msra.mxu0 0.0
        %5587 = vmatprep.subr.mxu0 0.0
        %5588 = vmatpush1.msra.mxu0 0.0
        %5589 = vmatprep.subr.mxu0 0.0
        %5590 = vmatpush1.msra.mxu0 0.0
        %5591 = vmatprep.subr.mxu0 0.0
        %5592 = vmatpush1.msra.mxu0 0.0
        %5593 = vmatprep.subr.mxu0 0.0
        %5594 = vmatpush1.msra.mxu0 0.0
        %5595 = vmatprep.subr.mxu0 0.0
        %5596 = vmatpush1.msra.mxu0 0.0
        %5597 = vmatprep.subr.mxu0 0.0
        %5598 = vmatpush1.msra.mxu0 0.0
        %5599 = vmatprep.subr.mxu0 0.0
        %5600 = vmatpush1.msra.mxu0 0.0
        %5601 = vmatprep.subr.mxu0 0.0
        %5602 = vmatpush1.msra.mxu0 0.0
        %5603 = vmatprep.subr.mxu0 0.0
        %5604 = vmatpush1.msra.mxu0 0.0
        %5605 = vmatprep.subr.mxu0 0.0
        %5606 = vmatpush1.msra.mxu0 0.0
        %5607 = vmatprep.subr.mxu0 0.0
        %5608 = vmatpush1.msra.mxu0 0.0
        %5609 = vmatprep.subr.mxu0 0.0
        %5610 = vmatpush1.msra.mxu0 0.0
        %5611 = vmatprep.subr.mxu0 0.0
        %5612 = vmatpush1.msra.mxu0 0.0
        %5613 = vmatprep.subr.mxu0 0.0
        %5614 = vmatpush1.msra.mxu0 0.0
        %5615 = vmatprep.subr.mxu0 0.0
        %5616 = vmatpush1.msra.mxu0 0.0
        %5617 = vmatprep.subr.mxu0 0.0
        %5618 = vmatpush1.msra.mxu0 0.0
        %5619 = vmatprep.mubr.f32.mxu0 0.0
        %5620 = vmatmul.mubr.f32.gmra.mrb[0].mxu0 %v4565
        %v5621 = vpop.f32.mrb[0].mxu0
        %v5622 = vadd.f32 0.0, %v5621
        %v5623 = vpop.f32.mrb[0].mxu0
        %v5624 = vadd.f32 0.0, %v5623
        %5625 = vdwg.mxu0
        %v5626 = vadd.f32 %v5545, %v5622
        %v5627 = vadd.f32 %v5547, %v5624
        %v5628 = vld [vmem:[#allocation18] sm:$0xf]
        %v5630 = vlaneseq
        %v5631 = vshrl.u32 %v5630, 7
        %v5632 = vsub.s32 0, %v5631
        %v5633 = vrot.slane %v5628, %v5632
        %v5634 = vlaneseq
        %v5635 = vshrl.u32 %v5634, 7
        %v5636 = vsub.s32 2, %v5635
        %v5637 = vrot.slane %v5628, %v5636
        %v5640 = vlaneseq
        %v5641 = vshrl.u32 %v5640, 7
        %v5642 = vsub.s32 0, %v5641
        %v5643 = vrot.slane %v5633, %v5642
        %v5644 = vlaneseq
        %v5645 = vshrl.u32 %v5644, 7
        %v5646 = vsub.s32 0, %v5645
        %v5647 = vrot.slane %v5637, %v5646
        %v5648 = vmul.f32 %v5626, %v5643
        %v5649 = vmul.f32 %v5627, %v5647
        %v5650 = vlaneseq
        %v5651 = vshrl.u32 %v5650, 7
        %v5652 = vsub.s32 1, %v5651
        %v5653 = vrot.slane %v5628, %v5652
        %v5654 = vlaneseq
        %v5655 = vshrl.u32 %v5654, 7
        %v5656 = vsub.s32 3, %v5655
        %v5657 = vrot.slane %v5628, %v5656
        %v5660 = vlaneseq
        %v5661 = vshrl.u32 %v5660, 7
        %v5662 = vsub.s32 1, %v5661
        %v5663 = vrot.slane %v5653, %v5662
        %v5664 = vlaneseq
        %v5665 = vshrl.u32 %v5664, 7
        %v5666 = vsub.s32 1, %v5665
        %v5667 = vrot.slane %v5657, %v5666
        %v5668 = vadd.f32 %v5648, %v5663
        %v5669 = vadd.f32 %v5649, %v5667
        %v5670 = vmax.f32 %v5668, 0.0
        %v5671 = vmax.f32 %v5669, 0.0
        %v5672 = vpack.c.bf16 %v5670, %v5670
        %v5673 = vpack.c.bf16 %v5671, %v5671
        %v5674 = vsel %vm989, %v3539, 0
        %v5677 = vsel %vm1002, %v5672, 0
        %v5680 = vsel %vm1002, %v5673, 0
        %5682 = vmatprep.subr.bf16.mxu0 %v5680
        %5683 = vmatpush1.bf16.msra.mxu0 %v5677
        %5684 = vmatprep.subr.bf16.mxu0 0
        %5685 = vmatpush1.bf16.msra.mxu0 0
        %5686 = vmatprep.subr.bf16.mxu0 0
        %5687 = vmatpush1.bf16.msra.mxu0 0
        %5688 = vmatprep.subr.bf16.mxu0 0
        %5689 = vmatpush1.bf16.msra.mxu0 0
        %5690 = vmatprep.subr.bf16.mxu0 0
        %5691 = vmatpush1.bf16.msra.mxu0 0
        %5692 = vmatprep.subr.bf16.mxu0 0
        %5693 = vmatpush1.bf16.msra.mxu0 0
        %5694 = vmatprep.subr.bf16.mxu0 0
        %5695 = vmatpush1.bf16.msra.mxu0 0
        %5696 = vmatprep.subr.bf16.mxu0 0
        %5697 = vmatpush1.bf16.msra.mxu0 0
        %5698 = vmatprep.subr.bf16.mxu0 0
        %5699 = vmatpush1.bf16.msra.mxu0 0
        %5700 = vmatprep.subr.bf16.mxu0 0
        %5701 = vmatpush1.bf16.msra.mxu0 0
        %5702 = vmatprep.subr.bf16.mxu0 0
        %5703 = vmatpush1.bf16.msra.mxu0 0
        %5704 = vmatprep.subr.bf16.mxu0 0
        %5705 = vmatpush1.bf16.msra.mxu0 0
        %5706 = vmatprep.subr.bf16.mxu0 0
        %5707 = vmatpush1.bf16.msra.mxu0 0
        %5708 = vmatprep.subr.bf16.mxu0 0
        %5709 = vmatpush1.bf16.msra.mxu0 0
        %5710 = vmatprep.subr.bf16.mxu0 0
        %5711 = vmatpush1.bf16.msra.mxu0 0
        %5712 = vmatprep.subr.bf16.mxu0 0
        %5713 = vmatpush1.bf16.msra.mxu0 0
        %5714 = vmatprep.mubr.bf16.mxu0 0
        %5715 = vmatmul.mubr.bf16.gmra.mrb[0].mxu0 %v5674
        %v5716 = vpop.f32.mrb[0].mxu0
        %v5717 = vadd.f32 0.0, %v5716
        %v5718 = vpop.f32.mrb[0].mxu0
        %v5719 = vadd.f32 0.0, %v5718
        %v5720 = vpop.f32.mrb[0].mxu0
        %v5721 = vpop.f32.mrb[0].mxu0
        %5722 = vdwg.mxu0
        %v5723 = vsel %vm989, %v3583, 0
        %5725 = vmatprep.subr.bf16.mxu0 %v5680
        %5726 = vmatpush1.bf16.msra.mxu0 %v5677
        %5727 = vmatprep.subr.bf16.mxu0 0
        %5728 = vmatpush1.bf16.msra.mxu0 0
        %5729 = vmatprep.subr.bf16.mxu0 0
        %5730 = vmatpush1.bf16.msra.mxu0 0
        %5731 = vmatprep.subr.bf16.mxu0 0
        %5732 = vmatpush1.bf16.msra.mxu0 0
        %5733 = vmatprep.subr.bf16.mxu0 0
        %5734 = vmatpush1.bf16.msra.mxu0 0
        %5735 = vmatprep.subr.bf16.mxu0 0
        %5736 = vmatpush1.bf16.msra.mxu0 0
        %5737 = vmatprep.subr.bf16.mxu0 0
        %5738 = vmatpush1.bf16.msra.mxu0 0
        %5739 = vmatprep.subr.bf16.mxu0 0
        %5740 = vmatpush1.bf16.msra.mxu0 0
        %5741 = vmatprep.subr.bf16.mxu0 0
        %5742 = vmatpush1.bf16.msra.mxu0 0
        %5743 = vmatprep.subr.bf16.mxu0 0
        %5744 = vmatpush1.bf16.msra.mxu0 0
        %5745 = vmatprep.subr.bf16.mxu0 0
        %5746 = vmatpush1.bf16.msra.mxu0 0
        %5747 = vmatprep.subr.bf16.mxu0 0
        %5748 = vmatpush1.bf16.msra.mxu0 0
        %5749 = vmatprep.subr.bf16.mxu0 0
        %5750 = vmatpush1.bf16.msra.mxu0 0
        %5751 = vmatprep.subr.bf16.mxu0 0
        %5752 = vmatpush1.bf16.msra.mxu0 0
        %5753 = vmatprep.subr.bf16.mxu0 0
        %5754 = vmatpush1.bf16.msra.mxu0 0
        %5755 = vmatprep.subr.bf16.mxu0 0
        %5756 = vmatpush1.bf16.msra.mxu0 0
        %5757 = vmatprep.mubr.bf16.mxu0 0
        %5758 = vmatmul.mubr.bf16.gmra.mrb[0].mxu0 %v5723
        %v5759 = vpop.f32.mrb[0].mxu0
        %v5760 = vadd.f32 0.0, %v5759
        %v5761 = vpop.f32.mrb[0].mxu0
        %v5762 = vadd.f32 0.0, %v5761
        %v5763 = vpop.f32.mrb[0].mxu0
        %v5764 = vpop.f32.mrb[0].mxu0
        %5765 = vdwg.mxu0
        %v5766 = vmax.f32 %v5717, %v5760
        %v5767 = vmax.f32 %v5719, %v5762
        %v5768 = vsel %vm989, %v3628, 0
        %5770 = vmatprep.subr.bf16.mxu0 %v5680
        %5771 = vmatpush1.bf16.msra.mxu0 %v5677
        %5772 = vmatprep.subr.bf16.mxu0 0
        %5773 = vmatpush1.bf16.msra.mxu0 0
        %5774 = vmatprep.subr.bf16.mxu0 0
        %5775 = vmatpush1.bf16.msra.mxu0 0
        %5776 = vmatprep.subr.bf16.mxu0 0
        %5777 = vmatpush1.bf16.msra.mxu0 0
        %5778 = vmatprep.subr.bf16.mxu0 0
        %5779 = vmatpush1.bf16.msra.mxu0 0
        %5780 = vmatprep.subr.bf16.mxu0 0
        %5781 = vmatpush1.bf16.msra.mxu0 0
        %5782 = vmatprep.subr.bf16.mxu0 0
        %5783 = vmatpush1.bf16.msra.mxu0 0
        %5784 = vmatprep.subr.bf16.mxu0 0
        %5785 = vmatpush1.bf16.msra.mxu0 0
        %5786 = vmatprep.subr.bf16.mxu0 0
        %5787 = vmatpush1.bf16.msra.mxu0 0
        %5788 = vmatprep.subr.bf16.mxu0 0
        %5789 = vmatpush1.bf16.msra.mxu0 0
        %5790 = vmatprep.subr.bf16.mxu0 0
        %5791 = vmatpush1.bf16.msra.mxu0 0
        %5792 = vmatprep.subr.bf16.mxu0 0
        %5793 = vmatpush1.bf16.msra.mxu0 0
        %5794 = vmatprep.subr.bf16.mxu0 0
        %5795 = vmatpush1.bf16.msra.mxu0 0
        %5796 = vmatprep.subr.bf16.mxu0 0
        %5797 = vmatpush1.bf16.msra.mxu0 0
        %5798 = vmatprep.subr.bf16.mxu0 0
        %5799 = vmatpush1.bf16.msra.mxu0 0
        %5800 = vmatprep.subr.bf16.mxu0 0
        %5801 = vmatpush1.bf16.msra.mxu0 0
        %5802 = vmatprep.mubr.bf16.mxu0 0
        %5803 = vmatmul.mubr.bf16.gmra.mrb[0].mxu0 %v5768
        %v5804 = vpop.f32.mrb[0].mxu0
        %v5805 = vadd.f32 0.0, %v5804
        %v5806 = vpop.f32.mrb[0].mxu0
        %v5807 = vadd.f32 0.0, %v5806
        %v5808 = vpop.f32.mrb[0].mxu0
        %v5809 = vpop.f32.mrb[0].mxu0
        %5810 = vdwg.mxu0
        %v5811 = vmax.f32 %v5766, %v5805
        %v5812 = vmax.f32 %v5767, %v5807
        %v5813 = vsel %vm989, %v3673, 0
        %5815 = vmatprep.subr.bf16.mxu0 %v5680
        %5816 = vmatpush1.bf16.msra.mxu0 %v5677
        %5817 = vmatprep.subr.bf16.mxu0 0
        %5818 = vmatpush1.bf16.msra.mxu0 0
        %5819 = vmatprep.subr.bf16.mxu0 0
        %5820 = vmatpush1.bf16.msra.mxu0 0
        %5821 = vmatprep.subr.bf16.mxu0 0
        %5822 = vmatpush1.bf16.msra.mxu0 0
        %5823 = vmatprep.subr.bf16.mxu0 0
        %5824 = vmatpush1.bf16.msra.mxu0 0
        %5825 = vmatprep.subr.bf16.mxu0 0
        %5826 = vmatpush1.bf16.msra.mxu0 0
        %5827 = vmatprep.subr.bf16.mxu0 0
        %5828 = vmatpush1.bf16.msra.mxu0 0
        %5829 = vmatprep.subr.bf16.mxu0 0
        %5830 = vmatpush1.bf16.msra.mxu0 0
        %5831 = vmatprep.subr.bf16.mxu0 0
        %5832 = vmatpush1.bf16.msra.mxu0 0
        %5833 = vmatprep.subr.bf16.mxu0 0
        %5834 = vmatpush1.bf16.msra.mxu0 0
        %5835 = vmatprep.subr.bf16.mxu0 0
        %5836 = vmatpush1.bf16.msra.mxu0 0
        %5837 = vmatprep.subr.bf16.mxu0 0
        %5838 = vmatpush1.bf16.msra.mxu0 0
        %5839 = vmatprep.subr.bf16.mxu0 0
        %5840 = vmatpush1.bf16.msra.mxu0 0
        %5841 = vmatprep.subr.bf16.mxu0 0
        %5842 = vmatpush1.bf16.msra.mxu0 0
        %5843 = vmatprep.subr.bf16.mxu0 0
        %5844 = vmatpush1.bf16.msra.mxu0 0
        %5845 = vmatprep.subr.bf16.mxu0 0
        %5846 = vmatpush1.bf16.msra.mxu0 0
        %5847 = vmatprep.mubr.bf16.mxu0 0
        %5848 = vmatmul.mubr.bf16.gmra.mrb[0].mxu0 %v5813
        %v5849 = vpop.f32.mrb[0].mxu0
        %v5850 = vadd.f32 0.0, %v5849
        %v5851 = vpop.f32.mrb[0].mxu0
        %v5852 = vadd.f32 0.0, %v5851
        %v5853 = vpop.f32.mrb[0].mxu0
        %v5854 = vpop.f32.mrb[0].mxu0
        %5855 = vdwg.mxu0
        %v5856 = vmax.f32 %v5811, %v5850
        %v5857 = vmax.f32 %v5812, %v5852
        %v5858 = vpack.c.bf16 %v5856, %v5856
        %v5859 = vpack.c.bf16 %v5857, %v5857
        %v5860 = vld [vmem:[#allocation19] sm:$0xff]
        %v5861 = vld [vmem:[#allocation19 + $0x8] sm:$0xff]
        %v5862 = vld [vmem:[#allocation19 + $0x10] sm:$0xff]
        %v5863 = vld [vmem:[#allocation19 + $0x18] sm:$0xff]
        %v5864 = vld [vmem:[#allocation19 + $0x20] sm:$0xff]
        %v5865 = vld [vmem:[#allocation19 + $0x28] sm:$0xff]
        %v5866 = vld [vmem:[#allocation19 + $0x30] sm:$0xff]
        %v5867 = vld [vmem:[#allocation19 + $0x38] sm:$0xff]
        %v5868 = vld [vmem:[#allocation19 + $0x40] sm:$0xff]
        %v5869 = vld [vmem:[#allocation19 + $0x48] sm:$0xff]
        %v5870 = vld [vmem:[#allocation19 + $0x50] sm:$0xff]
        %v5871 = vld [vmem:[#allocation19 + $0x58] sm:$0xff]
        %v5872 = vld [vmem:[#allocation19 + $0x60] sm:$0xff]
        %v5873 = vld [vmem:[#allocation19 + $0x68] sm:$0xff]
        %v5874 = vld [vmem:[#allocation19 + $0x70] sm:$0xff]
        %v5875 = vld [vmem:[#allocation19 + $0x78] sm:$0xff]
        %v5876 = vld [vmem:[#allocation19 + $0x80] sm:$0xff]
        %v5877 = vld [vmem:[#allocation19 + $0x88] sm:$0xff]
        %v5878 = vld [vmem:[#allocation19 + $0x90] sm:$0xff]
        %v5879 = vld [vmem:[#allocation19 + $0x98] sm:$0xff]
        %v5880 = vld [vmem:[#allocation19 + $0xa0] sm:$0xff]
        %v5881 = vld [vmem:[#allocation19 + $0xa8] sm:$0xff]
        %v5882 = vld [vmem:[#allocation19 + $0xb0] sm:$0xff]
        %v5883 = vld [vmem:[#allocation19 + $0xb8] sm:$0xff]
        %v5884 = vld [vmem:[#allocation19 + $0xc0] sm:$0xff]
        %v5885 = vld [vmem:[#allocation19 + $0xc8] sm:$0xff]
        %v5886 = vld [vmem:[#allocation19 + $0xd0] sm:$0xff]
        %v5887 = vld [vmem:[#allocation19 + $0xd8] sm:$0xff]
        %v5888 = vld [vmem:[#allocation19 + $0xe0] sm:$0xff]
        %v5889 = vld [vmem:[#allocation19 + $0xe8] sm:$0xff]
        %v5890 = vld [vmem:[#allocation19 + $0xf0] sm:$0xff]
        %v5891 = vld [vmem:[#allocation19 + $0xf8] sm:$0xff]
        %v5892 = vld [vmem:[#allocation19 + $0x100] sm:$0xff]
        %v5893 = vld [vmem:[#allocation19 + $0x108] sm:$0xff]
        %v5894 = vld [vmem:[#allocation19 + $0x110] sm:$0xff]
        %v5895 = vld [vmem:[#allocation19 + $0x118] sm:$0xff]
        %v5896 = vld [vmem:[#allocation19 + $0x120] sm:$0xff]
        %v5897 = vld [vmem:[#allocation19 + $0x128] sm:$0xff]
        %v5898 = vld [vmem:[#allocation19 + $0x130] sm:$0xff]
        %v5899 = vld [vmem:[#allocation19 + $0x138] sm:$0xff]
        %v5900 = vld [vmem:[#allocation19 + $0x140] sm:$0xff]
        %v5901 = vld [vmem:[#allocation19 + $0x148] sm:$0xff]
        %v5902 = vld [vmem:[#allocation19 + $0x150] sm:$0xff]
        %v5903 = vld [vmem:[#allocation19 + $0x158] sm:$0xff]
        %v5904 = vld [vmem:[#allocation19 + $0x160] sm:$0xff]
        %v5905 = vld [vmem:[#allocation19 + $0x168] sm:$0xff]
        %v5906 = vld [vmem:[#allocation19 + $0x170] sm:$0xff]
        %v5907 = vld [vmem:[#allocation19 + $0x178] sm:$0xff]
        %v5908 = vld [vmem:[#allocation19 + $0x180] sm:$0xff]
        %v5909 = vld [vmem:[#allocation19 + $0x188] sm:$0xff]
        %v5910 = vld [vmem:[#allocation19 + $0x190] sm:$0xff]
        %v5911 = vld [vmem:[#allocation19 + $0x198] sm:$0xff]
        %v5912 = vld [vmem:[#allocation19 + $0x1a0] sm:$0xff]
        %v5913 = vld [vmem:[#allocation19 + $0x1a8] sm:$0xff]
        %v5914 = vld [vmem:[#allocation19 + $0x1b0] sm:$0xff]
        %v5915 = vld [vmem:[#allocation19 + $0x1b8] sm:$0xff]
        %v5916 = vld [vmem:[#allocation19 + $0x1c0] sm:$0xff]
        %v5917 = vld [vmem:[#allocation19 + $0x1c8] sm:$0xff]
        %v5918 = vld [vmem:[#allocation19 + $0x1d0] sm:$0xff]
        %v5919 = vld [vmem:[#allocation19 + $0x1d8] sm:$0xff]
        %v5920 = vld [vmem:[#allocation19 + $0x1e0] sm:$0xff]
        %v5921 = vld [vmem:[#allocation19 + $0x1e8] sm:$0xff]
        %v5922 = vld [vmem:[#allocation19 + $0x1f0] sm:$0xff]
        %v5923 = vld [vmem:[#allocation19 + $0x1f8] sm:$0xff]
        %v5988 = vunpack.c.l.b16 %v5860
        %v5989 = vunpack.c.h.b16 %v5860
        %v5990 = vunpack.c.l.b16 %v5861
        %v5991 = vunpack.c.h.b16 %v5861
        %v5992 = vunpack.c.l.b16 %v5862
        %v5993 = vunpack.c.h.b16 %v5862
        %v5994 = vunpack.c.l.b16 %v5863
        %v5995 = vunpack.c.h.b16 %v5863
        %v5996 = vunpack.c.l.b16 %v5864
        %v5997 = vunpack.c.h.b16 %v5864
        %v5998 = vunpack.c.l.b16 %v5865
        %v5999 = vunpack.c.h.b16 %v5865
        %v6000 = vunpack.c.l.b16 %v5866
        %v6001 = vunpack.c.h.b16 %v5866
        %v6002 = vunpack.c.l.b16 %v5867
        %v6003 = vunpack.c.h.b16 %v5867
        %v6004 = vunpack.c.l.b16 %v5868
        %v6005 = vunpack.c.h.b16 %v5868
        %v6006 = vunpack.c.l.b16 %v5869
        %v6007 = vunpack.c.h.b16 %v5869
        %v6008 = vunpack.c.l.b16 %v5870
        %v6009 = vunpack.c.h.b16 %v5870
        %v6010 = vunpack.c.l.b16 %v5871
        %v6011 = vunpack.c.h.b16 %v5871
        %v6012 = vunpack.c.l.b16 %v5872
        %v6013 = vunpack.c.h.b16 %v5872
        %v6014 = vunpack.c.l.b16 %v5873
        %v6015 = vunpack.c.h.b16 %v5873
        %v6016 = vunpack.c.l.b16 %v5874
        %v6017 = vunpack.c.h.b16 %v5874
        %v6018 = vunpack.c.l.b16 %v5875
        %v6019 = vunpack.c.h.b16 %v5875
        %v6020 = vunpack.c.l.b16 %v5876
        %v6021 = vunpack.c.h.b16 %v5876
        %v6022 = vunpack.c.l.b16 %v5877
        %v6023 = vunpack.c.h.b16 %v5877
        %v6024 = vunpack.c.l.b16 %v5878
        %v6025 = vunpack.c.h.b16 %v5878
        %v6026 = vunpack.c.l.b16 %v5879
        %v6027 = vunpack.c.h.b16 %v5879
        %v6028 = vunpack.c.l.b16 %v5880
        %v6029 = vunpack.c.h.b16 %v5880
        %v6030 = vunpack.c.l.b16 %v5881
        %v6031 = vunpack.c.h.b16 %v5881
        %v6032 = vunpack.c.l.b16 %v5882
        %v6033 = vunpack.c.h.b16 %v5882
        %v6034 = vunpack.c.l.b16 %v5883
        %v6035 = vunpack.c.h.b16 %v5883
        %v6036 = vunpack.c.l.b16 %v5884
        %v6037 = vunpack.c.h.b16 %v5884
        %v6038 = vunpack.c.l.b16 %v5885
        %v6039 = vunpack.c.h.b16 %v5885
        %v6040 = vunpack.c.l.b16 %v5886
        %v6041 = vunpack.c.h.b16 %v5886
        %v6042 = vunpack.c.l.b16 %v5887
        %v6043 = vunpack.c.h.b16 %v5887
        %v6044 = vunpack.c.l.b16 %v5888
        %v6045 = vunpack.c.h.b16 %v5888
        %v6046 = vunpack.c.l.b16 %v5889
        %v6047 = vunpack.c.h.b16 %v5889
        %v6048 = vunpack.c.l.b16 %v5890
        %v6049 = vunpack.c.h.b16 %v5890
        %v6050 = vunpack.c.l.b16 %v5891
        %v6051 = vunpack.c.h.b16 %v5891
        %v6052 = vunpack.c.l.b16 %v5892
        %v6053 = vunpack.c.h.b16 %v5892
        %v6054 = vunpack.c.l.b16 %v5893
        %v6055 = vunpack.c.h.b16 %v5893
        %v6056 = vunpack.c.l.b16 %v5894
        %v6057 = vunpack.c.h.b16 %v5894
        %v6058 = vunpack.c.l.b16 %v5895
        %v6059 = vunpack.c.h.b16 %v5895
        %v6060 = vunpack.c.l.b16 %v5896
        %v6061 = vunpack.c.h.b16 %v5896
        %v6062 = vunpack.c.l.b16 %v5897
        %v6063 = vunpack.c.h.b16 %v5897
        %v6064 = vunpack.c.l.b16 %v5898
        %v6065 = vunpack.c.h.b16 %v5898
        %v6066 = vunpack.c.l.b16 %v5899
        %v6067 = vunpack.c.h.b16 %v5899
        %v6068 = vunpack.c.l.b16 %v5900
        %v6069 = vunpack.c.h.b16 %v5900
        %v6070 = vunpack.c.l.b16 %v5901
        %v6071 = vunpack.c.h.b16 %v5901
        %v6072 = vunpack.c.l.b16 %v5902
        %v6073 = vunpack.c.h.b16 %v5902
        %v6074 = vunpack.c.l.b16 %v5903
        %v6075 = vunpack.c.h.b16 %v5903
        %v6076 = vunpack.c.l.b16 %v5904
        %v6077 = vunpack.c.h.b16 %v5904
        %v6078 = vunpack.c.l.b16 %v5905
        %v6079 = vunpack.c.h.b16 %v5905
        %v6080 = vunpack.c.l.b16 %v5906
        %v6081 = vunpack.c.h.b16 %v5906
        %v6082 = vunpack.c.l.b16 %v5907
        %v6083 = vunpack.c.h.b16 %v5907
        %v6084 = vunpack.c.l.b16 %v5908
        %v6085 = vunpack.c.h.b16 %v5908
        %v6086 = vunpack.c.l.b16 %v5909
        %v6087 = vunpack.c.h.b16 %v5909
        %v6088 = vunpack.c.l.b16 %v5910
        %v6089 = vunpack.c.h.b16 %v5910
        %v6090 = vunpack.c.l.b16 %v5911
        %v6091 = vunpack.c.h.b16 %v5911
        %v6092 = vunpack.c.l.b16 %v5912
        %v6093 = vunpack.c.h.b16 %v5912
        %v6094 = vunpack.c.l.b16 %v5913
        %v6095 = vunpack.c.h.b16 %v5913
        %v6096 = vunpack.c.l.b16 %v5914
        %v6097 = vunpack.c.h.b16 %v5914
        %v6098 = vunpack.c.l.b16 %v5915
        %v6099 = vunpack.c.h.b16 %v5915
        %v6100 = vunpack.c.l.b16 %v5916
        %v6101 = vunpack.c.h.b16 %v5916
        %v6102 = vunpack.c.l.b16 %v5917
        %v6103 = vunpack.c.h.b16 %v5917
        %v6104 = vunpack.c.l.b16 %v5918
        %v6105 = vunpack.c.h.b16 %v5918
        %v6106 = vunpack.c.l.b16 %v5919
        %v6107 = vunpack.c.h.b16 %v5919
        %v6108 = vunpack.c.l.b16 %v5920
        %v6109 = vunpack.c.h.b16 %v5920
        %v6110 = vunpack.c.l.b16 %v5921
        %v6111 = vunpack.c.h.b16 %v5921
        %v6112 = vunpack.c.l.b16 %v5922
        %v6113 = vunpack.c.h.b16 %v5922
        %v6114 = vunpack.c.l.b16 %v5923
        %v6115 = vunpack.c.h.b16 %v5923
        %v6116 = vpack.c.b16 %v5992, %v5988
        %v6117 = vpack.c.b16 %v5993, %v5989
        %v6118 = vpack.c.b16 %v5994, %v5990
        %v6119 = vpack.c.b16 %v5995, %v5991
        %v6120 = vpack.c.b16 %v6000, %v5996
        %v6121 = vpack.c.b16 %v6001, %v5997
        %v6122 = vpack.c.b16 %v6002, %v5998
        %v6123 = vpack.c.b16 %v6003, %v5999
        %v6124 = vpack.c.b16 %v6008, %v6004
        %v6125 = vpack.c.b16 %v6009, %v6005
        %v6126 = vpack.c.b16 %v6010, %v6006
        %v6127 = vpack.c.b16 %v6011, %v6007
        %v6128 = vpack.c.b16 %v6016, %v6012
        %v6129 = vpack.c.b16 %v6017, %v6013
        %v6130 = vpack.c.b16 %v6018, %v6014
        %v6131 = vpack.c.b16 %v6019, %v6015
        %v6132 = vpack.c.b16 %v6024, %v6020
        %v6133 = vpack.c.b16 %v6025, %v6021
        %v6134 = vpack.c.b16 %v6026, %v6022
        %v6135 = vpack.c.b16 %v6027, %v6023
        %v6136 = vpack.c.b16 %v6032, %v6028
        %v6137 = vpack.c.b16 %v6033, %v6029
        %v6138 = vpack.c.b16 %v6034, %v6030
        %v6139 = vpack.c.b16 %v6035, %v6031
        %v6140 = vpack.c.b16 %v6040, %v6036
        %v6141 = vpack.c.b16 %v6041, %v6037
        %v6142 = vpack.c.b16 %v6042, %v6038
        %v6143 = vpack.c.b16 %v6043, %v6039
        %v6144 = vpack.c.b16 %v6048, %v6044
        %v6145 = vpack.c.b16 %v6049, %v6045
        %v6146 = vpack.c.b16 %v6050, %v6046
        %v6147 = vpack.c.b16 %v6051, %v6047
        %v6148 = vpack.c.b16 %v6056, %v6052
        %v6149 = vpack.c.b16 %v6057, %v6053
        %v6150 = vpack.c.b16 %v6058, %v6054
        %v6151 = vpack.c.b16 %v6059, %v6055
        %v6152 = vpack.c.b16 %v6064, %v6060
        %v6153 = vpack.c.b16 %v6065, %v6061
        %v6154 = vpack.c.b16 %v6066, %v6062
        %v6155 = vpack.c.b16 %v6067, %v6063
        %v6156 = vpack.c.b16 %v6072, %v6068
        %v6157 = vpack.c.b16 %v6073, %v6069
        %v6158 = vpack.c.b16 %v6074, %v6070
        %v6159 = vpack.c.b16 %v6075, %v6071
        %v6160 = vpack.c.b16 %v6080, %v6076
        %v6161 = vpack.c.b16 %v6081, %v6077
        %v6162 = vpack.c.b16 %v6082, %v6078
        %v6163 = vpack.c.b16 %v6083, %v6079
        %v6164 = vpack.c.b16 %v6088, %v6084
        %v6165 = vpack.c.b16 %v6089, %v6085
        %v6166 = vpack.c.b16 %v6090, %v6086
        %v6167 = vpack.c.b16 %v6091, %v6087
        %v6168 = vpack.c.b16 %v6096, %v6092
        %v6169 = vpack.c.b16 %v6097, %v6093
        %v6170 = vpack.c.b16 %v6098, %v6094
        %v6171 = vpack.c.b16 %v6099, %v6095
        %v6172 = vpack.c.b16 %v6104, %v6100
        %v6173 = vpack.c.b16 %v6105, %v6101
        %v6174 = vpack.c.b16 %v6106, %v6102
        %v6175 = vpack.c.b16 %v6107, %v6103
        %v6176 = vpack.c.b16 %v6112, %v6108
        %v6177 = vpack.c.b16 %v6113, %v6109
        %v6178 = vpack.c.b16 %v6114, %v6110
        %v6179 = vpack.c.b16 %v6115, %v6111
        %6244 = vmatprep.subr.bf16.mxu0 %v6117
        %6245 = vmatpush1.bf16.msra.mxu0 %v6116
        %6246 = vmatprep.subr.bf16.mxu0 %v6121
        %6247 = vmatpush1.bf16.msra.mxu0 %v6120
        %6248 = vmatprep.subr.bf16.mxu0 %v6125
        %6249 = vmatpush1.bf16.msra.mxu0 %v6124
        %6250 = vmatprep.subr.bf16.mxu0 %v6129
        %6251 = vmatpush1.bf16.msra.mxu0 %v6128
        %6252 = vmatprep.subr.bf16.mxu0 %v6133
        %6253 = vmatpush1.bf16.msra.mxu0 %v6132
        %6254 = vmatprep.subr.bf16.mxu0 %v6137
        %6255 = vmatpush1.bf16.msra.mxu0 %v6136
        %6256 = vmatprep.subr.bf16.mxu0 %v6141
        %6257 = vmatpush1.bf16.msra.mxu0 %v6140
        %6258 = vmatprep.subr.bf16.mxu0 %v6145
        %6259 = vmatpush1.bf16.msra.mxu0 %v6144
        %6260 = vmatprep.subr.bf16.mxu0 %v6149
        %6261 = vmatpush1.bf16.msra.mxu0 %v6148
        %6262 = vmatprep.subr.bf16.mxu0 %v6153
        %6263 = vmatpush1.bf16.msra.mxu0 %v6152
        %6264 = vmatprep.subr.bf16.mxu0 %v6157
        %6265 = vmatpush1.bf16.msra.mxu0 %v6156
        %6266 = vmatprep.subr.bf16.mxu0 %v6161
        %6267 = vmatpush1.bf16.msra.mxu0 %v6160
        %6268 = vmatprep.subr.bf16.mxu0 %v6165
        %6269 = vmatpush1.bf16.msra.mxu0 %v6164
        %6270 = vmatprep.subr.bf16.mxu0 %v6169
        %6271 = vmatpush1.bf16.msra.mxu0 %v6168
        %6272 = vmatprep.subr.bf16.mxu0 %v6173
        %6273 = vmatpush1.bf16.msra.mxu0 %v6172
        %6274 = vmatprep.subr.bf16.mxu0 %v6177
        %6275 = vmatpush1.bf16.msra.mxu0 %v6176
        %6276 = vmatprep.mubr.bf16.mxu0 %v5859
        %6277 = vmatmul.mubr.bf16.gmra.mrb[0].mxu0 %v5858
        %v6278 = vpop.f32.mrb[0].mxu0
        %v6279 = vadd.f32 0.0, %v6278
        %v6280 = vpop.f32.mrb[0].mxu0
        %v6281 = vadd.f32 0.0, %v6280
        %v6282 = vpop.f32.mrb[0].mxu0
        %v6283 = vpop.f32.mrb[0].mxu0
        %6284 = vdwg.mxu0
        %6285 = vmatprep.subr.bf16.mxu0 %v6119
        %6286 = vmatpush1.bf16.msra.mxu0 %v6118
        %6287 = vmatprep.subr.bf16.mxu0 %v6123
        %6288 = vmatpush1.bf16.msra.mxu0 %v6122
        %6289 = vmatprep.subr.bf16.mxu0 %v6127
        %6290 = vmatpush1.bf16.msra.mxu0 %v6126
        %6291 = vmatprep.subr.bf16.mxu0 %v6131
        %6292 = vmatpush1.bf16.msra.mxu0 %v6130
        %6293 = vmatprep.subr.bf16.mxu0 %v6135
        %6294 = vmatpush1.bf16.msra.mxu0 %v6134
        %6295 = vmatprep.subr.bf16.mxu0 %v6139
        %6296 = vmatpush1.bf16.msra.mxu0 %v6138
        %6297 = vmatprep.subr.bf16.mxu0 %v6143
        %6298 = vmatpush1.bf16.msra.mxu0 %v6142
        %6299 = vmatprep.subr.bf16.mxu0 %v6147
        %6300 = vmatpush1.bf16.msra.mxu0 %v6146
        %6301 = vmatprep.subr.bf16.mxu0 %v6151
        %6302 = vmatpush1.bf16.msra.mxu0 %v6150
        %6303 = vmatprep.subr.bf16.mxu0 %v6155
        %6304 = vmatpush1.bf16.msra.mxu0 %v6154
        %6305 = vmatprep.subr.bf16.mxu0 %v6159
        %6306 = vmatpush1.bf16.msra.mxu0 %v6158
        %6307 = vmatprep.subr.bf16.mxu0 %v6163
        %6308 = vmatpush1.bf16.msra.mxu0 %v6162
        %6309 = vmatprep.subr.bf16.mxu0 %v6167
        %6310 = vmatpush1.bf16.msra.mxu0 %v6166
        %6311 = vmatprep.subr.bf16.mxu0 %v6171
        %6312 = vmatpush1.bf16.msra.mxu0 %v6170
        %6313 = vmatprep.subr.bf16.mxu0 %v6175
        %6314 = vmatpush1.bf16.msra.mxu0 %v6174
        %6315 = vmatprep.subr.bf16.mxu0 %v6179
        %6316 = vmatpush1.bf16.msra.mxu0 %v6178
        %6317 = vmatprep.mubr.bf16.mxu0 %v5859
        %6318 = vmatmul.mubr.bf16.gmra.mrb[0].mxu0 %v5858
        %v6319 = vpop.f32.mrb[0].mxu0
        %v6320 = vadd.f32 0.0, %v6319
        %v6321 = vpop.f32.mrb[0].mxu0
        %v6322 = vadd.f32 0.0, %v6321
        %v6323 = vpop.f32.mrb[0].mxu0
        %v6324 = vpop.f32.mrb[0].mxu0
        %6325 = vdwg.mxu0
        %vm6326 = vcmp.eq.s32.totalorder %v1151, 0
        %v6327 = vlaneseq
        %v6328 = vshrl.u32 %v6327, 7
        %v6329 = vsub.s32 0, %v6328
        %v6330 = vrot.slane %v6279, %v6329
        %v6331 = vsel %vm6326, %v6330, 0.0
        %vm6332 = vcmp.eq.s32.totalorder %v1151, 1
        %v6333 = vlaneseq
        %v6334 = vshrl.u32 %v6333, 7
        %v6335 = vsub.s32 0, %v6334
        %v6336 = vrot.slane %v6281, %v6335
        %v6337 = vsel %vm6332, %v6336, 0.0
        %v6338 = vadd.f32 %v6331, %v6337
        %vm6339 = vcmp.eq.s32.totalorder %v1151, 2
        %v6340 = vlaneseq
        %v6341 = vshrl.u32 %v6340, 7
        %v6342 = vsub.s32 0, %v6341
        %v6343 = vrot.slane %v6320, %v6342
        %v6344 = vsel %vm6339, %v6343, 0.0
        %v6345 = vadd.f32 %v6338, %v6344
        %vm6346 = vcmp.eq.s32.totalorder %v1151, 3
        %v6347 = vlaneseq
        %v6348 = vshrl.u32 %v6347, 7
        %v6349 = vsub.s32 0, %v6348
        %v6350 = vrot.slane %v6322, %v6349
        %v6351 = vsel %vm6346, %v6350, 0.0
        %v6352 = vadd.f32 %v6345, %v6351
        %v6353 = vld [vmem:[#allocation21] sm:$0x3]
        %v6354 = vlaneseq
        %v6355 = vshrl.u32 %v6354, 7
        %v6356 = vsub.s32 0, %v6355
        %v6357 = vrot.slane %v6353, %v6356
        %v6358 = vmul.f32 %v6352, %v6357
        %v6359 = vlaneseq
        %v6360 = vshrl.u32 %v6359, 7
        %v6361 = vsub.s32 1, %v6360
        %v6362 = vrot.slane %v6353, %v6361
        %v6363 = vadd.f32 %v6358, %v6362
        %v6364 = vmax.f32 %v6363, 0.0
        %v6365 = vpack.c.bf16 %v6364, %v6364
        %v6366 = vld [vmem:[%s15] sm:$0xff]
        %v6367 = vld [vmem:[%s15 + $0x8] sm:$0xff]
        %v6368 = vld [vmem:[%s15 + $0x10] sm:$0xff]
        %v6369 = vld [vmem:[%s15 + $0x18] sm:$0xff]
        %v6370 = vld [vmem:[%s15 + $0x20] sm:$0xff]
        %v6371 = vld [vmem:[%s15 + $0x28] sm:$0xff]
        %v6372 = vld [vmem:[%s15 + $0x30] sm:$0xff]
        %v6373 = vld [vmem:[%s15 + $0x38] sm:$0xff]
        %v6374 = vld [vmem:[%s15 + $0x40] sm:$0xff]
        %v6375 = vld [vmem:[%s15 + $0x48] sm:$0xff]
        %v6376 = vld [vmem:[%s15 + $0x50] sm:$0xff]
        %v6377 = vld [vmem:[%s15 + $0x58] sm:$0xff]
        %v6378 = vld [vmem:[%s15 + $0x60] sm:$0xff]
        %v6379 = vld [vmem:[%s15 + $0x68] sm:$0xff]
        %v6380 = vld [vmem:[%s15 + $0x70] sm:$0xff]
        %v6381 = vld [vmem:[%s15 + $0x78] sm:$0xff]
        %v6382 = vld [vmem:[#allocation22] sm:$0xff]
        %v6383 = vld [vmem:[#allocation22 + $0x8] sm:$0xff]
        %v6384 = vld [vmem:[#allocation22 + $0x10] sm:$0xff]
        %v6385 = vld [vmem:[#allocation22 + $0x18] sm:$0xff]
        %v6386 = vld [vmem:[#allocation22 + $0x20] sm:$0xff]
        %v6387 = vld [vmem:[#allocation22 + $0x28] sm:$0xff]
        %v6388 = vld [vmem:[#allocation22 + $0x30] sm:$0xff]
        %v6389 = vld [vmem:[#allocation22 + $0x38] sm:$0xff]
        %v6390 = vld [vmem:[#allocation22 + $0x40] sm:$0xff]
        %v6391 = vld [vmem:[#allocation22 + $0x48] sm:$0xff]
        %v6392 = vld [vmem:[#allocation22 + $0x50] sm:$0xff]
        %v6393 = vld [vmem:[#allocation22 + $0x58] sm:$0xff]
        %v6394 = vld [vmem:[#allocation22 + $0x60] sm:$0xff]
        %v6395 = vld [vmem:[#allocation22 + $0x68] sm:$0xff]
        %v6396 = vld [vmem:[#allocation22 + $0x70] sm:$0xff]
        %v6397 = vld [vmem:[#allocation22 + $0x78] sm:$0xff]
        %v6414 = vunpack.c.l.b16 %v6382
        %v6415 = vunpack.c.h.b16 %v6382
        %v6416 = vunpack.c.l.b16 %v6383
        %v6417 = vunpack.c.h.b16 %v6383
        %v6418 = vunpack.c.l.b16 %v6384
        %v6419 = vunpack.c.h.b16 %v6384
        %v6420 = vunpack.c.l.b16 %v6385
        %v6421 = vunpack.c.h.b16 %v6385
        %v6422 = vunpack.c.l.b16 %v6386
        %v6423 = vunpack.c.h.b16 %v6386
        %v6424 = vunpack.c.l.b16 %v6387
        %v6425 = vunpack.c.h.b16 %v6387
        %v6426 = vunpack.c.l.b16 %v6388
        %v6427 = vunpack.c.h.b16 %v6388
        %v6428 = vunpack.c.l.b16 %v6389
        %v6429 = vunpack.c.h.b16 %v6389
        %v6430 = vunpack.c.l.b16 %v6390
        %v6431 = vunpack.c.h.b16 %v6390
        %v6432 = vunpack.c.l.b16 %v6391
        %v6433 = vunpack.c.h.b16 %v6391
        %v6434 = vunpack.c.l.b16 %v6392
        %v6435 = vunpack.c.h.b16 %v6392
        %v6436 = vunpack.c.l.b16 %v6393
        %v6437 = vunpack.c.h.b16 %v6393
        %v6438 = vunpack.c.l.b16 %v6394
        %v6439 = vunpack.c.h.b16 %v6394
        %v6440 = vunpack.c.l.b16 %v6395
        %v6441 = vunpack.c.h.b16 %v6395
        %v6442 = vunpack.c.l.b16 %v6396
        %v6443 = vunpack.c.h.b16 %v6396
        %v6444 = vunpack.c.l.b16 %v6397
        %v6445 = vunpack.c.h.b16 %v6397
        %v6446 = vpack.c.b16 %v6416, %v6414
        %v6447 = vpack.c.b16 %v6417, %v6415
        %v6448 = vpack.c.b16 %v6420, %v6418
        %v6449 = vpack.c.b16 %v6421, %v6419
        %v6450 = vpack.c.b16 %v6424, %v6422
        %v6451 = vpack.c.b16 %v6425, %v6423
        %v6452 = vpack.c.b16 %v6428, %v6426
        %v6453 = vpack.c.b16 %v6429, %v6427
        %v6454 = vpack.c.b16 %v6432, %v6430
        %v6455 = vpack.c.b16 %v6433, %v6431
        %v6456 = vpack.c.b16 %v6436, %v6434
        %v6457 = vpack.c.b16 %v6437, %v6435
        %v6458 = vpack.c.b16 %v6440, %v6438
        %v6459 = vpack.c.b16 %v6441, %v6439
        %v6460 = vpack.c.b16 %v6444, %v6442
        %v6461 = vpack.c.b16 %v6445, %v6443
        %6478 = vmatprep.subr.bf16.mxu0 %v6447
        %6479 = vmatpush1.bf16.msra.mxu0 %v6446
        %6480 = vmatprep.subr.bf16.mxu0 %v6449
        %6481 = vmatpush1.bf16.msra.mxu0 %v6448
        %6482 = vmatprep.subr.bf16.mxu0 %v6451
        %6483 = vmatpush1.bf16.msra.mxu0 %v6450
        %6484 = vmatprep.subr.bf16.mxu0 %v6453
        %6485 = vmatpush1.bf16.msra.mxu0 %v6452
        %6486 = vmatprep.subr.bf16.mxu0 %v6455
        %6487 = vmatpush1.bf16.msra.mxu0 %v6454
        %6488 = vmatprep.subr.bf16.mxu0 %v6457
        %6489 = vmatpush1.bf16.msra.mxu0 %v6456
        %6490 = vmatprep.subr.bf16.mxu0 %v6459
        %6491 = vmatpush1.bf16.msra.mxu0 %v6458
        %6492 = vmatprep.subr.bf16.mxu0 %v6461
        %6493 = vmatpush1.bf16.msra.mxu0 %v6460
        %6494 = vmatprep.subr.bf16.mxu0 0
        %6495 = vmatpush1.bf16.msra.mxu0 0
        %6496 = vmatprep.subr.bf16.mxu0 0
        %6497 = vmatpush1.bf16.msra.mxu0 0
        %6498 = vmatprep.subr.bf16.mxu0 0
        %6499 = vmatpush1.bf16.msra.mxu0 0
        %6500 = vmatprep.subr.bf16.mxu0 0
        %6501 = vmatpush1.bf16.msra.mxu0 0
        %6502 = vmatprep.subr.bf16.mxu0 0
        %6503 = vmatpush1.bf16.msra.mxu0 0
        %6504 = vmatprep.subr.bf16.mxu0 0
        %6505 = vmatpush1.bf16.msra.mxu0 0
        %6506 = vmatprep.subr.bf16.mxu0 0
        %6507 = vmatpush1.bf16.msra.mxu0 0
        %6508 = vmatprep.subr.bf16.mxu0 0
        %6509 = vmatpush1.bf16.msra.mxu0 0
        %6510 = vmatprep.mubr.bf16.mxu0 0
        %6511 = vmatmul.mubr.bf16.gmra.mrb[0].mxu0 %v3718
        %v6512 = vpop.f32.mrb[0].mxu0
        %v6513 = vadd.f32 0.0, %v6512
        %v6514 = vpop.f32.mrb[0].mxu0
        %v6515 = vadd.f32 0.0, %v6514
        %v6516 = vpop.f32.mrb[0].mxu0
        %v6517 = vpop.f32.mrb[0].mxu0
        %6518 = vdwg.mxu0
        %v6535 = vunpack.c.l.b16 %v6366
        %v6536 = vunpack.c.h.b16 %v6366
        %v6537 = vunpack.c.l.b16 %v6367
        %v6538 = vunpack.c.h.b16 %v6367
        %v6539 = vunpack.c.l.b16 %v6368
        %v6540 = vunpack.c.h.b16 %v6368
        %v6541 = vunpack.c.l.b16 %v6369
        %v6542 = vunpack.c.h.b16 %v6369
        %v6543 = vunpack.c.l.b16 %v6370
        %v6544 = vunpack.c.h.b16 %v6370
        %v6545 = vunpack.c.l.b16 %v6371
        %v6546 = vunpack.c.h.b16 %v6371
        %v6547 = vunpack.c.l.b16 %v6372
        %v6548 = vunpack.c.h.b16 %v6372
        %v6549 = vunpack.c.l.b16 %v6373
        %v6550 = vunpack.c.h.b16 %v6373
        %v6551 = vunpack.c.l.b16 %v6374
        %v6552 = vunpack.c.h.b16 %v6374
        %v6553 = vunpack.c.l.b16 %v6375
        %v6554 = vunpack.c.h.b16 %v6375
        %v6555 = vunpack.c.l.b16 %v6376
        %v6556 = vunpack.c.h.b16 %v6376
        %v6557 = vunpack.c.l.b16 %v6377
        %v6558 = vunpack.c.h.b16 %v6377
        %v6559 = vunpack.c.l.b16 %v6378
        %v6560 = vunpack.c.h.b16 %v6378
        %v6561 = vunpack.c.l.b16 %v6379
        %v6562 = vunpack.c.h.b16 %v6379
        %v6563 = vunpack.c.l.b16 %v6380
        %v6564 = vunpack.c.h.b16 %v6380
        %v6565 = vunpack.c.l.b16 %v6381
        %v6566 = vunpack.c.h.b16 %v6381
        %v6567 = vpack.c.b16 %v6537, %v6535
        %v6568 = vpack.c.b16 %v6538, %v6536
        %v6569 = vpack.c.b16 %v6541, %v6539
        %v6570 = vpack.c.b16 %v6542, %v6540
        %v6571 = vpack.c.b16 %v6545, %v6543
        %v6572 = vpack.c.b16 %v6546, %v6544
        %v6573 = vpack.c.b16 %v6549, %v6547
        %v6574 = vpack.c.b16 %v6550, %v6548
        %v6575 = vpack.c.b16 %v6553, %v6551
        %v6576 = vpack.c.b16 %v6554, %v6552
        %v6577 = vpack.c.b16 %v6557, %v6555
        %v6578 = vpack.c.b16 %v6558, %v6556
        %v6579 = vpack.c.b16 %v6561, %v6559
        %v6580 = vpack.c.b16 %v6562, %v6560
        %v6581 = vpack.c.b16 %v6565, %v6563
        %v6582 = vpack.c.b16 %v6566, %v6564
        %6599 = vmatprep.subr.bf16.mxu0 %v6568
        %6600 = vmatpush1.bf16.msra.mxu0 %v6567
        %6601 = vmatprep.subr.bf16.mxu0 %v6570
        %6602 = vmatpush1.bf16.msra.mxu0 %v6569
        %6603 = vmatprep.subr.bf16.mxu0 %v6572
        %6604 = vmatpush1.bf16.msra.mxu0 %v6571
        %6605 = vmatprep.subr.bf16.mxu0 %v6574
        %6606 = vmatpush1.bf16.msra.mxu0 %v6573
        %6607 = vmatprep.subr.bf16.mxu0 %v6576
        %6608 = vmatpush1.bf16.msra.mxu0 %v6575
        %6609 = vmatprep.subr.bf16.mxu0 %v6578
        %6610 = vmatpush1.bf16.msra.mxu0 %v6577
        %6611 = vmatprep.subr.bf16.mxu0 %v6580
        %6612 = vmatpush1.bf16.msra.mxu0 %v6579
        %6613 = vmatprep.subr.bf16.mxu0 %v6582
        %6614 = vmatpush1.bf16.msra.mxu0 %v6581
        %6615 = vmatprep.subr.bf16.mxu0 0
        %6616 = vmatpush1.bf16.msra.mxu0 0
        %6617 = vmatprep.subr.bf16.mxu0 0
        %6618 = vmatpush1.bf16.msra.mxu0 0
        %6619 = vmatprep.subr.bf16.mxu0 0
        %6620 = vmatpush1.bf16.msra.mxu0 0
        %6621 = vmatprep.subr.bf16.mxu0 0
        %6622 = vmatpush1.bf16.msra.mxu0 0
        %6623 = vmatprep.subr.bf16.mxu0 0
        %6624 = vmatpush1.bf16.msra.mxu0 0
        %6625 = vmatprep.subr.bf16.mxu0 0
        %6626 = vmatpush1.bf16.msra.mxu0 0
        %6627 = vmatprep.subr.bf16.mxu0 0
        %6628 = vmatpush1.bf16.msra.mxu0 0
        %6629 = vmatprep.subr.bf16.mxu0 0
        %6630 = vmatpush1.bf16.msra.mxu0 0
        %6631 = vmatprep.mubr.bf16.mxu0 0
        %6632 = vmatmul.mubr.bf16.gmra.mrb[0].mxu0 %v6365
        %v6633 = vpop.f32.mrb[0].mxu0
        %v6634 = vadd.f32 %v6513, %v6633
        %v6635 = vpop.f32.mrb[0].mxu0
        %v6636 = vadd.f32 %v6515, %v6635
        %v6637 = vpop.f32.mrb[0].mxu0
        %v6638 = vpop.f32.mrb[0].mxu0
        %6639 = vdwg.mxu0
        %v6640 = vmul.u32 %v1160, 4
        %vm6641 = vcmp.eq.s32.totalorder %v1151, %v6640
        %vm6642 = vcmp.eq.s32.totalorder %v1152, %v6640
        %v6643 = vsel %vm6641, 1.0, 0.0
        %v6644 = vsel %vm6642, 1.0, 0.0
        %v6645 = vadd.s32 %v6640, 1
        %vm6646 = vcmp.eq.s32.totalorder %v1151, %v6645
        %vm6647 = vcmp.eq.s32.totalorder %v1152, %v6645
        %v6648 = vsel %vm6646, 1.0, 0.0
        %v6649 = vsel %vm6647, 1.0, 0.0
        %6651 = vrot.lane.b32.xlu0 %v6634, 64
        %v6652 = vpop.permute.xlu0 %6651
        %v6654 = vsel %vm989, %v6648, 0
        %v6657 = vsel %vm989, %v6649, 0
        %v6659 = vsel %vm4406, %v6652, 0
        %6661 = vmatprep.subr.mxu0 0.0
        %6662 = vmatpush1.msra.mxu0 %v6659
        %6663 = vmatprep.subr.mxu0 0.0
        %6664 = vmatpush1.msra.mxu0 0.0
        %6665 = vmatprep.subr.mxu0 0.0
        %6666 = vmatpush1.msra.mxu0 0.0
        %6667 = vmatprep.subr.mxu0 0.0
        %6668 = vmatpush1.msra.mxu0 0.0
        %6669 = vmatprep.subr.mxu0 0.0
        %6670 = vmatpush1.msra.mxu0 0.0
        %6671 = vmatprep.subr.mxu0 0.0
        %6672 = vmatpush1.msra.mxu0 0.0
        %6673 = vmatprep.subr.mxu0 0.0
        %6674 = vmatpush1.msra.mxu0 0.0
        %6675 = vmatprep.subr.mxu0 0.0
        %6676 = vmatpush1.msra.mxu0 0.0
        %6677 = vmatprep.subr.mxu0 0.0
        %6678 = vmatpush1.msra.mxu0 0.0
        %6679 = vmatprep.subr.mxu0 0.0
        %6680 = vmatpush1.msra.mxu0 0.0
        %6681 = vmatprep.subr.mxu0 0.0
        %6682 = vmatpush1.msra.mxu0 0.0
        %6683 = vmatprep.subr.mxu0 0.0
        %6684 = vmatpush1.msra.mxu0 0.0
        %6685 = vmatprep.subr.mxu0 0.0
        %6686 = vmatpush1.msra.mxu0 0.0
        %6687 = vmatprep.subr.mxu0 0.0
        %6688 = vmatpush1.msra.mxu0 0.0
        %6689 = vmatprep.subr.mxu0 0.0
        %6690 = vmatpush1.msra.mxu0 0.0
        %6691 = vmatprep.subr.mxu0 0.0
        %6692 = vmatpush1.msra.mxu0 0.0
        %6693 = vmatprep.subr.mxu0 0.0
        %6694 = vmatpush1.msra.mxu0 0.0
        %6695 = vmatprep.subr.mxu0 0.0
        %6696 = vmatpush1.msra.mxu0 0.0
        %6697 = vmatprep.subr.mxu0 0.0
        %6698 = vmatpush1.msra.mxu0 0.0
        %6699 = vmatprep.subr.mxu0 0.0
        %6700 = vmatpush1.msra.mxu0 0.0
        %6701 = vmatprep.subr.mxu0 0.0
        %6702 = vmatpush1.msra.mxu0 0.0
        %6703 = vmatprep.subr.mxu0 0.0
        %6704 = vmatpush1.msra.mxu0 0.0
        %6705 = vmatprep.subr.mxu0 0.0
        %6706 = vmatpush1.msra.mxu0 0.0
        %6707 = vmatprep.subr.mxu0 0.0
        %6708 = vmatpush1.msra.mxu0 0.0
        %6709 = vmatprep.subr.mxu0 0.0
        %6710 = vmatpush1.msra.mxu0 0.0
        %6711 = vmatprep.subr.mxu0 0.0
        %6712 = vmatpush1.msra.mxu0 0.0
        %6713 = vmatprep.subr.mxu0 0.0
        %6714 = vmatpush1.msra.mxu0 0.0
        %6715 = vmatprep.subr.mxu0 0.0
        %6716 = vmatpush1.msra.mxu0 0.0
        %6717 = vmatprep.subr.mxu0 0.0
        %6718 = vmatpush1.msra.mxu0 0.0
        %6719 = vmatprep.subr.mxu0 0.0
        %6720 = vmatpush1.msra.mxu0 0.0
        %6721 = vmatprep.subr.mxu0 0.0
        %6722 = vmatpush1.msra.mxu0 0.0
        %6723 = vmatprep.subr.mxu0 0.0
        %6724 = vmatpush1.msra.mxu0 0.0
        %6725 = vmatprep.mubr.f32.mxu0 0.0
        %6726 = vmatmul.mubr.f32.gmra.mrb[0].mxu0 %v6654
        %v6727 = vpop.f32.mrb[0].mxu0
        %v6728 = vadd.f32 0.0, %v6727
        %v6729 = vpop.f32.mrb[0].mxu0
        %6730 = vmatprep.mubr.f32.mxu0 0.0
        %6731 = vmatmul.mubr.f32.gmra.mrb[0].mxu0 %v6657
        %v6732 = vpop.f32.mrb[0].mxu0
        %v6733 = vadd.f32 0.0, %v6732
        %v6734 = vpop.f32.mrb[0].mxu0
        %6735 = vdwg.mxu0
        %v6737 = vsel %vm989, %v6643, 0
        %v6740 = vsel %vm989, %v6644, 0
        %v6742 = vsel %vm4406, %v6634, 0
        %6744 = vmatprep.subr.mxu0 0.0
        %6745 = vmatpush1.msra.mxu0 %v6742
        %6746 = vmatprep.subr.mxu0 0.0
        %6747 = vmatpush1.msra.mxu0 0.0
        %6748 = vmatprep.subr.mxu0 0.0
        %6749 = vmatpush1.msra.mxu0 0.0
        %6750 = vmatprep.subr.mxu0 0.0
        %6751 = vmatpush1.msra.mxu0 0.0
        %6752 = vmatprep.subr.mxu0 0.0
        %6753 = vmatpush1.msra.mxu0 0.0
        %6754 = vmatprep.subr.mxu0 0.0
        %6755 = vmatpush1.msra.mxu0 0.0
        %6756 = vmatprep.subr.mxu0 0.0
        %6757 = vmatpush1.msra.mxu0 0.0
        %6758 = vmatprep.subr.mxu0 0.0
        %6759 = vmatpush1.msra.mxu0 0.0
        %6760 = vmatprep.subr.mxu0 0.0
        %6761 = vmatpush1.msra.mxu0 0.0
        %6762 = vmatprep.subr.mxu0 0.0
        %6763 = vmatpush1.msra.mxu0 0.0
        %6764 = vmatprep.subr.mxu0 0.0
        %6765 = vmatpush1.msra.mxu0 0.0
        %6766 = vmatprep.subr.mxu0 0.0
        %6767 = vmatpush1.msra.mxu0 0.0
        %6768 = vmatprep.subr.mxu0 0.0
        %6769 = vmatpush1.msra.mxu0 0.0
        %6770 = vmatprep.subr.mxu0 0.0
        %6771 = vmatpush1.msra.mxu0 0.0
        %6772 = vmatprep.subr.mxu0 0.0
        %6773 = vmatpush1.msra.mxu0 0.0
        %6774 = vmatprep.subr.mxu0 0.0
        %6775 = vmatpush1.msra.mxu0 0.0
        %6776 = vmatprep.subr.mxu0 0.0
        %6777 = vmatpush1.msra.mxu0 0.0
        %6778 = vmatprep.subr.mxu0 0.0
        %6779 = vmatpush1.msra.mxu0 0.0
        %6780 = vmatprep.subr.mxu0 0.0
        %6781 = vmatpush1.msra.mxu0 0.0
        %6782 = vmatprep.subr.mxu0 0.0
        %6783 = vmatpush1.msra.mxu0 0.0
        %6784 = vmatprep.subr.mxu0 0.0
        %6785 = vmatpush1.msra.mxu0 0.0
        %6786 = vmatprep.subr.mxu0 0.0
        %6787 = vmatpush1.msra.mxu0 0.0
        %6788 = vmatprep.subr.mxu0 0.0
        %6789 = vmatpush1.msra.mxu0 0.0
        %6790 = vmatprep.subr.mxu0 0.0
        %6791 = vmatpush1.msra.mxu0 0.0
        %6792 = vmatprep.subr.mxu0 0.0
        %6793 = vmatpush1.msra.mxu0 0.0
        %6794 = vmatprep.subr.mxu0 0.0
        %6795 = vmatpush1.msra.mxu0 0.0
        %6796 = vmatprep.subr.mxu0 0.0
        %6797 = vmatpush1.msra.mxu0 0.0
        %6798 = vmatprep.subr.mxu0 0.0
        %6799 = vmatpush1.msra.mxu0 0.0
        %6800 = vmatprep.subr.mxu0 0.0
        %6801 = vmatpush1.msra.mxu0 0.0
        %6802 = vmatprep.subr.mxu0 0.0
        %6803 = vmatpush1.msra.mxu0 0.0
        %6804 = vmatprep.subr.mxu0 0.0
        %6805 = vmatpush1.msra.mxu0 0.0
        %6806 = vmatprep.subr.mxu0 0.0
        %6807 = vmatpush1.msra.mxu0 0.0
        %6808 = vmatprep.mubr.f32.mxu0 0.0
        %6809 = vmatmul.mubr.f32.gmra.mrb[0].mxu0 %v6737
        %v6810 = vpop.f32.mrb[0].mxu0
        %v6811 = vadd.f32 %v6728, %v6810
        %v6812 = vpop.f32.mrb[0].mxu0
        %6813 = vmatprep.mubr.f32.mxu0 0.0
        %6814 = vmatmul.mubr.f32.gmra.mrb[0].mxu0 %v6740
        %v6815 = vpop.f32.mrb[0].mxu0
        %v6816 = vadd.f32 %v6733, %v6815
        %v6817 = vpop.f32.mrb[0].mxu0
        %6818 = vdwg.mxu0
        %v6819 = vadd.s32 %v6640, 2
        %vm6820 = vcmp.eq.s32.totalorder %v1151, %v6819
        %vm6821 = vcmp.eq.s32.totalorder %v1152, %v6819
        %v6822 = vsel %vm6820, 1.0, 0.0
        %v6823 = vsel %vm6821, 1.0, 0.0
        %v6825 = vsel %vm989, %v6822, 0
        %v6828 = vsel %vm989, %v6823, 0
        %v6831 = vsel %vm4406, %v6636, 0
        %6833 = vmatprep.subr.mxu0 0.0
        %6834 = vmatpush1.msra.mxu0 %v6831
        %6835 = vmatprep.subr.mxu0 0.0
        %6836 = vmatpush1.msra.mxu0 0.0
        %6837 = vmatprep.subr.mxu0 0.0
        %6838 = vmatpush1.msra.mxu0 0.0
        %6839 = vmatprep.subr.mxu0 0.0
        %6840 = vmatpush1.msra.mxu0 0.0
        %6841 = vmatprep.subr.mxu0 0.0
        %6842 = vmatpush1.msra.mxu0 0.0
        %6843 = vmatprep.subr.mxu0 0.0
        %6844 = vmatpush1.msra.mxu0 0.0
        %6845 = vmatprep.subr.mxu0 0.0
        %6846 = vmatpush1.msra.mxu0 0.0
        %6847 = vmatprep.subr.mxu0 0.0
        %6848 = vmatpush1.msra.mxu0 0.0
        %6849 = vmatprep.subr.mxu0 0.0
        %6850 = vmatpush1.msra.mxu0 0.0
        %6851 = vmatprep.subr.mxu0 0.0
        %6852 = vmatpush1.msra.mxu0 0.0
        %6853 = vmatprep.subr.mxu0 0.0
        %6854 = vmatpush1.msra.mxu0 0.0
        %6855 = vmatprep.subr.mxu0 0.0
        %6856 = vmatpush1.msra.mxu0 0.0
        %6857 = vmatprep.subr.mxu0 0.0
        %6858 = vmatpush1.msra.mxu0 0.0
        %6859 = vmatprep.subr.mxu0 0.0
        %6860 = vmatpush1.msra.mxu0 0.0
        %6861 = vmatprep.subr.mxu0 0.0
        %6862 = vmatpush1.msra.mxu0 0.0
        %6863 = vmatprep.subr.mxu0 0.0
        %6864 = vmatpush1.msra.mxu0 0.0
        %6865 = vmatprep.subr.mxu0 0.0
        %6866 = vmatpush1.msra.mxu0 0.0
        %6867 = vmatprep.subr.mxu0 0.0
        %6868 = vmatpush1.msra.mxu0 0.0
        %6869 = vmatprep.subr.mxu0 0.0
        %6870 = vmatpush1.msra.mxu0 0.0
        %6871 = vmatprep.subr.mxu0 0.0
        %6872 = vmatpush1.msra.mxu0 0.0
        %6873 = vmatprep.subr.mxu0 0.0
        %6874 = vmatpush1.msra.mxu0 0.0
        %6875 = vmatprep.subr.mxu0 0.0
        %6876 = vmatpush1.msra.mxu0 0.0
        %6877 = vmatprep.subr.mxu0 0.0
        %6878 = vmatpush1.msra.mxu0 0.0
        %6879 = vmatprep.subr.mxu0 0.0
        %6880 = vmatpush1.msra.mxu0 0.0
        %6881 = vmatprep.subr.mxu0 0.0
        %6882 = vmatpush1.msra.mxu0 0.0
        %6883 = vmatprep.subr.mxu0 0.0
        %6884 = vmatpush1.msra.mxu0 0.0
        %6885 = vmatprep.subr.mxu0 0.0
        %6886 = vmatpush1.msra.mxu0 0.0
        %6887 = vmatprep.subr.mxu0 0.0
        %6888 = vmatpush1.msra.mxu0 0.0
        %6889 = vmatprep.subr.mxu0 0.0
        %6890 = vmatpush1.msra.mxu0 0.0
        %6891 = vmatprep.subr.mxu0 0.0
        %6892 = vmatpush1.msra.mxu0 0.0
        %6893 = vmatprep.subr.mxu0 0.0
        %6894 = vmatpush1.msra.mxu0 0.0
        %6895 = vmatprep.subr.mxu0 0.0
        %6896 = vmatpush1.msra.mxu0 0.0
        %6897 = vmatprep.mubr.f32.mxu0 0.0
        %6898 = vmatmul.mubr.f32.gmra.mrb[0].mxu0 %v6825
        %v6899 = vpop.f32.mrb[0].mxu0
        %v6900 = vadd.f32 0.0, %v6899
        %v6901 = vpop.f32.mrb[0].mxu0
        %6902 = vmatprep.mubr.f32.mxu0 0.0
        %6903 = vmatmul.mubr.f32.gmra.mrb[0].mxu0 %v6828
        %v6904 = vpop.f32.mrb[0].mxu0
        %v6905 = vadd.f32 0.0, %v6904
        %v6906 = vpop.f32.mrb[0].mxu0
        %6907 = vdwg.mxu0
        %v6908 = vadd.f32 %v6811, %v6900
        %v6909 = vadd.f32 %v6816, %v6905
        %v6910 = vadd.s32 %v6640, 3
        %vm6911 = vcmp.eq.s32.totalorder %v1151, %v6910
        %vm6912 = vcmp.eq.s32.totalorder %v1152, %v6910
        %v6913 = vsel %vm6911, 1.0, 0.0
        %v6914 = vsel %vm6912, 1.0, 0.0
        %6915 = vrot.lane.b32.xlu0 %v6636, 64
        %v6916 = vpop.permute.xlu0 %6915
        %v6918 = vsel %vm989, %v6913, 0
        %v6921 = vsel %vm989, %v6914, 0
        %v6923 = vsel %vm4406, %v6916, 0
        %6925 = vmatprep.subr.mxu0 0.0
        %6926 = vmatpush1.msra.mxu0 %v6923
        %6927 = vmatprep.subr.mxu0 0.0
        %6928 = vmatpush1.msra.mxu0 0.0
        %6929 = vmatprep.subr.mxu0 0.0
        %6930 = vmatpush1.msra.mxu0 0.0
        %6931 = vmatprep.subr.mxu0 0.0
        %6932 = vmatpush1.msra.mxu0 0.0
        %6933 = vmatprep.subr.mxu0 0.0
        %6934 = vmatpush1.msra.mxu0 0.0
        %6935 = vmatprep.subr.mxu0 0.0
        %6936 = vmatpush1.msra.mxu0 0.0
        %6937 = vmatprep.subr.mxu0 0.0
        %6938 = vmatpush1.msra.mxu0 0.0
        %6939 = vmatprep.subr.mxu0 0.0
        %6940 = vmatpush1.msra.mxu0 0.0
        %6941 = vmatprep.subr.mxu0 0.0
        %6942 = vmatpush1.msra.mxu0 0.0
        %6943 = vmatprep.subr.mxu0 0.0
        %6944 = vmatpush1.msra.mxu0 0.0
        %6945 = vmatprep.subr.mxu0 0.0
        %6946 = vmatpush1.msra.mxu0 0.0
        %6947 = vmatprep.subr.mxu0 0.0
        %6948 = vmatpush1.msra.mxu0 0.0
        %6949 = vmatprep.subr.mxu0 0.0
        %6950 = vmatpush1.msra.mxu0 0.0
        %6951 = vmatprep.subr.mxu0 0.0
        %6952 = vmatpush1.msra.mxu0 0.0
        %6953 = vmatprep.subr.mxu0 0.0
        %6954 = vmatpush1.msra.mxu0 0.0
        %6955 = vmatprep.subr.mxu0 0.0
        %6956 = vmatpush1.msra.mxu0 0.0
        %6957 = vmatprep.subr.mxu0 0.0
        %6958 = vmatpush1.msra.mxu0 0.0
        %6959 = vmatprep.subr.mxu0 0.0
        %6960 = vmatpush1.msra.mxu0 0.0
        %6961 = vmatprep.subr.mxu0 0.0
        %6962 = vmatpush1.msra.mxu0 0.0
        %6963 = vmatprep.subr.mxu0 0.0
        %6964 = vmatpush1.msra.mxu0 0.0
        %6965 = vmatprep.subr.mxu0 0.0
        %6966 = vmatpush1.msra.mxu0 0.0
        %6967 = vmatprep.subr.mxu0 0.0
        %6968 = vmatpush1.msra.mxu0 0.0
        %6969 = vmatprep.subr.mxu0 0.0
        %6970 = vmatpush1.msra.mxu0 0.0
        %6971 = vmatprep.subr.mxu0 0.0
        %6972 = vmatpush1.msra.mxu0 0.0
        %6973 = vmatprep.subr.mxu0 0.0
        %6974 = vmatpush1.msra.mxu0 0.0
        %6975 = vmatprep.subr.mxu0 0.0
        %6976 = vmatpush1.msra.mxu0 0.0
        %6977 = vmatprep.subr.mxu0 0.0
        %6978 = vmatpush1.msra.mxu0 0.0
        %6979 = vmatprep.subr.mxu0 0.0
        %6980 = vmatpush1.msra.mxu0 0.0
        %6981 = vmatprep.subr.mxu0 0.0
        %6982 = vmatpush1.msra.mxu0 0.0
        %6983 = vmatprep.subr.mxu0 0.0
        %6984 = vmatpush1.msra.mxu0 0.0
        %6985 = vmatprep.subr.mxu0 0.0
        %6986 = vmatpush1.msra.mxu0 0.0
        %6987 = vmatprep.subr.mxu0 0.0
        %6988 = vmatpush1.msra.mxu0 0.0
        %6989 = vmatprep.mubr.f32.mxu0 0.0
        %6990 = vmatmul.mubr.f32.gmra.mrb[0].mxu0 %v6918
        %v6991 = vpop.f32.mrb[0].mxu0
        %v6992 = vadd.f32 0.0, %v6991
        %v6993 = vpop.f32.mrb[0].mxu0
        %6994 = vmatprep.mubr.f32.mxu0 0.0
        %6995 = vmatmul.mubr.f32.gmra.mrb[0].mxu0 %v6921
        %v6996 = vpop.f32.mrb[0].mxu0
        %v6997 = vadd.f32 0.0, %v6996
        %v6998 = vpop.f32.mrb[0].mxu0
        %6999 = vdwg.mxu0
        %v7000 = vadd.f32 %v6908, %v6992
        %v7001 = vadd.f32 %v6909, %v6997
        %v7002 = vld [vmem:[%s17] sm:$0x3]
        %v7003 = vlaneseq
        %v7004 = vshrl.u32 %v7003, 7
        %v7005 = vsub.s32 0, %v7004
        %v7006 = vrot.slane %v7002, %v7005
        %v7007 = vmul.f32 %v7000, %v7006
        %v7008 = vmul.f32 %v7001, %v7006
        %v7009 = vlaneseq
        %v7010 = vshrl.u32 %v7009, 7
        %v7011 = vsub.s32 1, %v7010
        %v7012 = vrot.slane %v7002, %v7011
        %v7013 = vadd.f32 %v7007, %v7012
        %v7014 = vadd.f32 %v7008, %v7012
        %v7015 = vmax.f32 %v7013, 0.0
        %v7016 = vmax.f32 %v7014, 0.0
        %v7017 = vpack.c.bf16 %v7016, %v7015
        %v7018 = vld [vmem:[%s18] sm:$0xf]
        %v7019 = vld [vmem:[%s18 + $0x4] sm:$0xf]
        %v7020 = vld [vmem:[%s18 + $0x8] sm:$0xf]
        %v7021 = vld [vmem:[%s18 + $0xc] sm:$0xf]
        %v7022 = vld [vmem:[%s18 + $0x10] sm:$0xf]
        %v7023 = vld [vmem:[%s18 + $0x14] sm:$0xf]
        %v7024 = vld [vmem:[%s18 + $0x18] sm:$0xf]
        %v7025 = vld [vmem:[%s18 + $0x1c] sm:$0xf]
        %v7026 = vld [vmem:[#allocation24] sm:$0xf]
        %v7027 = vld [vmem:[#allocation24 + $0x4] sm:$0xf]
        %v7028 = vld [vmem:[#allocation24 + $0x8] sm:$0xf]
        %v7029 = vld [vmem:[#allocation24 + $0xc] sm:$0xf]
        %v7030 = vld [vmem:[#allocation24 + $0x10] sm:$0xf]
        %v7031 = vld [vmem:[#allocation24 + $0x14] sm:$0xf]
        %v7032 = vld [vmem:[#allocation24 + $0x18] sm:$0xf]
        %v7033 = vld [vmem:[#allocation24 + $0x1c] sm:$0xf]
        %v7042 = vunpack.c.l.b16 %v7026
        %v7043 = vunpack.c.l.b16 %v7027
        %v7044 = vunpack.c.l.b16 %v7028
        %v7045 = vunpack.c.l.b16 %v7029
        %v7046 = vunpack.c.l.b16 %v7030
        %v7047 = vunpack.c.l.b16 %v7031
        %v7048 = vunpack.c.l.b16 %v7032
        %v7049 = vunpack.c.l.b16 %v7033
        %v7050 = vpack.c.b16 %v7043, %v7042
        %v7051 = vpack.c.b16 %v7045, %v7044
        %v7052 = vpack.c.b16 %v7047, %v7046
        %v7053 = vpack.c.b16 %v7049, %v7048
        %7058 = vmatprep.subr.bf16.mxu0 0
        %7059 = vmatpush1.bf16.msra.mxu0 %v7050
        %7060 = vmatprep.subr.bf16.mxu0 0
        %7061 = vmatpush1.bf16.msra.mxu0 %v7051
        %7062 = vmatprep.subr.bf16.mxu0 0
        %7063 = vmatpush1.bf16.msra.mxu0 %v7052
        %7064 = vmatprep.subr.bf16.mxu0 0
        %7065 = vmatpush1.bf16.msra.mxu0 %v7053
        %7066 = vmatprep.subr.bf16.mxu0 0
        %7067 = vmatpush1.bf16.msra.mxu0 0
        %7068 = vmatprep.subr.bf16.mxu0 0
        %7069 = vmatpush1.bf16.msra.mxu0 0
        %7070 = vmatprep.subr.bf16.mxu0 0
        %7071 = vmatpush1.bf16.msra.mxu0 0
        %7072 = vmatprep.subr.bf16.mxu0 0
        %7073 = vmatpush1.bf16.msra.mxu0 0
        %7074 = vmatprep.subr.bf16.mxu0 0
        %7075 = vmatpush1.bf16.msra.mxu0 0
        %7076 = vmatprep.subr.bf16.mxu0 0
        %7077 = vmatpush1.bf16.msra.mxu0 0
        %7078 = vmatprep.subr.bf16.mxu0 0
        %7079 = vmatpush1.bf16.msra.mxu0 0
        %7080 = vmatprep.subr.bf16.mxu0 0
        %7081 = vmatpush1.bf16.msra.mxu0 0
        %7082 = vmatprep.subr.bf16.mxu0 0
        %7083 = vmatpush1.bf16.msra.mxu0 0
        %7084 = vmatprep.subr.bf16.mxu0 0
        %7085 = vmatpush1.bf16.msra.mxu0 0
        %7086 = vmatprep.subr.bf16.mxu0 0
        %7087 = vmatpush1.bf16.msra.mxu0 0
        %7088 = vmatprep.subr.bf16.mxu0 0
        %7089 = vmatpush1.bf16.msra.mxu0 0
        %7090 = vmatprep.mubr.bf16.mxu0 0
        %7091 = vmatmul.mubr.bf16.gmra.mrb[0].mxu0 %v2659
        %v7092 = vpop.f32.mrb[0].mxu0
        %v7093 = vadd.f32 0.0, %v7092
        %v7094 = vpop.f32.mrb[0].mxu0
        %v7095 = vpop.f32.mrb[0].mxu0
        %v7096 = vadd.f32 0.0, %v7095
        %v7097 = vpop.f32.mrb[0].mxu0
        %7098 = vdwg.mxu0
        %v7107 = vunpack.c.l.b16 %v7018
        %v7108 = vunpack.c.l.b16 %v7019
        %v7109 = vunpack.c.l.b16 %v7020
        %v7110 = vunpack.c.l.b16 %v7021
        %v7111 = vunpack.c.l.b16 %v7022
        %v7112 = vunpack.c.l.b16 %v7023
        %v7113 = vunpack.c.l.b16 %v7024
        %v7114 = vunpack.c.l.b16 %v7025
        %v7115 = vpack.c.b16 %v7108, %v7107
        %v7116 = vpack.c.b16 %v7110, %v7109
        %v7117 = vpack.c.b16 %v7112, %v7111
        %v7118 = vpack.c.b16 %v7114, %v7113
        %v7124 = vsel %vm1241, %v7017, 0
        %7126 = vmatprep.subr.bf16.mxu0 0
        %7127 = vmatpush1.bf16.msra.mxu0 %v7115
        %7128 = vmatprep.subr.bf16.mxu0 0
        %7129 = vmatpush1.bf16.msra.mxu0 %v7116
        %7130 = vmatprep.subr.bf16.mxu0 0
        %7131 = vmatpush1.bf16.msra.mxu0 %v7117
        %7132 = vmatprep.subr.bf16.mxu0 0
        %7133 = vmatpush1.bf16.msra.mxu0 %v7118
        %7134 = vmatprep.subr.bf16.mxu0 0
        %7135 = vmatpush1.bf16.msra.mxu0 0
        %7136 = vmatprep.subr.bf16.mxu0 0
        %7137 = vmatpush1.bf16.msra.mxu0 0
        %7138 = vmatprep.subr.bf16.mxu0 0
        %7139 = vmatpush1.bf16.msra.mxu0 0
        %7140 = vmatprep.subr.bf16.mxu0 0
        %7141 = vmatpush1.bf16.msra.mxu0 0
        %7142 = vmatprep.subr.bf16.mxu0 0
        %7143 = vmatpush1.bf16.msra.mxu0 0
        %7144 = vmatprep.subr.bf16.mxu0 0
        %7145 = vmatpush1.bf16.msra.mxu0 0
        %7146 = vmatprep.subr.bf16.mxu0 0
        %7147 = vmatpush1.bf16.msra.mxu0 0
        %7148 = vmatprep.subr.bf16.mxu0 0
        %7149 = vmatpush1.bf16.msra.mxu0 0
        %7150 = vmatprep.subr.bf16.mxu0 0
        %7151 = vmatpush1.bf16.msra.mxu0 0
        %7152 = vmatprep.subr.bf16.mxu0 0
        %7153 = vmatpush1.bf16.msra.mxu0 0
        %7154 = vmatprep.subr.bf16.mxu0 0
        %7155 = vmatpush1.bf16.msra.mxu0 0
        %7156 = vmatprep.subr.bf16.mxu0 0
        %7157 = vmatpush1.bf16.msra.mxu0 0
        %7158 = vmatprep.mubr.bf16.mxu0 0
        %7159 = vmatmul.mubr.bf16.gmra.mrb[0].mxu0 %v7124
        %v7160 = vpop.f32.mrb[0].mxu0
        %v7161 = vadd.f32 %v7093, %v7160
        %v7162 = vpop.f32.mrb[0].mxu0
        %v7163 = vpop.f32.mrb[0].mxu0
        %v7164 = vadd.f32 %v7096, %v7163
        %v7165 = vpop.f32.mrb[0].mxu0
        %7166 = vdwg.mxu0
        %vm7167 = vcmp.eq.s32.totalorder %v1153, %v6640
        %vm7168 = vcmp.eq.s32.totalorder %v1154, %v6640
        %vm7169 = vcmp.eq.s32.totalorder %v1155, %v6640
        %vm7170 = vcmp.eq.s32.totalorder %v1156, %v6640
        %vm7171 = vcmp.eq.s32.totalorder %v1157, %v6640
        %vm7172 = vcmp.eq.s32.totalorder %v1158, %v6640
        %v7173 = vsel %vm7167, 1.0, 0.0
        %v7174 = vsel %vm7168, 1.0, 0.0
        %v7175 = vsel %vm7169, 1.0, 0.0
        %v7176 = vsel %vm7170, 1.0, 0.0
        %v7177 = vsel %vm7171, 1.0, 0.0
        %v7178 = vsel %vm7172, 1.0, 0.0
        %vm7179 = vcmp.eq.s32.totalorder %v1153, %v6645
        %vm7180 = vcmp.eq.s32.totalorder %v1154, %v6645
        %vm7181 = vcmp.eq.s32.totalorder %v1155, %v6645
        %vm7182 = vcmp.eq.s32.totalorder %v1156, %v6645
        %vm7183 = vcmp.eq.s32.totalorder %v1157, %v6645
        %vm7184 = vcmp.eq.s32.totalorder %v1158, %v6645
        %v7185 = vsel %vm7179, 1.0, 0.0
        %v7186 = vsel %vm7180, 1.0, 0.0
        %v7187 = vsel %vm7181, 1.0, 0.0
        %v7188 = vsel %vm7182, 1.0, 0.0
        %v7189 = vsel %vm7183, 1.0, 0.0
        %v7190 = vsel %vm7184, 1.0, 0.0
        %7193 = vrot.lane.b32.xlu0 %v7161, 96
        %v7194 = vpop.permute.xlu0 %7193
        %7195 = vrot.lane.b32.xlu0 %v7164, 96
        %v7196 = vpop.permute.xlu0 %7195
        %v7199 = vsel %vm2788, %v6648, 0
        %v7201 = vsel %vm2788, %v6649, 0
        %v7204 = vsel %vm2788, %v7185, 0
        %v7207 = vsel %vm2788, %v7186, 0
        %v7210 = vsel %vm2788, %v7187, 0
        %v7213 = vsel %vm2788, %v7188, 0
        %v7216 = vsel %vm2788, %v7189, 0
        %v7219 = vsel %vm2788, %v7190, 0
        %7221 = vmatprep.subr.mxu0 0.0
        %7222 = vmatpush1.msra.mxu0 %v7194
        %7223 = vmatprep.subr.mxu0 0.0
        %7224 = vmatpush1.msra.mxu0 %v7196
        %7225 = vmatprep.subr.mxu0 0.0
        %7226 = vmatpush1.msra.mxu0 0.0
        %7227 = vmatprep.subr.mxu0 0.0
        %7228 = vmatpush1.msra.mxu0 0.0
        %7229 = vmatprep.subr.mxu0 0.0
        %7230 = vmatpush1.msra.mxu0 0.0
        %7231 = vmatprep.subr.mxu0 0.0
        %7232 = vmatpush1.msra.mxu0 0.0
        %7233 = vmatprep.subr.mxu0 0.0
        %7234 = vmatpush1.msra.mxu0 0.0
        %7235 = vmatprep.subr.mxu0 0.0
        %7236 = vmatpush1.msra.mxu0 0.0
        %7237 = vmatprep.subr.mxu0 0.0
        %7238 = vmatpush1.msra.mxu0 0.0
        %7239 = vmatprep.subr.mxu0 0.0
        %7240 = vmatpush1.msra.mxu0 0.0
        %7241 = vmatprep.subr.mxu0 0.0
        %7242 = vmatpush1.msra.mxu0 0.0
        %7243 = vmatprep.subr.mxu0 0.0
        %7244 = vmatpush1.msra.mxu0 0.0
        %7245 = vmatprep.subr.mxu0 0.0
        %7246 = vmatpush1.msra.mxu0 0.0
        %7247 = vmatprep.subr.mxu0 0.0
        %7248 = vmatpush1.msra.mxu0 0.0
        %7249 = vmatprep.subr.mxu0 0.0
        %7250 = vmatpush1.msra.mxu0 0.0
        %7251 = vmatprep.subr.mxu0 0.0
        %7252 = vmatpush1.msra.mxu0 0.0
        %7253 = vmatprep.subr.mxu0 0.0
        %7254 = vmatpush1.msra.mxu0 0.0
        %7255 = vmatprep.subr.mxu0 0.0
        %7256 = vmatpush1.msra.mxu0 0.0
        %7257 = vmatprep.subr.mxu0 0.0
        %7258 = vmatpush1.msra.mxu0 0.0
        %7259 = vmatprep.subr.mxu0 0.0
        %7260 = vmatpush1.msra.mxu0 0.0
        %7261 = vmatprep.subr.mxu0 0.0
        %7262 = vmatpush1.msra.mxu0 0.0
        %7263 = vmatprep.subr.mxu0 0.0
        %7264 = vmatpush1.msra.mxu0 0.0
        %7265 = vmatprep.subr.mxu0 0.0
        %7266 = vmatpush1.msra.mxu0 0.0
        %7267 = vmatprep.subr.mxu0 0.0
        %7268 = vmatpush1.msra.mxu0 0.0
        %7269 = vmatprep.subr.mxu0 0.0
        %7270 = vmatpush1.msra.mxu0 0.0
        %7271 = vmatprep.subr.mxu0 0.0
        %7272 = vmatpush1.msra.mxu0 0.0
        %7273 = vmatprep.subr.mxu0 0.0
        %7274 = vmatpush1.msra.mxu0 0.0
        %7275 = vmatprep.subr.mxu0 0.0
        %7276 = vmatpush1.msra.mxu0 0.0
        %7277 = vmatprep.subr.mxu0 0.0
        %7278 = vmatpush1.msra.mxu0 0.0
        %7279 = vmatprep.subr.mxu0 0.0
        %7280 = vmatpush1.msra.mxu0 0.0
        %7281 = vmatprep.subr.mxu0 0.0
        %7282 = vmatpush1.msra.mxu0 0.0
        %7283 = vmatprep.subr.mxu0 0.0
        %7284 = vmatpush1.msra.mxu0 0.0
        %7285 = vmatprep.mubr.f32.mxu0 0.0
        %7286 = vmatmul.mubr.f32.gmra.mrb[0].mxu0 %v7199
        %v7287 = vpop.f32.mrb[0].mxu0
        %v7288 = vadd.f32 0.0, %v7287
        %v7289 = vpop.f32.mrb[0].mxu0
        %7290 = vmatprep.mubr.f32.mxu0 0.0
        %7291 = vmatmul.mubr.f32.gmra.mrb[0].mxu0 %v7201
        %v7292 = vpop.f32.mrb[0].mxu0
        %v7293 = vadd.f32 0.0, %v7292
        %v7294 = vpop.f32.mrb[0].mxu0
        %7295 = vmatprep.mubr.f32.mxu0 0.0
        %7296 = vmatmul.mubr.f32.gmra.mrb[0].mxu0 %v7204
        %v7297 = vpop.f32.mrb[0].mxu0
        %v7298 = vadd.f32 0.0, %v7297
        %v7299 = vpop.f32.mrb[0].mxu0
        %7300 = vmatprep.mubr.f32.mxu0 0.0
        %7301 = vmatmul.mubr.f32.gmra.mrb[0].mxu0 %v7207
        %v7302 = vpop.f32.mrb[0].mxu0
        %v7303 = vadd.f32 0.0, %v7302
        %v7304 = vpop.f32.mrb[0].mxu0
        %7305 = vmatprep.mubr.f32.mxu0 0.0
        %7306 = vmatmul.mubr.f32.gmra.mrb[0].mxu0 %v7210
        %v7307 = vpop.f32.mrb[0].mxu0
        %v7308 = vadd.f32 0.0, %v7307
        %v7309 = vpop.f32.mrb[0].mxu0
        %7310 = vmatprep.mubr.f32.mxu0 0.0
        %7311 = vmatmul.mubr.f32.gmra.mrb[0].mxu0 %v7213
        %v7312 = vpop.f32.mrb[0].mxu0
        %v7313 = vadd.f32 0.0, %v7312
        %v7314 = vpop.f32.mrb[0].mxu0
        %7315 = vmatprep.mubr.f32.mxu0 0.0
        %7316 = vmatmul.mubr.f32.gmra.mrb[0].mxu0 %v7216
        %v7317 = vpop.f32.mrb[0].mxu0
        %v7318 = vadd.f32 0.0, %v7317
        %v7319 = vpop.f32.mrb[0].mxu0
        %7320 = vmatprep.mubr.f32.mxu0 0.0
        %7321 = vmatmul.mubr.f32.gmra.mrb[0].mxu0 %v7219
        %v7322 = vpop.f32.mrb[0].mxu0
        %v7323 = vadd.f32 0.0, %v7322
        %v7324 = vpop.f32.mrb[0].mxu0
        %7325 = vdwg.mxu0
        %v7326 = vsel %vm2788, %v6643, 0
        %v7328 = vsel %vm2788, %v6644, 0
        %v7331 = vsel %vm2788, %v7173, 0
        %v7334 = vsel %vm2788, %v7174, 0
        %v7337 = vsel %vm2788, %v7175, 0
        %v7340 = vsel %vm2788, %v7176, 0
        %v7343 = vsel %vm2788, %v7177, 0
        %v7346 = vsel %vm2788, %v7178, 0
        %7348 = vmatprep.subr.mxu0 0.0
        %7349 = vmatpush1.msra.mxu0 %v7161
        %7350 = vmatprep.subr.mxu0 0.0
        %7351 = vmatpush1.msra.mxu0 %v7164
        %7352 = vmatprep.subr.mxu0 0.0
        %7353 = vmatpush1.msra.mxu0 0.0
        %7354 = vmatprep.subr.mxu0 0.0
        %7355 = vmatpush1.msra.mxu0 0.0
        %7356 = vmatprep.subr.mxu0 0.0
        %7357 = vmatpush1.msra.mxu0 0.0
        %7358 = vmatprep.subr.mxu0 0.0
        %7359 = vmatpush1.msra.mxu0 0.0
        %7360 = vmatprep.subr.mxu0 0.0
        %7361 = vmatpush1.msra.mxu0 0.0
        %7362 = vmatprep.subr.mxu0 0.0
        %7363 = vmatpush1.msra.mxu0 0.0
        %7364 = vmatprep.subr.mxu0 0.0
        %7365 = vmatpush1.msra.mxu0 0.0
        %7366 = vmatprep.subr.mxu0 0.0
        %7367 = vmatpush1.msra.mxu0 0.0
        %7368 = vmatprep.subr.mxu0 0.0
        %7369 = vmatpush1.msra.mxu0 0.0
        %7370 = vmatprep.subr.mxu0 0.0
        %7371 = vmatpush1.msra.mxu0 0.0
        %7372 = vmatprep.subr.mxu0 0.0
        %7373 = vmatpush1.msra.mxu0 0.0
        %7374 = vmatprep.subr.mxu0 0.0
        %7375 = vmatpush1.msra.mxu0 0.0
        %7376 = vmatprep.subr.mxu0 0.0
        %7377 = vmatpush1.msra.mxu0 0.0
        %7378 = vmatprep.subr.mxu0 0.0
        %7379 = vmatpush1.msra.mxu0 0.0
        %7380 = vmatprep.subr.mxu0 0.0
        %7381 = vmatpush1.msra.mxu0 0.0
        %7382 = vmatprep.subr.mxu0 0.0
        %7383 = vmatpush1.msra.mxu0 0.0
        %7384 = vmatprep.subr.mxu0 0.0
        %7385 = vmatpush1.msra.mxu0 0.0
        %7386 = vmatprep.subr.mxu0 0.0
        %7387 = vmatpush1.msra.mxu0 0.0
        %7388 = vmatprep.subr.mxu0 0.0
        %7389 = vmatpush1.msra.mxu0 0.0
        %7390 = vmatprep.subr.mxu0 0.0
        %7391 = vmatpush1.msra.mxu0 0.0
        %7392 = vmatprep.subr.mxu0 0.0
        %7393 = vmatpush1.msra.mxu0 0.0
        %7394 = vmatprep.subr.mxu0 0.0
        %7395 = vmatpush1.msra.mxu0 0.0
        %7396 = vmatprep.subr.mxu0 0.0
        %7397 = vmatpush1.msra.mxu0 0.0
        %7398 = vmatprep.subr.mxu0 0.0
        %7399 = vmatpush1.msra.mxu0 0.0
        %7400 = vmatprep.subr.mxu0 0.0
        %7401 = vmatpush1.msra.mxu0 0.0
        %7402 = vmatprep.subr.mxu0 0.0
        %7403 = vmatpush1.msra.mxu0 0.0
        %7404 = vmatprep.subr.mxu0 0.0
        %7405 = vmatpush1.msra.mxu0 0.0
        %7406 = vmatprep.subr.mxu0 0.0
        %7407 = vmatpush1.msra.mxu0 0.0
        %7408 = vmatprep.subr.mxu0 0.0
        %7409 = vmatpush1.msra.mxu0 0.0
        %7410 = vmatprep.subr.mxu0 0.0
        %7411 = vmatpush1.msra.mxu0 0.0
        %7412 = vmatprep.mubr.f32.mxu0 0.0
        %7413 = vmatmul.mubr.f32.gmra.mrb[0].mxu0 %v7326
        %v7414 = vpop.f32.mrb[0].mxu0
        %v7415 = vadd.f32 %v7288, %v7414
        %v7416 = vpop.f32.mrb[0].mxu0
        %7417 = vmatprep.mubr.f32.mxu0 0.0
        %7418 = vmatmul.mubr.f32.gmra.mrb[0].mxu0 %v7328
        %v7419 = vpop.f32.mrb[0].mxu0
        %v7420 = vadd.f32 %v7293, %v7419
        %v7421 = vpop.f32.mrb[0].mxu0
        %7422 = vmatprep.mubr.f32.mxu0 0.0
        %7423 = vmatmul.mubr.f32.gmra.mrb[0].mxu0 %v7331
        %v7424 = vpop.f32.mrb[0].mxu0
        %v7425 = vadd.f32 %v7298, %v7424
        %v7426 = vpop.f32.mrb[0].mxu0
        %7427 = vmatprep.mubr.f32.mxu0 0.0
        %7428 = vmatmul.mubr.f32.gmra.mrb[0].mxu0 %v7334
        %v7429 = vpop.f32.mrb[0].mxu0
        %v7430 = vadd.f32 %v7303, %v7429
        %v7431 = vpop.f32.mrb[0].mxu0
        %7432 = vmatprep.mubr.f32.mxu0 0.0
        %7433 = vmatmul.mubr.f32.gmra.mrb[0].mxu0 %v7337
        %v7434 = vpop.f32.mrb[0].mxu0
        %v7435 = vadd.f32 %v7308, %v7434
        %v7436 = vpop.f32.mrb[0].mxu0
        %7437 = vmatprep.mubr.f32.mxu0 0.0
        %7438 = vmatmul.mubr.f32.gmra.mrb[0].mxu0 %v7340
        %v7439 = vpop.f32.mrb[0].mxu0
        %v7440 = vadd.f32 %v7313, %v7439
        %v7441 = vpop.f32.mrb[0].mxu0
        %7442 = vmatprep.mubr.f32.mxu0 0.0
        %7443 = vmatmul.mubr.f32.gmra.mrb[0].mxu0 %v7343
        %v7444 = vpop.f32.mrb[0].mxu0
        %v7445 = vadd.f32 %v7318, %v7444
        %v7446 = vpop.f32.mrb[0].mxu0
        %7447 = vmatprep.mubr.f32.mxu0 0.0
        %7448 = vmatmul.mubr.f32.gmra.mrb[0].mxu0 %v7346
        %v7449 = vpop.f32.mrb[0].mxu0
        %v7450 = vadd.f32 %v7323, %v7449
        %v7451 = vpop.f32.mrb[0].mxu0
        %7452 = vdwg.mxu0
        %vm7453 = vcmp.eq.s32.totalorder %v1153, %v6819
        %vm7454 = vcmp.eq.s32.totalorder %v1154, %v6819
        %vm7455 = vcmp.eq.s32.totalorder %v1155, %v6819
        %vm7456 = vcmp.eq.s32.totalorder %v1156, %v6819
        %vm7457 = vcmp.eq.s32.totalorder %v1157, %v6819
        %vm7458 = vcmp.eq.s32.totalorder %v1158, %v6819
        %v7459 = vsel %vm7453, 1.0, 0.0
        %v7460 = vsel %vm7454, 1.0, 0.0
        %v7461 = vsel %vm7455, 1.0, 0.0
        %v7462 = vsel %vm7456, 1.0, 0.0
        %v7463 = vsel %vm7457, 1.0, 0.0
        %v7464 = vsel %vm7458, 1.0, 0.0
        %7465 = vrot.lane.b32.xlu0 %v7161, 64
        %v7466 = vpop.permute.xlu0 %7465
        %7467 = vrot.lane.b32.xlu0 %v7164, 64
        %v7468 = vpop.permute.xlu0 %7467
        %v7471 = vsel %vm2788, %v6822, 0
        %v7473 = vsel %vm2788, %v6823, 0
        %v7476 = vsel %vm2788, %v7459, 0
        %v7479 = vsel %vm2788, %v7460, 0
        %v7482 = vsel %vm2788, %v7461, 0
        %v7485 = vsel %vm2788, %v7462, 0
        %v7488 = vsel %vm2788, %v7463, 0
        %v7491 = vsel %vm2788, %v7464, 0
        %7493 = vmatprep.subr.mxu0 0.0
        %7494 = vmatpush1.msra.mxu0 %v7466
        %7495 = vmatprep.subr.mxu0 0.0
        %7496 = vmatpush1.msra.mxu0 %v7468
        %7497 = vmatprep.subr.mxu0 0.0
        %7498 = vmatpush1.msra.mxu0 0.0
        %7499 = vmatprep.subr.mxu0 0.0
        %7500 = vmatpush1.msra.mxu0 0.0
        %7501 = vmatprep.subr.mxu0 0.0
        %7502 = vmatpush1.msra.mxu0 0.0
        %7503 = vmatprep.subr.mxu0 0.0
        %7504 = vmatpush1.msra.mxu0 0.0
        %7505 = vmatprep.subr.mxu0 0.0
        %7506 = vmatpush1.msra.mxu0 0.0
        %7507 = vmatprep.subr.mxu0 0.0
        %7508 = vmatpush1.msra.mxu0 0.0
        %7509 = vmatprep.subr.mxu0 0.0
        %7510 = vmatpush1.msra.mxu0 0.0
        %7511 = vmatprep.subr.mxu0 0.0
        %7512 = vmatpush1.msra.mxu0 0.0
        %7513 = vmatprep.subr.mxu0 0.0
        %7514 = vmatpush1.msra.mxu0 0.0
        %7515 = vmatprep.subr.mxu0 0.0
        %7516 = vmatpush1.msra.mxu0 0.0
        %7517 = vmatprep.subr.mxu0 0.0
        %7518 = vmatpush1.msra.mxu0 0.0
        %7519 = vmatprep.subr.mxu0 0.0
        %7520 = vmatpush1.msra.mxu0 0.0
        %7521 = vmatprep.subr.mxu0 0.0
        %7522 = vmatpush1.msra.mxu0 0.0
        %7523 = vmatprep.subr.mxu0 0.0
        %7524 = vmatpush1.msra.mxu0 0.0
        %7525 = vmatprep.subr.mxu0 0.0
        %7526 = vmatpush1.msra.mxu0 0.0
        %7527 = vmatprep.subr.mxu0 0.0
        %7528 = vmatpush1.msra.mxu0 0.0
        %7529 = vmatprep.subr.mxu0 0.0
        %7530 = vmatpush1.msra.mxu0 0.0
        %7531 = vmatprep.subr.mxu0 0.0
        %7532 = vmatpush1.msra.mxu0 0.0
        %7533 = vmatprep.subr.mxu0 0.0
        %7534 = vmatpush1.msra.mxu0 0.0
        %7535 = vmatprep.subr.mxu0 0.0
        %7536 = vmatpush1.msra.mxu0 0.0
        %7537 = vmatprep.subr.mxu0 0.0
        %7538 = vmatpush1.msra.mxu0 0.0
        %7539 = vmatprep.subr.mxu0 0.0
        %7540 = vmatpush1.msra.mxu0 0.0
        %7541 = vmatprep.subr.mxu0 0.0
        %7542 = vmatpush1.msra.mxu0 0.0
        %7543 = vmatprep.subr.mxu0 0.0
        %7544 = vmatpush1.msra.mxu0 0.0
        %7545 = vmatprep.subr.mxu0 0.0
        %7546 = vmatpush1.msra.mxu0 0.0
        %7547 = vmatprep.subr.mxu0 0.0
        %7548 = vmatpush1.msra.mxu0 0.0
        %7549 = vmatprep.subr.mxu0 0.0
        %7550 = vmatpush1.msra.mxu0 0.0
        %7551 = vmatprep.subr.mxu0 0.0
        %7552 = vmatpush1.msra.mxu0 0.0
        %7553 = vmatprep.subr.mxu0 0.0
        %7554 = vmatpush1.msra.mxu0 0.0
        %7555 = vmatprep.subr.mxu0 0.0
        %7556 = vmatpush1.msra.mxu0 0.0
        %7557 = vmatprep.mubr.f32.mxu0 0.0
        %7558 = vmatmul.mubr.f32.gmra.mrb[0].mxu0 %v7471
        %v7559 = vpop.f32.mrb[0].mxu0
        %v7560 = vadd.f32 0.0, %v7559
        %v7561 = vpop.f32.mrb[0].mxu0
        %7562 = vmatprep.mubr.f32.mxu0 0.0
        %7563 = vmatmul.mubr.f32.gmra.mrb[0].mxu0 %v7473
        %v7564 = vpop.f32.mrb[0].mxu0
        %v7565 = vadd.f32 0.0, %v7564
        %v7566 = vpop.f32.mrb[0].mxu0
        %7567 = vmatprep.mubr.f32.mxu0 0.0
        %7568 = vmatmul.mubr.f32.gmra.mrb[0].mxu0 %v7476
        %v7569 = vpop.f32.mrb[0].mxu0
        %v7570 = vadd.f32 0.0, %v7569
        %v7571 = vpop.f32.mrb[0].mxu0
        %7572 = vmatprep.mubr.f32.mxu0 0.0
        %7573 = vmatmul.mubr.f32.gmra.mrb[0].mxu0 %v7479
        %v7574 = vpop.f32.mrb[0].mxu0
        %v7575 = vadd.f32 0.0, %v7574
        %v7576 = vpop.f32.mrb[0].mxu0
        %7577 = vmatprep.mubr.f32.mxu0 0.0
        %7578 = vmatmul.mubr.f32.gmra.mrb[0].mxu0 %v7482
        %v7579 = vpop.f32.mrb[0].mxu0
        %v7580 = vadd.f32 0.0, %v7579
        %v7581 = vpop.f32.mrb[0].mxu0
        %7582 = vmatprep.mubr.f32.mxu0 0.0
        %7583 = vmatmul.mubr.f32.gmra.mrb[0].mxu0 %v7485
        %v7584 = vpop.f32.mrb[0].mxu0
        %v7585 = vadd.f32 0.0, %v7584
        %v7586 = vpop.f32.mrb[0].mxu0
        %7587 = vmatprep.mubr.f32.mxu0 0.0
        %7588 = vmatmul.mubr.f32.gmra.mrb[0].mxu0 %v7488
        %v7589 = vpop.f32.mrb[0].mxu0
        %v7590 = vadd.f32 0.0, %v7589
        %v7591 = vpop.f32.mrb[0].mxu0
        %7592 = vmatprep.mubr.f32.mxu0 0.0
        %7593 = vmatmul.mubr.f32.gmra.mrb[0].mxu0 %v7491
        %v7594 = vpop.f32.mrb[0].mxu0
        %v7595 = vadd.f32 0.0, %v7594
        %v7596 = vpop.f32.mrb[0].mxu0
        %7597 = vdwg.mxu0
        %v7598 = vadd.f32 %v7415, %v7560
        %v7599 = vadd.f32 %v7420, %v7565
        %v7600 = vadd.f32 %v7425, %v7570
        %v7601 = vadd.f32 %v7430, %v7575
        %v7602 = vadd.f32 %v7435, %v7580
        %v7603 = vadd.f32 %v7440, %v7585
        %v7604 = vadd.f32 %v7445, %v7590
        %v7605 = vadd.f32 %v7450, %v7595
        %vm7606 = vcmp.eq.s32.totalorder %v1153, %v6910
        %vm7607 = vcmp.eq.s32.totalorder %v1154, %v6910
        %vm7608 = vcmp.eq.s32.totalorder %v1155, %v6910
        %vm7609 = vcmp.eq.s32.totalorder %v1156, %v6910
        %vm7610 = vcmp.eq.s32.totalorder %v1157, %v6910
        %vm7611 = vcmp.eq.s32.totalorder %v1158, %v6910
        %v7612 = vsel %vm7606, 1.0, 0.0
        %v7613 = vsel %vm7607, 1.0, 0.0
        %v7614 = vsel %vm7608, 1.0, 0.0
        %v7615 = vsel %vm7609, 1.0, 0.0
        %v7616 = vsel %vm7610, 1.0, 0.0
        %v7617 = vsel %vm7611, 1.0, 0.0
        %7618 = vrot.lane.b32.xlu0 %v7161, 32
        %v7619 = vpop.permute.xlu0 %7618
        %7620 = vrot.lane.b32.xlu0 %v7164, 32
        %v7621 = vpop.permute.xlu0 %7620
        %v7624 = vsel %vm2788, %v6913, 0
        %v7626 = vsel %vm2788, %v6914, 0
        %v7629 = vsel %vm2788, %v7612, 0
        %v7632 = vsel %vm2788, %v7613, 0
        %v7635 = vsel %vm2788, %v7614, 0
        %v7638 = vsel %vm2788, %v7615, 0
        %v7641 = vsel %vm2788, %v7616, 0
        %v7644 = vsel %vm2788, %v7617, 0
        %7646 = vmatprep.subr.mxu0 0.0
        %7647 = vmatpush1.msra.mxu0 %v7619
        %7648 = vmatprep.subr.mxu0 0.0
        %7649 = vmatpush1.msra.mxu0 %v7621
        %7650 = vmatprep.subr.mxu0 0.0
        %7651 = vmatpush1.msra.mxu0 0.0
        %7652 = vmatprep.subr.mxu0 0.0
        %7653 = vmatpush1.msra.mxu0 0.0
        %7654 = vmatprep.subr.mxu0 0.0
        %7655 = vmatpush1.msra.mxu0 0.0
        %7656 = vmatprep.subr.mxu0 0.0
        %7657 = vmatpush1.msra.mxu0 0.0
        %7658 = vmatprep.subr.mxu0 0.0
        %7659 = vmatpush1.msra.mxu0 0.0
        %7660 = vmatprep.subr.mxu0 0.0
        %7661 = vmatpush1.msra.mxu0 0.0
        %7662 = vmatprep.subr.mxu0 0.0
        %7663 = vmatpush1.msra.mxu0 0.0
        %7664 = vmatprep.subr.mxu0 0.0
        %7665 = vmatpush1.msra.mxu0 0.0
        %7666 = vmatprep.subr.mxu0 0.0
        %7667 = vmatpush1.msra.mxu0 0.0
        %7668 = vmatprep.subr.mxu0 0.0
        %7669 = vmatpush1.msra.mxu0 0.0
        %7670 = vmatprep.subr.mxu0 0.0
        %7671 = vmatpush1.msra.mxu0 0.0
        %7672 = vmatprep.subr.mxu0 0.0
        %7673 = vmatpush1.msra.mxu0 0.0
        %7674 = vmatprep.subr.mxu0 0.0
        %7675 = vmatpush1.msra.mxu0 0.0
        %7676 = vmatprep.subr.mxu0 0.0
        %7677 = vmatpush1.msra.mxu0 0.0
        %7678 = vmatprep.subr.mxu0 0.0
        %7679 = vmatpush1.msra.mxu0 0.0
        %7680 = vmatprep.subr.mxu0 0.0
        %7681 = vmatpush1.msra.mxu0 0.0
        %7682 = vmatprep.subr.mxu0 0.0
        %7683 = vmatpush1.msra.mxu0 0.0
        %7684 = vmatprep.subr.mxu0 0.0
        %7685 = vmatpush1.msra.mxu0 0.0
        %7686 = vmatprep.subr.mxu0 0.0
        %7687 = vmatpush1.msra.mxu0 0.0
        %7688 = vmatprep.subr.mxu0 0.0
        %7689 = vmatpush1.msra.mxu0 0.0
        %7690 = vmatprep.subr.mxu0 0.0
        %7691 = vmatpush1.msra.mxu0 0.0
        %7692 = vmatprep.subr.mxu0 0.0
        %7693 = vmatpush1.msra.mxu0 0.0
        %7694 = vmatprep.subr.mxu0 0.0
        %7695 = vmatpush1.msra.mxu0 0.0
        %7696 = vmatprep.subr.mxu0 0.0
        %7697 = vmatpush1.msra.mxu0 0.0
        %7698 = vmatprep.subr.mxu0 0.0
        %7699 = vmatpush1.msra.mxu0 0.0
        %7700 = vmatprep.subr.mxu0 0.0
        %7701 = vmatpush1.msra.mxu0 0.0
        %7702 = vmatprep.subr.mxu0 0.0
        %7703 = vmatpush1.msra.mxu0 0.0
        %7704 = vmatprep.subr.mxu0 0.0
        %7705 = vmatpush1.msra.mxu0 0.0
        %7706 = vmatprep.subr.mxu0 0.0
        %7707 = vmatpush1.msra.mxu0 0.0
        %7708 = vmatprep.subr.mxu0 0.0
        %7709 = vmatpush1.msra.mxu0 0.0
        %7710 = vmatprep.mubr.f32.mxu0 0.0
        %7711 = vmatmul.mubr.f32.gmra.mrb[0].mxu0 %v7624
        %v7712 = vpop.f32.mrb[0].mxu0
        %v7713 = vadd.f32 0.0, %v7712
        %v7714 = vpop.f32.mrb[0].mxu0
        %7715 = vmatprep.mubr.f32.mxu0 0.0
        %7716 = vmatmul.mubr.f32.gmra.mrb[0].mxu0 %v7626
        %v7717 = vpop.f32.mrb[0].mxu0
        %v7718 = vadd.f32 0.0, %v7717
        %v7719 = vpop.f32.mrb[0].mxu0
        %7720 = vmatprep.mubr.f32.mxu0 0.0
        %7721 = vmatmul.mubr.f32.gmra.mrb[0].mxu0 %v7629
        %v7722 = vpop.f32.mrb[0].mxu0
        %v7723 = vadd.f32 0.0, %v7722
        %v7724 = vpop.f32.mrb[0].mxu0
        %7725 = vmatprep.mubr.f32.mxu0 0.0
        %7726 = vmatmul.mubr.f32.gmra.mrb[0].mxu0 %v7632
        %v7727 = vpop.f32.mrb[0].mxu0
        %v7728 = vadd.f32 0.0, %v7727
        %v7729 = vpop.f32.mrb[0].mxu0
        %7730 = vmatprep.mubr.f32.mxu0 0.0
        %7731 = vmatmul.mubr.f32.gmra.mrb[0].mxu0 %v7635
        %v7732 = vpop.f32.mrb[0].mxu0
        %v7733 = vadd.f32 0.0, %v7732
        %v7734 = vpop.f32.mrb[0].mxu0
        %7735 = vmatprep.mubr.f32.mxu0 0.0
        %7736 = vmatmul.mubr.f32.gmra.mrb[0].mxu0 %v7638
        %v7737 = vpop.f32.mrb[0].mxu0
        %v7738 = vadd.f32 0.0, %v7737
        %v7739 = vpop.f32.mrb[0].mxu0
        %7740 = vmatprep.mubr.f32.mxu0 0.0
        %7741 = vmatmul.mubr.f32.gmra.mrb[0].mxu0 %v7641
        %v7742 = vpop.f32.mrb[0].mxu0
        %v7743 = vadd.f32 0.0, %v7742
        %v7744 = vpop.f32.mrb[0].mxu0
        %7745 = vmatprep.mubr.f32.mxu0 0.0
        %7746 = vmatmul.mubr.f32.gmra.mrb[0].mxu0 %v7644
        %v7747 = vpop.f32.mrb[0].mxu0
        %v7748 = vadd.f32 0.0, %v7747
        %v7749 = vpop.f32.mrb[0].mxu0
        %7750 = vdwg.mxu0
        %v7751 = vadd.f32 %v7598, %v7713
        %v7752 = vadd.f32 %v7599, %v7718
        %v7753 = vadd.f32 %v7600, %v7723
        %v7754 = vadd.f32 %v7601, %v7728
        %v7755 = vadd.f32 %v7602, %v7733
        %v7756 = vadd.f32 %v7603, %v7738
        %v7757 = vadd.f32 %v7604, %v7743
        %v7758 = vadd.f32 %v7605, %v7748
        %v7759 = vld [vmem:[%s20] sm:$0x3]
        %v7760 = vlaneseq
        %v7761 = vshrl.u32 %v7760, 7
        %v7762 = vsub.s32 0, %v7761
        %v7763 = vrot.slane %v7759, %v7762
        %v7764 = vmul.f32 %v7751, %v7763
        %v7765 = vmul.f32 %v7752, %v7763
        %v7766 = vmul.f32 %v7753, %v7763
        %v7767 = vmul.f32 %v7754, %v7763
        %v7768 = vmul.f32 %v7755, %v7763
        %v7769 = vmul.f32 %v7756, %v7763
        %v7770 = vmul.f32 %v7757, %v7763
        %v7771 = vmul.f32 %v7758, %v7763
        %v7772 = vlaneseq
        %v7773 = vshrl.u32 %v7772, 7
        %v7774 = vsub.s32 1, %v7773
        %v7775 = vrot.slane %v7759, %v7774
        %v7776 = vadd.f32 %v7764, %v7775
        %v7777 = vadd.f32 %v7765, %v7775
        %v7778 = vadd.f32 %v7766, %v7775
        %v7779 = vadd.f32 %v7767, %v7775
        %v7780 = vadd.f32 %v7768, %v7775
        %v7781 = vadd.f32 %v7769, %v7775
        %v7782 = vadd.f32 %v7770, %v7775
        %v7783 = vadd.f32 %v7771, %v7775
        %v7784 = vmax.f32 %v7776, 0.0
        %v7785 = vmax.f32 %v7777, 0.0
        %v7786 = vmax.f32 %v7778, 0.0
        %v7787 = vmax.f32 %v7779, 0.0
        %v7788 = vmax.f32 %v7780, 0.0
        %v7789 = vmax.f32 %v7781, 0.0
        %v7790 = vmax.f32 %v7782, 0.0
        %v7791 = vmax.f32 %v7783, 0.0
        %v7792 = vpack.c.bf16 %v7785, %v7784
        %v7793 = vpack.c.bf16 %v7787, %v7786
        %v7794 = vpack.c.bf16 %v7789, %v7788
        %v7795 = vpack.c.bf16 %v7791, %v7790
        %v7796 = vld [vmem:[%s21] sm:$0xf]
        %v7797 = vld [vmem:[%s21 + $0x4] sm:$0xf]
        %v7798 = vld [vmem:[%s21 + $0x8] sm:$0xf]
        %v7799 = vld [vmem:[%s21 + $0xc] sm:$0xf]
        %v7800 = vld [vmem:[%s22] sm:$0x3]
        %v7802 = vsel %vm1002, %v7800, 0
        %7804 = vmatprep.subr.bf16.mxu0 0
        %7805 = vmatpush1.bf16.msra.mxu0 %v7802
        %7806 = vmatprep.subr.bf16.mxu0 0
        %7807 = vmatpush1.bf16.msra.mxu0 0
        %7808 = vmatprep.subr.bf16.mxu0 0
        %7809 = vmatpush1.bf16.msra.mxu0 0
        %7810 = vmatprep.subr.bf16.mxu0 0
        %7811 = vmatpush1.bf16.msra.mxu0 0
        %7812 = vmatprep.subr.bf16.mxu0 0
        %7813 = vmatpush1.bf16.msra.mxu0 0
        %7814 = vmatprep.subr.bf16.mxu0 0
        %7815 = vmatpush1.bf16.msra.mxu0 0
        %7816 = vmatprep.subr.bf16.mxu0 0
        %7817 = vmatpush1.bf16.msra.mxu0 0
        %7818 = vmatprep.subr.bf16.mxu0 0
        %7819 = vmatpush1.bf16.msra.mxu0 0
        %7820 = vmatprep.subr.bf16.mxu0 0
        %7821 = vmatpush1.bf16.msra.mxu0 0
        %7822 = vmatprep.subr.bf16.mxu0 0
        %7823 = vmatpush1.bf16.msra.mxu0 0
        %7824 = vmatprep.subr.bf16.mxu0 0
        %7825 = vmatpush1.bf16.msra.mxu0 0
        %7826 = vmatprep.subr.bf16.mxu0 0
        %7827 = vmatpush1.bf16.msra.mxu0 0
        %7828 = vmatprep.subr.bf16.mxu0 0
        %7829 = vmatpush1.bf16.msra.mxu0 0
        %7830 = vmatprep.subr.bf16.mxu0 0
        %7831 = vmatpush1.bf16.msra.mxu0 0
        %7832 = vmatprep.subr.bf16.mxu0 0
        %7833 = vmatpush1.bf16.msra.mxu0 0
        %7834 = vmatprep.subr.bf16.mxu0 0
        %7835 = vmatpush1.bf16.msra.mxu0 0
        %7836 = vmatprep.mubr.bf16.mxu0 0
        %7837 = vmatmul.mubr.bf16.gmra.mrb[0].mxu0 %v991
        %v7838 = vpop.f32.mrb[0].mxu0
        %v7839 = vadd.f32 0.0, %v7838
        %v7840 = vpop.f32.mrb[0].mxu0
        %v7841 = vpop.f32.mrb[0].mxu0
        %v7842 = vadd.f32 0.0, %v7841
        %v7843 = vpop.f32.mrb[0].mxu0
        %7844 = vmatprep.mubr.bf16.mxu0 0
        %7845 = vmatmul.mubr.bf16.gmra.mrb[0].mxu0 %v994
        %v7846 = vpop.f32.mrb[0].mxu0
        %v7847 = vadd.f32 0.0, %v7846
        %v7848 = vpop.f32.mrb[0].mxu0
        %v7849 = vpop.f32.mrb[0].mxu0
        %v7850 = vadd.f32 0.0, %v7849
        %v7851 = vpop.f32.mrb[0].mxu0
        %7852 = vmatprep.mubr.bf16.mxu0 0
        %7853 = vmatmul.mubr.bf16.gmra.mrb[0].mxu0 %v997
        %v7854 = vpop.f32.mrb[0].mxu0
        %v7855 = vadd.f32 0.0, %v7854
        %v7856 = vpop.f32.mrb[0].mxu0
        %v7857 = vpop.f32.mrb[0].mxu0
        %v7858 = vadd.f32 0.0, %v7857
        %v7859 = vpop.f32.mrb[0].mxu0
        %7860 = vmatprep.mubr.bf16.mxu0 0
        %7861 = vmatmul.mubr.bf16.gmra.mrb[0].mxu0 %v1000
        %v7862 = vpop.f32.mrb[0].mxu0
        %v7863 = vadd.f32 0.0, %v7862
        %v7864 = vpop.f32.mrb[0].mxu0
        %v7865 = vpop.f32.mrb[0].mxu0
        %v7866 = vadd.f32 0.0, %v7865
        %v7867 = vpop.f32.mrb[0].mxu0
        %7868 = vdwg.mxu0
        %v7873 = vunpack.c.l.b16 %v7796
        %v7874 = vunpack.c.l.b16 %v7797
        %v7875 = vunpack.c.l.b16 %v7798
        %v7876 = vunpack.c.l.b16 %v7799
        %v7877 = vpack.c.b16 %v7874, %v7873
        %v7878 = vpack.c.b16 %v7876, %v7875
        %vm7881 = vcmask 261120
        %v7883 = vsel %vm7881, %v7792, 0
        %v7886 = vsel %vm7881, %v7793, 0
        %v7889 = vsel %vm7881, %v7794, 0
        %v7892 = vsel %vm7881, %v7795, 0
        %7894 = vmatprep.subr.bf16.mxu0 0
        %7895 = vmatpush1.bf16.msra.mxu0 %v7877
        %7896 = vmatprep.subr.bf16.mxu0 0
        %7897 = vmatpush1.bf16.msra.mxu0 %v7878
        %7898 = vmatprep.subr.bf16.mxu0 0
        %7899 = vmatpush1.bf16.msra.mxu0 0
        %7900 = vmatprep.subr.bf16.mxu0 0
        %7901 = vmatpush1.bf16.msra.mxu0 0
        %7902 = vmatprep.subr.bf16.mxu0 0
        %7903 = vmatpush1.bf16.msra.mxu0 0
        %7904 = vmatprep.subr.bf16.mxu0 0
        %7905 = vmatpush1.bf16.msra.mxu0 0
        %7906 = vmatprep.subr.bf16.mxu0 0
        %7907 = vmatpush1.bf16.msra.mxu0 0
        %7908 = vmatprep.subr.bf16.mxu0 0
        %7909 = vmatpush1.bf16.msra.mxu0 0
        %7910 = vmatprep.subr.bf16.mxu0 0
        %7911 = vmatpush1.bf16.msra.mxu0 0
        %7912 = vmatprep.subr.bf16.mxu0 0
        %7913 = vmatpush1.bf16.msra.mxu0 0
        %7914 = vmatprep.subr.bf16.mxu0 0
        %7915 = vmatpush1.bf16.msra.mxu0 0
        %7916 = vmatprep.subr.bf16.mxu0 0
        %7917 = vmatpush1.bf16.msra.mxu0 0
        %7918 = vmatprep.subr.bf16.mxu0 0
        %7919 = vmatpush1.bf16.msra.mxu0 0
        %7920 = vmatprep.subr.bf16.mxu0 0
        %7921 = vmatpush1.bf16.msra.mxu0 0
        %7922 = vmatprep.subr.bf16.mxu0 0
        %7923 = vmatpush1.bf16.msra.mxu0 0
        %7924 = vmatprep.subr.bf16.mxu0 0
        %7925 = vmatpush1.bf16.msra.mxu0 0
        %7926 = vmatprep.mubr.bf16.mxu0 0
        %7927 = vmatmul.mubr.bf16.gmra.mrb[0].mxu0 %v7883
        %v7928 = vpop.f32.mrb[0].mxu0
        %v7929 = vadd.f32 %v7839, %v7928
        %v7930 = vpop.f32.mrb[0].mxu0
        %v7931 = vpop.f32.mrb[0].mxu0
        %v7932 = vadd.f32 %v7842, %v7931
        %v7933 = vpop.f32.mrb[0].mxu0
        %7934 = vmatprep.mubr.bf16.mxu0 0
        %7935 = vmatmul.mubr.bf16.gmra.mrb[0].mxu0 %v7886
        %v7936 = vpop.f32.mrb[0].mxu0
        %v7937 = vadd.f32 %v7847, %v7936
        %v7938 = vpop.f32.mrb[0].mxu0
        %v7939 = vpop.f32.mrb[0].mxu0
        %v7940 = vadd.f32 %v7850, %v7939
        %v7941 = vpop.f32.mrb[0].mxu0
        %7942 = vmatprep.mubr.bf16.mxu0 0
        %7943 = vmatmul.mubr.bf16.gmra.mrb[0].mxu0 %v7889
        %v7944 = vpop.f32.mrb[0].mxu0
        %v7945 = vadd.f32 %v7855, %v7944
        %v7946 = vpop.f32.mrb[0].mxu0
        %v7947 = vpop.f32.mrb[0].mxu0
        %v7948 = vadd.f32 %v7858, %v7947
        %v7949 = vpop.f32.mrb[0].mxu0
        %7950 = vmatprep.mubr.bf16.mxu0 0
        %7951 = vmatmul.mubr.bf16.gmra.mrb[0].mxu0 %v7892
        %v7952 = vpop.f32.mrb[0].mxu0
        %v7953 = vadd.f32 %v7863, %v7952
        %v7954 = vpop.f32.mrb[0].mxu0
        %v7955 = vpop.f32.mrb[0].mxu0
        %v7956 = vadd.f32 %v7866, %v7955
        %v7957 = vpop.f32.mrb[0].mxu0
        %7958 = vdwg.mxu0
        %v7959 = vld [vmem:[%s23] sm:$0x3]
        %v7960 = vlaneseq
        %v7961 = vshrl.u32 %v7960, 7
        %v7962 = vsub.s32 0, %v7961
        %v7963 = vrot.slane %v7959, %v7962
        %v7964 = vmul.f32 %v7929, %v7963
        %v7965 = vmul.f32 %v7932, %v7963
        %v7966 = vmul.f32 %v7937, %v7963
        %v7967 = vmul.f32 %v7940, %v7963
        %v7968 = vmul.f32 %v7945, %v7963
        %v7969 = vmul.f32 %v7948, %v7963
        %v7970 = vmul.f32 %v7953, %v7963
        %v7971 = vmul.f32 %v7956, %v7963
        %v7972 = vlaneseq
        %v7973 = vshrl.u32 %v7972, 7
        %v7974 = vsub.s32 1, %v7973
        %v7975 = vrot.slane %v7959, %v7974
        %v7976 = vadd.f32 %v7964, %v7975
        %v7977 = vadd.f32 %v7965, %v7975
        %v7978 = vadd.f32 %v7966, %v7975
        %v7979 = vadd.f32 %v7967, %v7975
        %v7980 = vadd.f32 %v7968, %v7975
        %v7981 = vadd.f32 %v7969, %v7975
        %v7982 = vadd.f32 %v7970, %v7975
        %v7983 = vadd.f32 %v7971, %v7975
        %vm7984 = vcmask 7168
        %7985 = vst.msk [vmem:[%s941] sm:$0xff] %vm7984, %v7976
        %7986 = vst.msk [vmem:[%s941 + $0x8] sm:$0xff] %vm7984, %v7977
        %7987 = vst.msk [vmem:[%s941 + $0x10] sm:$0xff] %vm7984, %v7978
        %7988 = vst.msk [vmem:[%s941 + $0x18] sm:$0xff] %vm7984, %v7979
        %7989 = vst.msk [vmem:[%s941 + $0x20] sm:$0xff] %vm7984, %v7980
        %7990 = vst.msk [vmem:[%s941 + $0x28] sm:$0xff] %vm7984, %v7981
        %7991 = vst.msk [vmem:[%s941 + $0x30] sm:$0xff] %vm7984, %v7982
        %7992 = vst.msk [vmem:[%s941 + $0x38] sm:$0xff] %vm7984, %v7983
        %p7993 = scmp.lt.s32.totalorder %s43, 1
        %s7994 = scalar_select %p7993, %s43, 1
        %s7995 = smul.addr %s7994, 8
        %s7996 = smul.addr %s7995, 8
        %s7997 = scalar_lea.vmem %s24, %s7996
        // Predicated region
        $region177: #{unet_forward.1} parent=115 // pred_check
          %p7998 = pneg %p570
        $region178: #{unet_forward.1} parent=115 // pred_check_branch
          %8000 = sbr.rel (%p7998) target = $region180
        $region179: #{unet_forward.1} parent=115 // pred_region
          _
        $region180: #{unet_forward.1} parent=115 // pred_fallthru
          _
      $region116: #{unet_forward.1} parent=5 // pred_fallthru
        _
      %p8001 = scmp.le.s32.totalorder 2, %s38
      // Predicated region
      $region181: #{unet_forward.1} parent=5 // pred_check
        %p8002 = pneg %p8001
      $region182: #{unet_forward.1} parent=5 // pred_check_branch
        %8004 = sbr.rel (%p8002) target = $region184
      $region183: #{unet_forward.1} parent=5 // pred_region
        %s8005 = ssub.s32 %s38, 2
        // Predicated region
        $region185: #{unet_forward.1} parent=183 // pred_check
          %p8006 = pneg %p576
        $region186: #{unet_forward.1} parent=183 // pred_check_branch
          %8008 = sbr.rel (%p8006) target = $region188
        $region187: #{unet_forward.1} parent=183 // pred_region
          %p8009 = scmp.lt.s32.totalorder %s44, 1
          %s8010 = scalar_select %p8009, %s44, 1
          %s8011 = smul.addr %s8010, 8
          %s8012 = smul.addr %s8011, 8
          %s8013 = scalar_lea.vmem %s24, %s8012
        $region188: #{unet_forward.1} parent=183 // pred_fallthru
          _
      $region184: #{unet_forward.1} parent=5 // pred_fallthru
        _
    $region6: #{unet_forward.1} parent=1 // loop_footer
      %s42 = sadd.s32 1, %s38
    $region7: #{unet_forward.1} parent=1 // loop_footer_branch
      %37 = sbr.rel target = $region3
    $region8: #{unet_forward.1} parent=1 // loop_exit
      _
    %8014 = vsyncpa [#allocation3], 1
    %s8015 = scalar_lea.sflag [#allocation3], 1
    %8016 = vsyncpa %s8015, 1
    %8017 = vsyncpa [#allocation5], 1
    %8018 = vsyncpa [#allocation8], 1
    %8019 = vsyncpa [#allocation11], 1
    %8020 = vsyncpa [#allocation14], 1
    %8021 = vsyncpa [#allocation17], 1
    %8022 = vsyncpa [#allocation20], 1
    %8023 = vsyncpa [#allocation23], 1

</llo_original>
